<compile_context>
chip_gen: v7x
topology: tpu7x:2x2x1
jax: 0.10.0
libtpu: 0.0.40
codegen_flags: <defaults>
</compile_context>

<pallas_src>
import functools

import jax
import jax.numpy as jnp
from jax import lax
from jax.experimental import pallas as pl
from jax.experimental.pallas import tpu as pltpu

HEAD_SIZE = 64          # global_config...model.head_size (hard-coded 64 in RUN_CUDA_RWKV7g)
CHUNK_LEN = 24          # kernel requires T % CHUNK_LEN == 0
DTYPE = jnp.bfloat16    # model dtype (the CUDA kernel asserts bf16 inputs)
VMEM_LIMIT = 48 * 1024 * 1024   # safe on v5e/v6e (128 MiB) and v7x (64 MiB)


def _pick_tile(dim, cap, floor):
    """Largest tile <= cap that divides dim (halving search), else dim itself."""
    if dim <= cap:
        return dim
    t = cap
    while t >= floor:
        if dim % t == 0:
            return t
        t //= 2
    return dim


# ---- dot helpers: explicit contraction dims, f32 accumulate -------------------
def _dot(x, y):                     # x @ y
    return lax.dot_general(x, y, (((1,), (0,)), ((), ())),
                           preferred_element_type=jnp.float32)


def _dot_t(x, y):                   # x @ y.T
    return lax.dot_general(x, y, (((1,), (1,)), ((), ())),
                           preferred_element_type=jnp.float32)


def _dot_a(x, y):                   # x.T @ y
    return lax.dot_general(x, y, (((0,), (0,)), ((), ())),
                           preferred_element_type=jnp.float32)


# ----------------------------------------------------------------------------- #
# Tiled matmul kernels
# ----------------------------------------------------------------------------- #
def _matmul_kernel(x_ref, w_ref, o_ref, acc_ref):
    @pl.when(pl.program_id(2) == 0)
    def _():
        acc_ref[...] = jnp.zeros_like(acc_ref)

    acc_ref[...] += jnp.dot(x_ref[...], w_ref[...],
                            preferred_element_type=jnp.float32)

    @pl.when(pl.program_id(2) == pl.num_programs(2) - 1)
    def _():
        o_ref[...] = acc_ref[...].astype(o_ref.dtype)


def pallas_matmul(x, w, out_dtype=None, tm=256, tn=256, tk=512):
    M, K = x.shape
    K2, N = w.shape
    assert K == K2
    out_dtype = out_dtype or x.dtype
    tm = _pick_tile(M, tm, 8)
    tn = _pick_tile(N, tn, 128)
    tk = _pick_tile(K, tk, 128)
    grid = (M // tm, N // tn, K // tk)
    return pl.pallas_call(
        _matmul_kernel,
        out_shape=jax.ShapeDtypeStruct((M, N), out_dtype),
        grid=grid,
        in_specs=[pl.BlockSpec((tm, tk), lambda i, j, k: (i, k)),
                  pl.BlockSpec((tk, tn), lambda i, j, k: (k, j))],
        out_specs=pl.BlockSpec((tm, tn), lambda i, j, k: (i, j)),
        scratch_shapes=[pltpu.VMEM((tm, tn), jnp.float32)],
        compiler_params=pltpu.CompilerParams(
            dimension_semantics=("parallel", "parallel", "arbitrary"),
            vmem_limit_bytes=VMEM_LIMIT),
    )(x, w)


def _dual_matmul_kernel(x_ref, z_ref, a_ref, b_ref, o_ref, acc_ref, *, act):
    @pl.when(pl.program_id(2) == 0)
    def _():
        acc_ref[...] = jnp.zeros_like(acc_ref)

    acc_ref[...] += (jnp.dot(x_ref[...], a_ref[...], preferred_element_type=jnp.float32)
                     + jnp.dot(z_ref[...], b_ref[...], preferred_element_type=jnp.float32))

    @pl.when(pl.program_id(2) == pl.num_programs(2) - 1)
    def _():
        acc = acc_ref[...]
        if act == "relu2":
            acc = jnp.square(jnp.maximum(acc, 0.0))
        o_ref[...] = acc.astype(o_ref.dtype)


def pallas_mix_matmul(x, xx, wa, wb, act="none", out_dtype=None,
                      tm=256, tn=512, tk=512):
    """(x + xx*mix) @ W with the per-channel mix folded into wb:
       out = x @ wa + xx @ wb, optionally followed by relu()**2 (cmix)."""
    M, K = x.shape
    K2, N = wa.shape
    assert K == K2 and wb.shape == wa.shape and xx.shape == x.shape
    out_dtype = out_dtype or x.dtype
    tm = _pick_tile(M, tm, 8)
    tn = _pick_tile(N, tn, 128)
    tk = _pick_tile(K, tk, 128)
    grid = (M // tm, N // tn, K // tk)
    return pl.pallas_call(
        functools.partial(_dual_matmul_kernel, act=act),
        out_shape=jax.ShapeDtypeStruct((M, N), out_dtype),
        grid=grid,
        in_specs=[pl.BlockSpec((tm, tk), lambda i, j, k: (i, k)),
                  pl.BlockSpec((tm, tk), lambda i, j, k: (i, k)),
                  pl.BlockSpec((tk, tn), lambda i, j, k: (k, j)),
                  pl.BlockSpec((tk, tn), lambda i, j, k: (k, j))],
        out_specs=pl.BlockSpec((tm, tn), lambda i, j, k: (i, j)),
        scratch_shapes=[pltpu.VMEM((tm, tn), jnp.float32)],
        compiler_params=pltpu.CompilerParams(
            dimension_semantics=("parallel", "parallel", "arbitrary"),
            vmem_limit_bytes=VMEM_LIMIT),
    )(x, xx, wa, wb)


# ----------------------------------------------------------------------------- #
# LayerNorm (row-tiled, vectorized over the full C lanes)
# ----------------------------------------------------------------------------- #
def _layernorm_kernel(x_ref, w_ref, b_ref, o_ref, *, eps):
    x = x_ref[...].astype(jnp.float32)
    mu = jnp.mean(x, axis=-1, keepdims=True)
    var = jnp.mean(jnp.square(x - mu), axis=-1, keepdims=True)
    y = (x - mu) * lax.rsqrt(var + eps)
    y = y * w_ref[...].astype(jnp.float32) + b_ref[...].astype(jnp.float32)
    o_ref[...] = y.astype(o_ref.dtype)


def pallas_layer_norm(x2d, w, b, eps=1e-5):
    M, C = x2d.shape
    tm = _pick_tile(M, 512, 8)
    return pl.pallas_call(
        functools.partial(_layernorm_kernel, eps=eps),
        out_shape=jax.ShapeDtypeStruct((M, C), x2d.dtype),
        grid=(M // tm,),
        in_specs=[pl.BlockSpec((tm, C), lambda i: (i, 0)),
                  pl.BlockSpec((1, C), lambda i: (0, 0)),
                  pl.BlockSpec((1, C), lambda i: (0, 0))],
        out_specs=pl.BlockSpec((tm, C), lambda i: (i, 0)),
        compiler_params=pltpu.CompilerParams(
            dimension_semantics=("parallel",),
            vmem_limit_bytes=VMEM_LIMIT),
    )(x2d, w.reshape(1, C), b.reshape(1, C))


def layer_norm(x, w, b, eps=1e-5):
    B, T, C = x.shape
    return pallas_layer_norm(x.reshape(B * T, C), w, b, eps).reshape(B, T, C)


# ----------------------------------------------------------------------------- #
# Fused chunked WKV7 + kk-normalize + GroupNorm + bonus + gate
# ----------------------------------------------------------------------------- #
def _wkv_head_chunk(r, w, k, v, ag, g, kkw, kaw, rkw, lnw, lnb,
                    S0, mask_incl, mask_strict, eps):
    """One head, one CHUNK_LEN chunk (all f32).

    Per-timestep recurrence being reproduced (wind_backstepping forward):
      decay_j = exp(-exp(w_j));  sa_i = sum_j aa_j * S[i,j]     (old state)
      S[i,j]  = S[i,j]*decay_j + v_i*kmod_j + sa_i*bb_j
      y_i     = sum_j S[i,j] * r_j                               (new state)
    with aa = -normalize(k*k_k), bb = normalize(k*k_k)*a, kmod = k*(1+(a-1)*k_a),
    evaluated for the whole chunk as dense matmuls (WY/DPLR chunk form).
    Returns (fused output chunk (L,N), new state (N,N)).
    """
    L = r.shape[0]

    # derived per-timestep vectors
    kk = k * kkw
    norm = jnp.sqrt(jnp.sum(kk * kk, axis=-1, keepdims=True))
    kk = kk / jnp.maximum(norm, 1e-12)
    aa = -kk                         # "z"/a input of the CUDA kernel
    bb = kk * ag                     # "b" input of the CUDA kernel
    km = k * (1.0 + (ag - 1.0) * kaw)

    # cumulative log-decays (hoisted out of the recurrence, computed on MXU)
    logd = -jnp.exp(w)                                # log(decay) <= 0
    clogd = _dot(mask_incl, logd)                     # inclusive cumsum over time
    clogd_prev = clogd - logd                         # exclusive cumsum
    dec = jnp.exp(clogd)
    dec_inv = jnp.exp(-clogd)
    dec_prev = jnp.exp(clogd_prev)
    dec_last = jnp.exp(clogd[L - 1:L, :])             # total chunk decay (1,N)

    r_p = r * dec
    k_p = km * dec_inv
    b_p = bb * dec_inv
    a_p = aa * dec_prev

    # u_t = S_{t-1} a_t : strictly-lower-triangular (nilpotent) solve
    Tm = _dot_t(a_p, b_p) * mask_strict               # (L,L)
    rhs = _dot_t(a_p, S0) + _dot(_dot_t(a_p, k_p) * mask_strict, v)
    u = rhs
    q = Tm
    n_doubling = max(1, (L - 1).bit_length())         # 2**n >= L
    for i in range(n_doubling):                       # u = (I - Tm)^-1 rhs
        u = u + _dot(q, u)
        if i + 1 < n_doubling:
            q = _dot(q, q)

    # outputs for the chunk
    att_k = _dot_t(r_p, k_p) * mask_incl
    att_b = _dot_t(r_p, b_p) * mask_incl
    y = _dot_t(r_p, S0) + _dot(att_k, v) + _dot(att_b, u)

    # state carried to the next chunk
    S_new = S0 * dec_last + _dot_a(v, k_p * dec_last) + _dot_a(u, b_p * dec_last)

    # fused GroupNorm (per head == per group) + bonus term + output gate
    mu = jnp.mean(y, axis=-1, keepdims=True)
    var = jnp.mean(jnp.square(y - mu), axis=-1, keepdims=True)
    yn = (y - mu) * lax.rsqrt(var + eps) * lnw + lnb
    bonus = jnp.sum(r * km * rkw, axis=-1, keepdims=True) * v
    out = (yn + bonus) * g
    return out, S_new


def _wkv_kernel(r_ref, w_ref, k_ref, v_ref, a_ref, g_ref,
                kk_ref, ka_ref, rk_ref, lnw_ref, lnb_ref,
                o_ref, state_ref, *, n_head, eps):
    @pl.when(pl.program_id(1) == 0)
    def _():
        state_ref[...] = jnp.zeros_like(state_ref)

    L = CHUNK_LEN
    N = HEAD_SIZE
    f32 = jnp.float32
    row = lax.broadcasted_iota(jnp.int32, (L, L), 0)
    col = lax.broadcasted_iota(jnp.int32, (L, L), 1)
    mask_incl = (col <= row).astype(f32)
    mask_strict = (col < row).astype(f32)

    # lane-dense loads of the whole (L, C) chunk, then static per-head slices
    r_all = r_ref[...].astype(f32)
    w_all = w_ref[...].astype(f32)
    k_all = k_ref[...].astype(f32)
    v_all = v_ref[...].astype(f32)
    a_all = a_ref[...].astype(f32)
    g_all = g_ref[...].astype(f32)
    kk_all = kk_ref[...].astype(f32)
    ka_all = ka_ref[...].astype(f32)
    rk_all = rk_ref[...].astype(f32)
    lnw_all = lnw_ref[...].astype(f32)
    lnb_all = lnb_ref[...].astype(f32)

    outs = []
    for h in range(n_head):          # static unroll; fine for moderate head counts
        hs = slice(h * N, (h + 1) * N)
        out_h, s_new = _wkv_head_chunk(
            r_all[:, hs], w_all[:, hs], k_all[:, hs], v_all[:, hs],
            a_all[:, hs], g_all[:, hs],
            kk_all[:, hs], ka_all[:, hs], rk_all[:, hs],
            lnw_all[:, hs], lnb_all[:, hs],
            state_ref[h], mask_incl, mask_strict, eps)
        state_ref[h] = s_new
        outs.append(out_h)
    # one lane-dense (L, C) store per chunk
    o_ref[...] = jnp.concatenate(outs, axis=-1).astype(o_ref.dtype)


def rwkv7_wkv_fused(r, w, k, v, a, g, k_k, k_a, r_k, ln_w, ln_b, *, eps):
    """Fused RUN_CUDA_RWKV7g + F.normalize(kk) + k-mod + ln_x + bonus + gate."""
    B, T, C = r.shape
    H = C // HEAD_SIZE
    assert T % CHUNK_LEN == 0
    n_chunks = T // CHUNK_LEN
    act_spec = pl.BlockSpec((None, CHUNK_LEN, C), lambda b, c: (b, c, 0))
    par_spec = pl.BlockSpec((1, C), lambda b, c: (0, 0))
    return pl.pallas_call(
        functools.partial(_wkv_kernel, n_head=H, eps=eps),
        out_shape=jax.ShapeDtypeStruct((B, T, C), r.dtype),
        grid=(B, n_chunks),
        in_specs=[act_spec] * 6 + [par_spec] * 5,
        out_specs=act_spec,
        scratch_shapes=[pltpu.VMEM((H, HEAD_SIZE, HEAD_SIZE), jnp.float32)],
        compiler_params=pltpu.CompilerParams(
            dimension_semantics=("parallel", "arbitrary"),
            vmem_limit_bytes=VMEM_LIMIT),
    )(r, w, k, v, a, g,
      k_k.reshape(1, C), k_a.reshape(1, C), r_k.reshape(1, C),
      ln_w.reshape(1, C), ln_b.reshape(1, C))


# ----------------------------------------------------------------------------- #
# Model glue (plain JAX between kernels)
# ----------------------------------------------------------------------------- #
def time_shift(x):
    # nn.ZeroPad2d((0,0,1,-1)): out[:, t] = x[:, t-1], out[:, 0] = 0
    return jnp.pad(x, ((0, 0), (1, 0), (0, 0)))[:, :-1, :]


def tmix_forward(p, layer_id, x, v_first, head_size_divisor):
    B, T, C = x.shape
    M = B * T
    f32 = jnp.float32
    x2 = x.reshape(M, C)
    xx2 = (time_shift(x) - x).reshape(M, C)

    # one fused (C, 3C + sum_D) projection pair: mix folded into Wdown_mix
    down = pallas_mix_matmul(x2, xx2, p["Wdown"], p["Wdown_mix"])

    Dd = p["w2"].shape[0]
    Da = p["a2"].shape[0]
    Dg = p["g2"].shape[0]
    o = 0
    r = down[:, o:o + C]; o += C
    k = down[:, o:o + C]; o += C
    v = down[:, o:o + C]; o += C
    w_hid = down[:, o:o + Dd]; o += Dd
    a_hid = down[:, o:o + Da]; o += Da
    g_hid = down[:, o:o + Dg]; o += Dg

    w_up = pallas_matmul(jnp.tanh(w_hid), p["w2"])
    w = (-jax.nn.softplus(-(p["w0"].astype(f32) + w_up.astype(f32))) - 0.5).astype(DTYPE)

    if layer_id == 0:
        v_first = v.reshape(B, T, C)
    else:
        Dv = p["v2"].shape[0]
        v_hid = down[:, o:o + Dv]; o += Dv
        v_up = pallas_matmul(v_hid, p["v2"])
        gate = jax.nn.sigmoid(p["v0"].astype(f32) + v_up.astype(f32))
        vf2 = v_first.reshape(M, C).astype(f32)
        v = (v.astype(f32) + (vf2 - v.astype(f32)) * gate).astype(DTYPE)

    a_up = pallas_matmul(a_hid, p["a2"])
    a = jax.nn.sigmoid(p["a0"].astype(f32) + a_up.astype(f32)).astype(DTYPE)
    g = pallas_matmul(jax.nn.sigmoid(g_hid), p["g2"])

    eps = 1e-5 * head_size_divisor ** 2
    to3 = lambda t: t.reshape(B, T, C)
    y = rwkv7_wkv_fused(to3(r), to3(w), to3(k), to3(v), to3(a), to3(g),
                        p["k_k"], p["k_a"], p["r_k"],
                        p["ln_x_w"], p["ln_x_b"], eps=eps)
    out = pallas_matmul(y.reshape(M, C), p["Wo"]).reshape(B, T, C)
    return out, v_first


def cmix_forward(p, x):
    B, T, C = x.shape
    M = B * T
    x2 = x.reshape(M, C)
    xx2 = (time_shift(x) - x).reshape(M, C)
    h = pallas_mix_matmul(x2, xx2, p["cmix_Wk"], p["cmix_Wk_mix"], act="relu2")
    out = pallas_matmul(h, p["cmix_Wv"])
    return out.reshape(B, T, C)


def block_forward(p, layer_id, x, v_first, head_size_divisor):
    if layer_id == 0:
        x = layer_norm(x, p["ln0_w"], p["ln0_b"])
    att, v_first = tmix_forward(
        p, layer_id, layer_norm(x, p["ln1_w"], p["ln1_b"]), v_first, head_size_divisor)
    x = x + att
    x = x + cmix_forward(p, layer_norm(x, p["ln2_w"], p["ln2_b"]))
    return x, v_first


def rwkv_forward(params, idx, head_size_divisor=8.0):
    x = jnp.take(params["emb"], idx, axis=0)          # (B, T, C) bf16
    v_first = jnp.zeros_like(x)
    for layer_id, blk in enumerate(params["blocks"]):
        x, v_first = block_forward(blk, layer_id, x, v_first, head_size_divisor)
    x = layer_norm(x, params["ln_out_w"], params["ln_out_b"])
    B, T, C = x.shape
    logits = pallas_matmul(x.reshape(B * T, C), params["head"]).reshape(B, T, -1)
    return logits, v_first


# ----------------------------------------------------------------------------- #
# Deterministic synthetic parameter init (shapes match RWKV_Tmix/CMix_x070,
# with the token-mix vectors folded into fused projection weights)
# ----------------------------------------------------------------------------- #
def init_params(key, *, n_layer, n_embd, vocab_size):
    C = n_embd
    H = C // HEAD_SIZE
    D_DECAY = max(32, int(round(1.8 * C ** 0.5 / 32) * 32))
    D_AAA = max(32, int(round(1.8 * C ** 0.5 / 32) * 32))
    D_MV = max(32, int(round(1.3 * C ** 0.5 / 32) * 32))
    D_GATE = max(32, int(round(0.6 * C ** 0.8 / 32) * 32))

    keys = iter(jax.random.split(key, 1024))
    nrm32 = lambda shape, s=0.05: jax.random.normal(next(keys), shape, jnp.float32) * s
    ones = lambda shape: jnp.ones(shape, DTYPE)
    zeros = lambda shape: jnp.zeros(shape, DTYPE)

    params = {
        "emb": nrm32((vocab_size, C), 0.02).astype(DTYPE),
        "ln_out_w": ones((C,)), "ln_out_b": zeros((C,)),
        "head": nrm32((C, vocab_size), 0.02).astype(DTYPE),
        "blocks": [],
    }
    ddd = jnp.arange(C, dtype=jnp.float32) / C
    for layer_id in range(n_layer):
        r01 = layer_id / max(n_layer - 1, 1)
        r1a0 = 1.0 - layer_id / n_layer
        decay_speed = jnp.array(
            [-7.0 + 5.0 * (n / (C - 1)) ** (0.85 + 1.0 * r01 ** 0.5) for n in range(C)],
            jnp.float32)
        mix_r = 1.0 - ddd ** (0.2 * r1a0)
        mix_w = 1.0 - ddd ** (0.9 * r1a0)
        mix_k = 1.0 - (ddd ** (0.9 * r1a0) + 0.4 * r01)
        mix_v = 1.0 - (ddd ** (0.4 * r1a0) + 0.6 * r01)
        mix_a = 1.0 - ddd ** (0.9 * r1a0)
        mix_g = 1.0 - ddd ** (0.2 * r1a0)
        cmix_mix_k = 1.0 - ddd ** (r1a0 ** 4)

        Wr = nrm32((C, C)); Wk = nrm32((C, C)); Wv = nrm32((C, C))
        w1 = nrm32((C, D_DECAY)); a1 = nrm32((C, D_AAA)); g1 = nrm32((C, D_GATE))
        segs = [(Wr, mix_r), (Wk, mix_k), (Wv, mix_v),
                (w1, mix_w), (a1, mix_a), (g1, mix_g)]
        if layer_id != 0:
            v1 = nrm32((C, D_MV))
            segs.append((v1, mix_v))
        Wdown = jnp.concatenate([wgt for wgt, _ in segs], axis=1).astype(DTYPE)
        Wdown_mix = jnp.concatenate([wgt * m[:, None] for wgt, m in segs],
                                    axis=1).astype(DTYPE)

        cWk = nrm32((C, 4 * C)); cWv = nrm32((4 * C, C))

        blk = {
            "ln0_w": ones((C,)), "ln0_b": zeros((C,)),
            "ln1_w": ones((C,)), "ln1_b": zeros((C,)),
            "ln2_w": ones((C,)), "ln2_b": zeros((C,)),
            "Wdown": Wdown, "Wdown_mix": Wdown_mix,
            "w0": (decay_speed + 0.5).astype(DTYPE).reshape(1, C),
            "w2": nrm32((D_DECAY, C)).astype(DTYPE),
            "a0": zeros((1, C)), "a2": nrm32((D_AAA, C)).astype(DTYPE),
            "g2": nrm32((D_GATE, C)).astype(DTYPE),
            "k_k": (jnp.ones((1, C), jnp.float32) * 0.85).astype(DTYPE),
            "k_a": ones((1, C)),
            "r_k": nrm32((H, HEAD_SIZE)).astype(DTYPE).reshape(1, C),
            "Wo": nrm32((C, C)).astype(DTYPE),
            "ln_x_w": ones((C,)), "ln_x_b": zeros((C,)),
            "cmix_Wk": cWk.astype(DTYPE),
            "cmix_Wk_mix": (cWk * cmix_mix_k[:, None]).astype(DTYPE),
            "cmix_Wv": cWv.astype(DTYPE),
        }
        if layer_id != 0:
            blk["v0"] = ones((1, C))
            blk["v2"] = nrm32((D_MV, C)).astype(DTYPE)
        params["blocks"].append(blk)
    return params


if __name__ == "__main__":
    B, T = 2, 24                           # T must be a multiple of CHUNK_LEN (=24)
    n_embd, n_layer, vocab = 128, 2, 256   # C=128 -> H=2 heads of size 64

    key = jax.random.PRNGKey(0)
    pkey, ikey = jax.random.split(key)
    params = init_params(pkey, n_layer=n_layer, n_embd=n_embd, vocab_size=vocab)
    idx = jax.random.randint(ikey, (B, T), 0, vocab, dtype=jnp.int32)

    fwd = jax.jit(rwkv_forward)
    logits, v_first = fwd(params, idx)
    jax.block_until_ready((logits, v_first))

    assert logits.shape == (B, T, vocab) and logits.dtype == DTYPE
    assert v_first.shape == (B, T, n_embd)
    assert bool(jnp.all(jnp.isfinite(logits.astype(jnp.float32))))
    print("KERNEL_OK")
</pallas_src>

<mosaic_0001>
module attributes {stable_mosaic.version = 11 : i64} {
  func.func @_layernorm_kernel(%arg0: i32, %arg1: memref<48x128xbf16, #tpu.memory_space<vmem>>, %arg2: memref<1x128xbf16, #tpu.memory_space<vmem>>, %arg3: memref<1x128xbf16, #tpu.memory_space<vmem>>, %arg4: memref<48x128xbf16, #tpu.memory_space<vmem>>) attributes {dimension_semantics = [#tpu.dimension_semantics<parallel>], iteration_bounds = array<i64: 1>, scalar_prefetch = 0 : i64, scratch_operands = 0 : i64, tpu.core_type = #tpu.core_type<tc>, window_params = [{transform_indices = @transform_0, window_bounds = array<i64: 48, 128>}, {pipeline_mode = #tpu.pipeline_mode<synchronous>, transform_indices = @transform_1, window_bounds = array<i64: 1, 128>}, {pipeline_mode = #tpu.pipeline_mode<synchronous>, transform_indices = @transform_2, window_bounds = array<i64: 1, 128>}, {transform_indices = @transform_3, window_bounds = array<i64: 48, 128>}]} {
    %c0 = arith.constant 0 : index
    %c0_0 = arith.constant 0 : index
    %0 = vector.load %arg1[%c0, %c0_0] : memref<48x128xbf16, #tpu.memory_space<vmem>>, vector<48x128xbf16>
    %1 = arith.extf %0 : vector<48x128xbf16> to vector<48x128xf32>
    %cst = arith.constant dense<0.000000e+00> : vector<48xf32>
    %2 = vector.multi_reduction <add>, %1, %cst [1] : vector<48x128xf32> to vector<48xf32>
    %3 = vector.shape_cast %2 : vector<48xf32> to vector<48x1xf32>
    %cst_1 = arith.constant 1.280000e+02 : f32
    %4 = vector.broadcast %cst_1 : f32 to vector<48x1xf32>
    %5 = arith.divf %3, %4 : vector<48x1xf32>
    %6 = vector.broadcast %5 : vector<48x1xf32> to vector<48x128xf32>
    %7 = arith.subf %1, %6 : vector<48x128xf32>
    %8 = arith.mulf %7, %7 : vector<48x128xf32>
    %cst_2 = arith.constant dense<0.000000e+00> : vector<48xf32>
    %9 = vector.multi_reduction <add>, %8, %cst_2 [1] : vector<48x128xf32> to vector<48xf32>
    %10 = vector.shape_cast %9 : vector<48xf32> to vector<48x1xf32>
    %cst_3 = arith.constant 1.280000e+02 : f32
    %11 = vector.broadcast %cst_3 : f32 to vector<48x1xf32>
    %12 = arith.divf %10, %11 : vector<48x1xf32>
    %13 = vector.broadcast %5 : vector<48x1xf32> to vector<48x128xf32>
    %14 = arith.subf %1, %13 : vector<48x128xf32>
    %cst_4 = arith.constant 9.99999974E-6 : f32
    %15 = vector.broadcast %cst_4 : f32 to vector<48x1xf32>
    %16 = arith.addf %12, %15 : vector<48x1xf32>
    %17 = math.rsqrt %16 : vector<48x1xf32>
    %18 = vector.broadcast %17 : vector<48x1xf32> to vector<48x128xf32>
    %19 = arith.mulf %14, %18 : vector<48x128xf32>
    %c0_5 = arith.constant 0 : index
    %c0_6 = arith.constant 0 : index
    %20 = vector.load %arg2[%c0_5, %c0_6] : memref<1x128xbf16, #tpu.memory_space<vmem>>, vector<1x128xbf16>
    %21 = arith.extf %20 : vector<1x128xbf16> to vector<1x128xf32>
    %22 = vector.broadcast %21 : vector<1x128xf32> to vector<48x128xf32>
    %23 = arith.mulf %19, %22 : vector<48x128xf32>
    %c0_7 = arith.constant 0 : index
    %c0_8 = arith.constant 0 : index
    %24 = vector.load %arg3[%c0_7, %c0_8] : memref<1x128xbf16, #tpu.memory_space<vmem>>, vector<1x128xbf16>
    %25 = arith.extf %24 : vector<1x128xbf16> to vector<1x128xf32>
    %26 = vector.broadcast %25 : vector<1x128xf32> to vector<48x128xf32>
    %27 = arith.addf %23, %26 : vector<48x128xf32>
    %28 = arith.truncf %27 : vector<48x128xf32> to vector<48x128xbf16>
    %c0_9 = arith.constant 0 : index
    %c0_10 = arith.constant 0 : index
    %29 = vector.load %arg4[%c0_9, %c0_10] : memref<48x128xbf16, #tpu.memory_space<vmem>>, vector<48x128xbf16>
    tpu.vector_store %arg4[%c0_9, %c0_10], %28 {strides = array<i32>} : memref<48x128xbf16, #tpu.memory_space<vmem>>, vector<48x128xbf16>,
    return
  }
  func.func @transform_0(%arg0: i32) -> (i32, i32) {
    %c0_i32 = arith.constant 0 : i32
    %c0_i32_0 = arith.constant 0 : i32
    return %arg0, %c0_i32 : i32, i32
  }
  func.func @transform_1(%arg0: i32) -> (i32, i32) {
    %c0_i32 = arith.constant 0 : i32
    %c0_i32_0 = arith.constant 0 : i32
    %c0_i32_1 = arith.constant 0 : i32
    return %c0_i32, %c0_i32_0 : i32, i32
  }
  func.func @transform_2(%arg0: i32) -> (i32, i32) {
    %c0_i32 = arith.constant 0 : i32
    %c0_i32_0 = arith.constant 0 : i32
    %c0_i32_1 = arith.constant 0 : i32
    return %c0_i32, %c0_i32_0 : i32, i32
  }
  func.func @transform_3(%arg0: i32) -> (i32, i32) {
    %c0_i32 = arith.constant 0 : i32
    %c0_i32_0 = arith.constant 0 : i32
    return %arg0, %c0_i32 : i32, i32
  }
}

module attributes {stable_mosaic.version = 11 : i64} {
  func.func @_dual_matmul_kernel(%arg0: i32, %arg1: i32, %arg2: i32, %arg3: memref<48x128xbf16, #tpu.memory_space<vmem>>, %arg4: memref<48x128xbf16, #tpu.memory_space<vmem>>, %arg5: memref<128x480xbf16, #tpu.memory_space<vmem>>, %arg6: memref<128x480xbf16, #tpu.memory_space<vmem>>, %arg7: memref<48x480xbf16, #tpu.memory_space<vmem>>, %arg8: memref<48x480xf32, #tpu.memory_space<vmem>>) attributes {dimension_semantics = [#tpu.dimension_semantics<parallel>, #tpu.dimension_semantics<parallel>, #tpu.dimension_semantics<arbitrary>], iteration_bounds = array<i64: 1, 1, 1>, scalar_prefetch = 0 : i64, scratch_operands = 1 : i64, tpu.core_type = #tpu.core_type<tc>, window_params = [{transform_indices = @transform_0, window_bounds = array<i64: 48, 128>}, {transform_indices = @transform_1, window_bounds = array<i64: 48, 128>}, {transform_indices = @transform_2, window_bounds = array<i64: 128, 480>}, {transform_indices = @transform_3, window_bounds = array<i64: 128, 480>}, {transform_indices = @transform_4, window_bounds = array<i64: 48, 480>}]} {
    %c0_i32 = arith.constant 0 : i32
    %0 = arith.cmpi eq, %arg2, %c0_i32 : i32
    %1 = arith.extui %0 : i1 to i32
    %c0_i32_0 = arith.constant 0 : i32
    %2 = arith.cmpi ne, %1, %c0_i32_0 : i32
    scf.if %2 {
      %cst_15 = arith.constant 0.000000e+00 : f32
      %16 = vector.broadcast %cst_15 : f32 to vector<48x480xf32>
      %c0_16 = arith.constant 0 : index
      %c0_17 = arith.constant 0 : index
      %17 = vector.load %arg8[%c0_16, %c0_17] : memref<48x480xf32, #tpu.memory_space<vmem>>, vector<48x480xf32>
      tpu.vector_store %arg8[%c0_16, %c0_17], %16 {strides = array<i32>} : memref<48x480xf32, #tpu.memory_space<vmem>>, vector<48x480xf32>,
    } else {
    }
    %c0 = arith.constant 0 : index
    %c0_1 = arith.constant 0 : index
    %3 = vector.load %arg8[%c0, %c0_1] : memref<48x480xf32, #tpu.memory_space<vmem>>, vector<48x480xf32>
    %c0_2 = arith.constant 0 : index
    %c0_3 = arith.constant 0 : index
    %4 = vector.load %arg3[%c0_2, %c0_3] : memref<48x128xbf16, #tpu.memory_space<vmem>>, vector<48x128xbf16>
    %c0_4 = arith.constant 0 : index
    %c0_5 = arith.constant 0 : index
    %5 = vector.load %arg5[%c0_4, %c0_5] : memref<128x480xbf16, #tpu.memory_space<vmem>>, vector<128x480xbf16>
    %cst = arith.constant dense<0.000000e+00> : vector<48x480xf32>
    %6 = tpu.matmul %4, %5, %cst {dimension_numbers = #tpu.dot_dimension_numbers<[1], [0], [0], [1], [0, 0, 1, 1], [], []>} : vector<48x128xbf16>, vector<128x480xbf16>, vector<48x480xf32> -> vector<48x480xf32>
    %c0_6 = arith.constant 0 : index
    %c0_7 = arith.constant 0 : index
    %7 = vector.load %arg4[%c0_6, %c0_7] : memref<48x128xbf16, #tpu.memory_space<vmem>>, vector<48x128xbf16>
    %c0_8 = arith.constant 0 : index
    %c0_9 = arith.constant 0 : index
    %8 = vector.load %arg6[%c0_8, %c0_9] : memref<128x480xbf16, #tpu.memory_space<vmem>>, vector<128x480xbf16>
    %cst_10 = arith.constant dense<0.000000e+00> : vector<48x480xf32>
    %9 = tpu.matmul %7, %8, %cst_10 {dimension_numbers = #tpu.dot_dimension_numbers<[1], [0], [0], [1], [0, 0, 1, 1], [], []>} : vector<48x128xbf16>, vector<128x480xbf16>, vector<48x480xf32> -> vector<48x480xf32>
    %10 = arith.addf %6, %9 : vector<48x480xf32>
    %11 = arith.addf %3, %10 : vector<48x480xf32>
    %c0_11 = arith.constant 0 : index
    %c0_12 = arith.constant 0 : index
    %12 = vector.load %arg8[%c0_11, %c0_12] : memref<48x480xf32, #tpu.memory_space<vmem>>, vector<48x480xf32>
    tpu.vector_store %arg8[%c0_11, %c0_12], %11 {strides = array<i32>} : memref<48x480xf32, #tpu.memory_space<vmem>>, vector<48x480xf32>,
    %c0_i32_13 = arith.constant 0 : i32
    %13 = arith.cmpi eq, %arg2, %c0_i32_13 : i32
    %14 = arith.extui %13 : i1 to i32
    %c0_i32_14 = arith.constant 0 : i32
    %15 = arith.cmpi ne, %14, %c0_i32_14 : i32
    scf.if %15 {
      %c0_15 = arith.constant 0 : index
      %c0_16 = arith.constant 0 : index
      %16 = vector.load %arg8[%c0_15, %c0_16] : memref<48x480xf32, #tpu.memory_space<vmem>>, vector<48x480xf32>
      %17 = arith.truncf %16 : vector<48x480xf32> to vector<48x480xbf16>
      %c0_17 = arith.constant 0 : index
      %c0_18 = arith.constant 0 : index
      %18 = vector.load %arg7[%c0_17, %c0_18] : memref<48x480xbf16, #tpu.memory_space<vmem>>, vector<48x480xbf16>
      tpu.vector_store %arg7[%c0_17, %c0_18], %17 {strides = array<i32>} : memref<48x480xbf16, #tpu.memory_space<vmem>>, vector<48x480xbf16>,
    } else {
    }
    return
  }
  func.func @transform_0(%arg0: i32, %arg1: i32, %arg2: i32) -> (i32, i32) {
    %c0_i32 = arith.constant 0 : i32
    return %arg0, %arg2 : i32, i32
  }
  func.func @transform_1(%arg0: i32, %arg1: i32, %arg2: i32) -> (i32, i32) {
    %c0_i32 = arith.constant 0 : i32
    return %arg0, %arg2 : i32, i32
  }
  func.func @transform_2(%arg0: i32, %arg1: i32, %arg2: i32) -> (i32, i32) {
    %c0_i32 = arith.constant 0 : i32
    return %arg2, %arg1 : i32, i32
  }
  func.func @transform_3(%arg0: i32, %arg1: i32, %arg2: i32) -> (i32, i32) {
    %c0_i32 = arith.constant 0 : i32
    return %arg2, %arg1 : i32, i32
  }
  func.func @transform_4(%arg0: i32, %arg1: i32, %arg2: i32) -> (i32, i32) {
    %c0_i32 = arith.constant 0 : i32
    return %arg0, %arg1 : i32, i32
  }
}

module attributes {stable_mosaic.version = 11 : i64} {
  func.func @_matmul_kernel(%arg0: i32, %arg1: i32, %arg2: i32, %arg3: memref<48x32xbf16, #tpu.memory_space<vmem>>, %arg4: memref<32x128xbf16, #tpu.memory_space<vmem>>, %arg5: memref<48x128xbf16, #tpu.memory_space<vmem>>, %arg6: memref<48x128xf32, #tpu.memory_space<vmem>>) attributes {dimension_semantics = [#tpu.dimension_semantics<parallel>, #tpu.dimension_semantics<parallel>, #tpu.dimension_semantics<arbitrary>], iteration_bounds = array<i64: 1, 1, 1>, scalar_prefetch = 0 : i64, scratch_operands = 1 : i64, tpu.core_type = #tpu.core_type<tc>, window_params = [{transform_indices = @transform_0, window_bounds = array<i64: 48, 32>}, {transform_indices = @transform_1, window_bounds = array<i64: 32, 128>}, {transform_indices = @transform_2, window_bounds = array<i64: 48, 128>}]} {
    %c0_i32 = arith.constant 0 : i32
    %0 = arith.cmpi eq, %arg2, %c0_i32 : i32
    %1 = arith.extui %0 : i1 to i32
    %c0_i32_0 = arith.constant 0 : i32
    %2 = arith.cmpi ne, %1, %c0_i32_0 : i32
    scf.if %2 {
      %cst_10 = arith.constant 0.000000e+00 : f32
      %12 = vector.broadcast %cst_10 : f32 to vector<48x128xf32>
      %c0_11 = arith.constant 0 : index
      %c0_12 = arith.constant 0 : index
      %13 = vector.load %arg6[%c0_11, %c0_12] : memref<48x128xf32, #tpu.memory_space<vmem>>, vector<48x128xf32>
      tpu.vector_store %arg6[%c0_11, %c0_12], %12 {strides = array<i32>} : memref<48x128xf32, #tpu.memory_space<vmem>>, vector<48x128xf32>,
    } else {
    }
    %c0 = arith.constant 0 : index
    %c0_1 = arith.constant 0 : index
    %3 = vector.load %arg6[%c0, %c0_1] : memref<48x128xf32, #tpu.memory_space<vmem>>, vector<48x128xf32>
    %c0_2 = arith.constant 0 : index
    %c0_3 = arith.constant 0 : index
    %4 = vector.load %arg3[%c0_2, %c0_3] : memref<48x32xbf16, #tpu.memory_space<vmem>>, vector<48x32xbf16>
    %c0_4 = arith.constant 0 : index
    %c0_5 = arith.constant 0 : index
    %5 = vector.load %arg4[%c0_4, %c0_5] : memref<32x128xbf16, #tpu.memory_space<vmem>>, vector<32x128xbf16>
    %cst = arith.constant dense<0.000000e+00> : vector<48x128xf32>
    %6 = tpu.matmul %4, %5, %cst {dimension_numbers = #tpu.dot_dimension_numbers<[1], [0], [0], [1], [0, 0, 1, 1], [], []>} : vector<48x32xbf16>, vector<32x128xbf16>, vector<48x128xf32> -> vector<48x128xf32>
    %7 = arith.addf %3, %6 : vector<48x128xf32>
    %c0_6 = arith.constant 0 : index
    %c0_7 = arith.constant 0 : index
    %8 = vector.load %arg6[%c0_6, %c0_7] : memref<48x128xf32, #tpu.memory_space<vmem>>, vector<48x128xf32>
    tpu.vector_store %arg6[%c0_6, %c0_7], %7 {strides = array<i32>} : memref<48x128xf32, #tpu.memory_space<vmem>>, vector<48x128xf32>,
    %c0_i32_8 = arith.constant 0 : i32
    %9 = arith.cmpi eq, %arg2, %c0_i32_8 : i32
    %10 = arith.extui %9 : i1 to i32
    %c0_i32_9 = arith.constant 0 : i32
    %11 = arith.cmpi ne, %10, %c0_i32_9 : i32
    scf.if %11 {
      %c0_10 = arith.constant 0 : index
      %c0_11 = arith.constant 0 : index
      %12 = vector.load %arg6[%c0_10, %c0_11] : memref<48x128xf32, #tpu.memory_space<vmem>>, vector<48x128xf32>
      %13 = arith.truncf %12 : vector<48x128xf32> to vector<48x128xbf16>
      %c0_12 = arith.constant 0 : index
      %c0_13 = arith.constant 0 : index
      %14 = vector.load %arg5[%c0_12, %c0_13] : memref<48x128xbf16, #tpu.memory_space<vmem>>, vector<48x128xbf16>
      tpu.vector_store %arg5[%c0_12, %c0_13], %13 {strides = array<i32>} : memref<48x128xbf16, #tpu.memory_space<vmem>>, vector<48x128xbf16>,
    } else {
    }
    return
  }
  func.func @transform_0(%arg0: i32, %arg1: i32, %arg2: i32) -> (i32, i32) {
    %c0_i32 = arith.constant 0 : i32
    return %arg0, %arg2 : i32, i32
  }
  func.func @transform_1(%arg0: i32, %arg1: i32, %arg2: i32) -> (i32, i32) {
    %c0_i32 = arith.constant 0 : i32
    return %arg2, %arg1 : i32, i32
  }
  func.func @transform_2(%arg0: i32, %arg1: i32, %arg2: i32) -> (i32, i32) {
    %c0_i32 = arith.constant 0 : i32
    return %arg0, %arg1 : i32, i32
  }
}

module attributes {stable_mosaic.version = 11 : i64} {
  func.func @_matmul_kernel(%arg0: i32, %arg1: i32, %arg2: i32, %arg3: memref<48x128xbf16, #tpu.memory_space<vmem>>, %arg4: memref<128x128xbf16, #tpu.memory_space<vmem>>, %arg5: memref<48x128xbf16, #tpu.memory_space<vmem>>, %arg6: memref<48x128xf32, #tpu.memory_space<vmem>>) attributes {dimension_semantics = [#tpu.dimension_semantics<parallel>, #tpu.dimension_semantics<parallel>, #tpu.dimension_semantics<arbitrary>], iteration_bounds = array<i64: 1, 1, 1>, scalar_prefetch = 0 : i64, scratch_operands = 1 : i64, tpu.core_type = #tpu.core_type<tc>, window_params = [{transform_indices = @transform_0, window_bounds = array<i64: 48, 128>}, {transform_indices = @transform_1, window_bounds = array<i64: 128, 128>}, {transform_indices = @transform_2, window_bounds = array<i64: 48, 128>}]} {
    %c0_i32 = arith.constant 0 : i32
    %0 = arith.cmpi eq, %arg2, %c0_i32 : i32
    %1 = arith.extui %0 : i1 to i32
    %c0_i32_0 = arith.constant 0 : i32
    %2 = arith.cmpi ne, %1, %c0_i32_0 : i32
    scf.if %2 {
      %cst_10 = arith.constant 0.000000e+00 : f32
      %12 = vector.broadcast %cst_10 : f32 to vector<48x128xf32>
      %c0_11 = arith.constant 0 : index
      %c0_12 = arith.constant 0 : index
      %13 = vector.load %arg6[%c0_11, %c0_12] : memref<48x128xf32, #tpu.memory_space<vmem>>, vector<48x128xf32>
      tpu.vector_store %arg6[%c0_11, %c0_12], %12 {strides = array<i32>} : memref<48x128xf32, #tpu.memory_space<vmem>>, vector<48x128xf32>,
    } else {
    }
    %c0 = arith.constant 0 : index
    %c0_1 = arith.constant 0 : index
    %3 = vector.load %arg6[%c0, %c0_1] : memref<48x128xf32, #tpu.memory_space<vmem>>, vector<48x128xf32>
    %c0_2 = arith.constant 0 : index
    %c0_3 = arith.constant 0 : index
    %4 = vector.load %arg3[%c0_2, %c0_3] : memref<48x128xbf16, #tpu.memory_space<vmem>>, vector<48x128xbf16>
    %c0_4 = arith.constant 0 : index
    %c0_5 = arith.constant 0 : index
    %5 = vector.load %arg4[%c0_4, %c0_5] : memref<128x128xbf16, #tpu.memory_space<vmem>>, vector<128x128xbf16>
    %cst = arith.constant dense<0.000000e+00> : vector<48x128xf32>
    %6 = tpu.matmul %4, %5, %cst {dimension_numbers = #tpu.dot_dimension_numbers<[1], [0], [0], [1], [0, 0, 1, 1], [], []>} : vector<48x128xbf16>, vector<128x128xbf16>, vector<48x128xf32> -> vector<48x128xf32>
    %7 = arith.addf %3, %6 : vector<48x128xf32>
    %c0_6 = arith.constant 0 : index
    %c0_7 = arith.constant 0 : index
    %8 = vector.load %arg6[%c0_6, %c0_7] : memref<48x128xf32, #tpu.memory_space<vmem>>, vector<48x128xf32>
    tpu.vector_store %arg6[%c0_6, %c0_7], %7 {strides = array<i32>} : memref<48x128xf32, #tpu.memory_space<vmem>>, vector<48x128xf32>,
    %c0_i32_8 = arith.constant 0 : i32
    %9 = arith.cmpi eq, %arg2, %c0_i32_8 : i32
    %10 = arith.extui %9 : i1 to i32
    %c0_i32_9 = arith.constant 0 : i32
    %11 = arith.cmpi ne, %10, %c0_i32_9 : i32
    scf.if %11 {
      %c0_10 = arith.constant 0 : index
      %c0_11 = arith.constant 0 : index
      %12 = vector.load %arg6[%c0_10, %c0_11] : memref<48x128xf32, #tpu.memory_space<vmem>>, vector<48x128xf32>
      %13 = arith.truncf %12 : vector<48x128xf32> to vector<48x128xbf16>
      %c0_12 = arith.constant 0 : index
      %c0_13 = arith.constant 0 : index
      %14 = vector.load %arg5[%c0_12, %c0_13] : memref<48x128xbf16, #tpu.memory_space<vmem>>, vector<48x128xbf16>
      tpu.vector_store %arg5[%c0_12, %c0_13], %13 {strides = array<i32>} : memref<48x128xbf16, #tpu.memory_space<vmem>>, vector<48x128xbf16>,
    } else {
    }
    return
  }
  func.func @transform_0(%arg0: i32, %arg1: i32, %arg2: i32) -> (i32, i32) {
    %c0_i32 = arith.constant 0 : i32
    return %arg0, %arg2 : i32, i32
  }
  func.func @transform_1(%arg0: i32, %arg1: i32, %arg2: i32) -> (i32, i32) {
    %c0_i32 = arith.constant 0 : i32
    return %arg2, %arg1 : i32, i32
  }
  func.func @transform_2(%arg0: i32, %arg1: i32, %arg2: i32) -> (i32, i32) {
    %c0_i32 = arith.constant 0 : i32
    return %arg0, %arg1 : i32, i32
  }
}

module attributes {stable_mosaic.version = 11 : i64} {
  func.func @_wkv_kernel(%arg0: i32, %arg1: i32, %arg2: memref<1x24x128xbf16, #tpu.memory_space<vmem>>, %arg3: memref<1x24x128xbf16, #tpu.memory_space<vmem>>, %arg4: memref<1x24x128xbf16, #tpu.memory_space<vmem>>, %arg5: memref<1x24x128xbf16, #tpu.memory_space<vmem>>, %arg6: memref<1x24x128xbf16, #tpu.memory_space<vmem>>, %arg7: memref<1x24x128xbf16, #tpu.memory_space<vmem>>, %arg8: memref<1x128xbf16, #tpu.memory_space<vmem>>, %arg9: memref<1x128xbf16, #tpu.memory_space<vmem>>, %arg10: memref<1x128xbf16, #tpu.memory_space<vmem>>, %arg11: memref<1x128xbf16, #tpu.memory_space<vmem>>, %arg12: memref<1x128xbf16, #tpu.memory_space<vmem>>, %arg13: memref<1x24x128xbf16, #tpu.memory_space<vmem>>, %arg14: memref<2x64x64xf32, #tpu.memory_space<vmem>>) attributes {dimension_semantics = [#tpu.dimension_semantics<parallel>, #tpu.dimension_semantics<arbitrary>], iteration_bounds = array<i64: 2, 1>, scalar_prefetch = 0 : i64, scratch_operands = 1 : i64, tpu.core_type = #tpu.core_type<tc>, window_params = [{transform_indices = @transform_0, window_bounds = array<i64: 1, 24, 128>}, {transform_indices = @transform_1, window_bounds = array<i64: 1, 24, 128>}, {transform_indices = @transform_2, window_bounds = array<i64: 1, 24, 128>}, {transform_indices = @transform_3, window_bounds = array<i64: 1, 24, 128>}, {transform_indices = @transform_4, window_bounds = array<i64: 1, 24, 128>}, {transform_indices = @transform_5, window_bounds = array<i64: 1, 24, 128>}, {pipeline_mode = #tpu.pipeline_mode<synchronous>, transform_indices = @transform_6, window_bounds = array<i64: 1, 128>}, {pipeline_mode = #tpu.pipeline_mode<synchronous>, transform_indices = @transform_7, window_bounds = array<i64: 1, 128>}, {pipeline_mode = #tpu.pipeline_mode<synchronous>, transform_indices = @transform_8, window_bounds = array<i64: 1, 128>}, {pipeline_mode = #tpu.pipeline_mode<synchronous>, transform_indices = @transform_9, window_bounds = array<i64: 1, 128>}, {pipeline_mode = #tpu.pipeline_mode<synchronous>, transform_indices = @transform_10, window_bounds = array<i64: 1, 128>}, {transform_indices = @transform_11, window_bounds = array<i64: 1, 24, 128>}]} {
    %c0_i32 = arith.constant 0 : i32
    %0 = arith.cmpi eq, %arg1, %c0_i32 : i32
    %1 = arith.extui %0 : i1 to i32
    %c0_i32_0 = arith.constant 0 : i32
    %2 = arith.cmpi ne, %1, %c0_i32_0 : i32
    scf.if %2 {
      %cst_109 = arith.constant 0.000000e+00 : f32
      %290 = vector.broadcast %cst_109 : f32 to vector<2x64x64xf32>
      %c0_110 = arith.constant 0 : index
      %c0_111 = arith.constant 0 : index
      %c0_112 = arith.constant 0 : index
      %291 = vector.load %arg14[%c0_110, %c0_111, %c0_112] : memref<2x64x64xf32, #tpu.memory_space<vmem>>, vector<2x64x64xf32>
      tpu.vector_store %arg14[%c0_110, %c0_111, %c0_112], %290 {strides = array<i32>} : memref<2x64x64xf32, #tpu.memory_space<vmem>>, vector<2x64x64xf32>,
    } else {
    }
    %3 = tpu.iota {dimensions = array<i32: 0>} : vector<24x24xi32>
    %4 = tpu.iota {dimensions = array<i32: 1>} : vector<24x24xi32>
    %5 = arith.cmpi sle, %4, %3 : vector<24x24xi32>
    %6 = arith.extui %5 : vector<24x24xi1> to vector<24x24xi32>
    %7 = arith.sitofp %6 : vector<24x24xi32> to vector<24x24xf32>
    %8 = arith.cmpi slt, %4, %3 : vector<24x24xi32>
    %9 = arith.extui %8 : vector<24x24xi1> to vector<24x24xi32>
    %10 = arith.sitofp %9 : vector<24x24xi32> to vector<24x24xf32>
    %c0 = arith.constant 0 : index
    %c0_1 = arith.constant 0 : index
    %c0_2 = arith.constant 0 : index
    %11 = vector.load %arg2[%c0, %c0_1, %c0_2] : memref<1x24x128xbf16, #tpu.memory_space<vmem>>, vector<1x24x128xbf16>
    %12 = vector.shape_cast %11 : vector<1x24x128xbf16> to vector<24x128xbf16>
    %13 = arith.extf %12 : vector<24x128xbf16> to vector<24x128xf32>
    %c0_3 = arith.constant 0 : index
    %c0_4 = arith.constant 0 : index
    %c0_5 = arith.constant 0 : index
    %14 = vector.load %arg3[%c0_3, %c0_4, %c0_5] : memref<1x24x128xbf16, #tpu.memory_space<vmem>>, vector<1x24x128xbf16>
    %15 = vector.shape_cast %14 : vector<1x24x128xbf16> to vector<24x128xbf16>
    %16 = arith.extf %15 : vector<24x128xbf16> to vector<24x128xf32>
    %c0_6 = arith.constant 0 : index
    %c0_7 = arith.constant 0 : index
    %c0_8 = arith.constant 0 : index
    %17 = vector.load %arg4[%c0_6, %c0_7, %c0_8] : memref<1x24x128xbf16, #tpu.memory_space<vmem>>, vector<1x24x128xbf16>
    %18 = vector.shape_cast %17 : vector<1x24x128xbf16> to vector<24x128xbf16>
    %19 = arith.extf %18 : vector<24x128xbf16> to vector<24x128xf32>
    %c0_9 = arith.constant 0 : index
    %c0_10 = arith.constant 0 : index
    %c0_11 = arith.constant 0 : index
    %20 = vector.load %arg5[%c0_9, %c0_10, %c0_11] : memref<1x24x128xbf16, #tpu.memory_space<vmem>>, vector<1x24x128xbf16>
    %21 = vector.shape_cast %20 : vector<1x24x128xbf16> to vector<24x128xbf16>
    %22 = arith.extf %21 : vector<24x128xbf16> to vector<24x128xf32>
    %c0_12 = arith.constant 0 : index
    %c0_13 = arith.constant 0 : index
    %c0_14 = arith.constant 0 : index
    %23 = vector.load %arg6[%c0_12, %c0_13, %c0_14] : memref<1x24x128xbf16, #tpu.memory_space<vmem>>, vector<1x24x128xbf16>
    %24 = vector.shape_cast %23 : vector<1x24x128xbf16> to vector<24x128xbf16>
    %25 = arith.extf %24 : vector<24x128xbf16> to vector<24x128xf32>
    %c0_15 = arith.constant 0 : index
    %c0_16 = arith.constant 0 : index
    %c0_17 = arith.constant 0 : index
    %26 = vector.load %arg7[%c0_15, %c0_16, %c0_17] : memref<1x24x128xbf16, #tpu.memory_space<vmem>>, vector<1x24x128xbf16>
    %27 = vector.shape_cast %26 : vector<1x24x128xbf16> to vector<24x128xbf16>
    %28 = arith.extf %27 : vector<24x128xbf16> to vector<24x128xf32>
    %c0_18 = arith.constant 0 : index
    %c0_19 = arith.constant 0 : index
    %29 = vector.load %arg8[%c0_18, %c0_19] : memref<1x128xbf16, #tpu.memory_space<vmem>>, vector<1x128xbf16>
    %30 = arith.extf %29 : vector<1x128xbf16> to vector<1x128xf32>
    %c0_20 = arith.constant 0 : index
    %c0_21 = arith.constant 0 : index
    %31 = vector.load %arg9[%c0_20, %c0_21] : memref<1x128xbf16, #tpu.memory_space<vmem>>, vector<1x128xbf16>
    %32 = arith.extf %31 : vector<1x128xbf16> to vector<1x128xf32>
    %c0_22 = arith.constant 0 : index
    %c0_23 = arith.constant 0 : index
    %33 = vector.load %arg10[%c0_22, %c0_23] : memref<1x128xbf16, #tpu.memory_space<vmem>>, vector<1x128xbf16>
    %34 = arith.extf %33 : vector<1x128xbf16> to vector<1x128xf32>
    %c0_24 = arith.constant 0 : index
    %c0_25 = arith.constant 0 : index
    %35 = vector.load %arg11[%c0_24, %c0_25] : memref<1x128xbf16, #tpu.memory_space<vmem>>, vector<1x128xbf16>
    %36 = arith.extf %35 : vector<1x128xbf16> to vector<1x128xf32>
    %c0_26 = arith.constant 0 : index
    %c0_27 = arith.constant 0 : index
    %37 = vector.load %arg12[%c0_26, %c0_27] : memref<1x128xbf16, #tpu.memory_space<vmem>>, vector<1x128xbf16>
    %38 = arith.extf %37 : vector<1x128xbf16> to vector<1x128xf32>
    %39 = vector.extract_strided_slice %13 {offsets = [0, 0], sizes = [24, 64], strides = [1, 1]} : vector<24x128xf32> to vector<24x64xf32>
    %40 = vector.extract_strided_slice %16 {offsets = [0, 0], sizes = [24, 64], strides = [1, 1]} : vector<24x128xf32> to vector<24x64xf32>
    %41 = vector.extract_strided_slice %19 {offsets = [0, 0], sizes = [24, 64], strides = [1, 1]} : vector<24x128xf32> to vector<24x64xf32>
    %42 = vector.extract_strided_slice %22 {offsets = [0, 0], sizes = [24, 64], strides = [1, 1]} : vector<24x128xf32> to vector<24x64xf32>
    %43 = vector.extract_strided_slice %25 {offsets = [0, 0], sizes = [24, 64], strides = [1, 1]} : vector<24x128xf32> to vector<24x64xf32>
    %44 = vector.extract_strided_slice %28 {offsets = [0, 0], sizes = [24, 64], strides = [1, 1]} : vector<24x128xf32> to vector<24x64xf32>
    %45 = vector.extract_strided_slice %30 {offsets = [0, 0], sizes = [1, 64], strides = [1, 1]} : vector<1x128xf32> to vector<1x64xf32>
    %46 = vector.extract_strided_slice %32 {offsets = [0, 0], sizes = [1, 64], strides = [1, 1]} : vector<1x128xf32> to vector<1x64xf32>
    %47 = vector.extract_strided_slice %34 {offsets = [0, 0], sizes = [1, 64], strides = [1, 1]} : vector<1x128xf32> to vector<1x64xf32>
    %48 = vector.extract_strided_slice %36 {offsets = [0, 0], sizes = [1, 64], strides = [1, 1]} : vector<1x128xf32> to vector<1x64xf32>
    %49 = vector.extract_strided_slice %38 {offsets = [0, 0], sizes = [1, 64], strides = [1, 1]} : vector<1x128xf32> to vector<1x64xf32>
    %c0_28 = arith.constant 0 : index
    %c0_29 = arith.constant 0 : index
    %c0_30 = arith.constant 0 : index
    %50 = vector.load %arg14[%c0_28, %c0_29, %c0_30] : memref<2x64x64xf32, #tpu.memory_space<vmem>>, vector<1x64x64xf32>
    %51 = vector.shape_cast %50 : vector<1x64x64xf32> to vector<64x64xf32>
    %52 = vector.broadcast %45 : vector<1x64xf32> to vector<24x64xf32>
    %53 = arith.mulf %41, %52 : vector<24x64xf32>
    %54 = arith.mulf %53, %53 : vector<24x64xf32>
    %cst = arith.constant dense<0.000000e+00> : vector<24xf32>
    %55 = vector.multi_reduction <add>, %54, %cst [1] : vector<24x64xf32> to vector<24xf32>
    %56 = vector.shape_cast %55 : vector<24xf32> to vector<24x1xf32>
    %57 = math.sqrt %56 : vector<24x1xf32>
    %cst_31 = arith.constant 9.99999996E-13 : f32
    %58 = vector.broadcast %cst_31 : f32 to vector<24x1xf32>
    %59 = arith.maximumf %57, %58 : vector<24x1xf32>
    %60 = vector.broadcast %59 : vector<24x1xf32> to vector<24x64xf32>
    %61 = arith.divf %53, %60 : vector<24x64xf32>
    %cst_32 = arith.constant 0.000000e+00 : f32
    %62 = vector.broadcast %cst_32 : f32 to vector<24x64xf32>
    %63 = arith.subf %62, %61 : vector<24x64xf32>
    %64 = arith.mulf %61, %43 : vector<24x64xf32>
    %cst_33 = arith.constant 1.000000e+00 : f32
    %65 = vector.broadcast %cst_33 : f32 to vector<24x64xf32>
    %66 = arith.subf %43, %65 : vector<24x64xf32>
    %67 = vector.broadcast %46 : vector<1x64xf32> to vector<24x64xf32>
    %68 = arith.mulf %66, %67 : vector<24x64xf32>
    %cst_34 = arith.constant 1.000000e+00 : f32
    %69 = vector.broadcast %cst_34 : f32 to vector<24x64xf32>
    %70 = arith.addf %69, %68 : vector<24x64xf32>
    %71 = arith.mulf %41, %70 : vector<24x64xf32>
    %72 = math.exp %40 : vector<24x64xf32>
    %cst_35 = arith.constant 0.000000e+00 : f32
    %73 = vector.broadcast %cst_35 : f32 to vector<24x64xf32>
    %74 = arith.subf %73, %72 : vector<24x64xf32>
    %cst_36 = arith.constant dense<0.000000e+00> : vector<24x64xf32>
    %75 = tpu.matmul %7, %74, %cst_36 {dimension_numbers = #tpu.dot_dimension_numbers<[1], [0], [0], [1], [0, 0, 1, 1], [], []>} : vector<24x24xf32>, vector<24x64xf32>, vector<24x64xf32> -> vector<24x64xf32>
    %76 = arith.subf %75, %74 : vector<24x64xf32>
    %77 = math.exp %75 : vector<24x64xf32>
    %cst_37 = arith.constant 0.000000e+00 : f32
    %78 = vector.broadcast %cst_37 : f32 to vector<24x64xf32>
    %79 = arith.subf %78, %75 : vector<24x64xf32>
    %80 = math.exp %79 : vector<24x64xf32>
    %81 = math.exp %76 : vector<24x64xf32>
    %82 = vector.extract_strided_slice %75 {offsets = [23, 0], sizes = [1, 64], strides = [1, 1]} : vector<24x64xf32> to vector<1x64xf32>
    %83 = math.exp %82 : vector<1x64xf32>
    %84 = arith.mulf %39, %77 : vector<24x64xf32>
    %85 = arith.mulf %71, %80 : vector<24x64xf32>
    %86 = arith.mulf %64, %80 : vector<24x64xf32>
    %87 = arith.mulf %63, %81 : vector<24x64xf32>
    %cst_38 = arith.constant dense<0.000000e+00> : vector<24x24xf32>
    %88 = tpu.matmul %87, %86, %cst_38 {dimension_numbers = #tpu.dot_dimension_numbers<[1], [1], [0], [0], [0, 0, 1, 0], [], []>} : vector<24x64xf32>, vector<24x64xf32>, vector<24x24xf32> -> vector<24x24xf32>
    %89 = arith.mulf %88, %10 : vector<24x24xf32>
    %cst_39 = arith.constant dense<0.000000e+00> : vector<24x64xf32>
    %90 = tpu.matmul %87, %51, %cst_39 {dimension_numbers = #tpu.dot_dimension_numbers<[1], [1], [0], [0], [0, 0, 1, 0], [], []>} : vector<24x64xf32>, vector<64x64xf32>, vector<24x64xf32> -> vector<24x64xf32>
    %cst_40 = arith.constant dense<0.000000e+00> : vector<24x24xf32>
    %91 = tpu.matmul %87, %85, %cst_40 {dimension_numbers = #tpu.dot_dimension_numbers<[1], [1], [0], [0], [0, 0, 1, 0], [], []>} : vector<24x64xf32>, vector<24x64xf32>, vector<24x24xf32> -> vector<24x24xf32>
    %92 = arith.mulf %91, %10 : vector<24x24xf32>
    %cst_41 = arith.constant dense<0.000000e+00> : vector<24x64xf32>
    %93 = tpu.matmul %92, %42, %cst_41 {dimension_numbers = #tpu.dot_dimension_numbers<[1], [0], [0], [1], [0, 0, 1, 1], [], []>} : vector<24x24xf32>, vector<24x64xf32>, vector<24x64xf32> -> vector<24x64xf32>
    %94 = arith.addf %90, %93 : vector<24x64xf32>
    %cst_42 = arith.constant dense<0.000000e+00> : vector<24x64xf32>
    %95 = tpu.matmul %89, %94, %cst_42 {dimension_numbers = #tpu.dot_dimension_numbers<[1], [0], [0], [1], [0, 0, 1, 1], [], []>} : vector<24x24xf32>, vector<24x64xf32>, vector<24x64xf32> -> vector<24x64xf32>
    %96 = arith.addf %94, %95 : vector<24x64xf32>
    %cst_43 = arith.constant dense<0.000000e+00> : vector<24x24xf32>
    %97 = tpu.matmul %89, %89, %cst_43 {dimension_numbers = #tpu.dot_dimension_numbers<[1], [0], [0], [1], [0, 0, 1, 1], [], []>} : vector<24x24xf32>, vector<24x24xf32>, vector<24x24xf32> -> vector<24x24xf32>
    %cst_44 = arith.constant dense<0.000000e+00> : vector<24x64xf32>
    %98 = tpu.matmul %97, %96, %cst_44 {dimension_numbers = #tpu.dot_dimension_numbers<[1], [0], [0], [1], [0, 0, 1, 1], [], []>} : vector<24x24xf32>, vector<24x64xf32>, vector<24x64xf32> -> vector<24x64xf32>
    %99 = arith.addf %96, %98 : vector<24x64xf32>
    %cst_45 = arith.constant dense<0.000000e+00> : vector<24x24xf32>
    %100 = tpu.matmul %97, %97, %cst_45 {dimension_numbers = #tpu.dot_dimension_numbers<[1], [0], [0], [1], [0, 0, 1, 1], [], []>} : vector<24x24xf32>, vector<24x24xf32>, vector<24x24xf32> -> vector<24x24xf32>
    %cst_46 = arith.constant dense<0.000000e+00> : vector<24x64xf32>
    %101 = tpu.matmul %100, %99, %cst_46 {dimension_numbers = #tpu.dot_dimension_numbers<[1], [0], [0], [1], [0, 0, 1, 1], [], []>} : vector<24x24xf32>, vector<24x64xf32>, vector<24x64xf32> -> vector<24x64xf32>
    %102 = arith.addf %99, %101 : vector<24x64xf32>
    %cst_47 = arith.constant dense<0.000000e+00> : vector<24x24xf32>
    %103 = tpu.matmul %100, %100, %cst_47 {dimension_numbers = #tpu.dot_dimension_numbers<[1], [0], [0], [1], [0, 0, 1, 1], [], []>} : vector<24x24xf32>, vector<24x24xf32>, vector<24x24xf32> -> vector<24x24xf32>
    %cst_48 = arith.constant dense<0.000000e+00> : vector<24x64xf32>
    %104 = tpu.matmul %103, %102, %cst_48 {dimension_numbers = #tpu.dot_dimension_numbers<[1], [0], [0], [1], [0, 0, 1, 1], [], []>} : vector<24x24xf32>, vector<24x64xf32>, vector<24x64xf32> -> vector<24x64xf32>
    %105 = arith.addf %102, %104 : vector<24x64xf32>
    %cst_49 = arith.constant dense<0.000000e+00> : vector<24x24xf32>
    %106 = tpu.matmul %103, %103, %cst_49 {dimension_numbers = #tpu.dot_dimension_numbers<[1], [0], [0], [1], [0, 0, 1, 1], [], []>} : vector<24x24xf32>, vector<24x24xf32>, vector<24x24xf32> -> vector<24x24xf32>
    %cst_50 = arith.constant dense<0.000000e+00> : vector<24x64xf32>
    %107 = tpu.matmul %106, %105, %cst_50 {dimension_numbers = #tpu.dot_dimension_numbers<[1], [0], [0], [1], [0, 0, 1, 1], [], []>} : vector<24x24xf32>, vector<24x64xf32>, vector<24x64xf32> -> vector<24x64xf32>
    %108 = arith.addf %105, %107 : vector<24x64xf32>
    %cst_51 = arith.constant dense<0.000000e+00> : vector<24x24xf32>
    %109 = tpu.matmul %84, %85, %cst_51 {dimension_numbers = #tpu.dot_dimension_numbers<[1], [1], [0], [0], [0, 0, 1, 0], [], []>} : vector<24x64xf32>, vector<24x64xf32>, vector<24x24xf32> -> vector<24x24xf32>
    %110 = arith.mulf %109, %7 : vector<24x24xf32>
    %cst_52 = arith.constant dense<0.000000e+00> : vector<24x24xf32>
    %111 = tpu.matmul %84, %86, %cst_52 {dimension_numbers = #tpu.dot_dimension_numbers<[1], [1], [0], [0], [0, 0, 1, 0], [], []>} : vector<24x64xf32>, vector<24x64xf32>, vector<24x24xf32> -> vector<24x24xf32>
    %112 = arith.mulf %111, %7 : vector<24x24xf32>
    %cst_53 = arith.constant dense<0.000000e+00> : vector<24x64xf32>
    %113 = tpu.matmul %84, %51, %cst_53 {dimension_numbers = #tpu.dot_dimension_numbers<[1], [1], [0], [0], [0, 0, 1, 0], [], []>} : vector<24x64xf32>, vector<64x64xf32>, vector<24x64xf32> -> vector<24x64xf32>
    %cst_54 = arith.constant dense<0.000000e+00> : vector<24x64xf32>
    %114 = tpu.matmul %110, %42, %cst_54 {dimension_numbers = #tpu.dot_dimension_numbers<[1], [0], [0], [1], [0, 0, 1, 1], [], []>} : vector<24x24xf32>, vector<24x64xf32>, vector<24x64xf32> -> vector<24x64xf32>
    %115 = arith.addf %113, %114 : vector<24x64xf32>
    %cst_55 = arith.constant dense<0.000000e+00> : vector<24x64xf32>
    %116 = tpu.matmul %112, %108, %cst_55 {dimension_numbers = #tpu.dot_dimension_numbers<[1], [0], [0], [1], [0, 0, 1, 1], [], []>} : vector<24x24xf32>, vector<24x64xf32>, vector<24x64xf32> -> vector<24x64xf32>
    %117 = arith.addf %115, %116 : vector<24x64xf32>
    %118 = vector.broadcast %83 : vector<1x64xf32> to vector<64x64xf32>
    %119 = arith.mulf %51, %118 : vector<64x64xf32>
    %120 = vector.broadcast %83 : vector<1x64xf32> to vector<24x64xf32>
    %121 = arith.mulf %85, %120 : vector<24x64xf32>
    %cst_56 = arith.constant dense<0.000000e+00> : vector<64x64xf32>
    %122 = tpu.matmul %42, %121, %cst_56 {dimension_numbers = #tpu.dot_dimension_numbers<[0], [0], [1], [1], [0, 1, 1, 1], [], []>} : vector<24x64xf32>, vector<24x64xf32>, vector<64x64xf32> -> vector<64x64xf32>
    %123 = arith.addf %119, %122 : vector<64x64xf32>
    %124 = vector.broadcast %83 : vector<1x64xf32> to vector<24x64xf32>
    %125 = arith.mulf %86, %124 : vector<24x64xf32>
    %cst_57 = arith.constant dense<0.000000e+00> : vector<64x64xf32>
    %126 = tpu.matmul %108, %125, %cst_57 {dimension_numbers = #tpu.dot_dimension_numbers<[0], [0], [1], [1], [0, 1, 1, 1], [], []>} : vector<24x64xf32>, vector<24x64xf32>, vector<64x64xf32> -> vector<64x64xf32>
    %127 = arith.addf %123, %126 : vector<64x64xf32>
    %cst_58 = arith.constant dense<0.000000e+00> : vector<24xf32>
    %128 = vector.multi_reduction <add>, %117, %cst_58 [1] : vector<24x64xf32> to vector<24xf32>
    %129 = vector.shape_cast %128 : vector<24xf32> to vector<24x1xf32>
    %cst_59 = arith.constant 6.400000e+01 : f32
    %130 = vector.broadcast %cst_59 : f32 to vector<24x1xf32>
    %131 = arith.divf %129, %130 : vector<24x1xf32>
    %132 = vector.broadcast %131 : vector<24x1xf32> to vector<24x64xf32>
    %133 = arith.subf %117, %132 : vector<24x64xf32>
    %134 = arith.mulf %133, %133 : vector<24x64xf32>
    %cst_60 = arith.constant dense<0.000000e+00> : vector<24xf32>
    %135 = vector.multi_reduction <add>, %134, %cst_60 [1] : vector<24x64xf32> to vector<24xf32>
    %136 = vector.shape_cast %135 : vector<24xf32> to vector<24x1xf32>
    %cst_61 = arith.constant 6.400000e+01 : f32
    %137 = vector.broadcast %cst_61 : f32 to vector<24x1xf32>
    %138 = arith.divf %136, %137 : vector<24x1xf32>
    %139 = vector.broadcast %131 : vector<24x1xf32> to vector<24x64xf32>
    %140 = arith.subf %117, %139 : vector<24x64xf32>
    %cst_62 = arith.constant 6.400000e-04 : f32
    %141 = vector.broadcast %cst_62 : f32 to vector<24x1xf32>
    %142 = arith.addf %138, %141 : vector<24x1xf32>
    %143 = math.rsqrt %142 : vector<24x1xf32>
    %144 = vector.broadcast %143 : vector<24x1xf32> to vector<24x64xf32>
    %145 = arith.mulf %140, %144 : vector<24x64xf32>
    %146 = vector.broadcast %48 : vector<1x64xf32> to vector<24x64xf32>
    %147 = arith.mulf %145, %146 : vector<24x64xf32>
    %148 = vector.broadcast %49 : vector<1x64xf32> to vector<24x64xf32>
    %149 = arith.addf %147, %148 : vector<24x64xf32>
    %150 = arith.mulf %39, %71 : vector<24x64xf32>
    %151 = vector.broadcast %47 : vector<1x64xf32> to vector<24x64xf32>
    %152 = arith.mulf %150, %151 : vector<24x64xf32>
    %cst_63 = arith.constant dense<0.000000e+00> : vector<24xf32>
    %153 = vector.multi_reduction <add>, %152, %cst_63 [1] : vector<24x64xf32> to vector<24xf32>
    %154 = vector.shape_cast %153 : vector<24xf32> to vector<24x1xf32>
    %155 = vector.broadcast %154 : vector<24x1xf32> to vector<24x64xf32>
    %156 = arith.mulf %155, %42 : vector<24x64xf32>
    %157 = arith.addf %149, %156 : vector<24x64xf32>
    %158 = arith.mulf %157, %44 : vector<24x64xf32>
    %c0_64 = arith.constant 0 : index
    %c0_65 = arith.constant 0 : index
    %c0_66 = arith.constant 0 : index
    %159 = vector.load %arg14[%c0_64, %c0_65, %c0_66] : memref<2x64x64xf32, #tpu.memory_space<vmem>>, vector<1x64x64xf32>
    %160 = vector.shape_cast %159 : vector<1x64x64xf32> to vector<64x64xf32>
    %161 = vector.shape_cast %127 : vector<64x64xf32> to vector<1x64x64xf32>
    tpu.vector_store %arg14[%c0_64, %c0_65, %c0_66], %161 {strides = array<i32>} : memref<2x64x64xf32, #tpu.memory_space<vmem>>, vector<1x64x64xf32>,
    %162 = vector.extract_strided_slice %13 {offsets = [0, 64], sizes = [24, 64], strides = [1, 1]} : vector<24x128xf32> to vector<24x64xf32>
    %163 = vector.extract_strided_slice %16 {offsets = [0, 64], sizes = [24, 64], strides = [1, 1]} : vector<24x128xf32> to vector<24x64xf32>
    %164 = vector.extract_strided_slice %19 {offsets = [0, 64], sizes = [24, 64], strides = [1, 1]} : vector<24x128xf32> to vector<24x64xf32>
    %165 = vector.extract_strided_slice %22 {offsets = [0, 64], sizes = [24, 64], strides = [1, 1]} : vector<24x128xf32> to vector<24x64xf32>
    %166 = vector.extract_strided_slice %25 {offsets = [0, 64], sizes = [24, 64], strides = [1, 1]} : vector<24x128xf32> to vector<24x64xf32>
    %167 = vector.extract_strided_slice %28 {offsets = [0, 64], sizes = [24, 64], strides = [1, 1]} : vector<24x128xf32> to vector<24x64xf32>
    %168 = vector.extract_strided_slice %30 {offsets = [0, 64], sizes = [1, 64], strides = [1, 1]} : vector<1x128xf32> to vector<1x64xf32>
    %169 = vector.extract_strided_slice %32 {offsets = [0, 64], sizes = [1, 64], strides = [1, 1]} : vector<1x128xf32> to vector<1x64xf32>
    %170 = vector.extract_strided_slice %34 {offsets = [0, 64], sizes = [1, 64], strides = [1, 1]} : vector<1x128xf32> to vector<1x64xf32>
    %171 = vector.extract_strided_slice %36 {offsets = [0, 64], sizes = [1, 64], strides = [1, 1]} : vector<1x128xf32> to vector<1x64xf32>
    %172 = vector.extract_strided_slice %38 {offsets = [0, 64], sizes = [1, 64], strides = [1, 1]} : vector<1x128xf32> to vector<1x64xf32>
    %c1 = arith.constant 1 : index
    %c0_67 = arith.constant 0 : index
    %c0_68 = arith.constant 0 : index
    %173 = vector.load %arg14[%c1, %c0_67, %c0_68] : memref<2x64x64xf32, #tpu.memory_space<vmem>>, vector<1x64x64xf32>
    %174 = vector.shape_cast %173 : vector<1x64x64xf32> to vector<64x64xf32>
    %175 = vector.broadcast %168 : vector<1x64xf32> to vector<24x64xf32>
    %176 = arith.mulf %164, %175 : vector<24x64xf32>
    %177 = arith.mulf %176, %176 : vector<24x64xf32>
    %cst_69 = arith.constant dense<0.000000e+00> : vector<24xf32>
    %178 = vector.multi_reduction <add>, %177, %cst_69 [1] : vector<24x64xf32> to vector<24xf32>
    %179 = vector.shape_cast %178 : vector<24xf32> to vector<24x1xf32>
    %180 = math.sqrt %179 : vector<24x1xf32>
    %cst_70 = arith.constant 9.99999996E-13 : f32
    %181 = vector.broadcast %cst_70 : f32 to vector<24x1xf32>
    %182 = arith.maximumf %180, %181 : vector<24x1xf32>
    %183 = vector.broadcast %182 : vector<24x1xf32> to vector<24x64xf32>
    %184 = arith.divf %176, %183 : vector<24x64xf32>
    %cst_71 = arith.constant 0.000000e+00 : f32
    %185 = vector.broadcast %cst_71 : f32 to vector<24x64xf32>
    %186 = arith.subf %185, %184 : vector<24x64xf32>
    %187 = arith.mulf %184, %166 : vector<24x64xf32>
    %cst_72 = arith.constant 1.000000e+00 : f32
    %188 = vector.broadcast %cst_72 : f32 to vector<24x64xf32>
    %189 = arith.subf %166, %188 : vector<24x64xf32>
    %190 = vector.broadcast %169 : vector<1x64xf32> to vector<24x64xf32>
    %191 = arith.mulf %189, %190 : vector<24x64xf32>
    %cst_73 = arith.constant 1.000000e+00 : f32
    %192 = vector.broadcast %cst_73 : f32 to vector<24x64xf32>
    %193 = arith.addf %192, %191 : vector<24x64xf32>
    %194 = arith.mulf %164, %193 : vector<24x64xf32>
    %195 = math.exp %163 : vector<24x64xf32>
    %cst_74 = arith.constant 0.000000e+00 : f32
    %196 = vector.broadcast %cst_74 : f32 to vector<24x64xf32>
    %197 = arith.subf %196, %195 : vector<24x64xf32>
    %cst_75 = arith.constant dense<0.000000e+00> : vector<24x64xf32>
    %198 = tpu.matmul %7, %197, %cst_75 {dimension_numbers = #tpu.dot_dimension_numbers<[1], [0], [0], [1], [0, 0, 1, 1], [], []>} : vector<24x24xf32>, vector<24x64xf32>, vector<24x64xf32> -> vector<24x64xf32>
    %199 = arith.subf %198, %197 : vector<24x64xf32>
    %200 = math.exp %198 : vector<24x64xf32>
    %cst_76 = arith.constant 0.000000e+00 : f32
    %201 = vector.broadcast %cst_76 : f32 to vector<24x64xf32>
    %202 = arith.subf %201, %198 : vector<24x64xf32>
    %203 = math.exp %202 : vector<24x64xf32>
    %204 = math.exp %199 : vector<24x64xf32>
    %205 = vector.extract_strided_slice %198 {offsets = [23, 0], sizes = [1, 64], strides = [1, 1]} : vector<24x64xf32> to vector<1x64xf32>
    %206 = math.exp %205 : vector<1x64xf32>
    %207 = arith.mulf %162, %200 : vector<24x64xf32>
    %208 = arith.mulf %194, %203 : vector<24x64xf32>
    %209 = arith.mulf %187, %203 : vector<24x64xf32>
    %210 = arith.mulf %186, %204 : vector<24x64xf32>
    %cst_77 = arith.constant dense<0.000000e+00> : vector<24x24xf32>
    %211 = tpu.matmul %210, %209, %cst_77 {dimension_numbers = #tpu.dot_dimension_numbers<[1], [1], [0], [0], [0, 0, 1, 0], [], []>} : vector<24x64xf32>, vector<24x64xf32>, vector<24x24xf32> -> vector<24x24xf32>
    %212 = arith.mulf %211, %10 : vector<24x24xf32>
    %cst_78 = arith.constant dense<0.000000e+00> : vector<24x64xf32>
    %213 = tpu.matmul %210, %174, %cst_78 {dimension_numbers = #tpu.dot_dimension_numbers<[1], [1], [0], [0], [0, 0, 1, 0], [], []>} : vector<24x64xf32>, vector<64x64xf32>, vector<24x64xf32> -> vector<24x64xf32>
    %cst_79 = arith.constant dense<0.000000e+00> : vector<24x24xf32>
    %214 = tpu.matmul %210, %208, %cst_79 {dimension_numbers = #tpu.dot_dimension_numbers<[1], [1], [0], [0], [0, 0, 1, 0], [], []>} : vector<24x64xf32>, vector<24x64xf32>, vector<24x24xf32> -> vector<24x24xf32>
    %215 = arith.mulf %214, %10 : vector<24x24xf32>
    %cst_80 = arith.constant dense<0.000000e+00> : vector<24x64xf32>
    %216 = tpu.matmul %215, %165, %cst_80 {dimension_numbers = #tpu.dot_dimension_numbers<[1], [0], [0], [1], [0, 0, 1, 1], [], []>} : vector<24x24xf32>, vector<24x64xf32>, vector<24x64xf32> -> vector<24x64xf32>
    %217 = arith.addf %213, %216 : vector<24x64xf32>
    %cst_81 = arith.constant dense<0.000000e+00> : vector<24x64xf32>
    %218 = tpu.matmul %212, %217, %cst_81 {dimension_numbers = #tpu.dot_dimension_numbers<[1], [0], [0], [1], [0, 0, 1, 1], [], []>} : vector<24x24xf32>, vector<24x64xf32>, vector<24x64xf32> -> vector<24x64xf32>
    %219 = arith.addf %217, %218 : vector<24x64xf32>
    %cst_82 = arith.constant dense<0.000000e+00> : vector<24x24xf32>
    %220 = tpu.matmul %212, %212, %cst_82 {dimension_numbers = #tpu.dot_dimension_numbers<[1], [0], [0], [1], [0, 0, 1, 1], [], []>} : vector<24x24xf32>, vector<24x24xf32>, vector<24x24xf32> -> vector<24x24xf32>
    %cst_83 = arith.constant dense<0.000000e+00> : vector<24x64xf32>
    %221 = tpu.matmul %220, %219, %cst_83 {dimension_numbers = #tpu.dot_dimension_numbers<[1], [0], [0], [1], [0, 0, 1, 1], [], []>} : vector<24x24xf32>, vector<24x64xf32>, vector<24x64xf32> -> vector<24x64xf32>
    %222 = arith.addf %219, %221 : vector<24x64xf32>
    %cst_84 = arith.constant dense<0.000000e+00> : vector<24x24xf32>
    %223 = tpu.matmul %220, %220, %cst_84 {dimension_numbers = #tpu.dot_dimension_numbers<[1], [0], [0], [1], [0, 0, 1, 1], [], []>} : vector<24x24xf32>, vector<24x24xf32>, vector<24x24xf32> -> vector<24x24xf32>
    %cst_85 = arith.constant dense<0.000000e+00> : vector<24x64xf32>
    %224 = tpu.matmul %223, %222, %cst_85 {dimension_numbers = #tpu.dot_dimension_numbers<[1], [0], [0], [1], [0, 0, 1, 1], [], []>} : vector<24x24xf32>, vector<24x64xf32>, vector<24x64xf32> -> vector<24x64xf32>
    %225 = arith.addf %222, %224 : vector<24x64xf32>
    %cst_86 = arith.constant dense<0.000000e+00> : vector<24x24xf32>
    %226 = tpu.matmul %223, %223, %cst_86 {dimension_numbers = #tpu.dot_dimension_numbers<[1], [0], [0], [1], [0, 0, 1, 1], [], []>} : vector<24x24xf32>, vector<24x24xf32>, vector<24x24xf32> -> vector<24x24xf32>
    %cst_87 = arith.constant dense<0.000000e+00> : vector<24x64xf32>
    %227 = tpu.matmul %226, %225, %cst_87 {dimension_numbers = #tpu.dot_dimension_numbers<[1], [0], [0], [1], [0, 0, 1, 1], [], []>} : vector<24x24xf32>, vector<24x64xf32>, vector<24x64xf32> -> vector<24x64xf32>
    %228 = arith.addf %225, %227 : vector<24x64xf32>
    %cst_88 = arith.constant dense<0.000000e+00> : vector<24x24xf32>
    %229 = tpu.matmul %226, %226, %cst_88 {dimension_numbers = #tpu.dot_dimension_numbers<[1], [0], [0], [1], [0, 0, 1, 1], [], []>} : vector<24x24xf32>, vector<24x24xf32>, vector<24x24xf32> -> vector<24x24xf32>
    %cst_89 = arith.constant dense<0.000000e+00> : vector<24x64xf32>
    %230 = tpu.matmul %229, %228, %cst_89 {dimension_numbers = #tpu.dot_dimension_numbers<[1], [0], [0], [1], [0, 0, 1, 1], [], []>} : vector<24x24xf32>, vector<24x64xf32>, vector<24x64xf32> -> vector<24x64xf32>
    %231 = arith.addf %228, %230 : vector<24x64xf32>
    %cst_90 = arith.constant dense<0.000000e+00> : vector<24x24xf32>
    %232 = tpu.matmul %207, %208, %cst_90 {dimension_numbers = #tpu.dot_dimension_numbers<[1], [1], [0], [0], [0, 0, 1, 0], [], []>} : vector<24x64xf32>, vector<24x64xf32>, vector<24x24xf32> -> vector<24x24xf32>
    %233 = arith.mulf %232, %7 : vector<24x24xf32>
    %cst_91 = arith.constant dense<0.000000e+00> : vector<24x24xf32>
    %234 = tpu.matmul %207, %209, %cst_91 {dimension_numbers = #tpu.dot_dimension_numbers<[1], [1], [0], [0], [0, 0, 1, 0], [], []>} : vector<24x64xf32>, vector<24x64xf32>, vector<24x24xf32> -> vector<24x24xf32>
    %235 = arith.mulf %234, %7 : vector<24x24xf32>
    %cst_92 = arith.constant dense<0.000000e+00> : vector<24x64xf32>
    %236 = tpu.matmul %207, %174, %cst_92 {dimension_numbers = #tpu.dot_dimension_numbers<[1], [1], [0], [0], [0, 0, 1, 0], [], []>} : vector<24x64xf32>, vector<64x64xf32>, vector<24x64xf32> -> vector<24x64xf32>
    %cst_93 = arith.constant dense<0.000000e+00> : vector<24x64xf32>
    %237 = tpu.matmul %233, %165, %cst_93 {dimension_numbers = #tpu.dot_dimension_numbers<[1], [0], [0], [1], [0, 0, 1, 1], [], []>} : vector<24x24xf32>, vector<24x64xf32>, vector<24x64xf32> -> vector<24x64xf32>
    %238 = arith.addf %236, %237 : vector<24x64xf32>
    %cst_94 = arith.constant dense<0.000000e+00> : vector<24x64xf32>
    %239 = tpu.matmul %235, %231, %cst_94 {dimension_numbers = #tpu.dot_dimension_numbers<[1], [0], [0], [1], [0, 0, 1, 1], [], []>} : vector<24x24xf32>, vector<24x64xf32>, vector<24x64xf32> -> vector<24x64xf32>
    %240 = arith.addf %238, %239 : vector<24x64xf32>
    %241 = vector.broadcast %206 : vector<1x64xf32> to vector<64x64xf32>
    %242 = arith.mulf %174, %241 : vector<64x64xf32>
    %243 = vector.broadcast %206 : vector<1x64xf32> to vector<24x64xf32>
    %244 = arith.mulf %208, %243 : vector<24x64xf32>
    %cst_95 = arith.constant dense<0.000000e+00> : vector<64x64xf32>
    %245 = tpu.matmul %165, %244, %cst_95 {dimension_numbers = #tpu.dot_dimension_numbers<[0], [0], [1], [1], [0, 1, 1, 1], [], []>} : vector<24x64xf32>, vector<24x64xf32>, vector<64x64xf32> -> vector<64x64xf32>
    %246 = arith.addf %242, %245 : vector<64x64xf32>
    %247 = vector.broadcast %206 : vector<1x64xf32> to vector<24x64xf32>
    %248 = arith.mulf %209, %247 : vector<24x64xf32>
    %cst_96 = arith.constant dense<0.000000e+00> : vector<64x64xf32>
    %249 = tpu.matmul %231, %248, %cst_96 {dimension_numbers = #tpu.dot_dimension_numbers<[0], [0], [1], [1], [0, 1, 1, 1], [], []>} : vector<24x64xf32>, vector<24x64xf32>, vector<64x64xf32> -> vector<64x64xf32>
    %250 = arith.addf %246, %249 : vector<64x64xf32>
    %cst_97 = arith.constant dense<0.000000e+00> : vector<24xf32>
    %251 = vector.multi_reduction <add>, %240, %cst_97 [1] : vector<24x64xf32> to vector<24xf32>
    %252 = vector.shape_cast %251 : vector<24xf32> to vector<24x1xf32>
    %cst_98 = arith.constant 6.400000e+01 : f32
    %253 = vector.broadcast %cst_98 : f32 to vector<24x1xf32>
    %254 = arith.divf %252, %253 : vector<24x1xf32>
    %255 = vector.broadcast %254 : vector<24x1xf32> to vector<24x64xf32>
    %256 = arith.subf %240, %255 : vector<24x64xf32>
    %257 = arith.mulf %256, %256 : vector<24x64xf32>
    %cst_99 = arith.constant dense<0.000000e+00> : vector<24xf32>
    %258 = vector.multi_reduction <add>, %257, %cst_99 [1] : vector<24x64xf32> to vector<24xf32>
    %259 = vector.shape_cast %258 : vector<24xf32> to vector<24x1xf32>
    %cst_100 = arith.constant 6.400000e+01 : f32
    %260 = vector.broadcast %cst_100 : f32 to vector<24x1xf32>
    %261 = arith.divf %259, %260 : vector<24x1xf32>
    %262 = vector.broadcast %254 : vector<24x1xf32> to vector<24x64xf32>
    %263 = arith.subf %240, %262 : vector<24x64xf32>
    %cst_101 = arith.constant 6.400000e-04 : f32
    %264 = vector.broadcast %cst_101 : f32 to vector<24x1xf32>
    %265 = arith.addf %261, %264 : vector<24x1xf32>
    %266 = math.rsqrt %265 : vector<24x1xf32>
    %267 = vector.broadcast %266 : vector<24x1xf32> to vector<24x64xf32>
    %268 = arith.mulf %263, %267 : vector<24x64xf32>
    %269 = vector.broadcast %171 : vector<1x64xf32> to vector<24x64xf32>
    %270 = arith.mulf %268, %269 : vector<24x64xf32>
    %271 = vector.broadcast %172 : vector<1x64xf32> to vector<24x64xf32>
    %272 = arith.addf %270, %271 : vector<24x64xf32>
    %273 = arith.mulf %162, %194 : vector<24x64xf32>
    %274 = vector.broadcast %170 : vector<1x64xf32> to vector<24x64xf32>
    %275 = arith.mulf %273, %274 : vector<24x64xf32>
    %cst_102 = arith.constant dense<0.000000e+00> : vector<24xf32>
    %276 = vector.multi_reduction <add>, %275, %cst_102 [1] : vector<24x64xf32> to vector<24xf32>
    %277 = vector.shape_cast %276 : vector<24xf32> to vector<24x1xf32>
    %278 = vector.broadcast %277 : vector<24x1xf32> to vector<24x64xf32>
    %279 = arith.mulf %278, %165 : vector<24x64xf32>
    %280 = arith.addf %272, %279 : vector<24x64xf32>
    %281 = arith.mulf %280, %167 : vector<24x64xf32>
    %c1_103 = arith.constant 1 : index
    %c0_104 = arith.constant 0 : index
    %c0_105 = arith.constant 0 : index
    %282 = vector.load %arg14[%c1_103, %c0_104, %c0_105] : memref<2x64x64xf32, #tpu.memory_space<vmem>>, vector<1x64x64xf32>
    %283 = vector.shape_cast %282 : vector<1x64x64xf32> to vector<64x64xf32>
    %284 = vector.shape_cast %250 : vector<64x64xf32> to vector<1x64x64xf32>
    tpu.vector_store %arg14[%c1_103, %c0_104, %c0_105], %284 {strides = array<i32>} : memref<2x64x64xf32, #tpu.memory_space<vmem>>, vector<1x64x64xf32>,
    %285 = tpu.concatenate %158, %281 in 1 : vector<24x64xf32>, vector<24x64xf32> -> vector<24x128xf32>
    %286 = arith.truncf %285 : vector<24x128xf32> to vector<24x128xbf16>
    %c0_106 = arith.constant 0 : index
    %c0_107 = arith.constant 0 : index
    %c0_108 = arith.constant 0 : index
    %287 = vector.load %arg13[%c0_106, %c0_107, %c0_108] : memref<1x24x128xbf16, #tpu.memory_space<vmem>>, vector<1x24x128xbf16>
    %288 = vector.shape_cast %287 : vector<1x24x128xbf16> to vector<24x128xbf16>
    %289 = vector.shape_cast %286 : vector<24x128xbf16> to vector<1x24x128xbf16>
    tpu.vector_store %arg13[%c0_106, %c0_107, %c0_108], %289 {strides = array<i32>} : memref<1x24x128xbf16, #tpu.memory_space<vmem>>, vector<1x24x128xbf16>,
    return
  }
  func.func @transform_0(%arg0: i32, %arg1: i32) -> (i32, i32, i32) {
    %c0_i32 = arith.constant 0 : i32
    %c0_i32_0 = arith.constant 0 : i32
    return %arg0, %arg1, %c0_i32 : i32, i32, i32
  }
  func.func @transform_1(%arg0: i32, %arg1: i32) -> (i32, i32, i32) {
    %c0_i32 = arith.constant 0 : i32
    %c0_i32_0 = arith.constant 0 : i32
    return %arg0, %arg1, %c0_i32 : i32, i32, i32
  }
  func.func @transform_2(%arg0: i32, %arg1: i32) -> (i32, i32, i32) {
    %c0_i32 = arith.constant 0 : i32
    %c0_i32_0 = arith.constant 0 : i32
    return %arg0, %arg1, %c0_i32 : i32, i32, i32
  }
  func.func @transform_3(%arg0: i32, %arg1: i32) -> (i32, i32, i32) {
    %c0_i32 = arith.constant 0 : i32
    %c0_i32_0 = arith.constant 0 : i32
    return %arg0, %arg1, %c0_i32 : i32, i32, i32
  }
  func.func @transform_4(%arg0: i32, %arg1: i32) -> (i32, i32, i32) {
    %c0_i32 = arith.constant 0 : i32
    %c0_i32_0 = arith.constant 0 : i32
    return %arg0, %arg1, %c0_i32 : i32, i32, i32
  }
  func.func @transform_5(%arg0: i32, %arg1: i32) -> (i32, i32, i32) {
    %c0_i32 = arith.constant 0 : i32
    %c0_i32_0 = arith.constant 0 : i32
    return %arg0, %arg1, %c0_i32 : i32, i32, i32
  }
  func.func @transform_6(%arg0: i32, %arg1: i32) -> (i32, i32) {
    %c0_i32 = arith.constant 0 : i32
    %c0_i32_0 = arith.constant 0 : i32
    %c0_i32_1 = arith.constant 0 : i32
    return %c0_i32, %c0_i32_0 : i32, i32
  }
  func.func @transform_7(%arg0: i32, %arg1: i32) -> (i32, i32) {
    %c0_i32 = arith.constant 0 : i32
    %c0_i32_0 = arith.constant 0 : i32
    %c0_i32_1 = arith.constant 0 : i32
    return %c0_i32, %c0_i32_0 : i32, i32
  }
  func.func @transform_8(%arg0: i32, %arg1: i32) -> (i32, i32) {
    %c0_i32 = arith.constant 0 : i32
    %c0_i32_0 = arith.constant 0 : i32
    %c0_i32_1 = arith.constant 0 : i32
    return %c0_i32, %c0_i32_0 : i32, i32
  }
  func.func @transform_9(%arg0: i32, %arg1: i32) -> (i32, i32) {
    %c0_i32 = arith.constant 0 : i32
    %c0_i32_0 = arith.constant 0 : i32
    %c0_i32_1 = arith.constant 0 : i32
    return %c0_i32, %c0_i32_0 : i32, i32
  }
  func.func @transform_10(%arg0: i32, %arg1: i32) -> (i32, i32) {
    %c0_i32 = arith.constant 0 : i32
    %c0_i32_0 = arith.constant 0 : i32
    %c0_i32_1 = arith.constant 0 : i32
    return %c0_i32, %c0_i32_0 : i32, i32
  }
  func.func @transform_11(%arg0: i32, %arg1: i32) -> (i32, i32, i32) {
    %c0_i32 = arith.constant 0 : i32
    %c0_i32_0 = arith.constant 0 : i32
    return %arg0, %arg1, %c0_i32 : i32, i32, i32
  }
}

module attributes {stable_mosaic.version = 11 : i64} {
  func.func @_dual_matmul_kernel(%arg0: i32, %arg1: i32, %arg2: i32, %arg3: memref<48x128xbf16, #tpu.memory_space<vmem>>, %arg4: memref<48x128xbf16, #tpu.memory_space<vmem>>, %arg5: memref<128x512xbf16, #tpu.memory_space<vmem>>, %arg6: memref<128x512xbf16, #tpu.memory_space<vmem>>, %arg7: memref<48x512xbf16, #tpu.memory_space<vmem>>, %arg8: memref<48x512xf32, #tpu.memory_space<vmem>>) attributes {dimension_semantics = [#tpu.dimension_semantics<parallel>, #tpu.dimension_semantics<parallel>, #tpu.dimension_semantics<arbitrary>], iteration_bounds = array<i64: 1, 1, 1>, scalar_prefetch = 0 : i64, scratch_operands = 1 : i64, tpu.core_type = #tpu.core_type<tc>, window_params = [{transform_indices = @transform_0, window_bounds = array<i64: 48, 128>}, {transform_indices = @transform_1, window_bounds = array<i64: 48, 128>}, {transform_indices = @transform_2, window_bounds = array<i64: 128, 512>}, {transform_indices = @transform_3, window_bounds = array<i64: 128, 512>}, {transform_indices = @transform_4, window_bounds = array<i64: 48, 512>}]} {
    %c0_i32 = arith.constant 0 : i32
    %0 = arith.cmpi eq, %arg2, %c0_i32 : i32
    %1 = arith.extui %0 : i1 to i32
    %c0_i32_0 = arith.constant 0 : i32
    %2 = arith.cmpi ne, %1, %c0_i32_0 : i32
    scf.if %2 {
      %cst_15 = arith.constant 0.000000e+00 : f32
      %16 = vector.broadcast %cst_15 : f32 to vector<48x512xf32>
      %c0_16 = arith.constant 0 : index
      %c0_17 = arith.constant 0 : index
      %17 = vector.load %arg8[%c0_16, %c0_17] : memref<48x512xf32, #tpu.memory_space<vmem>>, vector<48x512xf32>
      tpu.vector_store %arg8[%c0_16, %c0_17], %16 {strides = array<i32>} : memref<48x512xf32, #tpu.memory_space<vmem>>, vector<48x512xf32>,
    } else {
    }
    %c0 = arith.constant 0 : index
    %c0_1 = arith.constant 0 : index
    %3 = vector.load %arg8[%c0, %c0_1] : memref<48x512xf32, #tpu.memory_space<vmem>>, vector<48x512xf32>
    %c0_2 = arith.constant 0 : index
    %c0_3 = arith.constant 0 : index
    %4 = vector.load %arg3[%c0_2, %c0_3] : memref<48x128xbf16, #tpu.memory_space<vmem>>, vector<48x128xbf16>
    %c0_4 = arith.constant 0 : index
    %c0_5 = arith.constant 0 : index
    %5 = vector.load %arg5[%c0_4, %c0_5] : memref<128x512xbf16, #tpu.memory_space<vmem>>, vector<128x512xbf16>
    %cst = arith.constant dense<0.000000e+00> : vector<48x512xf32>
    %6 = tpu.matmul %4, %5, %cst {dimension_numbers = #tpu.dot_dimension_numbers<[1], [0], [0], [1], [0, 0, 1, 1], [], []>} : vector<48x128xbf16>, vector<128x512xbf16>, vector<48x512xf32> -> vector<48x512xf32>
    %c0_6 = arith.constant 0 : index
    %c0_7 = arith.constant 0 : index
    %7 = vector.load %arg4[%c0_6, %c0_7] : memref<48x128xbf16, #tpu.memory_space<vmem>>, vector<48x128xbf16>
    %c0_8 = arith.constant 0 : index
    %c0_9 = arith.constant 0 : index
    %8 = vector.load %arg6[%c0_8, %c0_9] : memref<128x512xbf16, #tpu.memory_space<vmem>>, vector<128x512xbf16>
    %cst_10 = arith.constant dense<0.000000e+00> : vector<48x512xf32>
    %9 = tpu.matmul %7, %8, %cst_10 {dimension_numbers = #tpu.dot_dimension_numbers<[1], [0], [0], [1], [0, 0, 1, 1], [], []>} : vector<48x128xbf16>, vector<128x512xbf16>, vector<48x512xf32> -> vector<48x512xf32>
    %10 = arith.addf %6, %9 : vector<48x512xf32>
    %11 = arith.addf %3, %10 : vector<48x512xf32>
    %c0_11 = arith.constant 0 : index
    %c0_12 = arith.constant 0 : index
    %12 = vector.load %arg8[%c0_11, %c0_12] : memref<48x512xf32, #tpu.memory_space<vmem>>, vector<48x512xf32>
    tpu.vector_store %arg8[%c0_11, %c0_12], %11 {strides = array<i32>} : memref<48x512xf32, #tpu.memory_space<vmem>>, vector<48x512xf32>,
    %c0_i32_13 = arith.constant 0 : i32
    %13 = arith.cmpi eq, %arg2, %c0_i32_13 : i32
    %14 = arith.extui %13 : i1 to i32
    %c0_i32_14 = arith.constant 0 : i32
    %15 = arith.cmpi ne, %14, %c0_i32_14 : i32
    scf.if %15 {
      %c0_15 = arith.constant 0 : index
      %c0_16 = arith.constant 0 : index
      %16 = vector.load %arg8[%c0_15, %c0_16] : memref<48x512xf32, #tpu.memory_space<vmem>>, vector<48x512xf32>
      %cst_17 = arith.constant 0.000000e+00 : f32
      %17 = vector.broadcast %cst_17 : f32 to vector<48x512xf32>
      %18 = arith.maximumf %16, %17 : vector<48x512xf32>
      %19 = arith.mulf %18, %18 : vector<48x512xf32>
      %20 = arith.truncf %19 : vector<48x512xf32> to vector<48x512xbf16>
      %c0_18 = arith.constant 0 : index
      %c0_19 = arith.constant 0 : index
      %21 = vector.load %arg7[%c0_18, %c0_19] : memref<48x512xbf16, #tpu.memory_space<vmem>>, vector<48x512xbf16>
      tpu.vector_store %arg7[%c0_18, %c0_19], %20 {strides = array<i32>} : memref<48x512xbf16, #tpu.memory_space<vmem>>, vector<48x512xbf16>,
    } else {
    }
    return
  }
  func.func @transform_0(%arg0: i32, %arg1: i32, %arg2: i32) -> (i32, i32) {
    %c0_i32 = arith.constant 0 : i32
    return %arg0, %arg2 : i32, i32
  }
  func.func @transform_1(%arg0: i32, %arg1: i32, %arg2: i32) -> (i32, i32) {
    %c0_i32 = arith.constant 0 : i32
    return %arg0, %arg2 : i32, i32
  }
  func.func @transform_2(%arg0: i32, %arg1: i32, %arg2: i32) -> (i32, i32) {
    %c0_i32 = arith.constant 0 : i32
    return %arg2, %arg1 : i32, i32
  }
  func.func @transform_3(%arg0: i32, %arg1: i32, %arg2: i32) -> (i32, i32) {
    %c0_i32 = arith.constant 0 : i32
    return %arg2, %arg1 : i32, i32
  }
  func.func @transform_4(%arg0: i32, %arg1: i32, %arg2: i32) -> (i32, i32) {
    %c0_i32 = arith.constant 0 : i32
    return %arg0, %arg1 : i32, i32
  }
}

module attributes {stable_mosaic.version = 11 : i64} {
  func.func @_matmul_kernel(%arg0: i32, %arg1: i32, %arg2: i32, %arg3: memref<48x512xbf16, #tpu.memory_space<vmem>>, %arg4: memref<512x128xbf16, #tpu.memory_space<vmem>>, %arg5: memref<48x128xbf16, #tpu.memory_space<vmem>>, %arg6: memref<48x128xf32, #tpu.memory_space<vmem>>) attributes {dimension_semantics = [#tpu.dimension_semantics<parallel>, #tpu.dimension_semantics<parallel>, #tpu.dimension_semantics<arbitrary>], iteration_bounds = array<i64: 1, 1, 1>, scalar_prefetch = 0 : i64, scratch_operands = 1 : i64, tpu.core_type = #tpu.core_type<tc>, window_params = [{transform_indices = @transform_0, window_bounds = array<i64: 48, 512>}, {transform_indices = @transform_1, window_bounds = array<i64: 512, 128>}, {transform_indices = @transform_2, window_bounds = array<i64: 48, 128>}]} {
    %c0_i32 = arith.constant 0 : i32
    %0 = arith.cmpi eq, %arg2, %c0_i32 : i32
    %1 = arith.extui %0 : i1 to i32
    %c0_i32_0 = arith.constant 0 : i32
    %2 = arith.cmpi ne, %1, %c0_i32_0 : i32
    scf.if %2 {
      %cst_10 = arith.constant 0.000000e+00 : f32
      %12 = vector.broadcast %cst_10 : f32 to vector<48x128xf32>
      %c0_11 = arith.constant 0 : index
      %c0_12 = arith.constant 0 : index
      %13 = vector.load %arg6[%c0_11, %c0_12] : memref<48x128xf32, #tpu.memory_space<vmem>>, vector<48x128xf32>
      tpu.vector_store %arg6[%c0_11, %c0_12], %12 {strides = array<i32>} : memref<48x128xf32, #tpu.memory_space<vmem>>, vector<48x128xf32>,
    } else {
    }
    %c0 = arith.constant 0 : index
    %c0_1 = arith.constant 0 : index
    %3 = vector.load %arg6[%c0, %c0_1] : memref<48x128xf32, #tpu.memory_space<vmem>>, vector<48x128xf32>
    %c0_2 = arith.constant 0 : index
    %c0_3 = arith.constant 0 : index
    %4 = vector.load %arg3[%c0_2, %c0_3] : memref<48x512xbf16, #tpu.memory_space<vmem>>, vector<48x512xbf16>
    %c0_4 = arith.constant 0 : index
    %c0_5 = arith.constant 0 : index
    %5 = vector.load %arg4[%c0_4, %c0_5] : memref<512x128xbf16, #tpu.memory_space<vmem>>, vector<512x128xbf16>
    %cst = arith.constant dense<0.000000e+00> : vector<48x128xf32>
    %6 = tpu.matmul %4, %5, %cst {dimension_numbers = #tpu.dot_dimension_numbers<[1], [0], [0], [1], [0, 0, 1, 1], [], []>} : vector<48x512xbf16>, vector<512x128xbf16>, vector<48x128xf32> -> vector<48x128xf32>
    %7 = arith.addf %3, %6 : vector<48x128xf32>
    %c0_6 = arith.constant 0 : index
    %c0_7 = arith.constant 0 : index
    %8 = vector.load %arg6[%c0_6, %c0_7] : memref<48x128xf32, #tpu.memory_space<vmem>>, vector<48x128xf32>
    tpu.vector_store %arg6[%c0_6, %c0_7], %7 {strides = array<i32>} : memref<48x128xf32, #tpu.memory_space<vmem>>, vector<48x128xf32>,
    %c0_i32_8 = arith.constant 0 : i32
    %9 = arith.cmpi eq, %arg2, %c0_i32_8 : i32
    %10 = arith.extui %9 : i1 to i32
    %c0_i32_9 = arith.constant 0 : i32
    %11 = arith.cmpi ne, %10, %c0_i32_9 : i32
    scf.if %11 {
      %c0_10 = arith.constant 0 : index
      %c0_11 = arith.constant 0 : index
      %12 = vector.load %arg6[%c0_10, %c0_11] : memref<48x128xf32, #tpu.memory_space<vmem>>, vector<48x128xf32>
      %13 = arith.truncf %12 : vector<48x128xf32> to vector<48x128xbf16>
      %c0_12 = arith.constant 0 : index
      %c0_13 = arith.constant 0 : index
      %14 = vector.load %arg5[%c0_12, %c0_13] : memref<48x128xbf16, #tpu.memory_space<vmem>>, vector<48x128xbf16>
      tpu.vector_store %arg5[%c0_12, %c0_13], %13 {strides = array<i32>} : memref<48x128xbf16, #tpu.memory_space<vmem>>, vector<48x128xbf16>,
    } else {
    }
    return
  }
  func.func @transform_0(%arg0: i32, %arg1: i32, %arg2: i32) -> (i32, i32) {
    %c0_i32 = arith.constant 0 : i32
    return %arg0, %arg2 : i32, i32
  }
  func.func @transform_1(%arg0: i32, %arg1: i32, %arg2: i32) -> (i32, i32) {
    %c0_i32 = arith.constant 0 : i32
    return %arg2, %arg1 : i32, i32
  }
  func.func @transform_2(%arg0: i32, %arg1: i32, %arg2: i32) -> (i32, i32) {
    %c0_i32 = arith.constant 0 : i32
    return %arg0, %arg1 : i32, i32
  }
}

module attributes {stable_mosaic.version = 11 : i64} {
  func.func @_dual_matmul_kernel(%arg0: i32, %arg1: i32, %arg2: i32, %arg3: memref<48x128xbf16, #tpu.memory_space<vmem>>, %arg4: memref<48x128xbf16, #tpu.memory_space<vmem>>, %arg5: memref<128x512xbf16, #tpu.memory_space<vmem>>, %arg6: memref<128x512xbf16, #tpu.memory_space<vmem>>, %arg7: memref<48x512xbf16, #tpu.memory_space<vmem>>, %arg8: memref<48x512xf32, #tpu.memory_space<vmem>>) attributes {dimension_semantics = [#tpu.dimension_semantics<parallel>, #tpu.dimension_semantics<parallel>, #tpu.dimension_semantics<arbitrary>], iteration_bounds = array<i64: 1, 1, 1>, scalar_prefetch = 0 : i64, scratch_operands = 1 : i64, tpu.core_type = #tpu.core_type<tc>, window_params = [{transform_indices = @transform_0, window_bounds = array<i64: 48, 128>}, {transform_indices = @transform_1, window_bounds = array<i64: 48, 128>}, {transform_indices = @transform_2, window_bounds = array<i64: 128, 512>}, {transform_indices = @transform_3, window_bounds = array<i64: 128, 512>}, {transform_indices = @transform_4, window_bounds = array<i64: 48, 512>}]} {
    %c0_i32 = arith.constant 0 : i32
    %0 = arith.cmpi eq, %arg2, %c0_i32 : i32
    %1 = arith.extui %0 : i1 to i32
    %c0_i32_0 = arith.constant 0 : i32
    %2 = arith.cmpi ne, %1, %c0_i32_0 : i32
    scf.if %2 {
      %cst_15 = arith.constant 0.000000e+00 : f32
      %16 = vector.broadcast %cst_15 : f32 to vector<48x512xf32>
      %c0_16 = arith.constant 0 : index
      %c0_17 = arith.constant 0 : index
      %17 = vector.load %arg8[%c0_16, %c0_17] : memref<48x512xf32, #tpu.memory_space<vmem>>, vector<48x512xf32>
      tpu.vector_store %arg8[%c0_16, %c0_17], %16 {strides = array<i32>} : memref<48x512xf32, #tpu.memory_space<vmem>>, vector<48x512xf32>,
    } else {
    }
    %c0 = arith.constant 0 : index
    %c0_1 = arith.constant 0 : index
    %3 = vector.load %arg8[%c0, %c0_1] : memref<48x512xf32, #tpu.memory_space<vmem>>, vector<48x512xf32>
    %c0_2 = arith.constant 0 : index
    %c0_3 = arith.constant 0 : index
    %4 = vector.load %arg3[%c0_2, %c0_3] : memref<48x128xbf16, #tpu.memory_space<vmem>>, vector<48x128xbf16>
    %c0_4 = arith.constant 0 : index
    %c0_5 = arith.constant 0 : index
    %5 = vector.load %arg5[%c0_4, %c0_5] : memref<128x512xbf16, #tpu.memory_space<vmem>>, vector<128x512xbf16>
    %cst = arith.constant dense<0.000000e+00> : vector<48x512xf32>
    %6 = tpu.matmul %4, %5, %cst {dimension_numbers = #tpu.dot_dimension_numbers<[1], [0], [0], [1], [0, 0, 1, 1], [], []>} : vector<48x128xbf16>, vector<128x512xbf16>, vector<48x512xf32> -> vector<48x512xf32>
    %c0_6 = arith.constant 0 : index
    %c0_7 = arith.constant 0 : index
    %7 = vector.load %arg4[%c0_6, %c0_7] : memref<48x128xbf16, #tpu.memory_space<vmem>>, vector<48x128xbf16>
    %c0_8 = arith.constant 0 : index
    %c0_9 = arith.constant 0 : index
    %8 = vector.load %arg6[%c0_8, %c0_9] : memref<128x512xbf16, #tpu.memory_space<vmem>>, vector<128x512xbf16>
    %cst_10 = arith.constant dense<0.000000e+00> : vector<48x512xf32>
    %9 = tpu.matmul %7, %8, %cst_10 {dimension_numbers = #tpu.dot_dimension_numbers<[1], [0], [0], [1], [0, 0, 1, 1], [], []>} : vector<48x128xbf16>, vector<128x512xbf16>, vector<48x512xf32> -> vector<48x512xf32>
    %10 = arith.addf %6, %9 : vector<48x512xf32>
    %11 = arith.addf %3, %10 : vector<48x512xf32>
    %c0_11 = arith.constant 0 : index
    %c0_12 = arith.constant 0 : index
    %12 = vector.load %arg8[%c0_11, %c0_12] : memref<48x512xf32, #tpu.memory_space<vmem>>, vector<48x512xf32>
    tpu.vector_store %arg8[%c0_11, %c0_12], %11 {strides = array<i32>} : memref<48x512xf32, #tpu.memory_space<vmem>>, vector<48x512xf32>,
    %c0_i32_13 = arith.constant 0 : i32
    %13 = arith.cmpi eq, %arg2, %c0_i32_13 : i32
    %14 = arith.extui %13 : i1 to i32
    %c0_i32_14 = arith.constant 0 : i32
    %15 = arith.cmpi ne, %14, %c0_i32_14 : i32
    scf.if %15 {
      %c0_15 = arith.constant 0 : index
      %c0_16 = arith.constant 0 : index
      %16 = vector.load %arg8[%c0_15, %c0_16] : memref<48x512xf32, #tpu.memory_space<vmem>>, vector<48x512xf32>
      %17 = arith.truncf %16 : vector<48x512xf32> to vector<48x512xbf16>
      %c0_17 = arith.constant 0 : index
      %c0_18 = arith.constant 0 : index
      %18 = vector.load %arg7[%c0_17, %c0_18] : memref<48x512xbf16, #tpu.memory_space<vmem>>, vector<48x512xbf16>
      tpu.vector_store %arg7[%c0_17, %c0_18], %17 {strides = array<i32>} : memref<48x512xbf16, #tpu.memory_space<vmem>>, vector<48x512xbf16>,
    } else {
    }
    return
  }
  func.func @transform_0(%arg0: i32, %arg1: i32, %arg2: i32) -> (i32, i32) {
    %c0_i32 = arith.constant 0 : i32
    return %arg0, %arg2 : i32, i32
  }
  func.func @transform_1(%arg0: i32, %arg1: i32, %arg2: i32) -> (i32, i32) {
    %c0_i32 = arith.constant 0 : i32
    return %arg0, %arg2 : i32, i32
  }
  func.func @transform_2(%arg0: i32, %arg1: i32, %arg2: i32) -> (i32, i32) {
    %c0_i32 = arith.constant 0 : i32
    return %arg2, %arg1 : i32, i32
  }
  func.func @transform_3(%arg0: i32, %arg1: i32, %arg2: i32) -> (i32, i32) {
    %c0_i32 = arith.constant 0 : i32
    return %arg2, %arg1 : i32, i32
  }
  func.func @transform_4(%arg0: i32, %arg1: i32, %arg2: i32) -> (i32, i32) {
    %c0_i32 = arith.constant 0 : i32
    return %arg0, %arg1 : i32, i32
  }
}

module attributes {stable_mosaic.version = 11 : i64} {
  func.func @_matmul_kernel(%arg0: i32, %arg1: i32, %arg2: i32, %arg3: memref<48x128xbf16, #tpu.memory_space<vmem>>, %arg4: memref<128x256xbf16, #tpu.memory_space<vmem>>, %arg5: memref<48x256xbf16, #tpu.memory_space<vmem>>, %arg6: memref<48x256xf32, #tpu.memory_space<vmem>>) attributes {dimension_semantics = [#tpu.dimension_semantics<parallel>, #tpu.dimension_semantics<parallel>, #tpu.dimension_semantics<arbitrary>], iteration_bounds = array<i64: 1, 1, 1>, scalar_prefetch = 0 : i64, scratch_operands = 1 : i64, tpu.core_type = #tpu.core_type<tc>, window_params = [{transform_indices = @transform_0, window_bounds = array<i64: 48, 128>}, {transform_indices = @transform_1, window_bounds = array<i64: 128, 256>}, {transform_indices = @transform_2, window_bounds = array<i64: 48, 256>}]} {
    %c0_i32 = arith.constant 0 : i32
    %0 = arith.cmpi eq, %arg2, %c0_i32 : i32
    %1 = arith.extui %0 : i1 to i32
    %c0_i32_0 = arith.constant 0 : i32
    %2 = arith.cmpi ne, %1, %c0_i32_0 : i32
    scf.if %2 {
      %cst_10 = arith.constant 0.000000e+00 : f32
      %12 = vector.broadcast %cst_10 : f32 to vector<48x256xf32>
      %c0_11 = arith.constant 0 : index
      %c0_12 = arith.constant 0 : index
      %13 = vector.load %arg6[%c0_11, %c0_12] : memref<48x256xf32, #tpu.memory_space<vmem>>, vector<48x256xf32>
      tpu.vector_store %arg6[%c0_11, %c0_12], %12 {strides = array<i32>} : memref<48x256xf32, #tpu.memory_space<vmem>>, vector<48x256xf32>,
    } else {
    }
    %c0 = arith.constant 0 : index
    %c0_1 = arith.constant 0 : index
    %3 = vector.load %arg6[%c0, %c0_1] : memref<48x256xf32, #tpu.memory_space<vmem>>, vector<48x256xf32>
    %c0_2 = arith.constant 0 : index
    %c0_3 = arith.constant 0 : index
    %4 = vector.load %arg3[%c0_2, %c0_3] : memref<48x128xbf16, #tpu.memory_space<vmem>>, vector<48x128xbf16>
    %c0_4 = arith.constant 0 : index
    %c0_5 = arith.constant 0 : index
    %5 = vector.load %arg4[%c0_4, %c0_5] : memref<128x256xbf16, #tpu.memory_space<vmem>>, vector<128x256xbf16>
    %cst = arith.constant dense<0.000000e+00> : vector<48x256xf32>
    %6 = tpu.matmul %4, %5, %cst {dimension_numbers = #tpu.dot_dimension_numbers<[1], [0], [0], [1], [0, 0, 1, 1], [], []>} : vector<48x128xbf16>, vector<128x256xbf16>, vector<48x256xf32> -> vector<48x256xf32>
    %7 = arith.addf %3, %6 : vector<48x256xf32>
    %c0_6 = arith.constant 0 : index
    %c0_7 = arith.constant 0 : index
    %8 = vector.load %arg6[%c0_6, %c0_7] : memref<48x256xf32, #tpu.memory_space<vmem>>, vector<48x256xf32>
    tpu.vector_store %arg6[%c0_6, %c0_7], %7 {strides = array<i32>} : memref<48x256xf32, #tpu.memory_space<vmem>>, vector<48x256xf32>,
    %c0_i32_8 = arith.constant 0 : i32
    %9 = arith.cmpi eq, %arg2, %c0_i32_8 : i32
    %10 = arith.extui %9 : i1 to i32
    %c0_i32_9 = arith.constant 0 : i32
    %11 = arith.cmpi ne, %10, %c0_i32_9 : i32
    scf.if %11 {
      %c0_10 = arith.constant 0 : index
      %c0_11 = arith.constant 0 : index
      %12 = vector.load %arg6[%c0_10, %c0_11] : memref<48x256xf32, #tpu.memory_space<vmem>>, vector<48x256xf32>
      %13 = arith.truncf %12 : vector<48x256xf32> to vector<48x256xbf16>
      %c0_12 = arith.constant 0 : index
      %c0_13 = arith.constant 0 : index
      %14 = vector.load %arg5[%c0_12, %c0_13] : memref<48x256xbf16, #tpu.memory_space<vmem>>, vector<48x256xbf16>
      tpu.vector_store %arg5[%c0_12, %c0_13], %13 {strides = array<i32>} : memref<48x256xbf16, #tpu.memory_space<vmem>>, vector<48x256xbf16>,
    } else {
    }
    return
  }
  func.func @transform_0(%arg0: i32, %arg1: i32, %arg2: i32) -> (i32, i32) {
    %c0_i32 = arith.constant 0 : i32
    return %arg0, %arg2 : i32, i32
  }
  func.func @transform_1(%arg0: i32, %arg1: i32, %arg2: i32) -> (i32, i32) {
    %c0_i32 = arith.constant 0 : i32
    return %arg2, %arg1 : i32, i32
  }
  func.func @transform_2(%arg0: i32, %arg1: i32, %arg2: i32) -> (i32, i32) {
    %c0_i32 = arith.constant 0 : i32
    return %arg0, %arg1 : i32, i32
  }
}

</mosaic_0001>

<llo_original>
// kernel: rwkv_forward.24
$region0: #{rwkv_forward.24}
  #allocation0 [shape = 'u32[]', space=smem, size = 0x4, offset = 0x4, fixed_abs, tag = 'smem constant byte address 0x4 - core index']
  #allocation1 [shape = 'u32[144,128]{1,0:T(1,128)}', space=vmem, size = 0x12000, scoped, tag = 'internal scratch']
  %s0 = inlined_call_operand.vmem [shape: bf16[48,128], index: 0, kind: input, shape index: {}]
  %s1 = inlined_call_operand.vmem [shape: bf16[1,128], index: 1, kind: input, shape index: {}]
  %s2 = inlined_call_operand.vmem [shape: bf16[1,128], index: 2, kind: input, shape index: {}]
  %s3 = inlined_call_operand.vmem [shape: bf16[48,128], index: 3, kind: output, shape index: {}]
  %s4 = sld [smem:[#allocation0]]
  $region22: #{rwkv_forward.24} parent=0
    _
  %s6 = ssub.s32 1, %s4
  %s7 = scalar_select 0, %s6, %s4
  // Predicated region
  $region2: #{rwkv_forward.24} parent=0 // pred_check
    _
  $region3: #{rwkv_forward.24} parent=0 // pred_check_branch
    %9 = sbr.rel (0) target = $region5
  $region4: #{rwkv_forward.24} parent=0 // pred_region
    _
  $region5: #{rwkv_forward.24} parent=0 // pred_fallthru
    _
  // Predicated region
  $region6: #{rwkv_forward.24} parent=0 // pred_check
    _
  $region7: #{rwkv_forward.24} parent=0 // pred_check_branch
    %11 = sbr.rel (0) target = $region9
  $region8: #{rwkv_forward.24} parent=0 // pred_region
    _
  $region9: #{rwkv_forward.24} parent=0 // pred_fallthru
    _
  // Predicated region
  $region10: #{rwkv_forward.24} parent=0 // pred_check
    _
  $region11: #{rwkv_forward.24} parent=0 // pred_check_branch
    %13 = sbr.rel (0) target = $region13
  $region12: #{rwkv_forward.24} parent=0 // pred_region
    _
  $region13: #{rwkv_forward.24} parent=0 // pred_fallthru
    _
  %v14 = vld [vmem:[%s0] sm:$0xf]
  %v15 = vld [vmem:[%s0 + $0x4] sm:$0xf]
  %v16 = vld [vmem:[%s0 + $0x8] sm:$0xf]
  %v17 = vld [vmem:[%s0 + $0xc] sm:$0xf]
  %v18 = vld [vmem:[%s0 + $0x10] sm:$0xf]
  %v19 = vld [vmem:[%s0 + $0x14] sm:$0xf]
  %v20 = vunpack.c.l.bf16 %v14
  %v21 = vunpack.c.l.bf16 %v15
  %v22 = vunpack.c.l.bf16 %v16
  %v23 = vunpack.c.l.bf16 %v17
  %v24 = vunpack.c.l.bf16 %v18
  %v25 = vunpack.c.l.bf16 %v19
  %26 = vadd.xlane.f32.xlu0 %v20
  %v27 = vpop.xlane.xlu0 %26
  %28 = vadd.xlane.f32.xlu0 %v21
  %v29 = vpop.xlane.xlu0 %28
  %30 = vadd.xlane.f32.xlu0 %v22
  %v31 = vpop.xlane.xlu0 %30
  %32 = vadd.xlane.f32.xlu0 %v23
  %v33 = vpop.xlane.xlu0 %32
  %34 = vadd.xlane.f32.xlu0 %v24
  %v35 = vpop.xlane.xlu0 %34
  %36 = vadd.xlane.f32.xlu0 %v25
  %v37 = vpop.xlane.xlu0 %36
  %v38 = vrcp.pop 128.0
  %v39 = vmul.f32 %v27, %v38
  %v40 = vmul.f32 %v29, %v38
  %v41 = vmul.f32 %v31, %v38
  %v42 = vmul.f32 %v33, %v38
  %v43 = vmul.f32 %v35, %v38
  %v44 = vmul.f32 %v37, %v38
  %v45 = vsub.f32 %v20, %v39
  %v46 = vsub.f32 %v21, %v40
  %v47 = vsub.f32 %v22, %v41
  %v48 = vsub.f32 %v23, %v42
  %v49 = vsub.f32 %v24, %v43
  %v50 = vsub.f32 %v25, %v44
  %v51 = vmul.f32 %v45, %v45
  %v52 = vmul.f32 %v46, %v46
  %v53 = vmul.f32 %v47, %v47
  %v54 = vmul.f32 %v48, %v48
  %v55 = vmul.f32 %v49, %v49
  %v56 = vmul.f32 %v50, %v50
  %57 = vadd.xlane.f32.xlu0 %v51
  %v58 = vpop.xlane.xlu0 %57
  %59 = vadd.xlane.f32.xlu0 %v52
  %v60 = vpop.xlane.xlu0 %59
  %61 = vadd.xlane.f32.xlu0 %v53
  %v62 = vpop.xlane.xlu0 %61
  %63 = vadd.xlane.f32.xlu0 %v54
  %v64 = vpop.xlane.xlu0 %63
  %65 = vadd.xlane.f32.xlu0 %v55
  %v66 = vpop.xlane.xlu0 %65
  %67 = vadd.xlane.f32.xlu0 %v56
  %v68 = vpop.xlane.xlu0 %67
  %v69 = vmul.f32 %v58, %v38
  %v70 = vmul.f32 %v60, %v38
  %v71 = vmul.f32 %v62, %v38
  %v72 = vmul.f32 %v64, %v38
  %v73 = vmul.f32 %v66, %v38
  %v74 = vmul.f32 %v68, %v38
  %v75 = vadd.f32 %v69, 1e-05
  %v76 = vadd.f32 %v70, 1e-05
  %v77 = vadd.f32 %v71, 1e-05
  %v78 = vadd.f32 %v72, 1e-05
  %v79 = vadd.f32 %v73, 1e-05
  %v80 = vadd.f32 %v74, 1e-05
  %v81 = vrsqrt.pop %v75
  %v82 = vrsqrt.pop %v76
  %v83 = vrsqrt.pop %v77
  %v84 = vrsqrt.pop %v78
  %v85 = vrsqrt.pop %v79
  %v86 = vrsqrt.pop %v80
  %v87 = vmul.f32 %v45, %v81
  %v88 = vmul.f32 %v46, %v82
  %v89 = vmul.f32 %v47, %v83
  %v90 = vmul.f32 %v48, %v84
  %v91 = vmul.f32 %v49, %v85
  %v92 = vmul.f32 %v50, %v86
  %v93 = vld [vmem:[%s1] sm:$0x1]
  %v94 = vunpack.c.l.bf16 %v93
  %v95 = vlaneseq
  %v96 = vshrl.u32 %v95, 7
  %v97 = vsub.s32 0, %v96
  %v98 = vrot.slane %v94, %v97
  %v99 = vmul.f32 %v87, %v98
  %v100 = vmul.f32 %v88, %v98
  %v101 = vmul.f32 %v89, %v98
  %v102 = vmul.f32 %v90, %v98
  %v103 = vmul.f32 %v91, %v98
  %v104 = vmul.f32 %v92, %v98
  %v105 = vld [vmem:[%s2] sm:$0x1]
  %v106 = vunpack.c.l.bf16 %v105
  %v107 = vlaneseq
  %v108 = vshrl.u32 %v107, 7
  %v109 = vsub.s32 0, %v108
  %v110 = vrot.slane %v106, %v109
  %v111 = vadd.f32 %v99, %v110
  %v112 = vadd.f32 %v100, %v110
  %v113 = vadd.f32 %v101, %v110
  %v114 = vadd.f32 %v102, %v110
  %v115 = vadd.f32 %v103, %v110
  %v116 = vadd.f32 %v104, %v110
  %v117 = vpack.c.bf16 %v112, %v111
  %v118 = vpack.c.bf16 %v114, %v113
  %v119 = vpack.c.bf16 %v116, %v115
  %v123 = vunpack.c.l.b16 %v117
  %v124 = vunpack.c.h.b16 %v117
  %v125 = vunpack.c.l.b16 %v118
  %v126 = vunpack.c.h.b16 %v118
  %v127 = vunpack.c.l.b16 %v119
  %v128 = vunpack.c.h.b16 %v119
  %v129 = vpack.c.b16 %v123, %v123
  %v130 = vpack.c.b16 %v124, %v124
  %v131 = vpack.c.b16 %v125, %v125
  %v132 = vpack.c.b16 %v126, %v126
  %v133 = vpack.c.b16 %v127, %v127
  %v134 = vpack.c.b16 %v128, %v128
  %141 = vst [vmem:[%s3] sm:$0xf] %v129
  %142 = vst [vmem:[%s3 + $0x4] sm:$0xf] %v130
  %143 = vst [vmem:[%s3 + $0x8] sm:$0xf] %v131
  %144 = vst [vmem:[%s3 + $0xc] sm:$0xf] %v132
  %145 = vst [vmem:[%s3 + $0x10] sm:$0xf] %v133
  %146 = vst [vmem:[%s3 + $0x14] sm:$0xf] %v134
  // Predicated region
  $region14: #{rwkv_forward.24} parent=0 // pred_check
    _
  $region15: #{rwkv_forward.24} parent=0 // pred_check_branch
    %148 = sbr.rel (0) target = $region17
  $region16: #{rwkv_forward.24} parent=0 // pred_region
    _
  $region17: #{rwkv_forward.24} parent=0 // pred_fallthru
    _
  // Predicated region
  $region18: #{rwkv_forward.24} parent=0 // pred_check
    _
  $region19: #{rwkv_forward.24} parent=0 // pred_check_branch
    %150 = sbr.rel (0) target = $region21
  $region20: #{rwkv_forward.24} parent=0 // pred_region
    _
  $region21: #{rwkv_forward.24} parent=0 // pred_fallthru
    _

// kernel: rwkv_forward.28
$region0: #{rwkv_forward.28}
  #allocation0 [shape = 'u32[]', space=smem, size = 0x4, offset = 0x4, fixed_abs, tag = 'smem constant byte address 0x4 - core index']
  #allocation1 [shape = 'u32[144,128]{1,0:T(1,128)}', space=vmem, size = 0x12000, scoped, tag = 'internal scratch']
  #allocation2 [shape = 'f32[48,128]{1,0:T(8,128)}', space=vmem, size = 0x6000, scoped, tag = 'scratch operand']
  %s0 = inlined_call_operand.vmem [shape: bf16[48,32], index: 0, kind: input, shape index: {}]
  %s1 = inlined_call_operand.vmem [shape: bf16[32,128], index: 1, kind: input, shape index: {}]
  %s2 = inlined_call_operand.vmem [shape: bf16[48,128], index: 2, kind: output, shape index: {}]
  %s3 = sld [smem:[#allocation0]]
  $region26: #{rwkv_forward.28} parent=0
    _
  %s5 = ssub.s32 1, %s3
  %s6 = scalar_select 0, %s5, %s3
  // Predicated region
  $region2: #{rwkv_forward.28} parent=0 // pred_check
    _
  $region3: #{rwkv_forward.28} parent=0 // pred_check_branch
    %8 = sbr.rel (0) target = $region5
  $region4: #{rwkv_forward.28} parent=0 // pred_region
    _
  $region5: #{rwkv_forward.28} parent=0 // pred_fallthru
    _
  // Predicated region
  $region6: #{rwkv_forward.28} parent=0 // pred_check
    _
  $region7: #{rwkv_forward.28} parent=0 // pred_check_branch
    %10 = sbr.rel (0) target = $region9
  $region8: #{rwkv_forward.28} parent=0 // pred_region
    _
  $region9: #{rwkv_forward.28} parent=0 // pred_fallthru
    _
  %p12 = scmp.eq.s32.totalorder 0, 0
  // Predicated region
  $region10: #{rwkv_forward.28} parent=0 // pred_check
    %p13 = pneg %p12
  $region11: #{rwkv_forward.28} parent=0 // pred_check_branch
    %15 = sbr.rel (%p13) target = $region13
  $region12: #{rwkv_forward.28} parent=0 // pred_region
    %16 = vst [vmem:[#allocation2] sm:$0xff] 0.0
    %17 = vst [vmem:[#allocation2 + $0x8] sm:$0xff] 0.0
    %18 = vst [vmem:[#allocation2 + $0x10] sm:$0xff] 0.0
    %19 = vst [vmem:[#allocation2 + $0x18] sm:$0xff] 0.0
    %20 = vst [vmem:[#allocation2 + $0x20] sm:$0xff] 0.0
    %21 = vst [vmem:[#allocation2 + $0x28] sm:$0xff] 0.0
  $region13: #{rwkv_forward.28} parent=0 // pred_fallthru
    _
  %v22 = vld [vmem:[#allocation2] sm:$0xff]
  %v23 = vld [vmem:[#allocation2 + $0x8] sm:$0xff]
  %v24 = vld [vmem:[#allocation2 + $0x10] sm:$0xff]
  %v25 = vld [vmem:[#allocation2 + $0x18] sm:$0xff]
  %v26 = vld [vmem:[#allocation2 + $0x20] sm:$0xff]
  %v27 = vld [vmem:[#allocation2 + $0x28] sm:$0xff]
  %v28 = vld [vmem:[%s0] sm:$0xf]
  %v29 = vld [vmem:[%s0 + $0x4] sm:$0xf]
  %v30 = vld [vmem:[%s0 + $0x8] sm:$0xf]
  %v31 = vld [vmem:[%s0 + $0xc] sm:$0xf]
  %v32 = vld [vmem:[%s0 + $0x10] sm:$0xf]
  %v33 = vld [vmem:[%s0 + $0x14] sm:$0xf]
  %v34 = vld [vmem:[%s1] sm:$0xf]
  %v35 = vld [vmem:[%s1 + $0x4] sm:$0xf]
  %v36 = vld [vmem:[%s1 + $0x8] sm:$0xf]
  %v37 = vld [vmem:[%s1 + $0xc] sm:$0xf]
  %v44 = vunpack.c.l.b16 %v28
  %v45 = vunpack.c.l.b16 %v29
  %v46 = vunpack.c.l.b16 %v30
  %v47 = vunpack.c.l.b16 %v31
  %v48 = vunpack.c.l.b16 %v32
  %v49 = vunpack.c.l.b16 %v33
  %v50 = vpack.c.b16 %v45, %v44
  %v51 = vpack.c.b16 %v47, %v46
  %v52 = vpack.c.b16 %v49, %v48
  %v57 = vunpack.c.l.b16 %v34
  %v58 = vunpack.c.l.b16 %v35
  %v59 = vunpack.c.l.b16 %v36
  %v60 = vunpack.c.l.b16 %v37
  %v61 = vpack.c.b16 %v58, %v57
  %v62 = vpack.c.b16 %v60, %v59
  %vm65 = vcmask 261120
  %v67 = vsel %vm65, %v50, 0
  %v70 = vsel %vm65, %v51, 0
  %v73 = vsel %vm65, %v52, 0
  %75 = vmatprep.subr.bf16.mxu0 0
  %76 = vmatpush1.bf16.msra.mxu0 %v61
  %77 = vmatprep.subr.bf16.mxu0 0
  %78 = vmatpush1.bf16.msra.mxu0 %v62
  %79 = vmatprep.subr.bf16.mxu0 0
  %80 = vmatpush1.bf16.msra.mxu0 0
  %81 = vmatprep.subr.bf16.mxu0 0
  %82 = vmatpush1.bf16.msra.mxu0 0
  %83 = vmatprep.subr.bf16.mxu0 0
  %84 = vmatpush1.bf16.msra.mxu0 0
  %85 = vmatprep.subr.bf16.mxu0 0
  %86 = vmatpush1.bf16.msra.mxu0 0
  %87 = vmatprep.subr.bf16.mxu0 0
  %88 = vmatpush1.bf16.msra.mxu0 0
  %89 = vmatprep.subr.bf16.mxu0 0
  %90 = vmatpush1.bf16.msra.mxu0 0
  %91 = vmatprep.subr.bf16.mxu0 0
  %92 = vmatpush1.bf16.msra.mxu0 0
  %93 = vmatprep.subr.bf16.mxu0 0
  %94 = vmatpush1.bf16.msra.mxu0 0
  %95 = vmatprep.subr.bf16.mxu0 0
  %96 = vmatpush1.bf16.msra.mxu0 0
  %97 = vmatprep.subr.bf16.mxu0 0
  %98 = vmatpush1.bf16.msra.mxu0 0
  %99 = vmatprep.subr.bf16.mxu0 0
  %100 = vmatpush1.bf16.msra.mxu0 0
  %101 = vmatprep.subr.bf16.mxu0 0
  %102 = vmatpush1.bf16.msra.mxu0 0
  %103 = vmatprep.subr.bf16.mxu0 0
  %104 = vmatpush1.bf16.msra.mxu0 0
  %105 = vmatprep.subr.bf16.mxu0 0
  %106 = vmatpush1.bf16.msra.mxu0 0
  %107 = vmatprep.mubr.bf16.mxu0 0
  %108 = vmatmul.mubr.bf16.gmra.mrb[0].mxu0 %v67
  %v109 = vpop.f32.mrb[0].mxu0
  %v110 = vadd.f32 0.0, %v109
  %v111 = vpop.f32.mrb[0].mxu0
  %v112 = vpop.f32.mrb[0].mxu0
  %v113 = vadd.f32 0.0, %v112
  %v114 = vpop.f32.mrb[0].mxu0
  %115 = vmatprep.mubr.bf16.mxu0 0
  %116 = vmatmul.mubr.bf16.gmra.mrb[0].mxu0 %v70
  %v117 = vpop.f32.mrb[0].mxu0
  %v118 = vadd.f32 0.0, %v117
  %v119 = vpop.f32.mrb[0].mxu0
  %v120 = vpop.f32.mrb[0].mxu0
  %v121 = vadd.f32 0.0, %v120
  %v122 = vpop.f32.mrb[0].mxu0
  %123 = vmatprep.mubr.bf16.mxu0 0
  %124 = vmatmul.mubr.bf16.gmra.mrb[0].mxu0 %v73
  %v125 = vpop.f32.mrb[0].mxu0
  %v126 = vadd.f32 0.0, %v125
  %v127 = vpop.f32.mrb[0].mxu0
  %v128 = vpop.f32.mrb[0].mxu0
  %v129 = vadd.f32 0.0, %v128
  %v130 = vpop.f32.mrb[0].mxu0
  %131 = vdwg.mxu0
  %v132 = vadd.f32 %v22, %v110
  %v133 = vadd.f32 %v23, %v113
  %v134 = vadd.f32 %v24, %v118
  %v135 = vadd.f32 %v25, %v121
  %v136 = vadd.f32 %v26, %v126
  %v137 = vadd.f32 %v27, %v129
  %138 = vst [vmem:[#allocation2] sm:$0xff] %v132
  %139 = vst [vmem:[#allocation2 + $0x8] sm:$0xff] %v133
  %140 = vst [vmem:[#allocation2 + $0x10] sm:$0xff] %v134
  %141 = vst [vmem:[#allocation2 + $0x18] sm:$0xff] %v135
  %142 = vst [vmem:[#allocation2 + $0x20] sm:$0xff] %v136
  %143 = vst [vmem:[#allocation2 + $0x28] sm:$0xff] %v137
  // Predicated region
  $region14: #{rwkv_forward.28} parent=0 // pred_check
    %p144 = pneg %p12
  $region15: #{rwkv_forward.28} parent=0 // pred_check_branch
    %146 = sbr.rel (%p144) target = $region17
  $region16: #{rwkv_forward.28} parent=0 // pred_region
    %v147 = vld [vmem:[#allocation2] sm:$0xff]
    %v148 = vld [vmem:[#allocation2 + $0x8] sm:$0xff]
    %v149 = vld [vmem:[#allocation2 + $0x10] sm:$0xff]
    %v150 = vld [vmem:[#allocation2 + $0x18] sm:$0xff]
    %v151 = vld [vmem:[#allocation2 + $0x20] sm:$0xff]
    %v152 = vld [vmem:[#allocation2 + $0x28] sm:$0xff]
    %v153 = vpack.c.bf16 %v148, %v147
    %v154 = vpack.c.bf16 %v150, %v149
    %v155 = vpack.c.bf16 %v152, %v151
    %v159 = vunpack.c.l.b16 %v153
    %v160 = vunpack.c.h.b16 %v153
    %v161 = vunpack.c.l.b16 %v154
    %v162 = vunpack.c.h.b16 %v154
    %v163 = vunpack.c.l.b16 %v155
    %v164 = vunpack.c.h.b16 %v155
    %v165 = vpack.c.b16 %v159, %v159
    %v166 = vpack.c.b16 %v160, %v160
    %v167 = vpack.c.b16 %v161, %v161
    %v168 = vpack.c.b16 %v162, %v162
    %v169 = vpack.c.b16 %v163, %v163
    %v170 = vpack.c.b16 %v164, %v164
    %177 = vst [vmem:[%s2] sm:$0xf] %v165
    %178 = vst [vmem:[%s2 + $0x4] sm:$0xf] %v166
    %179 = vst [vmem:[%s2 + $0x8] sm:$0xf] %v167
    %180 = vst [vmem:[%s2 + $0xc] sm:$0xf] %v168
    %181 = vst [vmem:[%s2 + $0x10] sm:$0xf] %v169
    %182 = vst [vmem:[%s2 + $0x14] sm:$0xf] %v170
  $region17: #{rwkv_forward.28} parent=0 // pred_fallthru
    _
  // Predicated region
  $region18: #{rwkv_forward.28} parent=0 // pred_check
    _
  $region19: #{rwkv_forward.28} parent=0 // pred_check_branch
    %184 = sbr.rel (0) target = $region21
  $region20: #{rwkv_forward.28} parent=0 // pred_region
    _
  $region21: #{rwkv_forward.28} parent=0 // pred_fallthru
    _
  // Predicated region
  $region22: #{rwkv_forward.28} parent=0 // pred_check
    _
  $region23: #{rwkv_forward.28} parent=0 // pred_check_branch
    %186 = sbr.rel (0) target = $region25
  $region24: #{rwkv_forward.28} parent=0 // pred_region
    _
  $region25: #{rwkv_forward.28} parent=0 // pred_fallthru
    _

// kernel: rwkv_forward.26
$region0: #{rwkv_forward.26}
  #allocation0 [shape = 'u32[]', space=smem, size = 0x4, offset = 0x4, fixed_abs, tag = 'smem constant byte address 0x4 - core index']
  #allocation1 [shape = 'u32[144,128]{1,0:T(1,128)}', space=vmem, size = 0x12000, scoped, tag = 'internal scratch']
  #allocation2 [shape = 'f32[48,480]{1,0:T(8,128)}', space=vmem, size = 0x18000, scoped, tag = 'scratch operand']
  %s0 = inlined_call_operand.vmem [shape: bf16[48,128], index: 0, kind: input, shape index: {}]
  %s1 = inlined_call_operand.vmem [shape: bf16[48,128], index: 1, kind: input, shape index: {}]
  %s2 = inlined_call_operand.vmem [shape: bf16[128,480], index: 2, kind: input, shape index: {}]
  %s3 = inlined_call_operand.vmem [shape: bf16[128,480], index: 3, kind: input, shape index: {}]
  %s4 = inlined_call_operand.vmem [shape: bf16[48,480], index: 4, kind: output, shape index: {}]
  %s5 = sld [smem:[#allocation0]]
  $region34: #{rwkv_forward.26} parent=0
    _
  %s7 = ssub.s32 1, %s5
  %s8 = scalar_select 0, %s7, %s5
  // Predicated region
  $region2: #{rwkv_forward.26} parent=0 // pred_check
    _
  $region3: #{rwkv_forward.26} parent=0 // pred_check_branch
    %10 = sbr.rel (0) target = $region5
  $region4: #{rwkv_forward.26} parent=0 // pred_region
    _
  $region5: #{rwkv_forward.26} parent=0 // pred_fallthru
    _
  // Predicated region
  $region6: #{rwkv_forward.26} parent=0 // pred_check
    _
  $region7: #{rwkv_forward.26} parent=0 // pred_check_branch
    %12 = sbr.rel (0) target = $region9
  $region8: #{rwkv_forward.26} parent=0 // pred_region
    _
  $region9: #{rwkv_forward.26} parent=0 // pred_fallthru
    _
  // Predicated region
  $region10: #{rwkv_forward.26} parent=0 // pred_check
    _
  $region11: #{rwkv_forward.26} parent=0 // pred_check_branch
    %14 = sbr.rel (0) target = $region13
  $region12: #{rwkv_forward.26} parent=0 // pred_region
    _
  $region13: #{rwkv_forward.26} parent=0 // pred_fallthru
    _
  // Predicated region
  $region14: #{rwkv_forward.26} parent=0 // pred_check
    _
  $region15: #{rwkv_forward.26} parent=0 // pred_check_branch
    %16 = sbr.rel (0) target = $region17
  $region16: #{rwkv_forward.26} parent=0 // pred_region
    _
  $region17: #{rwkv_forward.26} parent=0 // pred_fallthru
    _
  %p18 = scmp.eq.s32.totalorder 0, 0
  // Predicated region
  $region18: #{rwkv_forward.26} parent=0 // pred_check
    %p19 = pneg %p18
  $region19: #{rwkv_forward.26} parent=0 // pred_check_branch
    %21 = sbr.rel (%p19) target = $region21
  $region20: #{rwkv_forward.26} parent=0 // pred_region
    %22 = vst [vmem:[#allocation2] sm:$0xff] 0.0
    %23 = vst [vmem:[#allocation2 + $0x8] sm:$0xff] 0.0
    %24 = vst [vmem:[#allocation2 + $0x10] sm:$0xff] 0.0
    %vm25 = vcmask 785408
    %26 = vst.msk [vmem:[#allocation2 + $0x18] sm:$0xff] %vm25, 0.0
    %27 = vst [vmem:[#allocation2 + $0x20] sm:$0xff] 0.0
    %28 = vst [vmem:[#allocation2 + $0x28] sm:$0xff] 0.0
    %29 = vst [vmem:[#allocation2 + $0x30] sm:$0xff] 0.0
    %30 = vst.msk [vmem:[#allocation2 + $0x38] sm:$0xff] %vm25, 0.0
    %31 = vst [vmem:[#allocation2 + $0x40] sm:$0xff] 0.0
    %32 = vst [vmem:[#allocation2 + $0x48] sm:$0xff] 0.0
    %33 = vst [vmem:[#allocation2 + $0x50] sm:$0xff] 0.0
    %34 = vst.msk [vmem:[#allocation2 + $0x58] sm:$0xff] %vm25, 0.0
    %35 = vst [vmem:[#allocation2 + $0x60] sm:$0xff] 0.0
    %36 = vst [vmem:[#allocation2 + $0x68] sm:$0xff] 0.0
    %37 = vst [vmem:[#allocation2 + $0x70] sm:$0xff] 0.0
    %38 = vst.msk [vmem:[#allocation2 + $0x78] sm:$0xff] %vm25, 0.0
    %39 = vst [vmem:[#allocation2 + $0x80] sm:$0xff] 0.0
    %40 = vst [vmem:[#allocation2 + $0x88] sm:$0xff] 0.0
    %41 = vst [vmem:[#allocation2 + $0x90] sm:$0xff] 0.0
    %42 = vst.msk [vmem:[#allocation2 + $0x98] sm:$0xff] %vm25, 0.0
    %43 = vst [vmem:[#allocation2 + $0xa0] sm:$0xff] 0.0
    %44 = vst [vmem:[#allocation2 + $0xa8] sm:$0xff] 0.0
    %45 = vst [vmem:[#allocation2 + $0xb0] sm:$0xff] 0.0
    %46 = vst.msk [vmem:[#allocation2 + $0xb8] sm:$0xff] %vm25, 0.0
  $region21: #{rwkv_forward.26} parent=0 // pred_fallthru
    _
  %v47 = vld [vmem:[#allocation2] sm:$0xff]
  %v48 = vld [vmem:[#allocation2 + $0x8] sm:$0xff]
  %v49 = vld [vmem:[#allocation2 + $0x10] sm:$0xff]
  %v50 = vld [vmem:[#allocation2 + $0x18] sm:$0xff]
  %v51 = vld [vmem:[#allocation2 + $0x20] sm:$0xff]
  %v52 = vld [vmem:[#allocation2 + $0x28] sm:$0xff]
  %v53 = vld [vmem:[#allocation2 + $0x30] sm:$0xff]
  %v54 = vld [vmem:[#allocation2 + $0x38] sm:$0xff]
  %v55 = vld [vmem:[#allocation2 + $0x40] sm:$0xff]
  %v56 = vld [vmem:[#allocation2 + $0x48] sm:$0xff]
  %v57 = vld [vmem:[#allocation2 + $0x50] sm:$0xff]
  %v58 = vld [vmem:[#allocation2 + $0x58] sm:$0xff]
  %v59 = vld [vmem:[#allocation2 + $0x60] sm:$0xff]
  %v60 = vld [vmem:[#allocation2 + $0x68] sm:$0xff]
  %v61 = vld [vmem:[#allocation2 + $0x70] sm:$0xff]
  %v62 = vld [vmem:[#allocation2 + $0x78] sm:$0xff]
  %v63 = vld [vmem:[#allocation2 + $0x80] sm:$0xff]
  %v64 = vld [vmem:[#allocation2 + $0x88] sm:$0xff]
  %v65 = vld [vmem:[#allocation2 + $0x90] sm:$0xff]
  %v66 = vld [vmem:[#allocation2 + $0x98] sm:$0xff]
  %v67 = vld [vmem:[#allocation2 + $0xa0] sm:$0xff]
  %v68 = vld [vmem:[#allocation2 + $0xa8] sm:$0xff]
  %v69 = vld [vmem:[#allocation2 + $0xb0] sm:$0xff]
  %v70 = vld [vmem:[#allocation2 + $0xb8] sm:$0xff]
  %v71 = vld [vmem:[%s0] sm:$0xf]
  %v72 = vld [vmem:[%s0 + $0x4] sm:$0xf]
  %v73 = vld [vmem:[%s0 + $0x8] sm:$0xf]
  %v74 = vld [vmem:[%s0 + $0xc] sm:$0xf]
  %v75 = vld [vmem:[%s0 + $0x10] sm:$0xf]
  %v76 = vld [vmem:[%s0 + $0x14] sm:$0xf]
  %v77 = vld [vmem:[%s2] sm:$0xff]
  %v78 = vld [vmem:[%s2 + $0x8] sm:$0xff]
  %v79 = vld [vmem:[%s2 + $0x10] sm:$0xff]
  %v80 = vld [vmem:[%s2 + $0x18] sm:$0xff]
  %v81 = vld [vmem:[%s2 + $0x20] sm:$0xff]
  %v82 = vld [vmem:[%s2 + $0x28] sm:$0xff]
  %v83 = vld [vmem:[%s2 + $0x30] sm:$0xff]
  %v84 = vld [vmem:[%s2 + $0x38] sm:$0xff]
  %v85 = vld [vmem:[%s2 + $0x40] sm:$0xff]
  %v86 = vld [vmem:[%s2 + $0x48] sm:$0xff]
  %v87 = vld [vmem:[%s2 + $0x50] sm:$0xff]
  %v88 = vld [vmem:[%s2 + $0x58] sm:$0xff]
  %v89 = vld [vmem:[%s2 + $0x60] sm:$0xff]
  %v90 = vld [vmem:[%s2 + $0x68] sm:$0xff]
  %v91 = vld [vmem:[%s2 + $0x70] sm:$0xff]
  %v92 = vld [vmem:[%s2 + $0x78] sm:$0xff]
  %v93 = vld [vmem:[%s2 + $0x80] sm:$0xff]
  %v94 = vld [vmem:[%s2 + $0x88] sm:$0xff]
  %v95 = vld [vmem:[%s2 + $0x90] sm:$0xff]
  %v96 = vld [vmem:[%s2 + $0x98] sm:$0xff]
  %v97 = vld [vmem:[%s2 + $0xa0] sm:$0xff]
  %v98 = vld [vmem:[%s2 + $0xa8] sm:$0xff]
  %v99 = vld [vmem:[%s2 + $0xb0] sm:$0xff]
  %v100 = vld [vmem:[%s2 + $0xb8] sm:$0xff]
  %v101 = vld [vmem:[%s2 + $0xc0] sm:$0xff]
  %v102 = vld [vmem:[%s2 + $0xc8] sm:$0xff]
  %v103 = vld [vmem:[%s2 + $0xd0] sm:$0xff]
  %v104 = vld [vmem:[%s2 + $0xd8] sm:$0xff]
  %v105 = vld [vmem:[%s2 + $0xe0] sm:$0xff]
  %v106 = vld [vmem:[%s2 + $0xe8] sm:$0xff]
  %v107 = vld [vmem:[%s2 + $0xf0] sm:$0xff]
  %v108 = vld [vmem:[%s2 + $0xf8] sm:$0xff]
  %v109 = vld [vmem:[%s1] sm:$0xf]
  %v110 = vld [vmem:[%s1 + $0x4] sm:$0xf]
  %v111 = vld [vmem:[%s1 + $0x8] sm:$0xf]
  %v112 = vld [vmem:[%s1 + $0xc] sm:$0xf]
  %v113 = vld [vmem:[%s1 + $0x10] sm:$0xf]
  %v114 = vld [vmem:[%s1 + $0x14] sm:$0xf]
  %v115 = vld [vmem:[%s3] sm:$0xff]
  %v116 = vld [vmem:[%s3 + $0x8] sm:$0xff]
  %v117 = vld [vmem:[%s3 + $0x10] sm:$0xff]
  %v118 = vld [vmem:[%s3 + $0x18] sm:$0xff]
  %v119 = vld [vmem:[%s3 + $0x20] sm:$0xff]
  %v120 = vld [vmem:[%s3 + $0x28] sm:$0xff]
  %v121 = vld [vmem:[%s3 + $0x30] sm:$0xff]
  %v122 = vld [vmem:[%s3 + $0x38] sm:$0xff]
  %v123 = vld [vmem:[%s3 + $0x40] sm:$0xff]
  %v124 = vld [vmem:[%s3 + $0x48] sm:$0xff]
  %v125 = vld [vmem:[%s3 + $0x50] sm:$0xff]
  %v126 = vld [vmem:[%s3 + $0x58] sm:$0xff]
  %v127 = vld [vmem:[%s3 + $0x60] sm:$0xff]
  %v128 = vld [vmem:[%s3 + $0x68] sm:$0xff]
  %v129 = vld [vmem:[%s3 + $0x70] sm:$0xff]
  %v130 = vld [vmem:[%s3 + $0x78] sm:$0xff]
  %v131 = vld [vmem:[%s3 + $0x80] sm:$0xff]
  %v132 = vld [vmem:[%s3 + $0x88] sm:$0xff]
  %v133 = vld [vmem:[%s3 + $0x90] sm:$0xff]
  %v134 = vld [vmem:[%s3 + $0x98] sm:$0xff]
  %v135 = vld [vmem:[%s3 + $0xa0] sm:$0xff]
  %v136 = vld [vmem:[%s3 + $0xa8] sm:$0xff]
  %v137 = vld [vmem:[%s3 + $0xb0] sm:$0xff]
  %v138 = vld [vmem:[%s3 + $0xb8] sm:$0xff]
  %v139 = vld [vmem:[%s3 + $0xc0] sm:$0xff]
  %v140 = vld [vmem:[%s3 + $0xc8] sm:$0xff]
  %v141 = vld [vmem:[%s3 + $0xd0] sm:$0xff]
  %v142 = vld [vmem:[%s3 + $0xd8] sm:$0xff]
  %v143 = vld [vmem:[%s3 + $0xe0] sm:$0xff]
  %v144 = vld [vmem:[%s3 + $0xe8] sm:$0xff]
  %v145 = vld [vmem:[%s3 + $0xf0] sm:$0xff]
  %v146 = vld [vmem:[%s3 + $0xf8] sm:$0xff]
  %v153 = vunpack.c.l.b16 %v109
  %v154 = vunpack.c.l.b16 %v110
  %v155 = vunpack.c.l.b16 %v111
  %v156 = vunpack.c.l.b16 %v112
  %v157 = vunpack.c.l.b16 %v113
  %v158 = vunpack.c.l.b16 %v114
  %v159 = vpack.c.b16 %v154, %v153
  %v160 = vpack.c.b16 %v156, %v155
  %v161 = vpack.c.b16 %v158, %v157
  %v197 = vunpack.c.l.b16 %v115
  %v198 = vunpack.c.h.b16 %v115
  %v199 = vunpack.c.l.b16 %v116
  %v200 = vunpack.c.h.b16 %v116
  %v201 = vunpack.c.l.b16 %v117
  %v202 = vunpack.c.h.b16 %v117
  %v203 = vunpack.c.l.b16 %v118
  %v204 = vunpack.c.h.b16 %v118
  %v205 = vunpack.c.l.b16 %v119
  %v206 = vunpack.c.h.b16 %v119
  %v207 = vunpack.c.l.b16 %v120
  %v208 = vunpack.c.h.b16 %v120
  %v209 = vunpack.c.l.b16 %v121
  %v210 = vunpack.c.h.b16 %v121
  %v211 = vunpack.c.l.b16 %v122
  %v212 = vunpack.c.h.b16 %v122
  %v213 = vunpack.c.l.b16 %v123
  %v214 = vunpack.c.h.b16 %v123
  %v215 = vunpack.c.l.b16 %v124
  %v216 = vunpack.c.h.b16 %v124
  %v217 = vunpack.c.l.b16 %v125
  %v218 = vunpack.c.h.b16 %v125
  %v219 = vunpack.c.l.b16 %v126
  %v220 = vunpack.c.h.b16 %v126
  %v221 = vunpack.c.l.b16 %v127
  %v222 = vunpack.c.h.b16 %v127
  %v223 = vunpack.c.l.b16 %v128
  %v224 = vunpack.c.h.b16 %v128
  %v225 = vunpack.c.l.b16 %v129
  %v226 = vunpack.c.h.b16 %v129
  %v227 = vunpack.c.l.b16 %v130
  %v228 = vunpack.c.h.b16 %v130
  %v229 = vunpack.c.l.b16 %v131
  %v230 = vunpack.c.h.b16 %v131
  %v231 = vunpack.c.l.b16 %v132
  %v232 = vunpack.c.h.b16 %v132
  %v233 = vunpack.c.l.b16 %v133
  %v234 = vunpack.c.h.b16 %v133
  %v235 = vunpack.c.l.b16 %v134
  %v236 = vunpack.c.h.b16 %v134
  %v237 = vunpack.c.l.b16 %v135
  %v238 = vunpack.c.h.b16 %v135
  %v239 = vunpack.c.l.b16 %v136
  %v240 = vunpack.c.h.b16 %v136
  %v241 = vunpack.c.l.b16 %v137
  %v242 = vunpack.c.h.b16 %v137
  %v243 = vunpack.c.l.b16 %v138
  %v244 = vunpack.c.h.b16 %v138
  %v245 = vunpack.c.l.b16 %v139
  %v246 = vunpack.c.h.b16 %v139
  %v247 = vunpack.c.l.b16 %v140
  %v248 = vunpack.c.h.b16 %v140
  %v249 = vunpack.c.l.b16 %v141
  %v250 = vunpack.c.h.b16 %v141
  %v251 = vunpack.c.l.b16 %v142
  %v252 = vunpack.c.h.b16 %v142
  %v253 = vunpack.c.l.b16 %v143
  %v254 = vunpack.c.h.b16 %v143
  %v255 = vunpack.c.l.b16 %v144
  %v256 = vunpack.c.h.b16 %v144
  %v257 = vunpack.c.l.b16 %v145
  %v258 = vunpack.c.h.b16 %v145
  %v259 = vunpack.c.l.b16 %v146
  %v260 = vunpack.c.h.b16 %v146
  %v261 = vpack.c.b16 %v201, %v197
  %v262 = vpack.c.b16 %v202, %v198
  %v263 = vpack.c.b16 %v203, %v199
  %v264 = vpack.c.b16 %v204, %v200
  %v265 = vpack.c.b16 %v209, %v205
  %v266 = vpack.c.b16 %v210, %v206
  %v267 = vpack.c.b16 %v211, %v207
  %v268 = vpack.c.b16 %v212, %v208
  %v269 = vpack.c.b16 %v217, %v213
  %v270 = vpack.c.b16 %v218, %v214
  %v271 = vpack.c.b16 %v219, %v215
  %v272 = vpack.c.b16 %v220, %v216
  %v273 = vpack.c.b16 %v225, %v221
  %v274 = vpack.c.b16 %v226, %v222
  %v275 = vpack.c.b16 %v227, %v223
  %v276 = vpack.c.b16 %v228, %v224
  %v277 = vpack.c.b16 %v233, %v229
  %v278 = vpack.c.b16 %v234, %v230
  %v279 = vpack.c.b16 %v235, %v231
  %v280 = vpack.c.b16 %v236, %v232
  %v281 = vpack.c.b16 %v241, %v237
  %v282 = vpack.c.b16 %v242, %v238
  %v283 = vpack.c.b16 %v243, %v239
  %v284 = vpack.c.b16 %v244, %v240
  %v285 = vpack.c.b16 %v249, %v245
  %v286 = vpack.c.b16 %v250, %v246
  %v287 = vpack.c.b16 %v251, %v247
  %v288 = vpack.c.b16 %v252, %v248
  %v289 = vpack.c.b16 %v257, %v253
  %v290 = vpack.c.b16 %v258, %v254
  %v291 = vpack.c.b16 %v259, %v255
  %v292 = vpack.c.b16 %v260, %v256
  %325 = vmatprep.subr.bf16.mxu0 %v262
  %326 = vmatpush1.bf16.msra.mxu0 %v261
  %327 = vmatprep.subr.bf16.mxu0 %v266
  %328 = vmatpush1.bf16.msra.mxu0 %v265
  %329 = vmatprep.subr.bf16.mxu0 %v270
  %330 = vmatpush1.bf16.msra.mxu0 %v269
  %331 = vmatprep.subr.bf16.mxu0 %v274
  %332 = vmatpush1.bf16.msra.mxu0 %v273
  %333 = vmatprep.subr.bf16.mxu0 %v278
  %334 = vmatpush1.bf16.msra.mxu0 %v277
  %335 = vmatprep.subr.bf16.mxu0 %v282
  %336 = vmatpush1.bf16.msra.mxu0 %v281
  %337 = vmatprep.subr.bf16.mxu0 %v286
  %338 = vmatpush1.bf16.msra.mxu0 %v285
  %339 = vmatprep.subr.bf16.mxu0 %v290
  %340 = vmatpush1.bf16.msra.mxu0 %v289
  %341 = vmatprep.subr.bf16.mxu0 0
  %342 = vmatpush1.bf16.msra.mxu0 0
  %343 = vmatprep.subr.bf16.mxu0 0
  %344 = vmatpush1.bf16.msra.mxu0 0
  %345 = vmatprep.subr.bf16.mxu0 0
  %346 = vmatpush1.bf16.msra.mxu0 0
  %347 = vmatprep.subr.bf16.mxu0 0
  %348 = vmatpush1.bf16.msra.mxu0 0
  %349 = vmatprep.subr.bf16.mxu0 0
  %350 = vmatpush1.bf16.msra.mxu0 0
  %351 = vmatprep.subr.bf16.mxu0 0
  %352 = vmatpush1.bf16.msra.mxu0 0
  %353 = vmatprep.subr.bf16.mxu0 0
  %354 = vmatpush1.bf16.msra.mxu0 0
  %355 = vmatprep.subr.bf16.mxu0 0
  %356 = vmatpush1.bf16.msra.mxu0 0
  %357 = vmatprep.mubr.bf16.mxu0 0
  %358 = vmatmul.mubr.bf16.gmra.mrb[0].mxu0 %v159
  %v359 = vpop.f32.mrb[0].mxu0
  %v360 = vadd.f32 0.0, %v359
  %v361 = vpop.f32.mrb[0].mxu0
  %v362 = vadd.f32 0.0, %v361
  %v363 = vpop.f32.mrb[0].mxu0
  %v364 = vadd.f32 0.0, %v363
  %v365 = vpop.f32.mrb[0].mxu0
  %v366 = vadd.f32 0.0, %v365
  %367 = vmatprep.mubr.bf16.mxu0 0
  %368 = vmatmul.mubr.bf16.gmra.mrb[0].mxu0 %v160
  %v369 = vpop.f32.mrb[0].mxu0
  %v370 = vadd.f32 0.0, %v369
  %v371 = vpop.f32.mrb[0].mxu0
  %v372 = vadd.f32 0.0, %v371
  %v373 = vpop.f32.mrb[0].mxu0
  %v374 = vadd.f32 0.0, %v373
  %v375 = vpop.f32.mrb[0].mxu0
  %v376 = vadd.f32 0.0, %v375
  %377 = vmatprep.mubr.bf16.mxu0 0
  %378 = vmatmul.mubr.bf16.gmra.mrb[0].mxu0 %v161
  %v379 = vpop.f32.mrb[0].mxu0
  %v380 = vadd.f32 0.0, %v379
  %v381 = vpop.f32.mrb[0].mxu0
  %v382 = vadd.f32 0.0, %v381
  %v383 = vpop.f32.mrb[0].mxu0
  %v384 = vadd.f32 0.0, %v383
  %v385 = vpop.f32.mrb[0].mxu0
  %v386 = vadd.f32 0.0, %v385
  %387 = vdwg.mxu0
  %388 = vmatprep.subr.bf16.mxu0 %v264
  %389 = vmatpush1.bf16.msra.mxu0 %v263
  %390 = vmatprep.subr.bf16.mxu0 %v268
  %391 = vmatpush1.bf16.msra.mxu0 %v267
  %392 = vmatprep.subr.bf16.mxu0 %v272
  %393 = vmatpush1.bf16.msra.mxu0 %v271
  %394 = vmatprep.subr.bf16.mxu0 %v276
  %395 = vmatpush1.bf16.msra.mxu0 %v275
  %396 = vmatprep.subr.bf16.mxu0 %v280
  %397 = vmatpush1.bf16.msra.mxu0 %v279
  %398 = vmatprep.subr.bf16.mxu0 %v284
  %399 = vmatpush1.bf16.msra.mxu0 %v283
  %400 = vmatprep.subr.bf16.mxu0 %v288
  %401 = vmatpush1.bf16.msra.mxu0 %v287
  %402 = vmatprep.subr.bf16.mxu0 %v292
  %403 = vmatpush1.bf16.msra.mxu0 %v291
  %404 = vmatprep.subr.bf16.mxu0 0
  %405 = vmatpush1.bf16.msra.mxu0 0
  %406 = vmatprep.subr.bf16.mxu0 0
  %407 = vmatpush1.bf16.msra.mxu0 0
  %408 = vmatprep.subr.bf16.mxu0 0
  %409 = vmatpush1.bf16.msra.mxu0 0
  %410 = vmatprep.subr.bf16.mxu0 0
  %411 = vmatpush1.bf16.msra.mxu0 0
  %412 = vmatprep.subr.bf16.mxu0 0
  %413 = vmatpush1.bf16.msra.mxu0 0
  %414 = vmatprep.subr.bf16.mxu0 0
  %415 = vmatpush1.bf16.msra.mxu0 0
  %416 = vmatprep.subr.bf16.mxu0 0
  %417 = vmatpush1.bf16.msra.mxu0 0
  %418 = vmatprep.subr.bf16.mxu0 0
  %419 = vmatpush1.bf16.msra.mxu0 0
  %420 = vmatprep.mubr.bf16.mxu0 0
  %421 = vmatmul.mubr.bf16.gmra.mrb[0].mxu0 %v159
  %v422 = vpop.f32.mrb[0].mxu0
  %v423 = vadd.f32 0.0, %v422
  %v424 = vpop.f32.mrb[0].mxu0
  %v425 = vadd.f32 0.0, %v424
  %v426 = vpop.f32.mrb[0].mxu0
  %v427 = vadd.f32 0.0, %v426
  %v428 = vpop.f32.mrb[0].mxu0
  %v429 = vadd.f32 0.0, %v428
  %430 = vmatprep.mubr.bf16.mxu0 0
  %431 = vmatmul.mubr.bf16.gmra.mrb[0].mxu0 %v160
  %v432 = vpop.f32.mrb[0].mxu0
  %v433 = vadd.f32 0.0, %v432
  %v434 = vpop.f32.mrb[0].mxu0
  %v435 = vadd.f32 0.0, %v434
  %v436 = vpop.f32.mrb[0].mxu0
  %v437 = vadd.f32 0.0, %v436
  %v438 = vpop.f32.mrb[0].mxu0
  %v439 = vadd.f32 0.0, %v438
  %440 = vmatprep.mubr.bf16.mxu0 0
  %441 = vmatmul.mubr.bf16.gmra.mrb[0].mxu0 %v161
  %v442 = vpop.f32.mrb[0].mxu0
  %v443 = vadd.f32 0.0, %v442
  %v444 = vpop.f32.mrb[0].mxu0
  %v445 = vadd.f32 0.0, %v444
  %v446 = vpop.f32.mrb[0].mxu0
  %v447 = vadd.f32 0.0, %v446
  %v448 = vpop.f32.mrb[0].mxu0
  %v449 = vadd.f32 0.0, %v448
  %450 = vdwg.mxu0
  %v457 = vunpack.c.l.b16 %v71
  %v458 = vunpack.c.l.b16 %v72
  %v459 = vunpack.c.l.b16 %v73
  %v460 = vunpack.c.l.b16 %v74
  %v461 = vunpack.c.l.b16 %v75
  %v462 = vunpack.c.l.b16 %v76
  %v463 = vpack.c.b16 %v458, %v457
  %v464 = vpack.c.b16 %v460, %v459
  %v465 = vpack.c.b16 %v462, %v461
  %v501 = vunpack.c.l.b16 %v77
  %v502 = vunpack.c.h.b16 %v77
  %v503 = vunpack.c.l.b16 %v78
  %v504 = vunpack.c.h.b16 %v78
  %v505 = vunpack.c.l.b16 %v79
  %v506 = vunpack.c.h.b16 %v79
  %v507 = vunpack.c.l.b16 %v80
  %v508 = vunpack.c.h.b16 %v80
  %v509 = vunpack.c.l.b16 %v81
  %v510 = vunpack.c.h.b16 %v81
  %v511 = vunpack.c.l.b16 %v82
  %v512 = vunpack.c.h.b16 %v82
  %v513 = vunpack.c.l.b16 %v83
  %v514 = vunpack.c.h.b16 %v83
  %v515 = vunpack.c.l.b16 %v84
  %v516 = vunpack.c.h.b16 %v84
  %v517 = vunpack.c.l.b16 %v85
  %v518 = vunpack.c.h.b16 %v85
  %v519 = vunpack.c.l.b16 %v86
  %v520 = vunpack.c.h.b16 %v86
  %v521 = vunpack.c.l.b16 %v87
  %v522 = vunpack.c.h.b16 %v87
  %v523 = vunpack.c.l.b16 %v88
  %v524 = vunpack.c.h.b16 %v88
  %v525 = vunpack.c.l.b16 %v89
  %v526 = vunpack.c.h.b16 %v89
  %v527 = vunpack.c.l.b16 %v90
  %v528 = vunpack.c.h.b16 %v90
  %v529 = vunpack.c.l.b16 %v91
  %v530 = vunpack.c.h.b16 %v91
  %v531 = vunpack.c.l.b16 %v92
  %v532 = vunpack.c.h.b16 %v92
  %v533 = vunpack.c.l.b16 %v93
  %v534 = vunpack.c.h.b16 %v93
  %v535 = vunpack.c.l.b16 %v94
  %v536 = vunpack.c.h.b16 %v94
  %v537 = vunpack.c.l.b16 %v95
  %v538 = vunpack.c.h.b16 %v95
  %v539 = vunpack.c.l.b16 %v96
  %v540 = vunpack.c.h.b16 %v96
  %v541 = vunpack.c.l.b16 %v97
  %v542 = vunpack.c.h.b16 %v97
  %v543 = vunpack.c.l.b16 %v98
  %v544 = vunpack.c.h.b16 %v98
  %v545 = vunpack.c.l.b16 %v99
  %v546 = vunpack.c.h.b16 %v99
  %v547 = vunpack.c.l.b16 %v100
  %v548 = vunpack.c.h.b16 %v100
  %v549 = vunpack.c.l.b16 %v101
  %v550 = vunpack.c.h.b16 %v101
  %v551 = vunpack.c.l.b16 %v102
  %v552 = vunpack.c.h.b16 %v102
  %v553 = vunpack.c.l.b16 %v103
  %v554 = vunpack.c.h.b16 %v103
  %v555 = vunpack.c.l.b16 %v104
  %v556 = vunpack.c.h.b16 %v104
  %v557 = vunpack.c.l.b16 %v105
  %v558 = vunpack.c.h.b16 %v105
  %v559 = vunpack.c.l.b16 %v106
  %v560 = vunpack.c.h.b16 %v106
  %v561 = vunpack.c.l.b16 %v107
  %v562 = vunpack.c.h.b16 %v107
  %v563 = vunpack.c.l.b16 %v108
  %v564 = vunpack.c.h.b16 %v108
  %v565 = vpack.c.b16 %v505, %v501
  %v566 = vpack.c.b16 %v506, %v502
  %v567 = vpack.c.b16 %v507, %v503
  %v568 = vpack.c.b16 %v508, %v504
  %v569 = vpack.c.b16 %v513, %v509
  %v570 = vpack.c.b16 %v514, %v510
  %v571 = vpack.c.b16 %v515, %v511
  %v572 = vpack.c.b16 %v516, %v512
  %v573 = vpack.c.b16 %v521, %v517
  %v574 = vpack.c.b16 %v522, %v518
  %v575 = vpack.c.b16 %v523, %v519
  %v576 = vpack.c.b16 %v524, %v520
  %v577 = vpack.c.b16 %v529, %v525
  %v578 = vpack.c.b16 %v530, %v526
  %v579 = vpack.c.b16 %v531, %v527
  %v580 = vpack.c.b16 %v532, %v528
  %v581 = vpack.c.b16 %v537, %v533
  %v582 = vpack.c.b16 %v538, %v534
  %v583 = vpack.c.b16 %v539, %v535
  %v584 = vpack.c.b16 %v540, %v536
  %v585 = vpack.c.b16 %v545, %v541
  %v586 = vpack.c.b16 %v546, %v542
  %v587 = vpack.c.b16 %v547, %v543
  %v588 = vpack.c.b16 %v548, %v544
  %v589 = vpack.c.b16 %v553, %v549
  %v590 = vpack.c.b16 %v554, %v550
  %v591 = vpack.c.b16 %v555, %v551
  %v592 = vpack.c.b16 %v556, %v552
  %v593 = vpack.c.b16 %v561, %v557
  %v594 = vpack.c.b16 %v562, %v558
  %v595 = vpack.c.b16 %v563, %v559
  %v596 = vpack.c.b16 %v564, %v560
  %629 = vmatprep.subr.bf16.mxu0 %v566
  %630 = vmatpush1.bf16.msra.mxu0 %v565
  %631 = vmatprep.subr.bf16.mxu0 %v570
  %632 = vmatpush1.bf16.msra.mxu0 %v569
  %633 = vmatprep.subr.bf16.mxu0 %v574
  %634 = vmatpush1.bf16.msra.mxu0 %v573
  %635 = vmatprep.subr.bf16.mxu0 %v578
  %636 = vmatpush1.bf16.msra.mxu0 %v577
  %637 = vmatprep.subr.bf16.mxu0 %v582
  %638 = vmatpush1.bf16.msra.mxu0 %v581
  %639 = vmatprep.subr.bf16.mxu0 %v586
  %640 = vmatpush1.bf16.msra.mxu0 %v585
  %641 = vmatprep.subr.bf16.mxu0 %v590
  %642 = vmatpush1.bf16.msra.mxu0 %v589
  %643 = vmatprep.subr.bf16.mxu0 %v594
  %644 = vmatpush1.bf16.msra.mxu0 %v593
  %645 = vmatprep.subr.bf16.mxu0 0
  %646 = vmatpush1.bf16.msra.mxu0 0
  %647 = vmatprep.subr.bf16.mxu0 0
  %648 = vmatpush1.bf16.msra.mxu0 0
  %649 = vmatprep.subr.bf16.mxu0 0
  %650 = vmatpush1.bf16.msra.mxu0 0
  %651 = vmatprep.subr.bf16.mxu0 0
  %652 = vmatpush1.bf16.msra.mxu0 0
  %653 = vmatprep.subr.bf16.mxu0 0
  %654 = vmatpush1.bf16.msra.mxu0 0
  %655 = vmatprep.subr.bf16.mxu0 0
  %656 = vmatpush1.bf16.msra.mxu0 0
  %657 = vmatprep.subr.bf16.mxu0 0
  %658 = vmatpush1.bf16.msra.mxu0 0
  %659 = vmatprep.subr.bf16.mxu0 0
  %660 = vmatpush1.bf16.msra.mxu0 0
  %661 = vmatprep.mubr.bf16.mxu0 0
  %662 = vmatmul.mubr.bf16.gmra.mrb[0].mxu0 %v463
  %v663 = vpop.f32.mrb[0].mxu0
  %v664 = vadd.f32 %v360, %v663
  %v665 = vpop.f32.mrb[0].mxu0
  %v666 = vadd.f32 %v362, %v665
  %v667 = vpop.f32.mrb[0].mxu0
  %v668 = vadd.f32 %v364, %v667
  %v669 = vpop.f32.mrb[0].mxu0
  %v670 = vadd.f32 %v366, %v669
  %671 = vmatprep.mubr.bf16.mxu0 0
  %672 = vmatmul.mubr.bf16.gmra.mrb[0].mxu0 %v464
  %v673 = vpop.f32.mrb[0].mxu0
  %v674 = vadd.f32 %v370, %v673
  %v675 = vpop.f32.mrb[0].mxu0
  %v676 = vadd.f32 %v372, %v675
  %v677 = vpop.f32.mrb[0].mxu0
  %v678 = vadd.f32 %v374, %v677
  %v679 = vpop.f32.mrb[0].mxu0
  %v680 = vadd.f32 %v376, %v679
  %681 = vmatprep.mubr.bf16.mxu0 0
  %682 = vmatmul.mubr.bf16.gmra.mrb[0].mxu0 %v465
  %v683 = vpop.f32.mrb[0].mxu0
  %v684 = vadd.f32 %v380, %v683
  %v685 = vpop.f32.mrb[0].mxu0
  %v686 = vadd.f32 %v382, %v685
  %v687 = vpop.f32.mrb[0].mxu0
  %v688 = vadd.f32 %v384, %v687
  %v689 = vpop.f32.mrb[0].mxu0
  %v690 = vadd.f32 %v386, %v689
  %691 = vdwg.mxu0
  %692 = vmatprep.subr.bf16.mxu0 %v568
  %693 = vmatpush1.bf16.msra.mxu0 %v567
  %694 = vmatprep.subr.bf16.mxu0 %v572
  %695 = vmatpush1.bf16.msra.mxu0 %v571
  %696 = vmatprep.subr.bf16.mxu0 %v576
  %697 = vmatpush1.bf16.msra.mxu0 %v575
  %698 = vmatprep.subr.bf16.mxu0 %v580
  %699 = vmatpush1.bf16.msra.mxu0 %v579
  %700 = vmatprep.subr.bf16.mxu0 %v584
  %701 = vmatpush1.bf16.msra.mxu0 %v583
  %702 = vmatprep.subr.bf16.mxu0 %v588
  %703 = vmatpush1.bf16.msra.mxu0 %v587
  %704 = vmatprep.subr.bf16.mxu0 %v592
  %705 = vmatpush1.bf16.msra.mxu0 %v591
  %706 = vmatprep.subr.bf16.mxu0 %v596
  %707 = vmatpush1.bf16.msra.mxu0 %v595
  %708 = vmatprep.subr.bf16.mxu0 0
  %709 = vmatpush1.bf16.msra.mxu0 0
  %710 = vmatprep.subr.bf16.mxu0 0
  %711 = vmatpush1.bf16.msra.mxu0 0
  %712 = vmatprep.subr.bf16.mxu0 0
  %713 = vmatpush1.bf16.msra.mxu0 0
  %714 = vmatprep.subr.bf16.mxu0 0
  %715 = vmatpush1.bf16.msra.mxu0 0
  %716 = vmatprep.subr.bf16.mxu0 0
  %717 = vmatpush1.bf16.msra.mxu0 0
  %718 = vmatprep.subr.bf16.mxu0 0
  %719 = vmatpush1.bf16.msra.mxu0 0
  %720 = vmatprep.subr.bf16.mxu0 0
  %721 = vmatpush1.bf16.msra.mxu0 0
  %722 = vmatprep.subr.bf16.mxu0 0
  %723 = vmatpush1.bf16.msra.mxu0 0
  %724 = vmatprep.mubr.bf16.mxu0 0
  %725 = vmatmul.mubr.bf16.gmra.mrb[0].mxu0 %v463
  %v726 = vpop.f32.mrb[0].mxu0
  %v727 = vadd.f32 %v423, %v726
  %v728 = vpop.f32.mrb[0].mxu0
  %v729 = vadd.f32 %v425, %v728
  %v730 = vpop.f32.mrb[0].mxu0
  %v731 = vadd.f32 %v427, %v730
  %v732 = vpop.f32.mrb[0].mxu0
  %v733 = vadd.f32 %v429, %v732
  %734 = vmatprep.mubr.bf16.mxu0 0
  %735 = vmatmul.mubr.bf16.gmra.mrb[0].mxu0 %v464
  %v736 = vpop.f32.mrb[0].mxu0
  %v737 = vadd.f32 %v433, %v736
  %v738 = vpop.f32.mrb[0].mxu0
  %v739 = vadd.f32 %v435, %v738
  %v740 = vpop.f32.mrb[0].mxu0
  %v741 = vadd.f32 %v437, %v740
  %v742 = vpop.f32.mrb[0].mxu0
  %v743 = vadd.f32 %v439, %v742
  %744 = vmatprep.mubr.bf16.mxu0 0
  %745 = vmatmul.mubr.bf16.gmra.mrb[0].mxu0 %v465
  %v746 = vpop.f32.mrb[0].mxu0
  %v747 = vadd.f32 %v443, %v746
  %v748 = vpop.f32.mrb[0].mxu0
  %v749 = vadd.f32 %v445, %v748
  %v750 = vpop.f32.mrb[0].mxu0
  %v751 = vadd.f32 %v447, %v750
  %v752 = vpop.f32.mrb[0].mxu0
  %v753 = vadd.f32 %v449, %v752
  %754 = vdwg.mxu0
  %v755 = vadd.f32 %v47, %v664
  %v756 = vadd.f32 %v48, %v666
  %v757 = vadd.f32 %v49, %v727
  %v758 = vadd.f32 %v50, %v729
  %v759 = vadd.f32 %v51, %v668
  %v760 = vadd.f32 %v52, %v670
  %v761 = vadd.f32 %v53, %v731
  %v762 = vadd.f32 %v54, %v733
  %v763 = vadd.f32 %v55, %v674
  %v764 = vadd.f32 %v56, %v676
  %v765 = vadd.f32 %v57, %v737
  %v766 = vadd.f32 %v58, %v739
  %v767 = vadd.f32 %v59, %v678
  %v768 = vadd.f32 %v60, %v680
  %v769 = vadd.f32 %v61, %v741
  %v770 = vadd.f32 %v62, %v743
  %v771 = vadd.f32 %v63, %v684
  %v772 = vadd.f32 %v64, %v686
  %v773 = vadd.f32 %v65, %v747
  %v774 = vadd.f32 %v66, %v749
  %v775 = vadd.f32 %v67, %v688
  %v776 = vadd.f32 %v68, %v690
  %v777 = vadd.f32 %v69, %v751
  %v778 = vadd.f32 %v70, %v753
  %779 = vst [vmem:[#allocation2] sm:$0xff] %v755
  %780 = vst [vmem:[#allocation2 + $0x8] sm:$0xff] %v756
  %781 = vst [vmem:[#allocation2 + $0x10] sm:$0xff] %v757
  %vm782 = vcmask 785408
  %783 = vst.msk [vmem:[#allocation2 + $0x18] sm:$0xff] %vm782, %v758
  %784 = vst [vmem:[#allocation2 + $0x20] sm:$0xff] %v759
  %785 = vst [vmem:[#allocation2 + $0x28] sm:$0xff] %v760
  %786 = vst [vmem:[#allocation2 + $0x30] sm:$0xff] %v761
  %787 = vst.msk [vmem:[#allocation2 + $0x38] sm:$0xff] %vm782, %v762
  %788 = vst [vmem:[#allocation2 + $0x40] sm:$0xff] %v763
  %789 = vst [vmem:[#allocation2 + $0x48] sm:$0xff] %v764
  %790 = vst [vmem:[#allocation2 + $0x50] sm:$0xff] %v765
  %791 = vst.msk [vmem:[#allocation2 + $0x58] sm:$0xff] %vm782, %v766
  %792 = vst [vmem:[#allocation2 + $0x60] sm:$0xff] %v767
  %793 = vst [vmem:[#allocation2 + $0x68] sm:$0xff] %v768
  %794 = vst [vmem:[#allocation2 + $0x70] sm:$0xff] %v769
  %795 = vst.msk [vmem:[#allocation2 + $0x78] sm:$0xff] %vm782, %v770
  %796 = vst [vmem:[#allocation2 + $0x80] sm:$0xff] %v771
  %797 = vst [vmem:[#allocation2 + $0x88] sm:$0xff] %v772
  %798 = vst [vmem:[#allocation2 + $0x90] sm:$0xff] %v773
  %799 = vst.msk [vmem:[#allocation2 + $0x98] sm:$0xff] %vm782, %v774
  %800 = vst [vmem:[#allocation2 + $0xa0] sm:$0xff] %v775
  %801 = vst [vmem:[#allocation2 + $0xa8] sm:$0xff] %v776
  %802 = vst [vmem:[#allocation2 + $0xb0] sm:$0xff] %v777
  %803 = vst.msk [vmem:[#allocation2 + $0xb8] sm:$0xff] %vm782, %v778
  // Predicated region
  $region22: #{rwkv_forward.26} parent=0 // pred_check
    %p804 = pneg %p18
  $region23: #{rwkv_forward.26} parent=0 // pred_check_branch
    %806 = sbr.rel (%p804) target = $region25
  $region24: #{rwkv_forward.26} parent=0 // pred_region
    %v807 = vld [vmem:[#allocation2] sm:$0xff]
    %v808 = vld [vmem:[#allocation2 + $0x8] sm:$0xff]
    %v809 = vld [vmem:[#allocation2 + $0x10] sm:$0xff]
    %v810 = vld [vmem:[#allocation2 + $0x18] sm:$0xff]
    %v811 = vld [vmem:[#allocation2 + $0x20] sm:$0xff]
    %v812 = vld [vmem:[#allocation2 + $0x28] sm:$0xff]
    %v813 = vld [vmem:[#allocation2 + $0x30] sm:$0xff]
    %v814 = vld [vmem:[#allocation2 + $0x38] sm:$0xff]
    %v815 = vld [vmem:[#allocation2 + $0x40] sm:$0xff]
    %v816 = vld [vmem:[#allocation2 + $0x48] sm:$0xff]
    %v817 = vld [vmem:[#allocation2 + $0x50] sm:$0xff]
    %v818 = vld [vmem:[#allocation2 + $0x58] sm:$0xff]
    %v819 = vld [vmem:[#allocation2 + $0x60] sm:$0xff]
    %v820 = vld [vmem:[#allocation2 + $0x68] sm:$0xff]
    %v821 = vld [vmem:[#allocation2 + $0x70] sm:$0xff]
    %v822 = vld [vmem:[#allocation2 + $0x78] sm:$0xff]
    %v823 = vld [vmem:[#allocation2 + $0x80] sm:$0xff]
    %v824 = vld [vmem:[#allocation2 + $0x88] sm:$0xff]
    %v825 = vld [vmem:[#allocation2 + $0x90] sm:$0xff]
    %v826 = vld [vmem:[#allocation2 + $0x98] sm:$0xff]
    %v827 = vld [vmem:[#allocation2 + $0xa0] sm:$0xff]
    %v828 = vld [vmem:[#allocation2 + $0xa8] sm:$0xff]
    %v829 = vld [vmem:[#allocation2 + $0xb0] sm:$0xff]
    %v830 = vld [vmem:[#allocation2 + $0xb8] sm:$0xff]
    %v831 = vpack.c.bf16 %v811, %v807
    %v832 = vpack.c.bf16 %v812, %v808
    %v833 = vpack.c.bf16 %v813, %v809
    %v834 = vpack.c.bf16 %v814, %v810
    %v835 = vpack.c.bf16 %v819, %v815
    %v836 = vpack.c.bf16 %v820, %v816
    %v837 = vpack.c.bf16 %v821, %v817
    %v838 = vpack.c.bf16 %v822, %v818
    %v839 = vpack.c.bf16 %v827, %v823
    %v840 = vpack.c.bf16 %v828, %v824
    %v841 = vpack.c.bf16 %v829, %v825
    %v842 = vpack.c.bf16 %v830, %v826
    %v855 = vunpack.c.l.b16 %v831
    %v856 = vunpack.c.l.b16 %v832
    %v857 = vunpack.c.l.b16 %v833
    %v858 = vunpack.c.l.b16 %v834
    %v859 = vunpack.c.h.b16 %v831
    %v860 = vunpack.c.h.b16 %v832
    %v861 = vunpack.c.h.b16 %v833
    %v862 = vunpack.c.h.b16 %v834
    %v863 = vunpack.c.l.b16 %v835
    %v864 = vunpack.c.l.b16 %v836
    %v865 = vunpack.c.l.b16 %v837
    %v866 = vunpack.c.l.b16 %v838
    %v867 = vunpack.c.h.b16 %v835
    %v868 = vunpack.c.h.b16 %v836
    %v869 = vunpack.c.h.b16 %v837
    %v870 = vunpack.c.h.b16 %v838
    %v871 = vunpack.c.l.b16 %v839
    %v872 = vunpack.c.l.b16 %v840
    %v873 = vunpack.c.l.b16 %v841
    %v874 = vunpack.c.l.b16 %v842
    %v875 = vunpack.c.h.b16 %v839
    %v876 = vunpack.c.h.b16 %v840
    %v877 = vunpack.c.h.b16 %v841
    %v878 = vunpack.c.h.b16 %v842
    %v879 = vpack.c.b16 %v856, %v855
    %v880 = vpack.c.b16 %v858, %v857
    %v881 = vpack.c.b16 %v860, %v859
    %v882 = vpack.c.b16 %v862, %v861
    %v883 = vpack.c.b16 %v864, %v863
    %v884 = vpack.c.b16 %v866, %v865
    %v885 = vpack.c.b16 %v868, %v867
    %v886 = vpack.c.b16 %v870, %v869
    %v887 = vpack.c.b16 %v872, %v871
    %v888 = vpack.c.b16 %v874, %v873
    %v889 = vpack.c.b16 %v876, %v875
    %v890 = vpack.c.b16 %v878, %v877
    %903 = vst [vmem:[%s4] sm:$0xff] %v879
    %vm904 = vcmask 1043456
    %vm905 = vcmask 785412
    %vm906 = vmor %vm905, %vm904
    %907 = vst.msk [vmem:[%s4 + $0x8] sm:$0xff] %vm906, %v880
    %908 = vst [vmem:[%s4 + $0x10] sm:$0xff] %v881
    %909 = vst.msk [vmem:[%s4 + $0x18] sm:$0xff] %vm906, %v882
    %910 = vst [vmem:[%s4 + $0x20] sm:$0xff] %v883
    %911 = vst.msk [vmem:[%s4 + $0x28] sm:$0xff] %vm906, %v884
    %912 = vst [vmem:[%s4 + $0x30] sm:$0xff] %v885
    %913 = vst.msk [vmem:[%s4 + $0x38] sm:$0xff] %vm906, %v886
    %914 = vst [vmem:[%s4 + $0x40] sm:$0xff] %v887
    %915 = vst.msk [vmem:[%s4 + $0x48] sm:$0xff] %vm906, %v888
    %916 = vst [vmem:[%s4 + $0x50] sm:$0xff] %v889
    %917 = vst.msk [vmem:[%s4 + $0x58] sm:$0xff] %vm906, %v890
  $region25: #{rwkv_forward.26} parent=0 // pred_fallthru
    _
  // Predicated region
  $region26: #{rwkv_forward.26} parent=0 // pred_check
    _
  $region27: #{rwkv_forward.26} parent=0 // pred_check_branch
    %919 = sbr.rel (0) target = $region29
  $region28: #{rwkv_forward.26} parent=0 // pred_region
    _
  $region29: #{rwkv_forward.26} parent=0 // pred_fallthru
    _
  // Predicated region
  $region30: #{rwkv_forward.26} parent=0 // pred_check
    _
  $region31: #{rwkv_forward.26} parent=0 // pred_check_branch
    %921 = sbr.rel (0) target = $region33
  $region32: #{rwkv_forward.26} parent=0 // pred_region
    _
  $region33: #{rwkv_forward.26} parent=0 // pred_fallthru
    _

// kernel: rwkv_forward.31
$region0: #{rwkv_forward.31}
  #allocation0 [shape = 'u32[]', space=smem, size = 0x4, offset = 0x4, fixed_abs, tag = 'smem constant byte address 0x4 - core index']
  #allocation1 [shape = 'u32[144,128]{1,0:T(1,128)}', space=vmem, size = 0x12000, scoped, tag = 'internal scratch']
  #allocation2 [shape = 'f32[48,128]{1,0:T(8,128)}', space=vmem, size = 0x6000, scoped, tag = 'scratch operand']
  %s0 = inlined_call_operand.vmem [shape: bf16[48,128], index: 0, kind: input, shape index: {}]
  %s1 = inlined_call_operand.vmem [shape: bf16[128,128], index: 1, kind: input, shape index: {}]
  %s2 = inlined_call_operand.vmem [shape: bf16[48,128], index: 2, kind: output, shape index: {}]
  %s3 = sld [smem:[#allocation0]]
  $region26: #{rwkv_forward.31} parent=0
    _
  %s5 = ssub.s32 1, %s3
  %s6 = scalar_select 0, %s5, %s3
  // Predicated region
  $region2: #{rwkv_forward.31} parent=0 // pred_check
    _
  $region3: #{rwkv_forward.31} parent=0 // pred_check_branch
    %8 = sbr.rel (0) target = $region5
  $region4: #{rwkv_forward.31} parent=0 // pred_region
    _
  $region5: #{rwkv_forward.31} parent=0 // pred_fallthru
    _
  // Predicated region
  $region6: #{rwkv_forward.31} parent=0 // pred_check
    _
  $region7: #{rwkv_forward.31} parent=0 // pred_check_branch
    %10 = sbr.rel (0) target = $region9
  $region8: #{rwkv_forward.31} parent=0 // pred_region
    _
  $region9: #{rwkv_forward.31} parent=0 // pred_fallthru
    _
  %p12 = scmp.eq.s32.totalorder 0, 0
  // Predicated region
  $region10: #{rwkv_forward.31} parent=0 // pred_check
    %p13 = pneg %p12
  $region11: #{rwkv_forward.31} parent=0 // pred_check_branch
    %15 = sbr.rel (%p13) target = $region13
  $region12: #{rwkv_forward.31} parent=0 // pred_region
    %16 = vst [vmem:[#allocation2] sm:$0xff] 0.0
    %17 = vst [vmem:[#allocation2 + $0x8] sm:$0xff] 0.0
    %18 = vst [vmem:[#allocation2 + $0x10] sm:$0xff] 0.0
    %19 = vst [vmem:[#allocation2 + $0x18] sm:$0xff] 0.0
    %20 = vst [vmem:[#allocation2 + $0x20] sm:$0xff] 0.0
    %21 = vst [vmem:[#allocation2 + $0x28] sm:$0xff] 0.0
  $region13: #{rwkv_forward.31} parent=0 // pred_fallthru
    _
  %v22 = vld [vmem:[#allocation2] sm:$0xff]
  %v23 = vld [vmem:[#allocation2 + $0x8] sm:$0xff]
  %v24 = vld [vmem:[#allocation2 + $0x10] sm:$0xff]
  %v25 = vld [vmem:[#allocation2 + $0x18] sm:$0xff]
  %v26 = vld [vmem:[#allocation2 + $0x20] sm:$0xff]
  %v27 = vld [vmem:[#allocation2 + $0x28] sm:$0xff]
  %v28 = vld [vmem:[%s0] sm:$0xf]
  %v29 = vld [vmem:[%s0 + $0x4] sm:$0xf]
  %v30 = vld [vmem:[%s0 + $0x8] sm:$0xf]
  %v31 = vld [vmem:[%s0 + $0xc] sm:$0xf]
  %v32 = vld [vmem:[%s0 + $0x10] sm:$0xf]
  %v33 = vld [vmem:[%s0 + $0x14] sm:$0xf]
  %v34 = vld [vmem:[%s1] sm:$0xf]
  %v35 = vld [vmem:[%s1 + $0x4] sm:$0xf]
  %v36 = vld [vmem:[%s1 + $0x8] sm:$0xf]
  %v37 = vld [vmem:[%s1 + $0xc] sm:$0xf]
  %v38 = vld [vmem:[%s1 + $0x10] sm:$0xf]
  %v39 = vld [vmem:[%s1 + $0x14] sm:$0xf]
  %v40 = vld [vmem:[%s1 + $0x18] sm:$0xf]
  %v41 = vld [vmem:[%s1 + $0x1c] sm:$0xf]
  %v42 = vld [vmem:[%s1 + $0x20] sm:$0xf]
  %v43 = vld [vmem:[%s1 + $0x24] sm:$0xf]
  %v44 = vld [vmem:[%s1 + $0x28] sm:$0xf]
  %v45 = vld [vmem:[%s1 + $0x2c] sm:$0xf]
  %v46 = vld [vmem:[%s1 + $0x30] sm:$0xf]
  %v47 = vld [vmem:[%s1 + $0x34] sm:$0xf]
  %v48 = vld [vmem:[%s1 + $0x38] sm:$0xf]
  %v49 = vld [vmem:[%s1 + $0x3c] sm:$0xf]
  %v56 = vunpack.c.l.b16 %v28
  %v57 = vunpack.c.l.b16 %v29
  %v58 = vunpack.c.l.b16 %v30
  %v59 = vunpack.c.l.b16 %v31
  %v60 = vunpack.c.l.b16 %v32
  %v61 = vunpack.c.l.b16 %v33
  %v62 = vpack.c.b16 %v57, %v56
  %v63 = vpack.c.b16 %v59, %v58
  %v64 = vpack.c.b16 %v61, %v60
  %v84 = vunpack.c.l.b16 %v34
  %v85 = vunpack.c.l.b16 %v35
  %v86 = vunpack.c.l.b16 %v36
  %v87 = vunpack.c.l.b16 %v37
  %v88 = vunpack.c.l.b16 %v38
  %v89 = vunpack.c.l.b16 %v39
  %v90 = vunpack.c.l.b16 %v40
  %v91 = vunpack.c.l.b16 %v41
  %v92 = vunpack.c.l.b16 %v42
  %v93 = vunpack.c.l.b16 %v43
  %v94 = vunpack.c.l.b16 %v44
  %v95 = vunpack.c.l.b16 %v45
  %v96 = vunpack.c.l.b16 %v46
  %v97 = vunpack.c.l.b16 %v47
  %v98 = vunpack.c.l.b16 %v48
  %v99 = vunpack.c.l.b16 %v49
  %v100 = vpack.c.b16 %v85, %v84
  %v101 = vpack.c.b16 %v87, %v86
  %v102 = vpack.c.b16 %v89, %v88
  %v103 = vpack.c.b16 %v91, %v90
  %v104 = vpack.c.b16 %v93, %v92
  %v105 = vpack.c.b16 %v95, %v94
  %v106 = vpack.c.b16 %v97, %v96
  %v107 = vpack.c.b16 %v99, %v98
  %116 = vmatprep.subr.bf16.mxu0 0
  %117 = vmatpush1.bf16.msra.mxu0 %v100
  %118 = vmatprep.subr.bf16.mxu0 0
  %119 = vmatpush1.bf16.msra.mxu0 %v101
  %120 = vmatprep.subr.bf16.mxu0 0
  %121 = vmatpush1.bf16.msra.mxu0 %v102
  %122 = vmatprep.subr.bf16.mxu0 0
  %123 = vmatpush1.bf16.msra.mxu0 %v103
  %124 = vmatprep.subr.bf16.mxu0 0
  %125 = vmatpush1.bf16.msra.mxu0 %v104
  %126 = vmatprep.subr.bf16.mxu0 0
  %127 = vmatpush1.bf16.msra.mxu0 %v105
  %128 = vmatprep.subr.bf16.mxu0 0
  %129 = vmatpush1.bf16.msra.mxu0 %v106
  %130 = vmatprep.subr.bf16.mxu0 0
  %131 = vmatpush1.bf16.msra.mxu0 %v107
  %132 = vmatprep.subr.bf16.mxu0 0
  %133 = vmatpush1.bf16.msra.mxu0 0
  %134 = vmatprep.subr.bf16.mxu0 0
  %135 = vmatpush1.bf16.msra.mxu0 0
  %136 = vmatprep.subr.bf16.mxu0 0
  %137 = vmatpush1.bf16.msra.mxu0 0
  %138 = vmatprep.subr.bf16.mxu0 0
  %139 = vmatpush1.bf16.msra.mxu0 0
  %140 = vmatprep.subr.bf16.mxu0 0
  %141 = vmatpush1.bf16.msra.mxu0 0
  %142 = vmatprep.subr.bf16.mxu0 0
  %143 = vmatpush1.bf16.msra.mxu0 0
  %144 = vmatprep.subr.bf16.mxu0 0
  %145 = vmatpush1.bf16.msra.mxu0 0
  %146 = vmatprep.subr.bf16.mxu0 0
  %147 = vmatpush1.bf16.msra.mxu0 0
  %148 = vmatprep.mubr.bf16.mxu0 0
  %149 = vmatmul.mubr.bf16.gmra.mrb[0].mxu0 %v62
  %v150 = vpop.f32.mrb[0].mxu0
  %v151 = vadd.f32 0.0, %v150
  %v152 = vpop.f32.mrb[0].mxu0
  %v153 = vpop.f32.mrb[0].mxu0
  %v154 = vadd.f32 0.0, %v153
  %v155 = vpop.f32.mrb[0].mxu0
  %156 = vmatprep.mubr.bf16.mxu0 0
  %157 = vmatmul.mubr.bf16.gmra.mrb[0].mxu0 %v63
  %v158 = vpop.f32.mrb[0].mxu0
  %v159 = vadd.f32 0.0, %v158
  %v160 = vpop.f32.mrb[0].mxu0
  %v161 = vpop.f32.mrb[0].mxu0
  %v162 = vadd.f32 0.0, %v161
  %v163 = vpop.f32.mrb[0].mxu0
  %164 = vmatprep.mubr.bf16.mxu0 0
  %165 = vmatmul.mubr.bf16.gmra.mrb[0].mxu0 %v64
  %v166 = vpop.f32.mrb[0].mxu0
  %v167 = vadd.f32 0.0, %v166
  %v168 = vpop.f32.mrb[0].mxu0
  %v169 = vpop.f32.mrb[0].mxu0
  %v170 = vadd.f32 0.0, %v169
  %v171 = vpop.f32.mrb[0].mxu0
  %172 = vdwg.mxu0
  %v173 = vadd.f32 %v22, %v151
  %v174 = vadd.f32 %v23, %v154
  %v175 = vadd.f32 %v24, %v159
  %v176 = vadd.f32 %v25, %v162
  %v177 = vadd.f32 %v26, %v167
  %v178 = vadd.f32 %v27, %v170
  %179 = vst [vmem:[#allocation2] sm:$0xff] %v173
  %180 = vst [vmem:[#allocation2 + $0x8] sm:$0xff] %v174
  %181 = vst [vmem:[#allocation2 + $0x10] sm:$0xff] %v175
  %182 = vst [vmem:[#allocation2 + $0x18] sm:$0xff] %v176
  %183 = vst [vmem:[#allocation2 + $0x20] sm:$0xff] %v177
  %184 = vst [vmem:[#allocation2 + $0x28] sm:$0xff] %v178
  // Predicated region
  $region14: #{rwkv_forward.31} parent=0 // pred_check
    %p185 = pneg %p12
  $region15: #{rwkv_forward.31} parent=0 // pred_check_branch
    %187 = sbr.rel (%p185) target = $region17
  $region16: #{rwkv_forward.31} parent=0 // pred_region
    %v188 = vld [vmem:[#allocation2] sm:$0xff]
    %v189 = vld [vmem:[#allocation2 + $0x8] sm:$0xff]
    %v190 = vld [vmem:[#allocation2 + $0x10] sm:$0xff]
    %v191 = vld [vmem:[#allocation2 + $0x18] sm:$0xff]
    %v192 = vld [vmem:[#allocation2 + $0x20] sm:$0xff]
    %v193 = vld [vmem:[#allocation2 + $0x28] sm:$0xff]
    %v194 = vpack.c.bf16 %v189, %v188
    %v195 = vpack.c.bf16 %v191, %v190
    %v196 = vpack.c.bf16 %v193, %v192
    %v200 = vunpack.c.l.b16 %v194
    %v201 = vunpack.c.h.b16 %v194
    %v202 = vunpack.c.l.b16 %v195
    %v203 = vunpack.c.h.b16 %v195
    %v204 = vunpack.c.l.b16 %v196
    %v205 = vunpack.c.h.b16 %v196
    %v206 = vpack.c.b16 %v200, %v200
    %v207 = vpack.c.b16 %v201, %v201
    %v208 = vpack.c.b16 %v202, %v202
    %v209 = vpack.c.b16 %v203, %v203
    %v210 = vpack.c.b16 %v204, %v204
    %v211 = vpack.c.b16 %v205, %v205
    %218 = vst [vmem:[%s2] sm:$0xf] %v206
    %219 = vst [vmem:[%s2 + $0x4] sm:$0xf] %v207
    %220 = vst [vmem:[%s2 + $0x8] sm:$0xf] %v208
    %221 = vst [vmem:[%s2 + $0xc] sm:$0xf] %v209
    %222 = vst [vmem:[%s2 + $0x10] sm:$0xf] %v210
    %223 = vst [vmem:[%s2 + $0x14] sm:$0xf] %v211
  $region17: #{rwkv_forward.31} parent=0 // pred_fallthru
    _
  // Predicated region
  $region18: #{rwkv_forward.31} parent=0 // pred_check
    _
  $region19: #{rwkv_forward.31} parent=0 // pred_check_branch
    %225 = sbr.rel (0) target = $region21
  $region20: #{rwkv_forward.31} parent=0 // pred_region
    _
  $region21: #{rwkv_forward.31} parent=0 // pred_fallthru
    _
  // Predicated region
  $region22: #{rwkv_forward.31} parent=0 // pred_check
    _
  $region23: #{rwkv_forward.31} parent=0 // pred_check_branch
    %227 = sbr.rel (0) target = $region25
  $region24: #{rwkv_forward.31} parent=0 // pred_region
    _
  $region25: #{rwkv_forward.31} parent=0 // pred_fallthru
    _

// kernel: rwkv_forward.33
$region0: #{rwkv_forward.33}
  #allocation0 [shape = 'u32[]', space=smem, size = 0x4, offset = 0x4, fixed_abs, tag = 'smem constant byte address 0x4 - core index']
  #allocation1 [shape = 'u32[144,128]{1,0:T(1,128)}', space=vmem, size = 0x12000, scoped, tag = 'internal scratch']
  #allocation2 [shape = 'f32[48,512]{1,0:T(8,128)}', space=vmem, size = 0x18000, scoped, tag = 'scratch operand']
  %s0 = inlined_call_operand.vmem [shape: bf16[48,128], index: 0, kind: input, shape index: {}]
  %s1 = inlined_call_operand.vmem [shape: bf16[48,128], index: 1, kind: input, shape index: {}]
  %s2 = inlined_call_operand.vmem [shape: bf16[128,512], index: 2, kind: input, shape index: {}]
  %s3 = inlined_call_operand.vmem [shape: bf16[128,512], index: 3, kind: input, shape index: {}]
  %s4 = inlined_call_operand.vmem [shape: bf16[48,512], index: 4, kind: output, shape index: {}]
  %s5 = sld [smem:[#allocation0]]
  $region34: #{rwkv_forward.33} parent=0
    _
  %s7 = ssub.s32 1, %s5
  %s8 = scalar_select 0, %s7, %s5
  // Predicated region
  $region2: #{rwkv_forward.33} parent=0 // pred_check
    _
  $region3: #{rwkv_forward.33} parent=0 // pred_check_branch
    %10 = sbr.rel (0) target = $region5
  $region4: #{rwkv_forward.33} parent=0 // pred_region
    _
  $region5: #{rwkv_forward.33} parent=0 // pred_fallthru
    _
  // Predicated region
  $region6: #{rwkv_forward.33} parent=0 // pred_check
    _
  $region7: #{rwkv_forward.33} parent=0 // pred_check_branch
    %12 = sbr.rel (0) target = $region9
  $region8: #{rwkv_forward.33} parent=0 // pred_region
    _
  $region9: #{rwkv_forward.33} parent=0 // pred_fallthru
    _
  // Predicated region
  $region10: #{rwkv_forward.33} parent=0 // pred_check
    _
  $region11: #{rwkv_forward.33} parent=0 // pred_check_branch
    %14 = sbr.rel (0) target = $region13
  $region12: #{rwkv_forward.33} parent=0 // pred_region
    _
  $region13: #{rwkv_forward.33} parent=0 // pred_fallthru
    _
  // Predicated region
  $region14: #{rwkv_forward.33} parent=0 // pred_check
    _
  $region15: #{rwkv_forward.33} parent=0 // pred_check_branch
    %16 = sbr.rel (0) target = $region17
  $region16: #{rwkv_forward.33} parent=0 // pred_region
    _
  $region17: #{rwkv_forward.33} parent=0 // pred_fallthru
    _
  %p18 = scmp.eq.s32.totalorder 0, 0
  // Predicated region
  $region18: #{rwkv_forward.33} parent=0 // pred_check
    %p19 = pneg %p18
  $region19: #{rwkv_forward.33} parent=0 // pred_check_branch
    %21 = sbr.rel (%p19) target = $region21
  $region20: #{rwkv_forward.33} parent=0 // pred_region
    %22 = vst [vmem:[#allocation2] sm:$0xff] 0.0
    %23 = vst [vmem:[#allocation2 + $0x8] sm:$0xff] 0.0
    %24 = vst [vmem:[#allocation2 + $0x10] sm:$0xff] 0.0
    %25 = vst [vmem:[#allocation2 + $0x18] sm:$0xff] 0.0
    %26 = vst [vmem:[#allocation2 + $0x20] sm:$0xff] 0.0
    %27 = vst [vmem:[#allocation2 + $0x28] sm:$0xff] 0.0
    %28 = vst [vmem:[#allocation2 + $0x30] sm:$0xff] 0.0
    %29 = vst [vmem:[#allocation2 + $0x38] sm:$0xff] 0.0
    %30 = vst [vmem:[#allocation2 + $0x40] sm:$0xff] 0.0
    %31 = vst [vmem:[#allocation2 + $0x48] sm:$0xff] 0.0
    %32 = vst [vmem:[#allocation2 + $0x50] sm:$0xff] 0.0
    %33 = vst [vmem:[#allocation2 + $0x58] sm:$0xff] 0.0
    %34 = vst [vmem:[#allocation2 + $0x60] sm:$0xff] 0.0
    %35 = vst [vmem:[#allocation2 + $0x68] sm:$0xff] 0.0
    %36 = vst [vmem:[#allocation2 + $0x70] sm:$0xff] 0.0
    %37 = vst [vmem:[#allocation2 + $0x78] sm:$0xff] 0.0
    %38 = vst [vmem:[#allocation2 + $0x80] sm:$0xff] 0.0
    %39 = vst [vmem:[#allocation2 + $0x88] sm:$0xff] 0.0
    %40 = vst [vmem:[#allocation2 + $0x90] sm:$0xff] 0.0
    %41 = vst [vmem:[#allocation2 + $0x98] sm:$0xff] 0.0
    %42 = vst [vmem:[#allocation2 + $0xa0] sm:$0xff] 0.0
    %43 = vst [vmem:[#allocation2 + $0xa8] sm:$0xff] 0.0
    %44 = vst [vmem:[#allocation2 + $0xb0] sm:$0xff] 0.0
    %45 = vst [vmem:[#allocation2 + $0xb8] sm:$0xff] 0.0
  $region21: #{rwkv_forward.33} parent=0 // pred_fallthru
    _
  %v46 = vld [vmem:[#allocation2] sm:$0xff]
  %v47 = vld [vmem:[#allocation2 + $0x8] sm:$0xff]
  %v48 = vld [vmem:[#allocation2 + $0x10] sm:$0xff]
  %v49 = vld [vmem:[#allocation2 + $0x18] sm:$0xff]
  %v50 = vld [vmem:[#allocation2 + $0x20] sm:$0xff]
  %v51 = vld [vmem:[#allocation2 + $0x28] sm:$0xff]
  %v52 = vld [vmem:[#allocation2 + $0x30] sm:$0xff]
  %v53 = vld [vmem:[#allocation2 + $0x38] sm:$0xff]
  %v54 = vld [vmem:[#allocation2 + $0x40] sm:$0xff]
  %v55 = vld [vmem:[#allocation2 + $0x48] sm:$0xff]
  %v56 = vld [vmem:[#allocation2 + $0x50] sm:$0xff]
  %v57 = vld [vmem:[#allocation2 + $0x58] sm:$0xff]
  %v58 = vld [vmem:[#allocation2 + $0x60] sm:$0xff]
  %v59 = vld [vmem:[#allocation2 + $0x68] sm:$0xff]
  %v60 = vld [vmem:[#allocation2 + $0x70] sm:$0xff]
  %v61 = vld [vmem:[#allocation2 + $0x78] sm:$0xff]
  %v62 = vld [vmem:[#allocation2 + $0x80] sm:$0xff]
  %v63 = vld [vmem:[#allocation2 + $0x88] sm:$0xff]
  %v64 = vld [vmem:[#allocation2 + $0x90] sm:$0xff]
  %v65 = vld [vmem:[#allocation2 + $0x98] sm:$0xff]
  %v66 = vld [vmem:[#allocation2 + $0xa0] sm:$0xff]
  %v67 = vld [vmem:[#allocation2 + $0xa8] sm:$0xff]
  %v68 = vld [vmem:[#allocation2 + $0xb0] sm:$0xff]
  %v69 = vld [vmem:[#allocation2 + $0xb8] sm:$0xff]
  %v70 = vld [vmem:[%s0] sm:$0xf]
  %v71 = vld [vmem:[%s0 + $0x4] sm:$0xf]
  %v72 = vld [vmem:[%s0 + $0x8] sm:$0xf]
  %v73 = vld [vmem:[%s0 + $0xc] sm:$0xf]
  %v74 = vld [vmem:[%s0 + $0x10] sm:$0xf]
  %v75 = vld [vmem:[%s0 + $0x14] sm:$0xf]
  %v76 = vld [vmem:[%s2] sm:$0xff]
  %v77 = vld [vmem:[%s2 + $0x8] sm:$0xff]
  %v78 = vld [vmem:[%s2 + $0x10] sm:$0xff]
  %v79 = vld [vmem:[%s2 + $0x18] sm:$0xff]
  %v80 = vld [vmem:[%s2 + $0x20] sm:$0xff]
  %v81 = vld [vmem:[%s2 + $0x28] sm:$0xff]
  %v82 = vld [vmem:[%s2 + $0x30] sm:$0xff]
  %v83 = vld [vmem:[%s2 + $0x38] sm:$0xff]
  %v84 = vld [vmem:[%s2 + $0x40] sm:$0xff]
  %v85 = vld [vmem:[%s2 + $0x48] sm:$0xff]
  %v86 = vld [vmem:[%s2 + $0x50] sm:$0xff]
  %v87 = vld [vmem:[%s2 + $0x58] sm:$0xff]
  %v88 = vld [vmem:[%s2 + $0x60] sm:$0xff]
  %v89 = vld [vmem:[%s2 + $0x68] sm:$0xff]
  %v90 = vld [vmem:[%s2 + $0x70] sm:$0xff]
  %v91 = vld [vmem:[%s2 + $0x78] sm:$0xff]
  %v92 = vld [vmem:[%s2 + $0x80] sm:$0xff]
  %v93 = vld [vmem:[%s2 + $0x88] sm:$0xff]
  %v94 = vld [vmem:[%s2 + $0x90] sm:$0xff]
  %v95 = vld [vmem:[%s2 + $0x98] sm:$0xff]
  %v96 = vld [vmem:[%s2 + $0xa0] sm:$0xff]
  %v97 = vld [vmem:[%s2 + $0xa8] sm:$0xff]
  %v98 = vld [vmem:[%s2 + $0xb0] sm:$0xff]
  %v99 = vld [vmem:[%s2 + $0xb8] sm:$0xff]
  %v100 = vld [vmem:[%s2 + $0xc0] sm:$0xff]
  %v101 = vld [vmem:[%s2 + $0xc8] sm:$0xff]
  %v102 = vld [vmem:[%s2 + $0xd0] sm:$0xff]
  %v103 = vld [vmem:[%s2 + $0xd8] sm:$0xff]
  %v104 = vld [vmem:[%s2 + $0xe0] sm:$0xff]
  %v105 = vld [vmem:[%s2 + $0xe8] sm:$0xff]
  %v106 = vld [vmem:[%s2 + $0xf0] sm:$0xff]
  %v107 = vld [vmem:[%s2 + $0xf8] sm:$0xff]
  %v108 = vld [vmem:[%s1] sm:$0xf]
  %v109 = vld [vmem:[%s1 + $0x4] sm:$0xf]
  %v110 = vld [vmem:[%s1 + $0x8] sm:$0xf]
  %v111 = vld [vmem:[%s1 + $0xc] sm:$0xf]
  %v112 = vld [vmem:[%s1 + $0x10] sm:$0xf]
  %v113 = vld [vmem:[%s1 + $0x14] sm:$0xf]
  %v114 = vld [vmem:[%s3] sm:$0xff]
  %v115 = vld [vmem:[%s3 + $0x8] sm:$0xff]
  %v116 = vld [vmem:[%s3 + $0x10] sm:$0xff]
  %v117 = vld [vmem:[%s3 + $0x18] sm:$0xff]
  %v118 = vld [vmem:[%s3 + $0x20] sm:$0xff]
  %v119 = vld [vmem:[%s3 + $0x28] sm:$0xff]
  %v120 = vld [vmem:[%s3 + $0x30] sm:$0xff]
  %v121 = vld [vmem:[%s3 + $0x38] sm:$0xff]
  %v122 = vld [vmem:[%s3 + $0x40] sm:$0xff]
  %v123 = vld [vmem:[%s3 + $0x48] sm:$0xff]
  %v124 = vld [vmem:[%s3 + $0x50] sm:$0xff]
  %v125 = vld [vmem:[%s3 + $0x58] sm:$0xff]
  %v126 = vld [vmem:[%s3 + $0x60] sm:$0xff]
  %v127 = vld [vmem:[%s3 + $0x68] sm:$0xff]
  %v128 = vld [vmem:[%s3 + $0x70] sm:$0xff]
  %v129 = vld [vmem:[%s3 + $0x78] sm:$0xff]
  %v130 = vld [vmem:[%s3 + $0x80] sm:$0xff]
  %v131 = vld [vmem:[%s3 + $0x88] sm:$0xff]
  %v132 = vld [vmem:[%s3 + $0x90] sm:$0xff]
  %v133 = vld [vmem:[%s3 + $0x98] sm:$0xff]
  %v134 = vld [vmem:[%s3 + $0xa0] sm:$0xff]
  %v135 = vld [vmem:[%s3 + $0xa8] sm:$0xff]
  %v136 = vld [vmem:[%s3 + $0xb0] sm:$0xff]
  %v137 = vld [vmem:[%s3 + $0xb8] sm:$0xff]
  %v138 = vld [vmem:[%s3 + $0xc0] sm:$0xff]
  %v139 = vld [vmem:[%s3 + $0xc8] sm:$0xff]
  %v140 = vld [vmem:[%s3 + $0xd0] sm:$0xff]
  %v141 = vld [vmem:[%s3 + $0xd8] sm:$0xff]
  %v142 = vld [vmem:[%s3 + $0xe0] sm:$0xff]
  %v143 = vld [vmem:[%s3 + $0xe8] sm:$0xff]
  %v144 = vld [vmem:[%s3 + $0xf0] sm:$0xff]
  %v145 = vld [vmem:[%s3 + $0xf8] sm:$0xff]
  %v152 = vunpack.c.l.b16 %v108
  %v153 = vunpack.c.l.b16 %v109
  %v154 = vunpack.c.l.b16 %v110
  %v155 = vunpack.c.l.b16 %v111
  %v156 = vunpack.c.l.b16 %v112
  %v157 = vunpack.c.l.b16 %v113
  %v158 = vpack.c.b16 %v153, %v152
  %v159 = vpack.c.b16 %v155, %v154
  %v160 = vpack.c.b16 %v157, %v156
  %v196 = vunpack.c.l.b16 %v114
  %v197 = vunpack.c.h.b16 %v114
  %v198 = vunpack.c.l.b16 %v115
  %v199 = vunpack.c.h.b16 %v115
  %v200 = vunpack.c.l.b16 %v116
  %v201 = vunpack.c.h.b16 %v116
  %v202 = vunpack.c.l.b16 %v117
  %v203 = vunpack.c.h.b16 %v117
  %v204 = vunpack.c.l.b16 %v118
  %v205 = vunpack.c.h.b16 %v118
  %v206 = vunpack.c.l.b16 %v119
  %v207 = vunpack.c.h.b16 %v119
  %v208 = vunpack.c.l.b16 %v120
  %v209 = vunpack.c.h.b16 %v120
  %v210 = vunpack.c.l.b16 %v121
  %v211 = vunpack.c.h.b16 %v121
  %v212 = vunpack.c.l.b16 %v122
  %v213 = vunpack.c.h.b16 %v122
  %v214 = vunpack.c.l.b16 %v123
  %v215 = vunpack.c.h.b16 %v123
  %v216 = vunpack.c.l.b16 %v124
  %v217 = vunpack.c.h.b16 %v124
  %v218 = vunpack.c.l.b16 %v125
  %v219 = vunpack.c.h.b16 %v125
  %v220 = vunpack.c.l.b16 %v126
  %v221 = vunpack.c.h.b16 %v126
  %v222 = vunpack.c.l.b16 %v127
  %v223 = vunpack.c.h.b16 %v127
  %v224 = vunpack.c.l.b16 %v128
  %v225 = vunpack.c.h.b16 %v128
  %v226 = vunpack.c.l.b16 %v129
  %v227 = vunpack.c.h.b16 %v129
  %v228 = vunpack.c.l.b16 %v130
  %v229 = vunpack.c.h.b16 %v130
  %v230 = vunpack.c.l.b16 %v131
  %v231 = vunpack.c.h.b16 %v131
  %v232 = vunpack.c.l.b16 %v132
  %v233 = vunpack.c.h.b16 %v132
  %v234 = vunpack.c.l.b16 %v133
  %v235 = vunpack.c.h.b16 %v133
  %v236 = vunpack.c.l.b16 %v134
  %v237 = vunpack.c.h.b16 %v134
  %v238 = vunpack.c.l.b16 %v135
  %v239 = vunpack.c.h.b16 %v135
  %v240 = vunpack.c.l.b16 %v136
  %v241 = vunpack.c.h.b16 %v136
  %v242 = vunpack.c.l.b16 %v137
  %v243 = vunpack.c.h.b16 %v137
  %v244 = vunpack.c.l.b16 %v138
  %v245 = vunpack.c.h.b16 %v138
  %v246 = vunpack.c.l.b16 %v139
  %v247 = vunpack.c.h.b16 %v139
  %v248 = vunpack.c.l.b16 %v140
  %v249 = vunpack.c.h.b16 %v140
  %v250 = vunpack.c.l.b16 %v141
  %v251 = vunpack.c.h.b16 %v141
  %v252 = vunpack.c.l.b16 %v142
  %v253 = vunpack.c.h.b16 %v142
  %v254 = vunpack.c.l.b16 %v143
  %v255 = vunpack.c.h.b16 %v143
  %v256 = vunpack.c.l.b16 %v144
  %v257 = vunpack.c.h.b16 %v144
  %v258 = vunpack.c.l.b16 %v145
  %v259 = vunpack.c.h.b16 %v145
  %v260 = vpack.c.b16 %v200, %v196
  %v261 = vpack.c.b16 %v201, %v197
  %v262 = vpack.c.b16 %v202, %v198
  %v263 = vpack.c.b16 %v203, %v199
  %v264 = vpack.c.b16 %v208, %v204
  %v265 = vpack.c.b16 %v209, %v205
  %v266 = vpack.c.b16 %v210, %v206
  %v267 = vpack.c.b16 %v211, %v207
  %v268 = vpack.c.b16 %v216, %v212
  %v269 = vpack.c.b16 %v217, %v213
  %v270 = vpack.c.b16 %v218, %v214
  %v271 = vpack.c.b16 %v219, %v215
  %v272 = vpack.c.b16 %v224, %v220
  %v273 = vpack.c.b16 %v225, %v221
  %v274 = vpack.c.b16 %v226, %v222
  %v275 = vpack.c.b16 %v227, %v223
  %v276 = vpack.c.b16 %v232, %v228
  %v277 = vpack.c.b16 %v233, %v229
  %v278 = vpack.c.b16 %v234, %v230
  %v279 = vpack.c.b16 %v235, %v231
  %v280 = vpack.c.b16 %v240, %v236
  %v281 = vpack.c.b16 %v241, %v237
  %v282 = vpack.c.b16 %v242, %v238
  %v283 = vpack.c.b16 %v243, %v239
  %v284 = vpack.c.b16 %v248, %v244
  %v285 = vpack.c.b16 %v249, %v245
  %v286 = vpack.c.b16 %v250, %v246
  %v287 = vpack.c.b16 %v251, %v247
  %v288 = vpack.c.b16 %v256, %v252
  %v289 = vpack.c.b16 %v257, %v253
  %v290 = vpack.c.b16 %v258, %v254
  %v291 = vpack.c.b16 %v259, %v255
  %324 = vmatprep.subr.bf16.mxu0 %v261
  %325 = vmatpush1.bf16.msra.mxu0 %v260
  %326 = vmatprep.subr.bf16.mxu0 %v265
  %327 = vmatpush1.bf16.msra.mxu0 %v264
  %328 = vmatprep.subr.bf16.mxu0 %v269
  %329 = vmatpush1.bf16.msra.mxu0 %v268
  %330 = vmatprep.subr.bf16.mxu0 %v273
  %331 = vmatpush1.bf16.msra.mxu0 %v272
  %332 = vmatprep.subr.bf16.mxu0 %v277
  %333 = vmatpush1.bf16.msra.mxu0 %v276
  %334 = vmatprep.subr.bf16.mxu0 %v281
  %335 = vmatpush1.bf16.msra.mxu0 %v280
  %336 = vmatprep.subr.bf16.mxu0 %v285
  %337 = vmatpush1.bf16.msra.mxu0 %v284
  %338 = vmatprep.subr.bf16.mxu0 %v289
  %339 = vmatpush1.bf16.msra.mxu0 %v288
  %340 = vmatprep.subr.bf16.mxu0 0
  %341 = vmatpush1.bf16.msra.mxu0 0
  %342 = vmatprep.subr.bf16.mxu0 0
  %343 = vmatpush1.bf16.msra.mxu0 0
  %344 = vmatprep.subr.bf16.mxu0 0
  %345 = vmatpush1.bf16.msra.mxu0 0
  %346 = vmatprep.subr.bf16.mxu0 0
  %347 = vmatpush1.bf16.msra.mxu0 0
  %348 = vmatprep.subr.bf16.mxu0 0
  %349 = vmatpush1.bf16.msra.mxu0 0
  %350 = vmatprep.subr.bf16.mxu0 0
  %351 = vmatpush1.bf16.msra.mxu0 0
  %352 = vmatprep.subr.bf16.mxu0 0
  %353 = vmatpush1.bf16.msra.mxu0 0
  %354 = vmatprep.subr.bf16.mxu0 0
  %355 = vmatpush1.bf16.msra.mxu0 0
  %356 = vmatprep.mubr.bf16.mxu0 0
  %357 = vmatmul.mubr.bf16.gmra.mrb[0].mxu0 %v158
  %v358 = vpop.f32.mrb[0].mxu0
  %v359 = vadd.f32 0.0, %v358
  %v360 = vpop.f32.mrb[0].mxu0
  %v361 = vadd.f32 0.0, %v360
  %v362 = vpop.f32.mrb[0].mxu0
  %v363 = vadd.f32 0.0, %v362
  %v364 = vpop.f32.mrb[0].mxu0
  %v365 = vadd.f32 0.0, %v364
  %366 = vmatprep.mubr.bf16.mxu0 0
  %367 = vmatmul.mubr.bf16.gmra.mrb[0].mxu0 %v159
  %v368 = vpop.f32.mrb[0].mxu0
  %v369 = vadd.f32 0.0, %v368
  %v370 = vpop.f32.mrb[0].mxu0
  %v371 = vadd.f32 0.0, %v370
  %v372 = vpop.f32.mrb[0].mxu0
  %v373 = vadd.f32 0.0, %v372
  %v374 = vpop.f32.mrb[0].mxu0
  %v375 = vadd.f32 0.0, %v374
  %376 = vmatprep.mubr.bf16.mxu0 0
  %377 = vmatmul.mubr.bf16.gmra.mrb[0].mxu0 %v160
  %v378 = vpop.f32.mrb[0].mxu0
  %v379 = vadd.f32 0.0, %v378
  %v380 = vpop.f32.mrb[0].mxu0
  %v381 = vadd.f32 0.0, %v380
  %v382 = vpop.f32.mrb[0].mxu0
  %v383 = vadd.f32 0.0, %v382
  %v384 = vpop.f32.mrb[0].mxu0
  %v385 = vadd.f32 0.0, %v384
  %386 = vdwg.mxu0
  %387 = vmatprep.subr.bf16.mxu0 %v263
  %388 = vmatpush1.bf16.msra.mxu0 %v262
  %389 = vmatprep.subr.bf16.mxu0 %v267
  %390 = vmatpush1.bf16.msra.mxu0 %v266
  %391 = vmatprep.subr.bf16.mxu0 %v271
  %392 = vmatpush1.bf16.msra.mxu0 %v270
  %393 = vmatprep.subr.bf16.mxu0 %v275
  %394 = vmatpush1.bf16.msra.mxu0 %v274
  %395 = vmatprep.subr.bf16.mxu0 %v279
  %396 = vmatpush1.bf16.msra.mxu0 %v278
  %397 = vmatprep.subr.bf16.mxu0 %v283
  %398 = vmatpush1.bf16.msra.mxu0 %v282
  %399 = vmatprep.subr.bf16.mxu0 %v287
  %400 = vmatpush1.bf16.msra.mxu0 %v286
  %401 = vmatprep.subr.bf16.mxu0 %v291
  %402 = vmatpush1.bf16.msra.mxu0 %v290
  %403 = vmatprep.subr.bf16.mxu0 0
  %404 = vmatpush1.bf16.msra.mxu0 0
  %405 = vmatprep.subr.bf16.mxu0 0
  %406 = vmatpush1.bf16.msra.mxu0 0
  %407 = vmatprep.subr.bf16.mxu0 0
  %408 = vmatpush1.bf16.msra.mxu0 0
  %409 = vmatprep.subr.bf16.mxu0 0
  %410 = vmatpush1.bf16.msra.mxu0 0
  %411 = vmatprep.subr.bf16.mxu0 0
  %412 = vmatpush1.bf16.msra.mxu0 0
  %413 = vmatprep.subr.bf16.mxu0 0
  %414 = vmatpush1.bf16.msra.mxu0 0
  %415 = vmatprep.subr.bf16.mxu0 0
  %416 = vmatpush1.bf16.msra.mxu0 0
  %417 = vmatprep.subr.bf16.mxu0 0
  %418 = vmatpush1.bf16.msra.mxu0 0
  %419 = vmatprep.mubr.bf16.mxu0 0
  %420 = vmatmul.mubr.bf16.gmra.mrb[0].mxu0 %v158
  %v421 = vpop.f32.mrb[0].mxu0
  %v422 = vadd.f32 0.0, %v421
  %v423 = vpop.f32.mrb[0].mxu0
  %v424 = vadd.f32 0.0, %v423
  %v425 = vpop.f32.mrb[0].mxu0
  %v426 = vadd.f32 0.0, %v425
  %v427 = vpop.f32.mrb[0].mxu0
  %v428 = vadd.f32 0.0, %v427
  %429 = vmatprep.mubr.bf16.mxu0 0
  %430 = vmatmul.mubr.bf16.gmra.mrb[0].mxu0 %v159
  %v431 = vpop.f32.mrb[0].mxu0
  %v432 = vadd.f32 0.0, %v431
  %v433 = vpop.f32.mrb[0].mxu0
  %v434 = vadd.f32 0.0, %v433
  %v435 = vpop.f32.mrb[0].mxu0
  %v436 = vadd.f32 0.0, %v435
  %v437 = vpop.f32.mrb[0].mxu0
  %v438 = vadd.f32 0.0, %v437
  %439 = vmatprep.mubr.bf16.mxu0 0
  %440 = vmatmul.mubr.bf16.gmra.mrb[0].mxu0 %v160
  %v441 = vpop.f32.mrb[0].mxu0
  %v442 = vadd.f32 0.0, %v441
  %v443 = vpop.f32.mrb[0].mxu0
  %v444 = vadd.f32 0.0, %v443
  %v445 = vpop.f32.mrb[0].mxu0
  %v446 = vadd.f32 0.0, %v445
  %v447 = vpop.f32.mrb[0].mxu0
  %v448 = vadd.f32 0.0, %v447
  %449 = vdwg.mxu0
  %v456 = vunpack.c.l.b16 %v70
  %v457 = vunpack.c.l.b16 %v71
  %v458 = vunpack.c.l.b16 %v72
  %v459 = vunpack.c.l.b16 %v73
  %v460 = vunpack.c.l.b16 %v74
  %v461 = vunpack.c.l.b16 %v75
  %v462 = vpack.c.b16 %v457, %v456
  %v463 = vpack.c.b16 %v459, %v458
  %v464 = vpack.c.b16 %v461, %v460
  %v500 = vunpack.c.l.b16 %v76
  %v501 = vunpack.c.h.b16 %v76
  %v502 = vunpack.c.l.b16 %v77
  %v503 = vunpack.c.h.b16 %v77
  %v504 = vunpack.c.l.b16 %v78
  %v505 = vunpack.c.h.b16 %v78
  %v506 = vunpack.c.l.b16 %v79
  %v507 = vunpack.c.h.b16 %v79
  %v508 = vunpack.c.l.b16 %v80
  %v509 = vunpack.c.h.b16 %v80
  %v510 = vunpack.c.l.b16 %v81
  %v511 = vunpack.c.h.b16 %v81
  %v512 = vunpack.c.l.b16 %v82
  %v513 = vunpack.c.h.b16 %v82
  %v514 = vunpack.c.l.b16 %v83
  %v515 = vunpack.c.h.b16 %v83
  %v516 = vunpack.c.l.b16 %v84
  %v517 = vunpack.c.h.b16 %v84
  %v518 = vunpack.c.l.b16 %v85
  %v519 = vunpack.c.h.b16 %v85
  %v520 = vunpack.c.l.b16 %v86
  %v521 = vunpack.c.h.b16 %v86
  %v522 = vunpack.c.l.b16 %v87
  %v523 = vunpack.c.h.b16 %v87
  %v524 = vunpack.c.l.b16 %v88
  %v525 = vunpack.c.h.b16 %v88
  %v526 = vunpack.c.l.b16 %v89
  %v527 = vunpack.c.h.b16 %v89
  %v528 = vunpack.c.l.b16 %v90
  %v529 = vunpack.c.h.b16 %v90
  %v530 = vunpack.c.l.b16 %v91
  %v531 = vunpack.c.h.b16 %v91
  %v532 = vunpack.c.l.b16 %v92
  %v533 = vunpack.c.h.b16 %v92
  %v534 = vunpack.c.l.b16 %v93
  %v535 = vunpack.c.h.b16 %v93
  %v536 = vunpack.c.l.b16 %v94
  %v537 = vunpack.c.h.b16 %v94
  %v538 = vunpack.c.l.b16 %v95
  %v539 = vunpack.c.h.b16 %v95
  %v540 = vunpack.c.l.b16 %v96
  %v541 = vunpack.c.h.b16 %v96
  %v542 = vunpack.c.l.b16 %v97
  %v543 = vunpack.c.h.b16 %v97
  %v544 = vunpack.c.l.b16 %v98
  %v545 = vunpack.c.h.b16 %v98
  %v546 = vunpack.c.l.b16 %v99
  %v547 = vunpack.c.h.b16 %v99
  %v548 = vunpack.c.l.b16 %v100
  %v549 = vunpack.c.h.b16 %v100
  %v550 = vunpack.c.l.b16 %v101
  %v551 = vunpack.c.h.b16 %v101
  %v552 = vunpack.c.l.b16 %v102
  %v553 = vunpack.c.h.b16 %v102
  %v554 = vunpack.c.l.b16 %v103
  %v555 = vunpack.c.h.b16 %v103
  %v556 = vunpack.c.l.b16 %v104
  %v557 = vunpack.c.h.b16 %v104
  %v558 = vunpack.c.l.b16 %v105
  %v559 = vunpack.c.h.b16 %v105
  %v560 = vunpack.c.l.b16 %v106
  %v561 = vunpack.c.h.b16 %v106
  %v562 = vunpack.c.l.b16 %v107
  %v563 = vunpack.c.h.b16 %v107
  %v564 = vpack.c.b16 %v504, %v500
  %v565 = vpack.c.b16 %v505, %v501
  %v566 = vpack.c.b16 %v506, %v502
  %v567 = vpack.c.b16 %v507, %v503
  %v568 = vpack.c.b16 %v512, %v508
  %v569 = vpack.c.b16 %v513, %v509
  %v570 = vpack.c.b16 %v514, %v510
  %v571 = vpack.c.b16 %v515, %v511
  %v572 = vpack.c.b16 %v520, %v516
  %v573 = vpack.c.b16 %v521, %v517
  %v574 = vpack.c.b16 %v522, %v518
  %v575 = vpack.c.b16 %v523, %v519
  %v576 = vpack.c.b16 %v528, %v524
  %v577 = vpack.c.b16 %v529, %v525
  %v578 = vpack.c.b16 %v530, %v526
  %v579 = vpack.c.b16 %v531, %v527
  %v580 = vpack.c.b16 %v536, %v532
  %v581 = vpack.c.b16 %v537, %v533
  %v582 = vpack.c.b16 %v538, %v534
  %v583 = vpack.c.b16 %v539, %v535
  %v584 = vpack.c.b16 %v544, %v540
  %v585 = vpack.c.b16 %v545, %v541
  %v586 = vpack.c.b16 %v546, %v542
  %v587 = vpack.c.b16 %v547, %v543
  %v588 = vpack.c.b16 %v552, %v548
  %v589 = vpack.c.b16 %v553, %v549
  %v590 = vpack.c.b16 %v554, %v550
  %v591 = vpack.c.b16 %v555, %v551
  %v592 = vpack.c.b16 %v560, %v556
  %v593 = vpack.c.b16 %v561, %v557
  %v594 = vpack.c.b16 %v562, %v558
  %v595 = vpack.c.b16 %v563, %v559
  %628 = vmatprep.subr.bf16.mxu0 %v565
  %629 = vmatpush1.bf16.msra.mxu0 %v564
  %630 = vmatprep.subr.bf16.mxu0 %v569
  %631 = vmatpush1.bf16.msra.mxu0 %v568
  %632 = vmatprep.subr.bf16.mxu0 %v573
  %633 = vmatpush1.bf16.msra.mxu0 %v572
  %634 = vmatprep.subr.bf16.mxu0 %v577
  %635 = vmatpush1.bf16.msra.mxu0 %v576
  %636 = vmatprep.subr.bf16.mxu0 %v581
  %637 = vmatpush1.bf16.msra.mxu0 %v580
  %638 = vmatprep.subr.bf16.mxu0 %v585
  %639 = vmatpush1.bf16.msra.mxu0 %v584
  %640 = vmatprep.subr.bf16.mxu0 %v589
  %641 = vmatpush1.bf16.msra.mxu0 %v588
  %642 = vmatprep.subr.bf16.mxu0 %v593
  %643 = vmatpush1.bf16.msra.mxu0 %v592
  %644 = vmatprep.subr.bf16.mxu0 0
  %645 = vmatpush1.bf16.msra.mxu0 0
  %646 = vmatprep.subr.bf16.mxu0 0
  %647 = vmatpush1.bf16.msra.mxu0 0
  %648 = vmatprep.subr.bf16.mxu0 0
  %649 = vmatpush1.bf16.msra.mxu0 0
  %650 = vmatprep.subr.bf16.mxu0 0
  %651 = vmatpush1.bf16.msra.mxu0 0
  %652 = vmatprep.subr.bf16.mxu0 0
  %653 = vmatpush1.bf16.msra.mxu0 0
  %654 = vmatprep.subr.bf16.mxu0 0
  %655 = vmatpush1.bf16.msra.mxu0 0
  %656 = vmatprep.subr.bf16.mxu0 0
  %657 = vmatpush1.bf16.msra.mxu0 0
  %658 = vmatprep.subr.bf16.mxu0 0
  %659 = vmatpush1.bf16.msra.mxu0 0
  %660 = vmatprep.mubr.bf16.mxu0 0
  %661 = vmatmul.mubr.bf16.gmra.mrb[0].mxu0 %v462
  %v662 = vpop.f32.mrb[0].mxu0
  %v663 = vadd.f32 %v359, %v662
  %v664 = vpop.f32.mrb[0].mxu0
  %v665 = vadd.f32 %v361, %v664
  %v666 = vpop.f32.mrb[0].mxu0
  %v667 = vadd.f32 %v363, %v666
  %v668 = vpop.f32.mrb[0].mxu0
  %v669 = vadd.f32 %v365, %v668
  %670 = vmatprep.mubr.bf16.mxu0 0
  %671 = vmatmul.mubr.bf16.gmra.mrb[0].mxu0 %v463
  %v672 = vpop.f32.mrb[0].mxu0
  %v673 = vadd.f32 %v369, %v672
  %v674 = vpop.f32.mrb[0].mxu0
  %v675 = vadd.f32 %v371, %v674
  %v676 = vpop.f32.mrb[0].mxu0
  %v677 = vadd.f32 %v373, %v676
  %v678 = vpop.f32.mrb[0].mxu0
  %v679 = vadd.f32 %v375, %v678
  %680 = vmatprep.mubr.bf16.mxu0 0
  %681 = vmatmul.mubr.bf16.gmra.mrb[0].mxu0 %v464
  %v682 = vpop.f32.mrb[0].mxu0
  %v683 = vadd.f32 %v379, %v682
  %v684 = vpop.f32.mrb[0].mxu0
  %v685 = vadd.f32 %v381, %v684
  %v686 = vpop.f32.mrb[0].mxu0
  %v687 = vadd.f32 %v383, %v686
  %v688 = vpop.f32.mrb[0].mxu0
  %v689 = vadd.f32 %v385, %v688
  %690 = vdwg.mxu0
  %691 = vmatprep.subr.bf16.mxu0 %v567
  %692 = vmatpush1.bf16.msra.mxu0 %v566
  %693 = vmatprep.subr.bf16.mxu0 %v571
  %694 = vmatpush1.bf16.msra.mxu0 %v570
  %695 = vmatprep.subr.bf16.mxu0 %v575
  %696 = vmatpush1.bf16.msra.mxu0 %v574
  %697 = vmatprep.subr.bf16.mxu0 %v579
  %698 = vmatpush1.bf16.msra.mxu0 %v578
  %699 = vmatprep.subr.bf16.mxu0 %v583
  %700 = vmatpush1.bf16.msra.mxu0 %v582
  %701 = vmatprep.subr.bf16.mxu0 %v587
  %702 = vmatpush1.bf16.msra.mxu0 %v586
  %703 = vmatprep.subr.bf16.mxu0 %v591
  %704 = vmatpush1.bf16.msra.mxu0 %v590
  %705 = vmatprep.subr.bf16.mxu0 %v595
  %706 = vmatpush1.bf16.msra.mxu0 %v594
  %707 = vmatprep.subr.bf16.mxu0 0
  %708 = vmatpush1.bf16.msra.mxu0 0
  %709 = vmatprep.subr.bf16.mxu0 0
  %710 = vmatpush1.bf16.msra.mxu0 0
  %711 = vmatprep.subr.bf16.mxu0 0
  %712 = vmatpush1.bf16.msra.mxu0 0
  %713 = vmatprep.subr.bf16.mxu0 0
  %714 = vmatpush1.bf16.msra.mxu0 0
  %715 = vmatprep.subr.bf16.mxu0 0
  %716 = vmatpush1.bf16.msra.mxu0 0
  %717 = vmatprep.subr.bf16.mxu0 0
  %718 = vmatpush1.bf16.msra.mxu0 0
  %719 = vmatprep.subr.bf16.mxu0 0
  %720 = vmatpush1.bf16.msra.mxu0 0
  %721 = vmatprep.subr.bf16.mxu0 0
  %722 = vmatpush1.bf16.msra.mxu0 0
  %723 = vmatprep.mubr.bf16.mxu0 0
  %724 = vmatmul.mubr.bf16.gmra.mrb[0].mxu0 %v462
  %v725 = vpop.f32.mrb[0].mxu0
  %v726 = vadd.f32 %v422, %v725
  %v727 = vpop.f32.mrb[0].mxu0
  %v728 = vadd.f32 %v424, %v727
  %v729 = vpop.f32.mrb[0].mxu0
  %v730 = vadd.f32 %v426, %v729
  %v731 = vpop.f32.mrb[0].mxu0
  %v732 = vadd.f32 %v428, %v731
  %733 = vmatprep.mubr.bf16.mxu0 0
  %734 = vmatmul.mubr.bf16.gmra.mrb[0].mxu0 %v463
  %v735 = vpop.f32.mrb[0].mxu0
  %v736 = vadd.f32 %v432, %v735
  %v737 = vpop.f32.mrb[0].mxu0
  %v738 = vadd.f32 %v434, %v737
  %v739 = vpop.f32.mrb[0].mxu0
  %v740 = vadd.f32 %v436, %v739
  %v741 = vpop.f32.mrb[0].mxu0
  %v742 = vadd.f32 %v438, %v741
  %743 = vmatprep.mubr.bf16.mxu0 0
  %744 = vmatmul.mubr.bf16.gmra.mrb[0].mxu0 %v464
  %v745 = vpop.f32.mrb[0].mxu0
  %v746 = vadd.f32 %v442, %v745
  %v747 = vpop.f32.mrb[0].mxu0
  %v748 = vadd.f32 %v444, %v747
  %v749 = vpop.f32.mrb[0].mxu0
  %v750 = vadd.f32 %v446, %v749
  %v751 = vpop.f32.mrb[0].mxu0
  %v752 = vadd.f32 %v448, %v751
  %753 = vdwg.mxu0
  %v754 = vadd.f32 %v46, %v663
  %v755 = vadd.f32 %v47, %v665
  %v756 = vadd.f32 %v48, %v726
  %v757 = vadd.f32 %v49, %v728
  %v758 = vadd.f32 %v50, %v667
  %v759 = vadd.f32 %v51, %v669
  %v760 = vadd.f32 %v52, %v730
  %v761 = vadd.f32 %v53, %v732
  %v762 = vadd.f32 %v54, %v673
  %v763 = vadd.f32 %v55, %v675
  %v764 = vadd.f32 %v56, %v736
  %v765 = vadd.f32 %v57, %v738
  %v766 = vadd.f32 %v58, %v677
  %v767 = vadd.f32 %v59, %v679
  %v768 = vadd.f32 %v60, %v740
  %v769 = vadd.f32 %v61, %v742
  %v770 = vadd.f32 %v62, %v683
  %v771 = vadd.f32 %v63, %v685
  %v772 = vadd.f32 %v64, %v746
  %v773 = vadd.f32 %v65, %v748
  %v774 = vadd.f32 %v66, %v687
  %v775 = vadd.f32 %v67, %v689
  %v776 = vadd.f32 %v68, %v750
  %v777 = vadd.f32 %v69, %v752
  %778 = vst [vmem:[#allocation2] sm:$0xff] %v754
  %779 = vst [vmem:[#allocation2 + $0x8] sm:$0xff] %v755
  %780 = vst [vmem:[#allocation2 + $0x10] sm:$0xff] %v756
  %781 = vst [vmem:[#allocation2 + $0x18] sm:$0xff] %v757
  %782 = vst [vmem:[#allocation2 + $0x20] sm:$0xff] %v758
  %783 = vst [vmem:[#allocation2 + $0x28] sm:$0xff] %v759
  %784 = vst [vmem:[#allocation2 + $0x30] sm:$0xff] %v760
  %785 = vst [vmem:[#allocation2 + $0x38] sm:$0xff] %v761
  %786 = vst [vmem:[#allocation2 + $0x40] sm:$0xff] %v762
  %787 = vst [vmem:[#allocation2 + $0x48] sm:$0xff] %v763
  %788 = vst [vmem:[#allocation2 + $0x50] sm:$0xff] %v764
  %789 = vst [vmem:[#allocation2 + $0x58] sm:$0xff] %v765
  %790 = vst [vmem:[#allocation2 + $0x60] sm:$0xff] %v766
  %791 = vst [vmem:[#allocation2 + $0x68] sm:$0xff] %v767
  %792 = vst [vmem:[#allocation2 + $0x70] sm:$0xff] %v768
  %793 = vst [vmem:[#allocation2 + $0x78] sm:$0xff] %v769
  %794 = vst [vmem:[#allocation2 + $0x80] sm:$0xff] %v770
  %795 = vst [vmem:[#allocation2 + $0x88] sm:$0xff] %v771
  %796 = vst [vmem:[#allocation2 + $0x90] sm:$0xff] %v772
  %797 = vst [vmem:[#allocation2 + $0x98] sm:$0xff] %v773
  %798 = vst [vmem:[#allocation2 + $0xa0] sm:$0xff] %v774
  %799 = vst [vmem:[#allocation2 + $0xa8] sm:$0xff] %v775
  %800 = vst [vmem:[#allocation2 + $0xb0] sm:$0xff] %v776
  %801 = vst [vmem:[#allocation2 + $0xb8] sm:$0xff] %v777
  // Predicated region
  $region22: #{rwkv_forward.33} parent=0 // pred_check
    %p802 = pneg %p18
  $region23: #{rwkv_forward.33} parent=0 // pred_check_branch
    %804 = sbr.rel (%p802) target = $region25
  $region24: #{rwkv_forward.33} parent=0 // pred_region
    %v805 = vld [vmem:[#allocation2] sm:$0xff]
    %v806 = vld [vmem:[#allocation2 + $0x8] sm:$0xff]
    %v807 = vld [vmem:[#allocation2 + $0x10] sm:$0xff]
    %v808 = vld [vmem:[#allocation2 + $0x18] sm:$0xff]
    %v809 = vld [vmem:[#allocation2 + $0x20] sm:$0xff]
    %v810 = vld [vmem:[#allocation2 + $0x28] sm:$0xff]
    %v811 = vld [vmem:[#allocation2 + $0x30] sm:$0xff]
    %v812 = vld [vmem:[#allocation2 + $0x38] sm:$0xff]
    %v813 = vld [vmem:[#allocation2 + $0x40] sm:$0xff]
    %v814 = vld [vmem:[#allocation2 + $0x48] sm:$0xff]
    %v815 = vld [vmem:[#allocation2 + $0x50] sm:$0xff]
    %v816 = vld [vmem:[#allocation2 + $0x58] sm:$0xff]
    %v817 = vld [vmem:[#allocation2 + $0x60] sm:$0xff]
    %v818 = vld [vmem:[#allocation2 + $0x68] sm:$0xff]
    %v819 = vld [vmem:[#allocation2 + $0x70] sm:$0xff]
    %v820 = vld [vmem:[#allocation2 + $0x78] sm:$0xff]
    %v821 = vld [vmem:[#allocation2 + $0x80] sm:$0xff]
    %v822 = vld [vmem:[#allocation2 + $0x88] sm:$0xff]
    %v823 = vld [vmem:[#allocation2 + $0x90] sm:$0xff]
    %v824 = vld [vmem:[#allocation2 + $0x98] sm:$0xff]
    %v825 = vld [vmem:[#allocation2 + $0xa0] sm:$0xff]
    %v826 = vld [vmem:[#allocation2 + $0xa8] sm:$0xff]
    %v827 = vld [vmem:[#allocation2 + $0xb0] sm:$0xff]
    %v828 = vld [vmem:[#allocation2 + $0xb8] sm:$0xff]
    %v829 = vmax.f32 %v805, 0.0
    %v830 = vmax.f32 %v806, 0.0
    %v831 = vmax.f32 %v807, 0.0
    %v832 = vmax.f32 %v808, 0.0
    %v833 = vmax.f32 %v809, 0.0
    %v834 = vmax.f32 %v810, 0.0
    %v835 = vmax.f32 %v811, 0.0
    %v836 = vmax.f32 %v812, 0.0
    %v837 = vmax.f32 %v813, 0.0
    %v838 = vmax.f32 %v814, 0.0
    %v839 = vmax.f32 %v815, 0.0
    %v840 = vmax.f32 %v816, 0.0
    %v841 = vmax.f32 %v817, 0.0
    %v842 = vmax.f32 %v818, 0.0
    %v843 = vmax.f32 %v819, 0.0
    %v844 = vmax.f32 %v820, 0.0
    %v845 = vmax.f32 %v821, 0.0
    %v846 = vmax.f32 %v822, 0.0
    %v847 = vmax.f32 %v823, 0.0
    %v848 = vmax.f32 %v824, 0.0
    %v849 = vmax.f32 %v825, 0.0
    %v850 = vmax.f32 %v826, 0.0
    %v851 = vmax.f32 %v827, 0.0
    %v852 = vmax.f32 %v828, 0.0
    %v853 = vmul.f32 %v829, %v829
    %v854 = vmul.f32 %v830, %v830
    %v855 = vmul.f32 %v831, %v831
    %v856 = vmul.f32 %v832, %v832
    %v857 = vmul.f32 %v833, %v833
    %v858 = vmul.f32 %v834, %v834
    %v859 = vmul.f32 %v835, %v835
    %v860 = vmul.f32 %v836, %v836
    %v861 = vmul.f32 %v837, %v837
    %v862 = vmul.f32 %v838, %v838
    %v863 = vmul.f32 %v839, %v839
    %v864 = vmul.f32 %v840, %v840
    %v865 = vmul.f32 %v841, %v841
    %v866 = vmul.f32 %v842, %v842
    %v867 = vmul.f32 %v843, %v843
    %v868 = vmul.f32 %v844, %v844
    %v869 = vmul.f32 %v845, %v845
    %v870 = vmul.f32 %v846, %v846
    %v871 = vmul.f32 %v847, %v847
    %v872 = vmul.f32 %v848, %v848
    %v873 = vmul.f32 %v849, %v849
    %v874 = vmul.f32 %v850, %v850
    %v875 = vmul.f32 %v851, %v851
    %v876 = vmul.f32 %v852, %v852
    %v877 = vpack.c.bf16 %v857, %v853
    %v878 = vpack.c.bf16 %v858, %v854
    %v879 = vpack.c.bf16 %v859, %v855
    %v880 = vpack.c.bf16 %v860, %v856
    %v881 = vpack.c.bf16 %v865, %v861
    %v882 = vpack.c.bf16 %v866, %v862
    %v883 = vpack.c.bf16 %v867, %v863
    %v884 = vpack.c.bf16 %v868, %v864
    %v885 = vpack.c.bf16 %v873, %v869
    %v886 = vpack.c.bf16 %v874, %v870
    %v887 = vpack.c.bf16 %v875, %v871
    %v888 = vpack.c.bf16 %v876, %v872
    %v901 = vunpack.c.l.b16 %v877
    %v902 = vunpack.c.l.b16 %v878
    %v903 = vunpack.c.l.b16 %v879
    %v904 = vunpack.c.l.b16 %v880
    %v905 = vunpack.c.h.b16 %v877
    %v906 = vunpack.c.h.b16 %v878
    %v907 = vunpack.c.h.b16 %v879
    %v908 = vunpack.c.h.b16 %v880
    %v909 = vunpack.c.l.b16 %v881
    %v910 = vunpack.c.l.b16 %v882
    %v911 = vunpack.c.l.b16 %v883
    %v912 = vunpack.c.l.b16 %v884
    %v913 = vunpack.c.h.b16 %v881
    %v914 = vunpack.c.h.b16 %v882
    %v915 = vunpack.c.h.b16 %v883
    %v916 = vunpack.c.h.b16 %v884
    %v917 = vunpack.c.l.b16 %v885
    %v918 = vunpack.c.l.b16 %v886
    %v919 = vunpack.c.l.b16 %v887
    %v920 = vunpack.c.l.b16 %v888
    %v921 = vunpack.c.h.b16 %v885
    %v922 = vunpack.c.h.b16 %v886
    %v923 = vunpack.c.h.b16 %v887
    %v924 = vunpack.c.h.b16 %v888
    %v925 = vpack.c.b16 %v902, %v901
    %v926 = vpack.c.b16 %v904, %v903
    %v927 = vpack.c.b16 %v906, %v905
    %v928 = vpack.c.b16 %v908, %v907
    %v929 = vpack.c.b16 %v910, %v909
    %v930 = vpack.c.b16 %v912, %v911
    %v931 = vpack.c.b16 %v914, %v913
    %v932 = vpack.c.b16 %v916, %v915
    %v933 = vpack.c.b16 %v918, %v917
    %v934 = vpack.c.b16 %v920, %v919
    %v935 = vpack.c.b16 %v922, %v921
    %v936 = vpack.c.b16 %v924, %v923
    %949 = vst [vmem:[%s4] sm:$0xff] %v925
    %950 = vst [vmem:[%s4 + $0x8] sm:$0xff] %v926
    %951 = vst [vmem:[%s4 + $0x10] sm:$0xff] %v927
    %952 = vst [vmem:[%s4 + $0x18] sm:$0xff] %v928
    %953 = vst [vmem:[%s4 + $0x20] sm:$0xff] %v929
    %954 = vst [vmem:[%s4 + $0x28] sm:$0xff] %v930
    %955 = vst [vmem:[%s4 + $0x30] sm:$0xff] %v931
    %956 = vst [vmem:[%s4 + $0x38] sm:$0xff] %v932
    %957 = vst [vmem:[%s4 + $0x40] sm:$0xff] %v933
    %958 = vst [vmem:[%s4 + $0x48] sm:$0xff] %v934
    %959 = vst [vmem:[%s4 + $0x50] sm:$0xff] %v935
    %960 = vst [vmem:[%s4 + $0x58] sm:$0xff] %v936
  $region25: #{rwkv_forward.33} parent=0 // pred_fallthru
    _
  // Predicated region
  $region26: #{rwkv_forward.33} parent=0 // pred_check
    _
  $region27: #{rwkv_forward.33} parent=0 // pred_check_branch
    %962 = sbr.rel (0) target = $region29
  $region28: #{rwkv_forward.33} parent=0 // pred_region
    _
  $region29: #{rwkv_forward.33} parent=0 // pred_fallthru
    _
  // Predicated region
  $region30: #{rwkv_forward.33} parent=0 // pred_check
    _
  $region31: #{rwkv_forward.33} parent=0 // pred_check_branch
    %964 = sbr.rel (0) target = $region33
  $region32: #{rwkv_forward.33} parent=0 // pred_region
    _
  $region33: #{rwkv_forward.33} parent=0 // pred_fallthru
    _

// kernel: rwkv_forward.34
$region0: #{rwkv_forward.34}
  #allocation0 [shape = 'u32[]', space=smem, size = 0x4, offset = 0x4, fixed_abs, tag = 'smem constant byte address 0x4 - core index']
  #allocation1 [shape = 'u32[144,128]{1,0:T(1,128)}', space=vmem, size = 0x12000, scoped, tag = 'internal scratch']
  #allocation2 [shape = 'f32[48,128]{1,0:T(8,128)}', space=vmem, size = 0x6000, scoped, tag = 'scratch operand']
  %s0 = inlined_call_operand.vmem [shape: bf16[48,512], index: 0, kind: input, shape index: {}]
  %s1 = inlined_call_operand.vmem [shape: bf16[512,128], index: 1, kind: input, shape index: {}]
  %s2 = inlined_call_operand.vmem [shape: bf16[48,128], index: 2, kind: output, shape index: {}]
  %s3 = sld [smem:[#allocation0]]
  $region26: #{rwkv_forward.34} parent=0
    _
  %s5 = ssub.s32 1, %s3
  %s6 = scalar_select 0, %s5, %s3
  // Predicated region
  $region2: #{rwkv_forward.34} parent=0 // pred_check
    _
  $region3: #{rwkv_forward.34} parent=0 // pred_check_branch
    %8 = sbr.rel (0) target = $region5
  $region4: #{rwkv_forward.34} parent=0 // pred_region
    _
  $region5: #{rwkv_forward.34} parent=0 // pred_fallthru
    _
  // Predicated region
  $region6: #{rwkv_forward.34} parent=0 // pred_check
    _
  $region7: #{rwkv_forward.34} parent=0 // pred_check_branch
    %10 = sbr.rel (0) target = $region9
  $region8: #{rwkv_forward.34} parent=0 // pred_region
    _
  $region9: #{rwkv_forward.34} parent=0 // pred_fallthru
    _
  %p12 = scmp.eq.s32.totalorder 0, 0
  // Predicated region
  $region10: #{rwkv_forward.34} parent=0 // pred_check
    %p13 = pneg %p12
  $region11: #{rwkv_forward.34} parent=0 // pred_check_branch
    %15 = sbr.rel (%p13) target = $region13
  $region12: #{rwkv_forward.34} parent=0 // pred_region
    %16 = vst [vmem:[#allocation2] sm:$0xff] 0.0
    %17 = vst [vmem:[#allocation2 + $0x8] sm:$0xff] 0.0
    %18 = vst [vmem:[#allocation2 + $0x10] sm:$0xff] 0.0
    %19 = vst [vmem:[#allocation2 + $0x18] sm:$0xff] 0.0
    %20 = vst [vmem:[#allocation2 + $0x20] sm:$0xff] 0.0
    %21 = vst [vmem:[#allocation2 + $0x28] sm:$0xff] 0.0
  $region13: #{rwkv_forward.34} parent=0 // pred_fallthru
    _
  %v22 = vld [vmem:[#allocation2] sm:$0xff]
  %v23 = vld [vmem:[#allocation2 + $0x8] sm:$0xff]
  %v24 = vld [vmem:[#allocation2 + $0x10] sm:$0xff]
  %v25 = vld [vmem:[#allocation2 + $0x18] sm:$0xff]
  %v26 = vld [vmem:[#allocation2 + $0x20] sm:$0xff]
  %v27 = vld [vmem:[#allocation2 + $0x28] sm:$0xff]
  %v28 = vld [vmem:[%s0] sm:$0xff]
  %v29 = vld [vmem:[%s0 + $0x8] sm:$0xff]
  %v30 = vld [vmem:[%s0 + $0x10] sm:$0xff]
  %v31 = vld [vmem:[%s0 + $0x18] sm:$0xff]
  %v32 = vld [vmem:[%s0 + $0x20] sm:$0xff]
  %v33 = vld [vmem:[%s0 + $0x28] sm:$0xff]
  %v34 = vld [vmem:[%s0 + $0x30] sm:$0xff]
  %v35 = vld [vmem:[%s0 + $0x38] sm:$0xff]
  %v36 = vld [vmem:[%s0 + $0x40] sm:$0xff]
  %v37 = vld [vmem:[%s0 + $0x48] sm:$0xff]
  %v38 = vld [vmem:[%s0 + $0x50] sm:$0xff]
  %v39 = vld [vmem:[%s0 + $0x58] sm:$0xff]
  %v40 = vld [vmem:[%s1] sm:$0xf]
  %v41 = vld [vmem:[%s1 + $0x4] sm:$0xf]
  %v42 = vld [vmem:[%s1 + $0x8] sm:$0xf]
  %v43 = vld [vmem:[%s1 + $0xc] sm:$0xf]
  %v44 = vld [vmem:[%s1 + $0x10] sm:$0xf]
  %v45 = vld [vmem:[%s1 + $0x14] sm:$0xf]
  %v46 = vld [vmem:[%s1 + $0x18] sm:$0xf]
  %v47 = vld [vmem:[%s1 + $0x1c] sm:$0xf]
  %v48 = vld [vmem:[%s1 + $0x20] sm:$0xf]
  %v49 = vld [vmem:[%s1 + $0x24] sm:$0xf]
  %v50 = vld [vmem:[%s1 + $0x28] sm:$0xf]
  %v51 = vld [vmem:[%s1 + $0x2c] sm:$0xf]
  %v52 = vld [vmem:[%s1 + $0x30] sm:$0xf]
  %v53 = vld [vmem:[%s1 + $0x34] sm:$0xf]
  %v54 = vld [vmem:[%s1 + $0x38] sm:$0xf]
  %v55 = vld [vmem:[%s1 + $0x3c] sm:$0xf]
  %v56 = vld [vmem:[%s1 + $0x40] sm:$0xf]
  %v57 = vld [vmem:[%s1 + $0x44] sm:$0xf]
  %v58 = vld [vmem:[%s1 + $0x48] sm:$0xf]
  %v59 = vld [vmem:[%s1 + $0x4c] sm:$0xf]
  %v60 = vld [vmem:[%s1 + $0x50] sm:$0xf]
  %v61 = vld [vmem:[%s1 + $0x54] sm:$0xf]
  %v62 = vld [vmem:[%s1 + $0x58] sm:$0xf]
  %v63 = vld [vmem:[%s1 + $0x5c] sm:$0xf]
  %v64 = vld [vmem:[%s1 + $0x60] sm:$0xf]
  %v65 = vld [vmem:[%s1 + $0x64] sm:$0xf]
  %v66 = vld [vmem:[%s1 + $0x68] sm:$0xf]
  %v67 = vld [vmem:[%s1 + $0x6c] sm:$0xf]
  %v68 = vld [vmem:[%s1 + $0x70] sm:$0xf]
  %v69 = vld [vmem:[%s1 + $0x74] sm:$0xf]
  %v70 = vld [vmem:[%s1 + $0x78] sm:$0xf]
  %v71 = vld [vmem:[%s1 + $0x7c] sm:$0xf]
  %v72 = vld [vmem:[%s1 + $0x80] sm:$0xf]
  %v73 = vld [vmem:[%s1 + $0x84] sm:$0xf]
  %v74 = vld [vmem:[%s1 + $0x88] sm:$0xf]
  %v75 = vld [vmem:[%s1 + $0x8c] sm:$0xf]
  %v76 = vld [vmem:[%s1 + $0x90] sm:$0xf]
  %v77 = vld [vmem:[%s1 + $0x94] sm:$0xf]
  %v78 = vld [vmem:[%s1 + $0x98] sm:$0xf]
  %v79 = vld [vmem:[%s1 + $0x9c] sm:$0xf]
  %v80 = vld [vmem:[%s1 + $0xa0] sm:$0xf]
  %v81 = vld [vmem:[%s1 + $0xa4] sm:$0xf]
  %v82 = vld [vmem:[%s1 + $0xa8] sm:$0xf]
  %v83 = vld [vmem:[%s1 + $0xac] sm:$0xf]
  %v84 = vld [vmem:[%s1 + $0xb0] sm:$0xf]
  %v85 = vld [vmem:[%s1 + $0xb4] sm:$0xf]
  %v86 = vld [vmem:[%s1 + $0xb8] sm:$0xf]
  %v87 = vld [vmem:[%s1 + $0xbc] sm:$0xf]
  %v88 = vld [vmem:[%s1 + $0xc0] sm:$0xf]
  %v89 = vld [vmem:[%s1 + $0xc4] sm:$0xf]
  %v90 = vld [vmem:[%s1 + $0xc8] sm:$0xf]
  %v91 = vld [vmem:[%s1 + $0xcc] sm:$0xf]
  %v92 = vld [vmem:[%s1 + $0xd0] sm:$0xf]
  %v93 = vld [vmem:[%s1 + $0xd4] sm:$0xf]
  %v94 = vld [vmem:[%s1 + $0xd8] sm:$0xf]
  %v95 = vld [vmem:[%s1 + $0xdc] sm:$0xf]
  %v96 = vld [vmem:[%s1 + $0xe0] sm:$0xf]
  %v97 = vld [vmem:[%s1 + $0xe4] sm:$0xf]
  %v98 = vld [vmem:[%s1 + $0xe8] sm:$0xf]
  %v99 = vld [vmem:[%s1 + $0xec] sm:$0xf]
  %v100 = vld [vmem:[%s1 + $0xf0] sm:$0xf]
  %v101 = vld [vmem:[%s1 + $0xf4] sm:$0xf]
  %v102 = vld [vmem:[%s1 + $0xf8] sm:$0xf]
  %v103 = vld [vmem:[%s1 + $0xfc] sm:$0xf]
  %v116 = vunpack.c.l.b16 %v28
  %v117 = vunpack.c.h.b16 %v28
  %v118 = vunpack.c.l.b16 %v29
  %v119 = vunpack.c.h.b16 %v29
  %v120 = vunpack.c.l.b16 %v30
  %v121 = vunpack.c.h.b16 %v30
  %v122 = vunpack.c.l.b16 %v31
  %v123 = vunpack.c.h.b16 %v31
  %v124 = vunpack.c.l.b16 %v32
  %v125 = vunpack.c.h.b16 %v32
  %v126 = vunpack.c.l.b16 %v33
  %v127 = vunpack.c.h.b16 %v33
  %v128 = vunpack.c.l.b16 %v34
  %v129 = vunpack.c.h.b16 %v34
  %v130 = vunpack.c.l.b16 %v35
  %v131 = vunpack.c.h.b16 %v35
  %v132 = vunpack.c.l.b16 %v36
  %v133 = vunpack.c.h.b16 %v36
  %v134 = vunpack.c.l.b16 %v37
  %v135 = vunpack.c.h.b16 %v37
  %v136 = vunpack.c.l.b16 %v38
  %v137 = vunpack.c.h.b16 %v38
  %v138 = vunpack.c.l.b16 %v39
  %v139 = vunpack.c.h.b16 %v39
  %v140 = vpack.c.b16 %v120, %v116
  %v141 = vpack.c.b16 %v121, %v117
  %v142 = vpack.c.b16 %v122, %v118
  %v143 = vpack.c.b16 %v123, %v119
  %v144 = vpack.c.b16 %v128, %v124
  %v145 = vpack.c.b16 %v129, %v125
  %v146 = vpack.c.b16 %v130, %v126
  %v147 = vpack.c.b16 %v131, %v127
  %v148 = vpack.c.b16 %v136, %v132
  %v149 = vpack.c.b16 %v137, %v133
  %v150 = vpack.c.b16 %v138, %v134
  %v151 = vpack.c.b16 %v139, %v135
  %v228 = vunpack.c.l.b16 %v40
  %v229 = vunpack.c.l.b16 %v41
  %v230 = vunpack.c.l.b16 %v42
  %v231 = vunpack.c.l.b16 %v43
  %v232 = vunpack.c.l.b16 %v44
  %v233 = vunpack.c.l.b16 %v45
  %v234 = vunpack.c.l.b16 %v46
  %v235 = vunpack.c.l.b16 %v47
  %v236 = vunpack.c.l.b16 %v48
  %v237 = vunpack.c.l.b16 %v49
  %v238 = vunpack.c.l.b16 %v50
  %v239 = vunpack.c.l.b16 %v51
  %v240 = vunpack.c.l.b16 %v52
  %v241 = vunpack.c.l.b16 %v53
  %v242 = vunpack.c.l.b16 %v54
  %v243 = vunpack.c.l.b16 %v55
  %v244 = vunpack.c.l.b16 %v56
  %v245 = vunpack.c.l.b16 %v57
  %v246 = vunpack.c.l.b16 %v58
  %v247 = vunpack.c.l.b16 %v59
  %v248 = vunpack.c.l.b16 %v60
  %v249 = vunpack.c.l.b16 %v61
  %v250 = vunpack.c.l.b16 %v62
  %v251 = vunpack.c.l.b16 %v63
  %v252 = vunpack.c.l.b16 %v64
  %v253 = vunpack.c.l.b16 %v65
  %v254 = vunpack.c.l.b16 %v66
  %v255 = vunpack.c.l.b16 %v67
  %v256 = vunpack.c.l.b16 %v68
  %v257 = vunpack.c.l.b16 %v69
  %v258 = vunpack.c.l.b16 %v70
  %v259 = vunpack.c.l.b16 %v71
  %v260 = vunpack.c.l.b16 %v72
  %v261 = vunpack.c.l.b16 %v73
  %v262 = vunpack.c.l.b16 %v74
  %v263 = vunpack.c.l.b16 %v75
  %v264 = vunpack.c.l.b16 %v76
  %v265 = vunpack.c.l.b16 %v77
  %v266 = vunpack.c.l.b16 %v78
  %v267 = vunpack.c.l.b16 %v79
  %v268 = vunpack.c.l.b16 %v80
  %v269 = vunpack.c.l.b16 %v81
  %v270 = vunpack.c.l.b16 %v82
  %v271 = vunpack.c.l.b16 %v83
  %v272 = vunpack.c.l.b16 %v84
  %v273 = vunpack.c.l.b16 %v85
  %v274 = vunpack.c.l.b16 %v86
  %v275 = vunpack.c.l.b16 %v87
  %v276 = vunpack.c.l.b16 %v88
  %v277 = vunpack.c.l.b16 %v89
  %v278 = vunpack.c.l.b16 %v90
  %v279 = vunpack.c.l.b16 %v91
  %v280 = vunpack.c.l.b16 %v92
  %v281 = vunpack.c.l.b16 %v93
  %v282 = vunpack.c.l.b16 %v94
  %v283 = vunpack.c.l.b16 %v95
  %v284 = vunpack.c.l.b16 %v96
  %v285 = vunpack.c.l.b16 %v97
  %v286 = vunpack.c.l.b16 %v98
  %v287 = vunpack.c.l.b16 %v99
  %v288 = vunpack.c.l.b16 %v100
  %v289 = vunpack.c.l.b16 %v101
  %v290 = vunpack.c.l.b16 %v102
  %v291 = vunpack.c.l.b16 %v103
  %v292 = vpack.c.b16 %v229, %v228
  %v293 = vpack.c.b16 %v231, %v230
  %v294 = vpack.c.b16 %v233, %v232
  %v295 = vpack.c.b16 %v235, %v234
  %v296 = vpack.c.b16 %v237, %v236
  %v297 = vpack.c.b16 %v239, %v238
  %v298 = vpack.c.b16 %v241, %v240
  %v299 = vpack.c.b16 %v243, %v242
  %v300 = vpack.c.b16 %v245, %v244
  %v301 = vpack.c.b16 %v247, %v246
  %v302 = vpack.c.b16 %v249, %v248
  %v303 = vpack.c.b16 %v251, %v250
  %v304 = vpack.c.b16 %v253, %v252
  %v305 = vpack.c.b16 %v255, %v254
  %v306 = vpack.c.b16 %v257, %v256
  %v307 = vpack.c.b16 %v259, %v258
  %v308 = vpack.c.b16 %v261, %v260
  %v309 = vpack.c.b16 %v263, %v262
  %v310 = vpack.c.b16 %v265, %v264
  %v311 = vpack.c.b16 %v267, %v266
  %v312 = vpack.c.b16 %v269, %v268
  %v313 = vpack.c.b16 %v271, %v270
  %v314 = vpack.c.b16 %v273, %v272
  %v315 = vpack.c.b16 %v275, %v274
  %v316 = vpack.c.b16 %v277, %v276
  %v317 = vpack.c.b16 %v279, %v278
  %v318 = vpack.c.b16 %v281, %v280
  %v319 = vpack.c.b16 %v283, %v282
  %v320 = vpack.c.b16 %v285, %v284
  %v321 = vpack.c.b16 %v287, %v286
  %v322 = vpack.c.b16 %v289, %v288
  %v323 = vpack.c.b16 %v291, %v290
  %356 = vmatprep.subr.bf16.mxu0 0
  %357 = vmatpush1.bf16.msra.mxu0 %v292
  %358 = vmatprep.subr.bf16.mxu0 0
  %359 = vmatpush1.bf16.msra.mxu0 %v293
  %360 = vmatprep.subr.bf16.mxu0 0
  %361 = vmatpush1.bf16.msra.mxu0 %v294
  %362 = vmatprep.subr.bf16.mxu0 0
  %363 = vmatpush1.bf16.msra.mxu0 %v295
  %364 = vmatprep.subr.bf16.mxu0 0
  %365 = vmatpush1.bf16.msra.mxu0 %v296
  %366 = vmatprep.subr.bf16.mxu0 0
  %367 = vmatpush1.bf16.msra.mxu0 %v297
  %368 = vmatprep.subr.bf16.mxu0 0
  %369 = vmatpush1.bf16.msra.mxu0 %v298
  %370 = vmatprep.subr.bf16.mxu0 0
  %371 = vmatpush1.bf16.msra.mxu0 %v299
  %372 = vmatprep.subr.bf16.mxu0 0
  %373 = vmatpush1.bf16.msra.mxu0 %v300
  %374 = vmatprep.subr.bf16.mxu0 0
  %375 = vmatpush1.bf16.msra.mxu0 %v301
  %376 = vmatprep.subr.bf16.mxu0 0
  %377 = vmatpush1.bf16.msra.mxu0 %v302
  %378 = vmatprep.subr.bf16.mxu0 0
  %379 = vmatpush1.bf16.msra.mxu0 %v303
  %380 = vmatprep.subr.bf16.mxu0 0
  %381 = vmatpush1.bf16.msra.mxu0 %v304
  %382 = vmatprep.subr.bf16.mxu0 0
  %383 = vmatpush1.bf16.msra.mxu0 %v305
  %384 = vmatprep.subr.bf16.mxu0 0
  %385 = vmatpush1.bf16.msra.mxu0 %v306
  %386 = vmatprep.subr.bf16.mxu0 0
  %387 = vmatpush1.bf16.msra.mxu0 %v307
  %388 = vmatprep.mubr.bf16.mxu0 %v141
  %389 = vmatmul.mubr.bf16.gmra.mrb[0].mxu0 %v140
  %v390 = vpop.f32.mrb[0].mxu0
  %v391 = vadd.f32 0.0, %v390
  %v392 = vpop.f32.mrb[0].mxu0
  %v393 = vpop.f32.mrb[0].mxu0
  %v394 = vadd.f32 0.0, %v393
  %v395 = vpop.f32.mrb[0].mxu0
  %396 = vmatprep.mubr.bf16.mxu0 %v145
  %397 = vmatmul.mubr.bf16.gmra.mrb[0].mxu0 %v144
  %v398 = vpop.f32.mrb[0].mxu0
  %v399 = vadd.f32 0.0, %v398
  %v400 = vpop.f32.mrb[0].mxu0
  %v401 = vpop.f32.mrb[0].mxu0
  %v402 = vadd.f32 0.0, %v401
  %v403 = vpop.f32.mrb[0].mxu0
  %404 = vmatprep.mubr.bf16.mxu0 %v149
  %405 = vmatmul.mubr.bf16.gmra.mrb[0].mxu0 %v148
  %v406 = vpop.f32.mrb[0].mxu0
  %v407 = vadd.f32 0.0, %v406
  %v408 = vpop.f32.mrb[0].mxu0
  %v409 = vpop.f32.mrb[0].mxu0
  %v410 = vadd.f32 0.0, %v409
  %v411 = vpop.f32.mrb[0].mxu0
  %412 = vdwg.mxu0
  %413 = vmatprep.subr.bf16.mxu0 0
  %414 = vmatpush1.bf16.msra.mxu0 %v308
  %415 = vmatprep.subr.bf16.mxu0 0
  %416 = vmatpush1.bf16.msra.mxu0 %v309
  %417 = vmatprep.subr.bf16.mxu0 0
  %418 = vmatpush1.bf16.msra.mxu0 %v310
  %419 = vmatprep.subr.bf16.mxu0 0
  %420 = vmatpush1.bf16.msra.mxu0 %v311
  %421 = vmatprep.subr.bf16.mxu0 0
  %422 = vmatpush1.bf16.msra.mxu0 %v312
  %423 = vmatprep.subr.bf16.mxu0 0
  %424 = vmatpush1.bf16.msra.mxu0 %v313
  %425 = vmatprep.subr.bf16.mxu0 0
  %426 = vmatpush1.bf16.msra.mxu0 %v314
  %427 = vmatprep.subr.bf16.mxu0 0
  %428 = vmatpush1.bf16.msra.mxu0 %v315
  %429 = vmatprep.subr.bf16.mxu0 0
  %430 = vmatpush1.bf16.msra.mxu0 %v316
  %431 = vmatprep.subr.bf16.mxu0 0
  %432 = vmatpush1.bf16.msra.mxu0 %v317
  %433 = vmatprep.subr.bf16.mxu0 0
  %434 = vmatpush1.bf16.msra.mxu0 %v318
  %435 = vmatprep.subr.bf16.mxu0 0
  %436 = vmatpush1.bf16.msra.mxu0 %v319
  %437 = vmatprep.subr.bf16.mxu0 0
  %438 = vmatpush1.bf16.msra.mxu0 %v320
  %439 = vmatprep.subr.bf16.mxu0 0
  %440 = vmatpush1.bf16.msra.mxu0 %v321
  %441 = vmatprep.subr.bf16.mxu0 0
  %442 = vmatpush1.bf16.msra.mxu0 %v322
  %443 = vmatprep.subr.bf16.mxu0 0
  %444 = vmatpush1.bf16.msra.mxu0 %v323
  %445 = vmatprep.mubr.bf16.mxu0 %v143
  %446 = vmatmul.mubr.bf16.gmra.mrb[0].mxu0 %v142
  %v447 = vpop.f32.mrb[0].mxu0
  %v448 = vadd.f32 %v391, %v447
  %v449 = vpop.f32.mrb[0].mxu0
  %v450 = vpop.f32.mrb[0].mxu0
  %v451 = vadd.f32 %v394, %v450
  %v452 = vpop.f32.mrb[0].mxu0
  %453 = vmatprep.mubr.bf16.mxu0 %v147
  %454 = vmatmul.mubr.bf16.gmra.mrb[0].mxu0 %v146
  %v455 = vpop.f32.mrb[0].mxu0
  %v456 = vadd.f32 %v399, %v455
  %v457 = vpop.f32.mrb[0].mxu0
  %v458 = vpop.f32.mrb[0].mxu0
  %v459 = vadd.f32 %v402, %v458
  %v460 = vpop.f32.mrb[0].mxu0
  %461 = vmatprep.mubr.bf16.mxu0 %v151
  %462 = vmatmul.mubr.bf16.gmra.mrb[0].mxu0 %v150
  %v463 = vpop.f32.mrb[0].mxu0
  %v464 = vadd.f32 %v407, %v463
  %v465 = vpop.f32.mrb[0].mxu0
  %v466 = vpop.f32.mrb[0].mxu0
  %v467 = vadd.f32 %v410, %v466
  %v468 = vpop.f32.mrb[0].mxu0
  %469 = vdwg.mxu0
  %v470 = vadd.f32 %v22, %v448
  %v471 = vadd.f32 %v23, %v451
  %v472 = vadd.f32 %v24, %v456
  %v473 = vadd.f32 %v25, %v459
  %v474 = vadd.f32 %v26, %v464
  %v475 = vadd.f32 %v27, %v467
  %476 = vst [vmem:[#allocation2] sm:$0xff] %v470
  %477 = vst [vmem:[#allocation2 + $0x8] sm:$0xff] %v471
  %478 = vst [vmem:[#allocation2 + $0x10] sm:$0xff] %v472
  %479 = vst [vmem:[#allocation2 + $0x18] sm:$0xff] %v473
  %480 = vst [vmem:[#allocation2 + $0x20] sm:$0xff] %v474
  %481 = vst [vmem:[#allocation2 + $0x28] sm:$0xff] %v475
  // Predicated region
  $region14: #{rwkv_forward.34} parent=0 // pred_check
    %p482 = pneg %p12
  $region15: #{rwkv_forward.34} parent=0 // pred_check_branch
    %484 = sbr.rel (%p482) target = $region17
  $region16: #{rwkv_forward.34} parent=0 // pred_region
    %v485 = vld [vmem:[#allocation2] sm:$0xff]
    %v486 = vld [vmem:[#allocation2 + $0x8] sm:$0xff]
    %v487 = vld [vmem:[#allocation2 + $0x10] sm:$0xff]
    %v488 = vld [vmem:[#allocation2 + $0x18] sm:$0xff]
    %v489 = vld [vmem:[#allocation2 + $0x20] sm:$0xff]
    %v490 = vld [vmem:[#allocation2 + $0x28] sm:$0xff]
    %v491 = vpack.c.bf16 %v486, %v485
    %v492 = vpack.c.bf16 %v488, %v487
    %v493 = vpack.c.bf16 %v490, %v489
    %v497 = vunpack.c.l.b16 %v491
    %v498 = vunpack.c.h.b16 %v491
    %v499 = vunpack.c.l.b16 %v492
    %v500 = vunpack.c.h.b16 %v492
    %v501 = vunpack.c.l.b16 %v493
    %v502 = vunpack.c.h.b16 %v493
    %v503 = vpack.c.b16 %v497, %v497
    %v504 = vpack.c.b16 %v498, %v498
    %v505 = vpack.c.b16 %v499, %v499
    %v506 = vpack.c.b16 %v500, %v500
    %v507 = vpack.c.b16 %v501, %v501
    %v508 = vpack.c.b16 %v502, %v502
    %515 = vst [vmem:[%s2] sm:$0xf] %v503
    %516 = vst [vmem:[%s2 + $0x4] sm:$0xf] %v504
    %517 = vst [vmem:[%s2 + $0x8] sm:$0xf] %v505
    %518 = vst [vmem:[%s2 + $0xc] sm:$0xf] %v506
    %519 = vst [vmem:[%s2 + $0x10] sm:$0xf] %v507
    %520 = vst [vmem:[%s2 + $0x14] sm:$0xf] %v508
  $region17: #{rwkv_forward.34} parent=0 // pred_fallthru
    _
  // Predicated region
  $region18: #{rwkv_forward.34} parent=0 // pred_check
    _
  $region19: #{rwkv_forward.34} parent=0 // pred_check_branch
    %522 = sbr.rel (0) target = $region21
  $region20: #{rwkv_forward.34} parent=0 // pred_region
    _
  $region21: #{rwkv_forward.34} parent=0 // pred_fallthru
    _
  // Predicated region
  $region22: #{rwkv_forward.34} parent=0 // pred_check
    _
  $region23: #{rwkv_forward.34} parent=0 // pred_check_branch
    %524 = sbr.rel (0) target = $region25
  $region24: #{rwkv_forward.34} parent=0 // pred_region
    _
  $region25: #{rwkv_forward.34} parent=0 // pred_fallthru
    _

// kernel: rwkv_forward.36
$region0: #{rwkv_forward.36}
  #allocation0 [shape = 'u32[]', space=smem, size = 0x4, offset = 0x4, fixed_abs, tag = 'smem constant byte address 0x4 - core index']
  #allocation1 [shape = 'u32[144,128]{1,0:T(1,128)}', space=vmem, size = 0x12000, scoped, tag = 'internal scratch']
  #allocation2 [shape = 'f32[48,512]{1,0:T(8,128)}', space=vmem, size = 0x18000, scoped, tag = 'scratch operand']
  %s0 = inlined_call_operand.vmem [shape: bf16[48,128], index: 0, kind: input, shape index: {}]
  %s1 = inlined_call_operand.vmem [shape: bf16[48,128], index: 1, kind: input, shape index: {}]
  %s2 = inlined_call_operand.vmem [shape: bf16[128,512], index: 2, kind: input, shape index: {}]
  %s3 = inlined_call_operand.vmem [shape: bf16[128,512], index: 3, kind: input, shape index: {}]
  %s4 = inlined_call_operand.vmem [shape: bf16[48,512], index: 4, kind: output, shape index: {}]
  %s5 = sld [smem:[#allocation0]]
  $region34: #{rwkv_forward.36} parent=0
    _
  %s7 = ssub.s32 1, %s5
  %s8 = scalar_select 0, %s7, %s5
  // Predicated region
  $region2: #{rwkv_forward.36} parent=0 // pred_check
    _
  $region3: #{rwkv_forward.36} parent=0 // pred_check_branch
    %10 = sbr.rel (0) target = $region5
  $region4: #{rwkv_forward.36} parent=0 // pred_region
    _
  $region5: #{rwkv_forward.36} parent=0 // pred_fallthru
    _
  // Predicated region
  $region6: #{rwkv_forward.36} parent=0 // pred_check
    _
  $region7: #{rwkv_forward.36} parent=0 // pred_check_branch
    %12 = sbr.rel (0) target = $region9
  $region8: #{rwkv_forward.36} parent=0 // pred_region
    _
  $region9: #{rwkv_forward.36} parent=0 // pred_fallthru
    _
  // Predicated region
  $region10: #{rwkv_forward.36} parent=0 // pred_check
    _
  $region11: #{rwkv_forward.36} parent=0 // pred_check_branch
    %14 = sbr.rel (0) target = $region13
  $region12: #{rwkv_forward.36} parent=0 // pred_region
    _
  $region13: #{rwkv_forward.36} parent=0 // pred_fallthru
    _
  // Predicated region
  $region14: #{rwkv_forward.36} parent=0 // pred_check
    _
  $region15: #{rwkv_forward.36} parent=0 // pred_check_branch
    %16 = sbr.rel (0) target = $region17
  $region16: #{rwkv_forward.36} parent=0 // pred_region
    _
  $region17: #{rwkv_forward.36} parent=0 // pred_fallthru
    _
  %p18 = scmp.eq.s32.totalorder 0, 0
  // Predicated region
  $region18: #{rwkv_forward.36} parent=0 // pred_check
    %p19 = pneg %p18
  $region19: #{rwkv_forward.36} parent=0 // pred_check_branch
    %21 = sbr.rel (%p19) target = $region21
  $region20: #{rwkv_forward.36} parent=0 // pred_region
    %22 = vst [vmem:[#allocation2] sm:$0xff] 0.0
    %23 = vst [vmem:[#allocation2 + $0x8] sm:$0xff] 0.0
    %24 = vst [vmem:[#allocation2 + $0x10] sm:$0xff] 0.0
    %25 = vst [vmem:[#allocation2 + $0x18] sm:$0xff] 0.0
    %26 = vst [vmem:[#allocation2 + $0x20] sm:$0xff] 0.0
    %27 = vst [vmem:[#allocation2 + $0x28] sm:$0xff] 0.0
    %28 = vst [vmem:[#allocation2 + $0x30] sm:$0xff] 0.0
    %29 = vst [vmem:[#allocation2 + $0x38] sm:$0xff] 0.0
    %30 = vst [vmem:[#allocation2 + $0x40] sm:$0xff] 0.0
    %31 = vst [vmem:[#allocation2 + $0x48] sm:$0xff] 0.0
    %32 = vst [vmem:[#allocation2 + $0x50] sm:$0xff] 0.0
    %33 = vst [vmem:[#allocation2 + $0x58] sm:$0xff] 0.0
    %34 = vst [vmem:[#allocation2 + $0x60] sm:$0xff] 0.0
    %35 = vst [vmem:[#allocation2 + $0x68] sm:$0xff] 0.0
    %36 = vst [vmem:[#allocation2 + $0x70] sm:$0xff] 0.0
    %37 = vst [vmem:[#allocation2 + $0x78] sm:$0xff] 0.0
    %38 = vst [vmem:[#allocation2 + $0x80] sm:$0xff] 0.0
    %39 = vst [vmem:[#allocation2 + $0x88] sm:$0xff] 0.0
    %40 = vst [vmem:[#allocation2 + $0x90] sm:$0xff] 0.0
    %41 = vst [vmem:[#allocation2 + $0x98] sm:$0xff] 0.0
    %42 = vst [vmem:[#allocation2 + $0xa0] sm:$0xff] 0.0
    %43 = vst [vmem:[#allocation2 + $0xa8] sm:$0xff] 0.0
    %44 = vst [vmem:[#allocation2 + $0xb0] sm:$0xff] 0.0
    %45 = vst [vmem:[#allocation2 + $0xb8] sm:$0xff] 0.0
  $region21: #{rwkv_forward.36} parent=0 // pred_fallthru
    _
  %v46 = vld [vmem:[#allocation2] sm:$0xff]
  %v47 = vld [vmem:[#allocation2 + $0x8] sm:$0xff]
  %v48 = vld [vmem:[#allocation2 + $0x10] sm:$0xff]
  %v49 = vld [vmem:[#allocation2 + $0x18] sm:$0xff]
  %v50 = vld [vmem:[#allocation2 + $0x20] sm:$0xff]
  %v51 = vld [vmem:[#allocation2 + $0x28] sm:$0xff]
  %v52 = vld [vmem:[#allocation2 + $0x30] sm:$0xff]
  %v53 = vld [vmem:[#allocation2 + $0x38] sm:$0xff]
  %v54 = vld [vmem:[#allocation2 + $0x40] sm:$0xff]
  %v55 = vld [vmem:[#allocation2 + $0x48] sm:$0xff]
  %v56 = vld [vmem:[#allocation2 + $0x50] sm:$0xff]
  %v57 = vld [vmem:[#allocation2 + $0x58] sm:$0xff]
  %v58 = vld [vmem:[#allocation2 + $0x60] sm:$0xff]
  %v59 = vld [vmem:[#allocation2 + $0x68] sm:$0xff]
  %v60 = vld [vmem:[#allocation2 + $0x70] sm:$0xff]
  %v61 = vld [vmem:[#allocation2 + $0x78] sm:$0xff]
  %v62 = vld [vmem:[#allocation2 + $0x80] sm:$0xff]
  %v63 = vld [vmem:[#allocation2 + $0x88] sm:$0xff]
  %v64 = vld [vmem:[#allocation2 + $0x90] sm:$0xff]
  %v65 = vld [vmem:[#allocation2 + $0x98] sm:$0xff]
  %v66 = vld [vmem:[#allocation2 + $0xa0] sm:$0xff]
  %v67 = vld [vmem:[#allocation2 + $0xa8] sm:$0xff]
  %v68 = vld [vmem:[#allocation2 + $0xb0] sm:$0xff]
  %v69 = vld [vmem:[#allocation2 + $0xb8] sm:$0xff]
  %v70 = vld [vmem:[%s0] sm:$0xf]
  %v71 = vld [vmem:[%s0 + $0x4] sm:$0xf]
  %v72 = vld [vmem:[%s0 + $0x8] sm:$0xf]
  %v73 = vld [vmem:[%s0 + $0xc] sm:$0xf]
  %v74 = vld [vmem:[%s0 + $0x10] sm:$0xf]
  %v75 = vld [vmem:[%s0 + $0x14] sm:$0xf]
  %v76 = vld [vmem:[%s2] sm:$0xff]
  %v77 = vld [vmem:[%s2 + $0x8] sm:$0xff]
  %v78 = vld [vmem:[%s2 + $0x10] sm:$0xff]
  %v79 = vld [vmem:[%s2 + $0x18] sm:$0xff]
  %v80 = vld [vmem:[%s2 + $0x20] sm:$0xff]
  %v81 = vld [vmem:[%s2 + $0x28] sm:$0xff]
  %v82 = vld [vmem:[%s2 + $0x30] sm:$0xff]
  %v83 = vld [vmem:[%s2 + $0x38] sm:$0xff]
  %v84 = vld [vmem:[%s2 + $0x40] sm:$0xff]
  %v85 = vld [vmem:[%s2 + $0x48] sm:$0xff]
  %v86 = vld [vmem:[%s2 + $0x50] sm:$0xff]
  %v87 = vld [vmem:[%s2 + $0x58] sm:$0xff]
  %v88 = vld [vmem:[%s2 + $0x60] sm:$0xff]
  %v89 = vld [vmem:[%s2 + $0x68] sm:$0xff]
  %v90 = vld [vmem:[%s2 + $0x70] sm:$0xff]
  %v91 = vld [vmem:[%s2 + $0x78] sm:$0xff]
  %v92 = vld [vmem:[%s2 + $0x80] sm:$0xff]
  %v93 = vld [vmem:[%s2 + $0x88] sm:$0xff]
  %v94 = vld [vmem:[%s2 + $0x90] sm:$0xff]
  %v95 = vld [vmem:[%s2 + $0x98] sm:$0xff]
  %v96 = vld [vmem:[%s2 + $0xa0] sm:$0xff]
  %v97 = vld [vmem:[%s2 + $0xa8] sm:$0xff]
  %v98 = vld [vmem:[%s2 + $0xb0] sm:$0xff]
  %v99 = vld [vmem:[%s2 + $0xb8] sm:$0xff]
  %v100 = vld [vmem:[%s2 + $0xc0] sm:$0xff]
  %v101 = vld [vmem:[%s2 + $0xc8] sm:$0xff]
  %v102 = vld [vmem:[%s2 + $0xd0] sm:$0xff]
  %v103 = vld [vmem:[%s2 + $0xd8] sm:$0xff]
  %v104 = vld [vmem:[%s2 + $0xe0] sm:$0xff]
  %v105 = vld [vmem:[%s2 + $0xe8] sm:$0xff]
  %v106 = vld [vmem:[%s2 + $0xf0] sm:$0xff]
  %v107 = vld [vmem:[%s2 + $0xf8] sm:$0xff]
  %v108 = vld [vmem:[%s1] sm:$0xf]
  %v109 = vld [vmem:[%s1 + $0x4] sm:$0xf]
  %v110 = vld [vmem:[%s1 + $0x8] sm:$0xf]
  %v111 = vld [vmem:[%s1 + $0xc] sm:$0xf]
  %v112 = vld [vmem:[%s1 + $0x10] sm:$0xf]
  %v113 = vld [vmem:[%s1 + $0x14] sm:$0xf]
  %v114 = vld [vmem:[%s3] sm:$0xff]
  %v115 = vld [vmem:[%s3 + $0x8] sm:$0xff]
  %v116 = vld [vmem:[%s3 + $0x10] sm:$0xff]
  %v117 = vld [vmem:[%s3 + $0x18] sm:$0xff]
  %v118 = vld [vmem:[%s3 + $0x20] sm:$0xff]
  %v119 = vld [vmem:[%s3 + $0x28] sm:$0xff]
  %v120 = vld [vmem:[%s3 + $0x30] sm:$0xff]
  %v121 = vld [vmem:[%s3 + $0x38] sm:$0xff]
  %v122 = vld [vmem:[%s3 + $0x40] sm:$0xff]
  %v123 = vld [vmem:[%s3 + $0x48] sm:$0xff]
  %v124 = vld [vmem:[%s3 + $0x50] sm:$0xff]
  %v125 = vld [vmem:[%s3 + $0x58] sm:$0xff]
  %v126 = vld [vmem:[%s3 + $0x60] sm:$0xff]
  %v127 = vld [vmem:[%s3 + $0x68] sm:$0xff]
  %v128 = vld [vmem:[%s3 + $0x70] sm:$0xff]
  %v129 = vld [vmem:[%s3 + $0x78] sm:$0xff]
  %v130 = vld [vmem:[%s3 + $0x80] sm:$0xff]
  %v131 = vld [vmem:[%s3 + $0x88] sm:$0xff]
  %v132 = vld [vmem:[%s3 + $0x90] sm:$0xff]
  %v133 = vld [vmem:[%s3 + $0x98] sm:$0xff]
  %v134 = vld [vmem:[%s3 + $0xa0] sm:$0xff]
  %v135 = vld [vmem:[%s3 + $0xa8] sm:$0xff]
  %v136 = vld [vmem:[%s3 + $0xb0] sm:$0xff]
  %v137 = vld [vmem:[%s3 + $0xb8] sm:$0xff]
  %v138 = vld [vmem:[%s3 + $0xc0] sm:$0xff]
  %v139 = vld [vmem:[%s3 + $0xc8] sm:$0xff]
  %v140 = vld [vmem:[%s3 + $0xd0] sm:$0xff]
  %v141 = vld [vmem:[%s3 + $0xd8] sm:$0xff]
  %v142 = vld [vmem:[%s3 + $0xe0] sm:$0xff]
  %v143 = vld [vmem:[%s3 + $0xe8] sm:$0xff]
  %v144 = vld [vmem:[%s3 + $0xf0] sm:$0xff]
  %v145 = vld [vmem:[%s3 + $0xf8] sm:$0xff]
  %v152 = vunpack.c.l.b16 %v108
  %v153 = vunpack.c.l.b16 %v109
  %v154 = vunpack.c.l.b16 %v110
  %v155 = vunpack.c.l.b16 %v111
  %v156 = vunpack.c.l.b16 %v112
  %v157 = vunpack.c.l.b16 %v113
  %v158 = vpack.c.b16 %v153, %v152
  %v159 = vpack.c.b16 %v155, %v154
  %v160 = vpack.c.b16 %v157, %v156
  %v196 = vunpack.c.l.b16 %v114
  %v197 = vunpack.c.h.b16 %v114
  %v198 = vunpack.c.l.b16 %v115
  %v199 = vunpack.c.h.b16 %v115
  %v200 = vunpack.c.l.b16 %v116
  %v201 = vunpack.c.h.b16 %v116
  %v202 = vunpack.c.l.b16 %v117
  %v203 = vunpack.c.h.b16 %v117
  %v204 = vunpack.c.l.b16 %v118
  %v205 = vunpack.c.h.b16 %v118
  %v206 = vunpack.c.l.b16 %v119
  %v207 = vunpack.c.h.b16 %v119
  %v208 = vunpack.c.l.b16 %v120
  %v209 = vunpack.c.h.b16 %v120
  %v210 = vunpack.c.l.b16 %v121
  %v211 = vunpack.c.h.b16 %v121
  %v212 = vunpack.c.l.b16 %v122
  %v213 = vunpack.c.h.b16 %v122
  %v214 = vunpack.c.l.b16 %v123
  %v215 = vunpack.c.h.b16 %v123
  %v216 = vunpack.c.l.b16 %v124
  %v217 = vunpack.c.h.b16 %v124
  %v218 = vunpack.c.l.b16 %v125
  %v219 = vunpack.c.h.b16 %v125
  %v220 = vunpack.c.l.b16 %v126
  %v221 = vunpack.c.h.b16 %v126
  %v222 = vunpack.c.l.b16 %v127
  %v223 = vunpack.c.h.b16 %v127
  %v224 = vunpack.c.l.b16 %v128
  %v225 = vunpack.c.h.b16 %v128
  %v226 = vunpack.c.l.b16 %v129
  %v227 = vunpack.c.h.b16 %v129
  %v228 = vunpack.c.l.b16 %v130
  %v229 = vunpack.c.h.b16 %v130
  %v230 = vunpack.c.l.b16 %v131
  %v231 = vunpack.c.h.b16 %v131
  %v232 = vunpack.c.l.b16 %v132
  %v233 = vunpack.c.h.b16 %v132
  %v234 = vunpack.c.l.b16 %v133
  %v235 = vunpack.c.h.b16 %v133
  %v236 = vunpack.c.l.b16 %v134
  %v237 = vunpack.c.h.b16 %v134
  %v238 = vunpack.c.l.b16 %v135
  %v239 = vunpack.c.h.b16 %v135
  %v240 = vunpack.c.l.b16 %v136
  %v241 = vunpack.c.h.b16 %v136
  %v242 = vunpack.c.l.b16 %v137
  %v243 = vunpack.c.h.b16 %v137
  %v244 = vunpack.c.l.b16 %v138
  %v245 = vunpack.c.h.b16 %v138
  %v246 = vunpack.c.l.b16 %v139
  %v247 = vunpack.c.h.b16 %v139
  %v248 = vunpack.c.l.b16 %v140
  %v249 = vunpack.c.h.b16 %v140
  %v250 = vunpack.c.l.b16 %v141
  %v251 = vunpack.c.h.b16 %v141
  %v252 = vunpack.c.l.b16 %v142
  %v253 = vunpack.c.h.b16 %v142
  %v254 = vunpack.c.l.b16 %v143
  %v255 = vunpack.c.h.b16 %v143
  %v256 = vunpack.c.l.b16 %v144
  %v257 = vunpack.c.h.b16 %v144
  %v258 = vunpack.c.l.b16 %v145
  %v259 = vunpack.c.h.b16 %v145
  %v260 = vpack.c.b16 %v200, %v196
  %v261 = vpack.c.b16 %v201, %v197
  %v262 = vpack.c.b16 %v202, %v198
  %v263 = vpack.c.b16 %v203, %v199
  %v264 = vpack.c.b16 %v208, %v204
  %v265 = vpack.c.b16 %v209, %v205
  %v266 = vpack.c.b16 %v210, %v206
  %v267 = vpack.c.b16 %v211, %v207
  %v268 = vpack.c.b16 %v216, %v212
  %v269 = vpack.c.b16 %v217, %v213
  %v270 = vpack.c.b16 %v218, %v214
  %v271 = vpack.c.b16 %v219, %v215
  %v272 = vpack.c.b16 %v224, %v220
  %v273 = vpack.c.b16 %v225, %v221
  %v274 = vpack.c.b16 %v226, %v222
  %v275 = vpack.c.b16 %v227, %v223
  %v276 = vpack.c.b16 %v232, %v228
  %v277 = vpack.c.b16 %v233, %v229
  %v278 = vpack.c.b16 %v234, %v230
  %v279 = vpack.c.b16 %v235, %v231
  %v280 = vpack.c.b16 %v240, %v236
  %v281 = vpack.c.b16 %v241, %v237
  %v282 = vpack.c.b16 %v242, %v238
  %v283 = vpack.c.b16 %v243, %v239
  %v284 = vpack.c.b16 %v248, %v244
  %v285 = vpack.c.b16 %v249, %v245
  %v286 = vpack.c.b16 %v250, %v246
  %v287 = vpack.c.b16 %v251, %v247
  %v288 = vpack.c.b16 %v256, %v252
  %v289 = vpack.c.b16 %v257, %v253
  %v290 = vpack.c.b16 %v258, %v254
  %v291 = vpack.c.b16 %v259, %v255
  %324 = vmatprep.subr.bf16.mxu0 %v261
  %325 = vmatpush1.bf16.msra.mxu0 %v260
  %326 = vmatprep.subr.bf16.mxu0 %v265
  %327 = vmatpush1.bf16.msra.mxu0 %v264
  %328 = vmatprep.subr.bf16.mxu0 %v269
  %329 = vmatpush1.bf16.msra.mxu0 %v268
  %330 = vmatprep.subr.bf16.mxu0 %v273
  %331 = vmatpush1.bf16.msra.mxu0 %v272
  %332 = vmatprep.subr.bf16.mxu0 %v277
  %333 = vmatpush1.bf16.msra.mxu0 %v276
  %334 = vmatprep.subr.bf16.mxu0 %v281
  %335 = vmatpush1.bf16.msra.mxu0 %v280
  %336 = vmatprep.subr.bf16.mxu0 %v285
  %337 = vmatpush1.bf16.msra.mxu0 %v284
  %338 = vmatprep.subr.bf16.mxu0 %v289
  %339 = vmatpush1.bf16.msra.mxu0 %v288
  %340 = vmatprep.subr.bf16.mxu0 0
  %341 = vmatpush1.bf16.msra.mxu0 0
  %342 = vmatprep.subr.bf16.mxu0 0
  %343 = vmatpush1.bf16.msra.mxu0 0
  %344 = vmatprep.subr.bf16.mxu0 0
  %345 = vmatpush1.bf16.msra.mxu0 0
  %346 = vmatprep.subr.bf16.mxu0 0
  %347 = vmatpush1.bf16.msra.mxu0 0
  %348 = vmatprep.subr.bf16.mxu0 0
  %349 = vmatpush1.bf16.msra.mxu0 0
  %350 = vmatprep.subr.bf16.mxu0 0
  %351 = vmatpush1.bf16.msra.mxu0 0
  %352 = vmatprep.subr.bf16.mxu0 0
  %353 = vmatpush1.bf16.msra.mxu0 0
  %354 = vmatprep.subr.bf16.mxu0 0
  %355 = vmatpush1.bf16.msra.mxu0 0
  %356 = vmatprep.mubr.bf16.mxu0 0
  %357 = vmatmul.mubr.bf16.gmra.mrb[0].mxu0 %v158
  %v358 = vpop.f32.mrb[0].mxu0
  %v359 = vadd.f32 0.0, %v358
  %v360 = vpop.f32.mrb[0].mxu0
  %v361 = vadd.f32 0.0, %v360
  %v362 = vpop.f32.mrb[0].mxu0
  %v363 = vadd.f32 0.0, %v362
  %v364 = vpop.f32.mrb[0].mxu0
  %v365 = vadd.f32 0.0, %v364
  %366 = vmatprep.mubr.bf16.mxu0 0
  %367 = vmatmul.mubr.bf16.gmra.mrb[0].mxu0 %v159
  %v368 = vpop.f32.mrb[0].mxu0
  %v369 = vadd.f32 0.0, %v368
  %v370 = vpop.f32.mrb[0].mxu0
  %v371 = vadd.f32 0.0, %v370
  %v372 = vpop.f32.mrb[0].mxu0
  %v373 = vadd.f32 0.0, %v372
  %v374 = vpop.f32.mrb[0].mxu0
  %v375 = vadd.f32 0.0, %v374
  %376 = vmatprep.mubr.bf16.mxu0 0
  %377 = vmatmul.mubr.bf16.gmra.mrb[0].mxu0 %v160
  %v378 = vpop.f32.mrb[0].mxu0
  %v379 = vadd.f32 0.0, %v378
  %v380 = vpop.f32.mrb[0].mxu0
  %v381 = vadd.f32 0.0, %v380
  %v382 = vpop.f32.mrb[0].mxu0
  %v383 = vadd.f32 0.0, %v382
  %v384 = vpop.f32.mrb[0].mxu0
  %v385 = vadd.f32 0.0, %v384
  %386 = vdwg.mxu0
  %387 = vmatprep.subr.bf16.mxu0 %v263
  %388 = vmatpush1.bf16.msra.mxu0 %v262
  %389 = vmatprep.subr.bf16.mxu0 %v267
  %390 = vmatpush1.bf16.msra.mxu0 %v266
  %391 = vmatprep.subr.bf16.mxu0 %v271
  %392 = vmatpush1.bf16.msra.mxu0 %v270
  %393 = vmatprep.subr.bf16.mxu0 %v275
  %394 = vmatpush1.bf16.msra.mxu0 %v274
  %395 = vmatprep.subr.bf16.mxu0 %v279
  %396 = vmatpush1.bf16.msra.mxu0 %v278
  %397 = vmatprep.subr.bf16.mxu0 %v283
  %398 = vmatpush1.bf16.msra.mxu0 %v282
  %399 = vmatprep.subr.bf16.mxu0 %v287
  %400 = vmatpush1.bf16.msra.mxu0 %v286
  %401 = vmatprep.subr.bf16.mxu0 %v291
  %402 = vmatpush1.bf16.msra.mxu0 %v290
  %403 = vmatprep.subr.bf16.mxu0 0
  %404 = vmatpush1.bf16.msra.mxu0 0
  %405 = vmatprep.subr.bf16.mxu0 0
  %406 = vmatpush1.bf16.msra.mxu0 0
  %407 = vmatprep.subr.bf16.mxu0 0
  %408 = vmatpush1.bf16.msra.mxu0 0
  %409 = vmatprep.subr.bf16.mxu0 0
  %410 = vmatpush1.bf16.msra.mxu0 0
  %411 = vmatprep.subr.bf16.mxu0 0
  %412 = vmatpush1.bf16.msra.mxu0 0
  %413 = vmatprep.subr.bf16.mxu0 0
  %414 = vmatpush1.bf16.msra.mxu0 0
  %415 = vmatprep.subr.bf16.mxu0 0
  %416 = vmatpush1.bf16.msra.mxu0 0
  %417 = vmatprep.subr.bf16.mxu0 0
  %418 = vmatpush1.bf16.msra.mxu0 0
  %419 = vmatprep.mubr.bf16.mxu0 0
  %420 = vmatmul.mubr.bf16.gmra.mrb[0].mxu0 %v158
  %v421 = vpop.f32.mrb[0].mxu0
  %v422 = vadd.f32 0.0, %v421
  %v423 = vpop.f32.mrb[0].mxu0
  %v424 = vadd.f32 0.0, %v423
  %v425 = vpop.f32.mrb[0].mxu0
  %v426 = vadd.f32 0.0, %v425
  %v427 = vpop.f32.mrb[0].mxu0
  %v428 = vadd.f32 0.0, %v427
  %429 = vmatprep.mubr.bf16.mxu0 0
  %430 = vmatmul.mubr.bf16.gmra.mrb[0].mxu0 %v159
  %v431 = vpop.f32.mrb[0].mxu0
  %v432 = vadd.f32 0.0, %v431
  %v433 = vpop.f32.mrb[0].mxu0
  %v434 = vadd.f32 0.0, %v433
  %v435 = vpop.f32.mrb[0].mxu0
  %v436 = vadd.f32 0.0, %v435
  %v437 = vpop.f32.mrb[0].mxu0
  %v438 = vadd.f32 0.0, %v437
  %439 = vmatprep.mubr.bf16.mxu0 0
  %440 = vmatmul.mubr.bf16.gmra.mrb[0].mxu0 %v160
  %v441 = vpop.f32.mrb[0].mxu0
  %v442 = vadd.f32 0.0, %v441
  %v443 = vpop.f32.mrb[0].mxu0
  %v444 = vadd.f32 0.0, %v443
  %v445 = vpop.f32.mrb[0].mxu0
  %v446 = vadd.f32 0.0, %v445
  %v447 = vpop.f32.mrb[0].mxu0
  %v448 = vadd.f32 0.0, %v447
  %449 = vdwg.mxu0
  %v456 = vunpack.c.l.b16 %v70
  %v457 = vunpack.c.l.b16 %v71
  %v458 = vunpack.c.l.b16 %v72
  %v459 = vunpack.c.l.b16 %v73
  %v460 = vunpack.c.l.b16 %v74
  %v461 = vunpack.c.l.b16 %v75
  %v462 = vpack.c.b16 %v457, %v456
  %v463 = vpack.c.b16 %v459, %v458
  %v464 = vpack.c.b16 %v461, %v460
  %v500 = vunpack.c.l.b16 %v76
  %v501 = vunpack.c.h.b16 %v76
  %v502 = vunpack.c.l.b16 %v77
  %v503 = vunpack.c.h.b16 %v77
  %v504 = vunpack.c.l.b16 %v78
  %v505 = vunpack.c.h.b16 %v78
  %v506 = vunpack.c.l.b16 %v79
  %v507 = vunpack.c.h.b16 %v79
  %v508 = vunpack.c.l.b16 %v80
  %v509 = vunpack.c.h.b16 %v80
  %v510 = vunpack.c.l.b16 %v81
  %v511 = vunpack.c.h.b16 %v81
  %v512 = vunpack.c.l.b16 %v82
  %v513 = vunpack.c.h.b16 %v82
  %v514 = vunpack.c.l.b16 %v83
  %v515 = vunpack.c.h.b16 %v83
  %v516 = vunpack.c.l.b16 %v84
  %v517 = vunpack.c.h.b16 %v84
  %v518 = vunpack.c.l.b16 %v85
  %v519 = vunpack.c.h.b16 %v85
  %v520 = vunpack.c.l.b16 %v86
  %v521 = vunpack.c.h.b16 %v86
  %v522 = vunpack.c.l.b16 %v87
  %v523 = vunpack.c.h.b16 %v87
  %v524 = vunpack.c.l.b16 %v88
  %v525 = vunpack.c.h.b16 %v88
  %v526 = vunpack.c.l.b16 %v89
  %v527 = vunpack.c.h.b16 %v89
  %v528 = vunpack.c.l.b16 %v90
  %v529 = vunpack.c.h.b16 %v90
  %v530 = vunpack.c.l.b16 %v91
  %v531 = vunpack.c.h.b16 %v91
  %v532 = vunpack.c.l.b16 %v92
  %v533 = vunpack.c.h.b16 %v92
  %v534 = vunpack.c.l.b16 %v93
  %v535 = vunpack.c.h.b16 %v93
  %v536 = vunpack.c.l.b16 %v94
  %v537 = vunpack.c.h.b16 %v94
  %v538 = vunpack.c.l.b16 %v95
  %v539 = vunpack.c.h.b16 %v95
  %v540 = vunpack.c.l.b16 %v96
  %v541 = vunpack.c.h.b16 %v96
  %v542 = vunpack.c.l.b16 %v97
  %v543 = vunpack.c.h.b16 %v97
  %v544 = vunpack.c.l.b16 %v98
  %v545 = vunpack.c.h.b16 %v98
  %v546 = vunpack.c.l.b16 %v99
  %v547 = vunpack.c.h.b16 %v99
  %v548 = vunpack.c.l.b16 %v100
  %v549 = vunpack.c.h.b16 %v100
  %v550 = vunpack.c.l.b16 %v101
  %v551 = vunpack.c.h.b16 %v101
  %v552 = vunpack.c.l.b16 %v102
  %v553 = vunpack.c.h.b16 %v102
  %v554 = vunpack.c.l.b16 %v103
  %v555 = vunpack.c.h.b16 %v103
  %v556 = vunpack.c.l.b16 %v104
  %v557 = vunpack.c.h.b16 %v104
  %v558 = vunpack.c.l.b16 %v105
  %v559 = vunpack.c.h.b16 %v105
  %v560 = vunpack.c.l.b16 %v106
  %v561 = vunpack.c.h.b16 %v106
  %v562 = vunpack.c.l.b16 %v107
  %v563 = vunpack.c.h.b16 %v107
  %v564 = vpack.c.b16 %v504, %v500
  %v565 = vpack.c.b16 %v505, %v501
  %v566 = vpack.c.b16 %v506, %v502
  %v567 = vpack.c.b16 %v507, %v503
  %v568 = vpack.c.b16 %v512, %v508
  %v569 = vpack.c.b16 %v513, %v509
  %v570 = vpack.c.b16 %v514, %v510
  %v571 = vpack.c.b16 %v515, %v511
  %v572 = vpack.c.b16 %v520, %v516
  %v573 = vpack.c.b16 %v521, %v517
  %v574 = vpack.c.b16 %v522, %v518
  %v575 = vpack.c.b16 %v523, %v519
  %v576 = vpack.c.b16 %v528, %v524
  %v577 = vpack.c.b16 %v529, %v525
  %v578 = vpack.c.b16 %v530, %v526
  %v579 = vpack.c.b16 %v531, %v527
  %v580 = vpack.c.b16 %v536, %v532
  %v581 = vpack.c.b16 %v537, %v533
  %v582 = vpack.c.b16 %v538, %v534
  %v583 = vpack.c.b16 %v539, %v535
  %v584 = vpack.c.b16 %v544, %v540
  %v585 = vpack.c.b16 %v545, %v541
  %v586 = vpack.c.b16 %v546, %v542
  %v587 = vpack.c.b16 %v547, %v543
  %v588 = vpack.c.b16 %v552, %v548
  %v589 = vpack.c.b16 %v553, %v549
  %v590 = vpack.c.b16 %v554, %v550
  %v591 = vpack.c.b16 %v555, %v551
  %v592 = vpack.c.b16 %v560, %v556
  %v593 = vpack.c.b16 %v561, %v557
  %v594 = vpack.c.b16 %v562, %v558
  %v595 = vpack.c.b16 %v563, %v559
  %628 = vmatprep.subr.bf16.mxu0 %v565
  %629 = vmatpush1.bf16.msra.mxu0 %v564
  %630 = vmatprep.subr.bf16.mxu0 %v569
  %631 = vmatpush1.bf16.msra.mxu0 %v568
  %632 = vmatprep.subr.bf16.mxu0 %v573
  %633 = vmatpush1.bf16.msra.mxu0 %v572
  %634 = vmatprep.subr.bf16.mxu0 %v577
  %635 = vmatpush1.bf16.msra.mxu0 %v576
  %636 = vmatprep.subr.bf16.mxu0 %v581
  %637 = vmatpush1.bf16.msra.mxu0 %v580
  %638 = vmatprep.subr.bf16.mxu0 %v585
  %639 = vmatpush1.bf16.msra.mxu0 %v584
  %640 = vmatprep.subr.bf16.mxu0 %v589
  %641 = vmatpush1.bf16.msra.mxu0 %v588
  %642 = vmatprep.subr.bf16.mxu0 %v593
  %643 = vmatpush1.bf16.msra.mxu0 %v592
  %644 = vmatprep.subr.bf16.mxu0 0
  %645 = vmatpush1.bf16.msra.mxu0 0
  %646 = vmatprep.subr.bf16.mxu0 0
  %647 = vmatpush1.bf16.msra.mxu0 0
  %648 = vmatprep.subr.bf16.mxu0 0
  %649 = vmatpush1.bf16.msra.mxu0 0
  %650 = vmatprep.subr.bf16.mxu0 0
  %651 = vmatpush1.bf16.msra.mxu0 0
  %652 = vmatprep.subr.bf16.mxu0 0
  %653 = vmatpush1.bf16.msra.mxu0 0
  %654 = vmatprep.subr.bf16.mxu0 0
  %655 = vmatpush1.bf16.msra.mxu0 0
  %656 = vmatprep.subr.bf16.mxu0 0
  %657 = vmatpush1.bf16.msra.mxu0 0
  %658 = vmatprep.subr.bf16.mxu0 0
  %659 = vmatpush1.bf16.msra.mxu0 0
  %660 = vmatprep.mubr.bf16.mxu0 0
  %661 = vmatmul.mubr.bf16.gmra.mrb[0].mxu0 %v462
  %v662 = vpop.f32.mrb[0].mxu0
  %v663 = vadd.f32 %v359, %v662
  %v664 = vpop.f32.mrb[0].mxu0
  %v665 = vadd.f32 %v361, %v664
  %v666 = vpop.f32.mrb[0].mxu0
  %v667 = vadd.f32 %v363, %v666
  %v668 = vpop.f32.mrb[0].mxu0
  %v669 = vadd.f32 %v365, %v668
  %670 = vmatprep.mubr.bf16.mxu0 0
  %671 = vmatmul.mubr.bf16.gmra.mrb[0].mxu0 %v463
  %v672 = vpop.f32.mrb[0].mxu0
  %v673 = vadd.f32 %v369, %v672
  %v674 = vpop.f32.mrb[0].mxu0
  %v675 = vadd.f32 %v371, %v674
  %v676 = vpop.f32.mrb[0].mxu0
  %v677 = vadd.f32 %v373, %v676
  %v678 = vpop.f32.mrb[0].mxu0
  %v679 = vadd.f32 %v375, %v678
  %680 = vmatprep.mubr.bf16.mxu0 0
  %681 = vmatmul.mubr.bf16.gmra.mrb[0].mxu0 %v464
  %v682 = vpop.f32.mrb[0].mxu0
  %v683 = vadd.f32 %v379, %v682
  %v684 = vpop.f32.mrb[0].mxu0
  %v685 = vadd.f32 %v381, %v684
  %v686 = vpop.f32.mrb[0].mxu0
  %v687 = vadd.f32 %v383, %v686
  %v688 = vpop.f32.mrb[0].mxu0
  %v689 = vadd.f32 %v385, %v688
  %690 = vdwg.mxu0
  %691 = vmatprep.subr.bf16.mxu0 %v567
  %692 = vmatpush1.bf16.msra.mxu0 %v566
  %693 = vmatprep.subr.bf16.mxu0 %v571
  %694 = vmatpush1.bf16.msra.mxu0 %v570
  %695 = vmatprep.subr.bf16.mxu0 %v575
  %696 = vmatpush1.bf16.msra.mxu0 %v574
  %697 = vmatprep.subr.bf16.mxu0 %v579
  %698 = vmatpush1.bf16.msra.mxu0 %v578
  %699 = vmatprep.subr.bf16.mxu0 %v583
  %700 = vmatpush1.bf16.msra.mxu0 %v582
  %701 = vmatprep.subr.bf16.mxu0 %v587
  %702 = vmatpush1.bf16.msra.mxu0 %v586
  %703 = vmatprep.subr.bf16.mxu0 %v591
  %704 = vmatpush1.bf16.msra.mxu0 %v590
  %705 = vmatprep.subr.bf16.mxu0 %v595
  %706 = vmatpush1.bf16.msra.mxu0 %v594
  %707 = vmatprep.subr.bf16.mxu0 0
  %708 = vmatpush1.bf16.msra.mxu0 0
  %709 = vmatprep.subr.bf16.mxu0 0
  %710 = vmatpush1.bf16.msra.mxu0 0
  %711 = vmatprep.subr.bf16.mxu0 0
  %712 = vmatpush1.bf16.msra.mxu0 0
  %713 = vmatprep.subr.bf16.mxu0 0
  %714 = vmatpush1.bf16.msra.mxu0 0
  %715 = vmatprep.subr.bf16.mxu0 0
  %716 = vmatpush1.bf16.msra.mxu0 0
  %717 = vmatprep.subr.bf16.mxu0 0
  %718 = vmatpush1.bf16.msra.mxu0 0
  %719 = vmatprep.subr.bf16.mxu0 0
  %720 = vmatpush1.bf16.msra.mxu0 0
  %721 = vmatprep.subr.bf16.mxu0 0
  %722 = vmatpush1.bf16.msra.mxu0 0
  %723 = vmatprep.mubr.bf16.mxu0 0
  %724 = vmatmul.mubr.bf16.gmra.mrb[0].mxu0 %v462
  %v725 = vpop.f32.mrb[0].mxu0
  %v726 = vadd.f32 %v422, %v725
  %v727 = vpop.f32.mrb[0].mxu0
  %v728 = vadd.f32 %v424, %v727
  %v729 = vpop.f32.mrb[0].mxu0
  %v730 = vadd.f32 %v426, %v729
  %v731 = vpop.f32.mrb[0].mxu0
  %v732 = vadd.f32 %v428, %v731
  %733 = vmatprep.mubr.bf16.mxu0 0
  %734 = vmatmul.mubr.bf16.gmra.mrb[0].mxu0 %v463
  %v735 = vpop.f32.mrb[0].mxu0
  %v736 = vadd.f32 %v432, %v735
  %v737 = vpop.f32.mrb[0].mxu0
  %v738 = vadd.f32 %v434, %v737
  %v739 = vpop.f32.mrb[0].mxu0
  %v740 = vadd.f32 %v436, %v739
  %v741 = vpop.f32.mrb[0].mxu0
  %v742 = vadd.f32 %v438, %v741
  %743 = vmatprep.mubr.bf16.mxu0 0
  %744 = vmatmul.mubr.bf16.gmra.mrb[0].mxu0 %v464
  %v745 = vpop.f32.mrb[0].mxu0
  %v746 = vadd.f32 %v442, %v745
  %v747 = vpop.f32.mrb[0].mxu0
  %v748 = vadd.f32 %v444, %v747
  %v749 = vpop.f32.mrb[0].mxu0
  %v750 = vadd.f32 %v446, %v749
  %v751 = vpop.f32.mrb[0].mxu0
  %v752 = vadd.f32 %v448, %v751
  %753 = vdwg.mxu0
  %v754 = vadd.f32 %v46, %v663
  %v755 = vadd.f32 %v47, %v665
  %v756 = vadd.f32 %v48, %v726
  %v757 = vadd.f32 %v49, %v728
  %v758 = vadd.f32 %v50, %v667
  %v759 = vadd.f32 %v51, %v669
  %v760 = vadd.f32 %v52, %v730
  %v761 = vadd.f32 %v53, %v732
  %v762 = vadd.f32 %v54, %v673
  %v763 = vadd.f32 %v55, %v675
  %v764 = vadd.f32 %v56, %v736
  %v765 = vadd.f32 %v57, %v738
  %v766 = vadd.f32 %v58, %v677
  %v767 = vadd.f32 %v59, %v679
  %v768 = vadd.f32 %v60, %v740
  %v769 = vadd.f32 %v61, %v742
  %v770 = vadd.f32 %v62, %v683
  %v771 = vadd.f32 %v63, %v685
  %v772 = vadd.f32 %v64, %v746
  %v773 = vadd.f32 %v65, %v748
  %v774 = vadd.f32 %v66, %v687
  %v775 = vadd.f32 %v67, %v689
  %v776 = vadd.f32 %v68, %v750
  %v777 = vadd.f32 %v69, %v752
  %778 = vst [vmem:[#allocation2] sm:$0xff] %v754
  %779 = vst [vmem:[#allocation2 + $0x8] sm:$0xff] %v755
  %780 = vst [vmem:[#allocation2 + $0x10] sm:$0xff] %v756
  %781 = vst [vmem:[#allocation2 + $0x18] sm:$0xff] %v757
  %782 = vst [vmem:[#allocation2 + $0x20] sm:$0xff] %v758
  %783 = vst [vmem:[#allocation2 + $0x28] sm:$0xff] %v759
  %784 = vst [vmem:[#allocation2 + $0x30] sm:$0xff] %v760
  %785 = vst [vmem:[#allocation2 + $0x38] sm:$0xff] %v761
  %786 = vst [vmem:[#allocation2 + $0x40] sm:$0xff] %v762
  %787 = vst [vmem:[#allocation2 + $0x48] sm:$0xff] %v763
  %788 = vst [vmem:[#allocation2 + $0x50] sm:$0xff] %v764
  %789 = vst [vmem:[#allocation2 + $0x58] sm:$0xff] %v765
  %790 = vst [vmem:[#allocation2 + $0x60] sm:$0xff] %v766
  %791 = vst [vmem:[#allocation2 + $0x68] sm:$0xff] %v767
  %792 = vst [vmem:[#allocation2 + $0x70] sm:$0xff] %v768
  %793 = vst [vmem:[#allocation2 + $0x78] sm:$0xff] %v769
  %794 = vst [vmem:[#allocation2 + $0x80] sm:$0xff] %v770
  %795 = vst [vmem:[#allocation2 + $0x88] sm:$0xff] %v771
  %796 = vst [vmem:[#allocation2 + $0x90] sm:$0xff] %v772
  %797 = vst [vmem:[#allocation2 + $0x98] sm:$0xff] %v773
  %798 = vst [vmem:[#allocation2 + $0xa0] sm:$0xff] %v774
  %799 = vst [vmem:[#allocation2 + $0xa8] sm:$0xff] %v775
  %800 = vst [vmem:[#allocation2 + $0xb0] sm:$0xff] %v776
  %801 = vst [vmem:[#allocation2 + $0xb8] sm:$0xff] %v777
  // Predicated region
  $region22: #{rwkv_forward.36} parent=0 // pred_check
    %p802 = pneg %p18
  $region23: #{rwkv_forward.36} parent=0 // pred_check_branch
    %804 = sbr.rel (%p802) target = $region25
  $region24: #{rwkv_forward.36} parent=0 // pred_region
    %v805 = vld [vmem:[#allocation2] sm:$0xff]
    %v806 = vld [vmem:[#allocation2 + $0x8] sm:$0xff]
    %v807 = vld [vmem:[#allocation2 + $0x10] sm:$0xff]
    %v808 = vld [vmem:[#allocation2 + $0x18] sm:$0xff]
    %v809 = vld [vmem:[#allocation2 + $0x20] sm:$0xff]
    %v810 = vld [vmem:[#allocation2 + $0x28] sm:$0xff]
    %v811 = vld [vmem:[#allocation2 + $0x30] sm:$0xff]
    %v812 = vld [vmem:[#allocation2 + $0x38] sm:$0xff]
    %v813 = vld [vmem:[#allocation2 + $0x40] sm:$0xff]
    %v814 = vld [vmem:[#allocation2 + $0x48] sm:$0xff]
    %v815 = vld [vmem:[#allocation2 + $0x50] sm:$0xff]
    %v816 = vld [vmem:[#allocation2 + $0x58] sm:$0xff]
    %v817 = vld [vmem:[#allocation2 + $0x60] sm:$0xff]
    %v818 = vld [vmem:[#allocation2 + $0x68] sm:$0xff]
    %v819 = vld [vmem:[#allocation2 + $0x70] sm:$0xff]
    %v820 = vld [vmem:[#allocation2 + $0x78] sm:$0xff]
    %v821 = vld [vmem:[#allocation2 + $0x80] sm:$0xff]
    %v822 = vld [vmem:[#allocation2 + $0x88] sm:$0xff]
    %v823 = vld [vmem:[#allocation2 + $0x90] sm:$0xff]
    %v824 = vld [vmem:[#allocation2 + $0x98] sm:$0xff]
    %v825 = vld [vmem:[#allocation2 + $0xa0] sm:$0xff]
    %v826 = vld [vmem:[#allocation2 + $0xa8] sm:$0xff]
    %v827 = vld [vmem:[#allocation2 + $0xb0] sm:$0xff]
    %v828 = vld [vmem:[#allocation2 + $0xb8] sm:$0xff]
    %v829 = vpack.c.bf16 %v809, %v805
    %v830 = vpack.c.bf16 %v810, %v806
    %v831 = vpack.c.bf16 %v811, %v807
    %v832 = vpack.c.bf16 %v812, %v808
    %v833 = vpack.c.bf16 %v817, %v813
    %v834 = vpack.c.bf16 %v818, %v814
    %v835 = vpack.c.bf16 %v819, %v815
    %v836 = vpack.c.bf16 %v820, %v816
    %v837 = vpack.c.bf16 %v825, %v821
    %v838 = vpack.c.bf16 %v826, %v822
    %v839 = vpack.c.bf16 %v827, %v823
    %v840 = vpack.c.bf16 %v828, %v824
    %v853 = vunpack.c.l.b16 %v829
    %v854 = vunpack.c.l.b16 %v830
    %v855 = vunpack.c.l.b16 %v831
    %v856 = vunpack.c.l.b16 %v832
    %v857 = vunpack.c.h.b16 %v829
    %v858 = vunpack.c.h.b16 %v830
    %v859 = vunpack.c.h.b16 %v831
    %v860 = vunpack.c.h.b16 %v832
    %v861 = vunpack.c.l.b16 %v833
    %v862 = vunpack.c.l.b16 %v834
    %v863 = vunpack.c.l.b16 %v835
    %v864 = vunpack.c.l.b16 %v836
    %v865 = vunpack.c.h.b16 %v833
    %v866 = vunpack.c.h.b16 %v834
    %v867 = vunpack.c.h.b16 %v835
    %v868 = vunpack.c.h.b16 %v836
    %v869 = vunpack.c.l.b16 %v837
    %v870 = vunpack.c.l.b16 %v838
    %v871 = vunpack.c.l.b16 %v839
    %v872 = vunpack.c.l.b16 %v840
    %v873 = vunpack.c.h.b16 %v837
    %v874 = vunpack.c.h.b16 %v838
    %v875 = vunpack.c.h.b16 %v839
    %v876 = vunpack.c.h.b16 %v840
    %v877 = vpack.c.b16 %v854, %v853
    %v878 = vpack.c.b16 %v856, %v855
    %v879 = vpack.c.b16 %v858, %v857
    %v880 = vpack.c.b16 %v860, %v859
    %v881 = vpack.c.b16 %v862, %v861
    %v882 = vpack.c.b16 %v864, %v863
    %v883 = vpack.c.b16 %v866, %v865
    %v884 = vpack.c.b16 %v868, %v867
    %v885 = vpack.c.b16 %v870, %v869
    %v886 = vpack.c.b16 %v872, %v871
    %v887 = vpack.c.b16 %v874, %v873
    %v888 = vpack.c.b16 %v876, %v875
    %901 = vst [vmem:[%s4] sm:$0xff] %v877
    %902 = vst [vmem:[%s4 + $0x8] sm:$0xff] %v878
    %903 = vst [vmem:[%s4 + $0x10] sm:$0xff] %v879
    %904 = vst [vmem:[%s4 + $0x18] sm:$0xff] %v880
    %905 = vst [vmem:[%s4 + $0x20] sm:$0xff] %v881
    %906 = vst [vmem:[%s4 + $0x28] sm:$0xff] %v882
    %907 = vst [vmem:[%s4 + $0x30] sm:$0xff] %v883
    %908 = vst [vmem:[%s4 + $0x38] sm:$0xff] %v884
    %909 = vst [vmem:[%s4 + $0x40] sm:$0xff] %v885
    %910 = vst [vmem:[%s4 + $0x48] sm:$0xff] %v886
    %911 = vst [vmem:[%s4 + $0x50] sm:$0xff] %v887
    %912 = vst [vmem:[%s4 + $0x58] sm:$0xff] %v888
  $region25: #{rwkv_forward.36} parent=0 // pred_fallthru
    _
  // Predicated region
  $region26: #{rwkv_forward.36} parent=0 // pred_check
    _
  $region27: #{rwkv_forward.36} parent=0 // pred_check_branch
    %914 = sbr.rel (0) target = $region29
  $region28: #{rwkv_forward.36} parent=0 // pred_region
    _
  $region29: #{rwkv_forward.36} parent=0 // pred_fallthru
    _
  // Predicated region
  $region30: #{rwkv_forward.36} parent=0 // pred_check
    _
  $region31: #{rwkv_forward.36} parent=0 // pred_check_branch
    %916 = sbr.rel (0) target = $region33
  $region32: #{rwkv_forward.36} parent=0 // pred_region
    _
  $region33: #{rwkv_forward.36} parent=0 // pred_fallthru
    _

// kernel: rwkv_forward.47
$region0: #{rwkv_forward.47}
  #allocation0 [shape = 'u32[]', space=smem, size = 0x4, offset = 0x4, fixed_abs, tag = 'smem constant byte address 0x4 - core index']
  #allocation1 [shape = 'u32[144,128]{1,0:T(1,128)}', space=vmem, size = 0x12000, scoped, tag = 'internal scratch']
  #allocation2 [shape = 'f32[48,256]{1,0:T(8,128)}', space=vmem, size = 0xc000, scoped, tag = 'scratch operand']
  %s0 = inlined_call_operand.vmem [shape: bf16[48,128], index: 0, kind: input, shape index: {}]
  %s1 = inlined_call_operand.vmem [shape: bf16[128,256], index: 1, kind: input, shape index: {}]
  %s2 = inlined_call_operand.hbm [shape: bf16[48,256], index: 2, kind: output, shape index: {}]
  %s3 = sld [smem:[#allocation0]]
  $region26: #{rwkv_forward.47} parent=0
    _
  %s5 = ssub.s32 1, %s3
  %s6 = scalar_select 0, %s5, %s3
  $region1: #{rwkv_forward.47} parent=0
    #allocation3 [shape = 'u8[24576]{0}', space=vmem, size = 0x6000, scoped, tag = 'output window, operand 0, single buffered']
    #allocation4 [shape = 's32[1]{0}', space=sflag, size = 0x4, scoped, tag = 'scoped memory for rwkv_forward.47']
    %7 = vsyncpa [#allocation4], 0
    // Predicated region
    $region2: #{rwkv_forward.47} parent=1 // pred_check
      _
    $region3: #{rwkv_forward.47} parent=1 // pred_check_branch
      %9 = sbr.rel (0) target = $region5
    $region4: #{rwkv_forward.47} parent=1 // pred_region
      _
    $region5: #{rwkv_forward.47} parent=1 // pred_fallthru
      _
    // Predicated region
    $region6: #{rwkv_forward.47} parent=1 // pred_check
      _
    $region7: #{rwkv_forward.47} parent=1 // pred_check_branch
      %11 = sbr.rel (0) target = $region9
    $region8: #{rwkv_forward.47} parent=1 // pred_region
      _
    $region9: #{rwkv_forward.47} parent=1 // pred_fallthru
      _
    %p13 = scmp.eq.s32.totalorder 0, 0
    // Predicated region
    $region10: #{rwkv_forward.47} parent=1 // pred_check
      %p14 = pneg %p13
    $region11: #{rwkv_forward.47} parent=1 // pred_check_branch
      %16 = sbr.rel (%p14) target = $region13
    $region12: #{rwkv_forward.47} parent=1 // pred_region
      %17 = vst [vmem:[#allocation2] sm:$0xff] 0.0
      %18 = vst [vmem:[#allocation2 + $0x8] sm:$0xff] 0.0
      %19 = vst [vmem:[#allocation2 + $0x10] sm:$0xff] 0.0
      %20 = vst [vmem:[#allocation2 + $0x18] sm:$0xff] 0.0
      %21 = vst [vmem:[#allocation2 + $0x20] sm:$0xff] 0.0
      %22 = vst [vmem:[#allocation2 + $0x28] sm:$0xff] 0.0
      %23 = vst [vmem:[#allocation2 + $0x30] sm:$0xff] 0.0
      %24 = vst [vmem:[#allocation2 + $0x38] sm:$0xff] 0.0
      %25 = vst [vmem:[#allocation2 + $0x40] sm:$0xff] 0.0
      %26 = vst [vmem:[#allocation2 + $0x48] sm:$0xff] 0.0
      %27 = vst [vmem:[#allocation2 + $0x50] sm:$0xff] 0.0
      %28 = vst [vmem:[#allocation2 + $0x58] sm:$0xff] 0.0
    $region13: #{rwkv_forward.47} parent=1 // pred_fallthru
      _
    %v29 = vld [vmem:[#allocation2] sm:$0xff]
    %v30 = vld [vmem:[#allocation2 + $0x8] sm:$0xff]
    %v31 = vld [vmem:[#allocation2 + $0x10] sm:$0xff]
    %v32 = vld [vmem:[#allocation2 + $0x18] sm:$0xff]
    %v33 = vld [vmem:[#allocation2 + $0x20] sm:$0xff]
    %v34 = vld [vmem:[#allocation2 + $0x28] sm:$0xff]
    %v35 = vld [vmem:[#allocation2 + $0x30] sm:$0xff]
    %v36 = vld [vmem:[#allocation2 + $0x38] sm:$0xff]
    %v37 = vld [vmem:[#allocation2 + $0x40] sm:$0xff]
    %v38 = vld [vmem:[#allocation2 + $0x48] sm:$0xff]
    %v39 = vld [vmem:[#allocation2 + $0x50] sm:$0xff]
    %v40 = vld [vmem:[#allocation2 + $0x58] sm:$0xff]
    %v41 = vld [vmem:[%s0] sm:$0xf]
    %v42 = vld [vmem:[%s0 + $0x4] sm:$0xf]
    %v43 = vld [vmem:[%s0 + $0x8] sm:$0xf]
    %v44 = vld [vmem:[%s0 + $0xc] sm:$0xf]
    %v45 = vld [vmem:[%s0 + $0x10] sm:$0xf]
    %v46 = vld [vmem:[%s0 + $0x14] sm:$0xf]
    %v47 = vld [vmem:[%s1] sm:$0xff]
    %v48 = vld [vmem:[%s1 + $0x8] sm:$0xff]
    %v49 = vld [vmem:[%s1 + $0x10] sm:$0xff]
    %v50 = vld [vmem:[%s1 + $0x18] sm:$0xff]
    %v51 = vld [vmem:[%s1 + $0x20] sm:$0xff]
    %v52 = vld [vmem:[%s1 + $0x28] sm:$0xff]
    %v53 = vld [vmem:[%s1 + $0x30] sm:$0xff]
    %v54 = vld [vmem:[%s1 + $0x38] sm:$0xff]
    %v55 = vld [vmem:[%s1 + $0x40] sm:$0xff]
    %v56 = vld [vmem:[%s1 + $0x48] sm:$0xff]
    %v57 = vld [vmem:[%s1 + $0x50] sm:$0xff]
    %v58 = vld [vmem:[%s1 + $0x58] sm:$0xff]
    %v59 = vld [vmem:[%s1 + $0x60] sm:$0xff]
    %v60 = vld [vmem:[%s1 + $0x68] sm:$0xff]
    %v61 = vld [vmem:[%s1 + $0x70] sm:$0xff]
    %v62 = vld [vmem:[%s1 + $0x78] sm:$0xff]
    %v69 = vunpack.c.l.b16 %v41
    %v70 = vunpack.c.l.b16 %v42
    %v71 = vunpack.c.l.b16 %v43
    %v72 = vunpack.c.l.b16 %v44
    %v73 = vunpack.c.l.b16 %v45
    %v74 = vunpack.c.l.b16 %v46
    %v75 = vpack.c.b16 %v70, %v69
    %v76 = vpack.c.b16 %v72, %v71
    %v77 = vpack.c.b16 %v74, %v73
    %v97 = vunpack.c.l.b16 %v47
    %v98 = vunpack.c.h.b16 %v47
    %v99 = vunpack.c.l.b16 %v48
    %v100 = vunpack.c.h.b16 %v48
    %v101 = vunpack.c.l.b16 %v49
    %v102 = vunpack.c.h.b16 %v49
    %v103 = vunpack.c.l.b16 %v50
    %v104 = vunpack.c.h.b16 %v50
    %v105 = vunpack.c.l.b16 %v51
    %v106 = vunpack.c.h.b16 %v51
    %v107 = vunpack.c.l.b16 %v52
    %v108 = vunpack.c.h.b16 %v52
    %v109 = vunpack.c.l.b16 %v53
    %v110 = vunpack.c.h.b16 %v53
    %v111 = vunpack.c.l.b16 %v54
    %v112 = vunpack.c.h.b16 %v54
    %v113 = vunpack.c.l.b16 %v55
    %v114 = vunpack.c.h.b16 %v55
    %v115 = vunpack.c.l.b16 %v56
    %v116 = vunpack.c.h.b16 %v56
    %v117 = vunpack.c.l.b16 %v57
    %v118 = vunpack.c.h.b16 %v57
    %v119 = vunpack.c.l.b16 %v58
    %v120 = vunpack.c.h.b16 %v58
    %v121 = vunpack.c.l.b16 %v59
    %v122 = vunpack.c.h.b16 %v59
    %v123 = vunpack.c.l.b16 %v60
    %v124 = vunpack.c.h.b16 %v60
    %v125 = vunpack.c.l.b16 %v61
    %v126 = vunpack.c.h.b16 %v61
    %v127 = vunpack.c.l.b16 %v62
    %v128 = vunpack.c.h.b16 %v62
    %v129 = vpack.c.b16 %v99, %v97
    %v130 = vpack.c.b16 %v100, %v98
    %v131 = vpack.c.b16 %v103, %v101
    %v132 = vpack.c.b16 %v104, %v102
    %v133 = vpack.c.b16 %v107, %v105
    %v134 = vpack.c.b16 %v108, %v106
    %v135 = vpack.c.b16 %v111, %v109
    %v136 = vpack.c.b16 %v112, %v110
    %v137 = vpack.c.b16 %v115, %v113
    %v138 = vpack.c.b16 %v116, %v114
    %v139 = vpack.c.b16 %v119, %v117
    %v140 = vpack.c.b16 %v120, %v118
    %v141 = vpack.c.b16 %v123, %v121
    %v142 = vpack.c.b16 %v124, %v122
    %v143 = vpack.c.b16 %v127, %v125
    %v144 = vpack.c.b16 %v128, %v126
    %161 = vmatprep.subr.bf16.mxu0 %v130
    %162 = vmatpush1.bf16.msra.mxu0 %v129
    %163 = vmatprep.subr.bf16.mxu0 %v132
    %164 = vmatpush1.bf16.msra.mxu0 %v131
    %165 = vmatprep.subr.bf16.mxu0 %v134
    %166 = vmatpush1.bf16.msra.mxu0 %v133
    %167 = vmatprep.subr.bf16.mxu0 %v136
    %168 = vmatpush1.bf16.msra.mxu0 %v135
    %169 = vmatprep.subr.bf16.mxu0 %v138
    %170 = vmatpush1.bf16.msra.mxu0 %v137
    %171 = vmatprep.subr.bf16.mxu0 %v140
    %172 = vmatpush1.bf16.msra.mxu0 %v139
    %173 = vmatprep.subr.bf16.mxu0 %v142
    %174 = vmatpush1.bf16.msra.mxu0 %v141
    %175 = vmatprep.subr.bf16.mxu0 %v144
    %176 = vmatpush1.bf16.msra.mxu0 %v143
    %177 = vmatprep.subr.bf16.mxu0 0
    %178 = vmatpush1.bf16.msra.mxu0 0
    %179 = vmatprep.subr.bf16.mxu0 0
    %180 = vmatpush1.bf16.msra.mxu0 0
    %181 = vmatprep.subr.bf16.mxu0 0
    %182 = vmatpush1.bf16.msra.mxu0 0
    %183 = vmatprep.subr.bf16.mxu0 0
    %184 = vmatpush1.bf16.msra.mxu0 0
    %185 = vmatprep.subr.bf16.mxu0 0
    %186 = vmatpush1.bf16.msra.mxu0 0
    %187 = vmatprep.subr.bf16.mxu0 0
    %188 = vmatpush1.bf16.msra.mxu0 0
    %189 = vmatprep.subr.bf16.mxu0 0
    %190 = vmatpush1.bf16.msra.mxu0 0
    %191 = vmatprep.subr.bf16.mxu0 0
    %192 = vmatpush1.bf16.msra.mxu0 0
    %193 = vmatprep.mubr.bf16.mxu0 0
    %194 = vmatmul.mubr.bf16.gmra.mrb[0].mxu0 %v75
    %v195 = vpop.f32.mrb[0].mxu0
    %v196 = vadd.f32 0.0, %v195
    %v197 = vpop.f32.mrb[0].mxu0
    %v198 = vadd.f32 0.0, %v197
    %v199 = vpop.f32.mrb[0].mxu0
    %v200 = vadd.f32 0.0, %v199
    %v201 = vpop.f32.mrb[0].mxu0
    %v202 = vadd.f32 0.0, %v201
    %203 = vmatprep.mubr.bf16.mxu0 0
    %204 = vmatmul.mubr.bf16.gmra.mrb[0].mxu0 %v76
    %v205 = vpop.f32.mrb[0].mxu0
    %v206 = vadd.f32 0.0, %v205
    %v207 = vpop.f32.mrb[0].mxu0
    %v208 = vadd.f32 0.0, %v207
    %v209 = vpop.f32.mrb[0].mxu0
    %v210 = vadd.f32 0.0, %v209
    %v211 = vpop.f32.mrb[0].mxu0
    %v212 = vadd.f32 0.0, %v211
    %213 = vmatprep.mubr.bf16.mxu0 0
    %214 = vmatmul.mubr.bf16.gmra.mrb[0].mxu0 %v77
    %v215 = vpop.f32.mrb[0].mxu0
    %v216 = vadd.f32 0.0, %v215
    %v217 = vpop.f32.mrb[0].mxu0
    %v218 = vadd.f32 0.0, %v217
    %v219 = vpop.f32.mrb[0].mxu0
    %v220 = vadd.f32 0.0, %v219
    %v221 = vpop.f32.mrb[0].mxu0
    %v222 = vadd.f32 0.0, %v221
    %223 = vdwg.mxu0
    %v224 = vadd.f32 %v29, %v196
    %v225 = vadd.f32 %v30, %v198
    %v226 = vadd.f32 %v31, %v200
    %v227 = vadd.f32 %v32, %v202
    %v228 = vadd.f32 %v33, %v206
    %v229 = vadd.f32 %v34, %v208
    %v230 = vadd.f32 %v35, %v210
    %v231 = vadd.f32 %v36, %v212
    %v232 = vadd.f32 %v37, %v216
    %v233 = vadd.f32 %v38, %v218
    %v234 = vadd.f32 %v39, %v220
    %v235 = vadd.f32 %v40, %v222
    %236 = vst [vmem:[#allocation2] sm:$0xff] %v224
    %237 = vst [vmem:[#allocation2 + $0x8] sm:$0xff] %v225
    %238 = vst [vmem:[#allocation2 + $0x10] sm:$0xff] %v226
    %239 = vst [vmem:[#allocation2 + $0x18] sm:$0xff] %v227
    %240 = vst [vmem:[#allocation2 + $0x20] sm:$0xff] %v228
    %241 = vst [vmem:[#allocation2 + $0x28] sm:$0xff] %v229
    %242 = vst [vmem:[#allocation2 + $0x30] sm:$0xff] %v230
    %243 = vst [vmem:[#allocation2 + $0x38] sm:$0xff] %v231
    %244 = vst [vmem:[#allocation2 + $0x40] sm:$0xff] %v232
    %245 = vst [vmem:[#allocation2 + $0x48] sm:$0xff] %v233
    %246 = vst [vmem:[#allocation2 + $0x50] sm:$0xff] %v234
    %247 = vst [vmem:[#allocation2 + $0x58] sm:$0xff] %v235
    // Predicated region
    $region14: #{rwkv_forward.47} parent=1 // pred_check
      %p248 = pneg %p13
    $region15: #{rwkv_forward.47} parent=1 // pred_check_branch
      %250 = sbr.rel (%p248) target = $region17
    $region16: #{rwkv_forward.47} parent=1 // pred_region
      %v251 = vld [vmem:[#allocation2] sm:$0xff]
      %v252 = vld [vmem:[#allocation2 + $0x8] sm:$0xff]
      %v253 = vld [vmem:[#allocation2 + $0x10] sm:$0xff]
      %v254 = vld [vmem:[#allocation2 + $0x18] sm:$0xff]
      %v255 = vld [vmem:[#allocation2 + $0x20] sm:$0xff]
      %v256 = vld [vmem:[#allocation2 + $0x28] sm:$0xff]
      %v257 = vld [vmem:[#allocation2 + $0x30] sm:$0xff]
      %v258 = vld [vmem:[#allocation2 + $0x38] sm:$0xff]
      %v259 = vld [vmem:[#allocation2 + $0x40] sm:$0xff]
      %v260 = vld [vmem:[#allocation2 + $0x48] sm:$0xff]
      %v261 = vld [vmem:[#allocation2 + $0x50] sm:$0xff]
      %v262 = vld [vmem:[#allocation2 + $0x58] sm:$0xff]
      %v263 = vpack.c.bf16 %v253, %v251
      %v264 = vpack.c.bf16 %v254, %v252
      %v265 = vpack.c.bf16 %v257, %v255
      %v266 = vpack.c.bf16 %v258, %v256
      %v267 = vpack.c.bf16 %v261, %v259
      %v268 = vpack.c.bf16 %v262, %v260
      %v275 = vunpack.c.l.b16 %v263
      %v276 = vunpack.c.l.b16 %v264
      %v277 = vunpack.c.h.b16 %v263
      %v278 = vunpack.c.h.b16 %v264
      %v279 = vunpack.c.l.b16 %v265
      %v280 = vunpack.c.l.b16 %v266
      %v281 = vunpack.c.h.b16 %v265
      %v282 = vunpack.c.h.b16 %v266
      %v283 = vunpack.c.l.b16 %v267
      %v284 = vunpack.c.l.b16 %v268
      %v285 = vunpack.c.h.b16 %v267
      %v286 = vunpack.c.h.b16 %v268
      %v287 = vpack.c.b16 %v276, %v275
      %v288 = vpack.c.b16 %v278, %v277
      %v289 = vpack.c.b16 %v280, %v279
      %v290 = vpack.c.b16 %v282, %v281
      %v291 = vpack.c.b16 %v284, %v283
      %v292 = vpack.c.b16 %v286, %v285
      %299 = vst [vmem:[#allocation3] sm:$0xff] %v287
      %300 = vst [vmem:[#allocation3 + $0x8] sm:$0xff] %v288
      %301 = vst [vmem:[#allocation3 + $0x10] sm:$0xff] %v289
      %302 = vst [vmem:[#allocation3 + $0x18] sm:$0xff] %v290
      %303 = vst [vmem:[#allocation3 + $0x20] sm:$0xff] %v291
      %304 = vst [vmem:[#allocation3 + $0x28] sm:$0xff] %v292
    $region17: #{rwkv_forward.47} parent=1 // pred_fallthru
      _
    // Predicated region
    $region18: #{rwkv_forward.47} parent=1 // pred_check
      _
    $region19: #{rwkv_forward.47} parent=1 // pred_check_branch
      %306 = sbr.rel (0) target = $region21
    $region20: #{rwkv_forward.47} parent=1 // pred_region
      %s308 = ssub.s32 768, 768
      %309 = vsyncadd [#allocation4], %s308
      %s310 = sshll.u32 [#allocation3], 4
      %s311 = int_to_ptr.vmem [resolvable:$true] %s310
      %316 = dma.vmem_to_hbm [thread:$0]  %s311, 768, %s2, [#allocation4], 128, 128, 8
    $region21: #{rwkv_forward.47} parent=1 // pred_fallthru
      _
    // Predicated region
    $region22: #{rwkv_forward.47} parent=1 // pred_check
      _
    $region23: #{rwkv_forward.47} parent=1 // pred_check_branch
      %318 = sbr.rel (0) target = $region25
    $region24: #{rwkv_forward.47} parent=1 // pred_region
      %319 = dma.done [#allocation4], 768
    $region25: #{rwkv_forward.47} parent=1 // pred_fallthru
      _
    %320 = vsyncpa [#allocation4], 1

// kernel: rwkv_forward.30
$region0: #{rwkv_forward.30}
  #allocation0 [shape = 'u32[]', space=smem, size = 0x4, offset = 0x4, fixed_abs, tag = 'smem constant byte address 0x4 - core index']
  #allocation1 [shape = 'u32[144,128]{1,0:T(1,128)}', space=vmem, size = 0x12000, scoped, tag = 'internal scratch']
  #allocation2 [shape = 'f32[2,64,64]{2,1,0:T(8,128)}', space=vmem, size = 0x10000, scoped, tag = 'scratch operand']
  %s0 = inlined_call_operand.vmem [shape: bf16[2,24,128], index: 0, kind: input, shape index: {}]
  %s1 = inlined_call_operand.vmem [shape: bf16[2,24,128], index: 1, kind: input, shape index: {}]
  %s2 = inlined_call_operand.vmem [shape: bf16[2,24,128], index: 2, kind: input, shape index: {}]
  %s3 = inlined_call_operand.vmem [shape: bf16[2,24,128], index: 3, kind: input, shape index: {}]
  %s4 = inlined_call_operand.vmem [shape: bf16[2,24,128], index: 4, kind: input, shape index: {}]
  %s5 = inlined_call_operand.vmem [shape: bf16[2,24,128], index: 5, kind: input, shape index: {}]
  %s6 = inlined_call_operand.vmem [shape: bf16[1,128], index: 6, kind: input, shape index: {}]
  %s7 = inlined_call_operand.vmem [shape: bf16[1,128], index: 7, kind: input, shape index: {}]
  %s8 = inlined_call_operand.vmem [shape: bf16[1,128], index: 8, kind: input, shape index: {}]
  %s9 = inlined_call_operand.vmem [shape: bf16[1,128], index: 9, kind: input, shape index: {}]
  %s10 = inlined_call_operand.vmem [shape: bf16[1,128], index: 10, kind: input, shape index: {}]
  %s11 = inlined_call_operand.vmem [shape: bf16[2,24,128], index: 11, kind: output, shape index: {}]
  %s12 = sld [smem:[#allocation0]]
  $region81: #{rwkv_forward.30} parent=0
    _
  %s14 = ssub.s32 1, %s12
  %s15 = scalar_select 0, %s14, %s12
  loop: start=0, step=1, limit=4
  $region2: #{rwkv_forward.30} parent=0 // loop_pre_header
    _
  $region3: #{rwkv_forward.30} parent=0 // loop_header
    %s17 = sphi 0, %s21
    %p18 = scmp.ge.s32.totalorder %s17, 4
    %s24 = sphi 0, %s36
    %s25 = sphi 0, %s32
    %s26 = sphi 0, %s24
    %s27 = sphi 0, %s25
    %s28 = sphi 0, %s26
    %s29 = sphi 0, %s27
    %s41 = sphi 0, %s43
    %s44 = sphi 0, %s41
    %s45 = sphi 0, %s44
    %s61 = sphi 0, %s45
    %s69 = sphi 0, %s71
    %s72 = sphi 0, %s69
    %s73 = sphi 0, %s72
    %s89 = sphi 0, %s73
    %s97 = sphi 0, %s99
    %s100 = sphi 0, %s97
    %s101 = sphi 0, %s100
    %s117 = sphi 0, %s101
    %s125 = sphi 0, %s127
    %s128 = sphi 0, %s125
    %s129 = sphi 0, %s128
    %s145 = sphi 0, %s129
    %s153 = sphi 0, %s155
    %s156 = sphi 0, %s153
    %s157 = sphi 0, %s156
    %s173 = sphi 0, %s157
    %s181 = sphi 0, %s183
    %s184 = sphi 0, %s181
    %s185 = sphi 0, %s184
    %s201 = sphi 0, %s185
    %s205 = sphi 0, %s205
    %s207 = sphi 0, %s205
    %s208 = sphi 0, %s207
    %s222 = sphi 0, %s208
    %s226 = sphi 0, %s226
    %s228 = sphi 0, %s226
    %s229 = sphi 0, %s228
    %s243 = sphi 0, %s229
    %s247 = sphi 0, %s247
    %s249 = sphi 0, %s247
    %s250 = sphi 0, %s249
    %s264 = sphi 0, %s250
    %s268 = sphi 0, %s268
    %s270 = sphi 0, %s268
    %s271 = sphi 0, %s270
    %s285 = sphi 0, %s271
    %s289 = sphi 0, %s289
    %s291 = sphi 0, %s289
    %s292 = sphi 0, %s291
    %s306 = sphi 0, %s292
    %s314 = sphi 0, %s316
    %s317 = sphi 0, %s314
    %s318 = sphi 0, %s317
    %s334 = sphi 0, %s318
  $region4: #{rwkv_forward.30} parent=0 // loop_header_branch
    %20 = sbr.rel (%p18) target = $region8
  $region5: #{rwkv_forward.30} parent=0 // loop_body
    %s22 = ssub.s32 %s17, 1
    %s23 = ssub.s32 %s17, 2
    %s30 = sadd.s32 1, %s25
    %p31 = scmp.ge.s32.totalorder %s30, 1
    %s32 = scalar_select %p31, 0, %s30
    %s33 = sadd.s32 1, %s24
    %s34 = scalar_select %p31, %s33, %s24
    %p35 = scmp.ge.s32.totalorder %s34, 2
    %s36 = scalar_select %p35, 0, %s34
    %s37 = ssub.s32 %s24, %s36
    %s38 = ssub.s32 %s25, %s32
    %s39 = sor.u32 %s37, %s38
    %p40 = scmp.eq.s32.totalorder %s39, 0
    %s42 = sadd.s32 %s41, 1
    %s43 = scalar_select %p40, %s41, %s42
    %p46 = pneg %p40
    %p47 = scmp.eq.s32.totalorder %s17, 1
    %p48 = por %p46, %p47
    %p49 = scmp.ne.s32.totalorder %s41, %s44
    %p50 = scmp.eq.s32.totalorder %s17, 0
    %p51 = por %p49, %p50
    %p52 = scmp.ne.s32.totalorder %s41, %s44
    %p53 = scmp.eq.s32.totalorder %s22, 1
    %p54 = por %p52, %p53
    %p55 = scmp.ne.s32.totalorder %s44, %s45
    %p56 = scmp.eq.s32.totalorder %s22, 0
    %p57 = por %p55, %p56
    %p58 = scmp.ne.s32.totalorder %s44, %s45
    %p59 = scmp.eq.s32.totalorder %s23, 1
    %p60 = por %p58, %p59
    %p62 = scmp.ne.s32.totalorder %s45, %s61
    %p63 = scmp.eq.s32.totalorder %s23, 0
    %p64 = por %p62, %p63
    %s65 = ssub.s32 %s24, %s36
    %s66 = ssub.s32 %s25, %s32
    %s67 = sor.u32 %s65, %s66
    %p68 = scmp.eq.s32.totalorder %s67, 0
    %s70 = sadd.s32 %s69, 1
    %s71 = scalar_select %p68, %s69, %s70
    %p74 = pneg %p68
    %p75 = scmp.eq.s32.totalorder %s17, 1
    %p76 = por %p74, %p75
    %p77 = scmp.ne.s32.totalorder %s69, %s72
    %p78 = scmp.eq.s32.totalorder %s17, 0
    %p79 = por %p77, %p78
    %p80 = scmp.ne.s32.totalorder %s69, %s72
    %p81 = scmp.eq.s32.totalorder %s22, 1
    %p82 = por %p80, %p81
    %p83 = scmp.ne.s32.totalorder %s72, %s73
    %p84 = scmp.eq.s32.totalorder %s22, 0
    %p85 = por %p83, %p84
    %p86 = scmp.ne.s32.totalorder %s72, %s73
    %p87 = scmp.eq.s32.totalorder %s23, 1
    %p88 = por %p86, %p87
    %p90 = scmp.ne.s32.totalorder %s73, %s89
    %p91 = scmp.eq.s32.totalorder %s23, 0
    %p92 = por %p90, %p91
    %s93 = ssub.s32 %s24, %s36
    %s94 = ssub.s32 %s25, %s32
    %s95 = sor.u32 %s93, %s94
    %p96 = scmp.eq.s32.totalorder %s95, 0
    %s98 = sadd.s32 %s97, 1
    %s99 = scalar_select %p96, %s97, %s98
    %p102 = pneg %p96
    %p103 = scmp.eq.s32.totalorder %s17, 1
    %p104 = por %p102, %p103
    %p105 = scmp.ne.s32.totalorder %s97, %s100
    %p106 = scmp.eq.s32.totalorder %s17, 0
    %p107 = por %p105, %p106
    %p108 = scmp.ne.s32.totalorder %s97, %s100
    %p109 = scmp.eq.s32.totalorder %s22, 1
    %p110 = por %p108, %p109
    %p111 = scmp.ne.s32.totalorder %s100, %s101
    %p112 = scmp.eq.s32.totalorder %s22, 0
    %p113 = por %p111, %p112
    %p114 = scmp.ne.s32.totalorder %s100, %s101
    %p115 = scmp.eq.s32.totalorder %s23, 1
    %p116 = por %p114, %p115
    %p118 = scmp.ne.s32.totalorder %s101, %s117
    %p119 = scmp.eq.s32.totalorder %s23, 0
    %p120 = por %p118, %p119
    %s121 = ssub.s32 %s24, %s36
    %s122 = ssub.s32 %s25, %s32
    %s123 = sor.u32 %s121, %s122
    %p124 = scmp.eq.s32.totalorder %s123, 0
    %s126 = sadd.s32 %s125, 1
    %s127 = scalar_select %p124, %s125, %s126
    %p130 = pneg %p124
    %p131 = scmp.eq.s32.totalorder %s17, 1
    %p132 = por %p130, %p131
    %p133 = scmp.ne.s32.totalorder %s125, %s128
    %p134 = scmp.eq.s32.totalorder %s17, 0
    %p135 = por %p133, %p134
    %p136 = scmp.ne.s32.totalorder %s125, %s128
    %p137 = scmp.eq.s32.totalorder %s22, 1
    %p138 = por %p136, %p137
    %p139 = scmp.ne.s32.totalorder %s128, %s129
    %p140 = scmp.eq.s32.totalorder %s22, 0
    %p141 = por %p139, %p140
    %p142 = scmp.ne.s32.totalorder %s128, %s129
    %p143 = scmp.eq.s32.totalorder %s23, 1
    %p144 = por %p142, %p143
    %p146 = scmp.ne.s32.totalorder %s129, %s145
    %p147 = scmp.eq.s32.totalorder %s23, 0
    %p148 = por %p146, %p147
    %s149 = ssub.s32 %s24, %s36
    %s150 = ssub.s32 %s25, %s32
    %s151 = sor.u32 %s149, %s150
    %p152 = scmp.eq.s32.totalorder %s151, 0
    %s154 = sadd.s32 %s153, 1
    %s155 = scalar_select %p152, %s153, %s154
    %p158 = pneg %p152
    %p159 = scmp.eq.s32.totalorder %s17, 1
    %p160 = por %p158, %p159
    %p161 = scmp.ne.s32.totalorder %s153, %s156
    %p162 = scmp.eq.s32.totalorder %s17, 0
    %p163 = por %p161, %p162
    %p164 = scmp.ne.s32.totalorder %s153, %s156
    %p165 = scmp.eq.s32.totalorder %s22, 1
    %p166 = por %p164, %p165
    %p167 = scmp.ne.s32.totalorder %s156, %s157
    %p168 = scmp.eq.s32.totalorder %s22, 0
    %p169 = por %p167, %p168
    %p170 = scmp.ne.s32.totalorder %s156, %s157
    %p171 = scmp.eq.s32.totalorder %s23, 1
    %p172 = por %p170, %p171
    %p174 = scmp.ne.s32.totalorder %s157, %s173
    %p175 = scmp.eq.s32.totalorder %s23, 0
    %p176 = por %p174, %p175
    %s177 = ssub.s32 %s24, %s36
    %s178 = ssub.s32 %s25, %s32
    %s179 = sor.u32 %s177, %s178
    %p180 = scmp.eq.s32.totalorder %s179, 0
    %s182 = sadd.s32 %s181, 1
    %s183 = scalar_select %p180, %s181, %s182
    %p186 = pneg %p180
    %p187 = scmp.eq.s32.totalorder %s17, 1
    %p188 = por %p186, %p187
    %p189 = scmp.ne.s32.totalorder %s181, %s184
    %p190 = scmp.eq.s32.totalorder %s17, 0
    %p191 = por %p189, %p190
    %p192 = scmp.ne.s32.totalorder %s181, %s184
    %p193 = scmp.eq.s32.totalorder %s22, 1
    %p194 = por %p192, %p193
    %p195 = scmp.ne.s32.totalorder %s184, %s185
    %p196 = scmp.eq.s32.totalorder %s22, 0
    %p197 = por %p195, %p196
    %p198 = scmp.ne.s32.totalorder %s184, %s185
    %p199 = scmp.eq.s32.totalorder %s23, 1
    %p200 = por %p198, %p199
    %p202 = scmp.ne.s32.totalorder %s185, %s201
    %p203 = scmp.eq.s32.totalorder %s23, 0
    %p204 = por %p202, %p203
    %s206 = sadd.s32 %s205, 1
    %p209 = scmp.eq.s32.totalorder %s17, 1
    %p210 = scmp.ne.s32.totalorder %s205, %s207
    %p211 = scmp.eq.s32.totalorder %s17, 0
    %p212 = por %p210, %p211
    %p213 = scmp.ne.s32.totalorder %s205, %s207
    %p214 = scmp.eq.s32.totalorder %s22, 1
    %p215 = por %p213, %p214
    %p216 = scmp.ne.s32.totalorder %s207, %s208
    %p217 = scmp.eq.s32.totalorder %s22, 0
    %p218 = por %p216, %p217
    %p219 = scmp.ne.s32.totalorder %s207, %s208
    %p220 = scmp.eq.s32.totalorder %s23, 1
    %p221 = por %p219, %p220
    %p223 = scmp.ne.s32.totalorder %s208, %s222
    %p224 = scmp.eq.s32.totalorder %s23, 0
    %p225 = por %p223, %p224
    %s227 = sadd.s32 %s226, 1
    %p230 = scmp.eq.s32.totalorder %s17, 1
    %p231 = scmp.ne.s32.totalorder %s226, %s228
    %p232 = scmp.eq.s32.totalorder %s17, 0
    %p233 = por %p231, %p232
    %p234 = scmp.ne.s32.totalorder %s226, %s228
    %p235 = scmp.eq.s32.totalorder %s22, 1
    %p236 = por %p234, %p235
    %p237 = scmp.ne.s32.totalorder %s228, %s229
    %p238 = scmp.eq.s32.totalorder %s22, 0
    %p239 = por %p237, %p238
    %p240 = scmp.ne.s32.totalorder %s228, %s229
    %p241 = scmp.eq.s32.totalorder %s23, 1
    %p242 = por %p240, %p241
    %p244 = scmp.ne.s32.totalorder %s229, %s243
    %p245 = scmp.eq.s32.totalorder %s23, 0
    %p246 = por %p244, %p245
    %s248 = sadd.s32 %s247, 1
    %p251 = scmp.eq.s32.totalorder %s17, 1
    %p252 = scmp.ne.s32.totalorder %s247, %s249
    %p253 = scmp.eq.s32.totalorder %s17, 0
    %p254 = por %p252, %p253
    %p255 = scmp.ne.s32.totalorder %s247, %s249
    %p256 = scmp.eq.s32.totalorder %s22, 1
    %p257 = por %p255, %p256
    %p258 = scmp.ne.s32.totalorder %s249, %s250
    %p259 = scmp.eq.s32.totalorder %s22, 0
    %p260 = por %p258, %p259
    %p261 = scmp.ne.s32.totalorder %s249, %s250
    %p262 = scmp.eq.s32.totalorder %s23, 1
    %p263 = por %p261, %p262
    %p265 = scmp.ne.s32.totalorder %s250, %s264
    %p266 = scmp.eq.s32.totalorder %s23, 0
    %p267 = por %p265, %p266
    %s269 = sadd.s32 %s268, 1
    %p272 = scmp.eq.s32.totalorder %s17, 1
    %p273 = scmp.ne.s32.totalorder %s268, %s270
    %p274 = scmp.eq.s32.totalorder %s17, 0
    %p275 = por %p273, %p274
    %p276 = scmp.ne.s32.totalorder %s268, %s270
    %p277 = scmp.eq.s32.totalorder %s22, 1
    %p278 = por %p276, %p277
    %p279 = scmp.ne.s32.totalorder %s270, %s271
    %p280 = scmp.eq.s32.totalorder %s22, 0
    %p281 = por %p279, %p280
    %p282 = scmp.ne.s32.totalorder %s270, %s271
    %p283 = scmp.eq.s32.totalorder %s23, 1
    %p284 = por %p282, %p283
    %p286 = scmp.ne.s32.totalorder %s271, %s285
    %p287 = scmp.eq.s32.totalorder %s23, 0
    %p288 = por %p286, %p287
    %s290 = sadd.s32 %s289, 1
    %p293 = scmp.eq.s32.totalorder %s17, 1
    %p294 = scmp.ne.s32.totalorder %s289, %s291
    %p295 = scmp.eq.s32.totalorder %s17, 0
    %p296 = por %p294, %p295
    %p297 = scmp.ne.s32.totalorder %s289, %s291
    %p298 = scmp.eq.s32.totalorder %s22, 1
    %p299 = por %p297, %p298
    %p300 = scmp.ne.s32.totalorder %s291, %s292
    %p301 = scmp.eq.s32.totalorder %s22, 0
    %p302 = por %p300, %p301
    %p303 = scmp.ne.s32.totalorder %s291, %s292
    %p304 = scmp.eq.s32.totalorder %s23, 1
    %p305 = por %p303, %p304
    %p307 = scmp.ne.s32.totalorder %s292, %s306
    %p308 = scmp.eq.s32.totalorder %s23, 0
    %p309 = por %p307, %p308
    %s310 = ssub.s32 %s24, %s36
    %s311 = ssub.s32 %s25, %s32
    %s312 = sor.u32 %s310, %s311
    %p313 = scmp.eq.s32.totalorder %s312, 0
    %s315 = sadd.s32 %s314, 1
    %s316 = scalar_select %p313, %s314, %s315
    %p319 = pneg %p313
    %p320 = scmp.eq.s32.totalorder %s17, 1
    %p321 = por %p319, %p320
    %p322 = scmp.ne.s32.totalorder %s314, %s317
    %p323 = scmp.eq.s32.totalorder %s17, 0
    %p324 = por %p322, %p323
    %p325 = scmp.ne.s32.totalorder %s314, %s317
    %p326 = scmp.eq.s32.totalorder %s22, 1
    %p327 = por %p325, %p326
    %p328 = scmp.ne.s32.totalorder %s317, %s318
    %p329 = scmp.eq.s32.totalorder %s22, 0
    %p330 = por %p328, %p329
    %p331 = scmp.ne.s32.totalorder %s317, %s318
    %p332 = scmp.eq.s32.totalorder %s23, 1
    %p333 = por %p331, %p332
    %p335 = scmp.ne.s32.totalorder %s318, %s334
    %p336 = scmp.eq.s32.totalorder %s23, 0
    %p337 = por %p335, %p336
    %p338 = scmp.le.s32.totalorder 1, %s17
    %p339 = scmp.lt.s32.totalorder %s17, 3
    %p340 = pnand %p338, %p339
    %p341 = pneg %p340
    // Predicated region
    $region9: #{rwkv_forward.30} parent=5 // pred_check
      _
    $region10: #{rwkv_forward.30} parent=5 // pred_check_branch
      %343 = sbr.rel (%p340) target = $region12
    $region11: #{rwkv_forward.30} parent=5 // pred_region
      %s344 = ssub.s32 %s17, 1
      // Predicated region
      $region13: #{rwkv_forward.30} parent=11 // pred_check
        %p345 = pneg %p218
      $region14: #{rwkv_forward.30} parent=11 // pred_check_branch
        %347 = sbr.rel (%p345) target = $region16
      $region15: #{rwkv_forward.30} parent=11 // pred_region
        _
      $region16: #{rwkv_forward.30} parent=11 // pred_fallthru
        _
      // Predicated region
      $region17: #{rwkv_forward.30} parent=11 // pred_check
        %p348 = pneg %p239
      $region18: #{rwkv_forward.30} parent=11 // pred_check_branch
        %350 = sbr.rel (%p348) target = $region20
      $region19: #{rwkv_forward.30} parent=11 // pred_region
        _
      $region20: #{rwkv_forward.30} parent=11 // pred_fallthru
        _
      // Predicated region
      $region21: #{rwkv_forward.30} parent=11 // pred_check
        %p351 = pneg %p260
      $region22: #{rwkv_forward.30} parent=11 // pred_check_branch
        %353 = sbr.rel (%p351) target = $region24
      $region23: #{rwkv_forward.30} parent=11 // pred_region
        _
      $region24: #{rwkv_forward.30} parent=11 // pred_fallthru
        _
      // Predicated region
      $region25: #{rwkv_forward.30} parent=11 // pred_check
        %p354 = pneg %p281
      $region26: #{rwkv_forward.30} parent=11 // pred_check_branch
        %356 = sbr.rel (%p354) target = $region28
      $region27: #{rwkv_forward.30} parent=11 // pred_region
        _
      $region28: #{rwkv_forward.30} parent=11 // pred_fallthru
        _
      // Predicated region
      $region29: #{rwkv_forward.30} parent=11 // pred_check
        %p357 = pneg %p302
      $region30: #{rwkv_forward.30} parent=11 // pred_check_branch
        %359 = sbr.rel (%p357) target = $region32
      $region31: #{rwkv_forward.30} parent=11 // pred_region
        _
      $region32: #{rwkv_forward.30} parent=11 // pred_fallthru
        _
    $region12: #{rwkv_forward.30} parent=5 // pred_fallthru
      _
    %p360 = scmp.lt.s32.totalorder %s17, 2
    // Predicated region
    $region33: #{rwkv_forward.30} parent=5 // pred_check
      %p361 = pneg %p360
    $region34: #{rwkv_forward.30} parent=5 // pred_check_branch
      %363 = sbr.rel (%p361) target = $region36
    $region35: #{rwkv_forward.30} parent=5 // pred_region
      // Predicated region
      $region37: #{rwkv_forward.30} parent=35 // pred_check
        %p364 = pneg %p51
      $region38: #{rwkv_forward.30} parent=35 // pred_check_branch
        %366 = sbr.rel (%p364) target = $region40
      $region39: #{rwkv_forward.30} parent=35 // pred_region
        %s367 = smul.u32 3, %s25
        %p368 = scmp.lt.s32.totalorder %s24, 1
        %s369 = scalar_select %p368, %s24, 1
        %p370 = scmp.lt.s32.totalorder %s367, 2
        %s371 = scalar_select %p370, %s367, 2
        %s372 = smul.addr %s369, 3
        %s373 = sadd.s32 %s371, %s372
        %s374 = smul.addr %s373, 4
        %s375 = scalar_lea.vmem %s0, %s374
        %s376 = smul.u32 3, %s25
      $region40: #{rwkv_forward.30} parent=35 // pred_fallthru
        _
      // Predicated region
      $region41: #{rwkv_forward.30} parent=35 // pred_check
        %p377 = pneg %p79
      $region42: #{rwkv_forward.30} parent=35 // pred_check_branch
        %379 = sbr.rel (%p377) target = $region44
      $region43: #{rwkv_forward.30} parent=35 // pred_region
        %s380 = smul.u32 3, %s25
        %p381 = scmp.lt.s32.totalorder %s24, 1
        %s382 = scalar_select %p381, %s24, 1
        %p383 = scmp.lt.s32.totalorder %s380, 2
        %s384 = scalar_select %p383, %s380, 2
        %s385 = smul.addr %s382, 3
        %s386 = sadd.s32 %s384, %s385
        %s387 = smul.addr %s386, 4
        %s388 = scalar_lea.vmem %s1, %s387
        %s389 = smul.u32 3, %s25
      $region44: #{rwkv_forward.30} parent=35 // pred_fallthru
        _
      // Predicated region
      $region45: #{rwkv_forward.30} parent=35 // pred_check
        %p390 = pneg %p107
      $region46: #{rwkv_forward.30} parent=35 // pred_check_branch
        %392 = sbr.rel (%p390) target = $region48
      $region47: #{rwkv_forward.30} parent=35 // pred_region
        %s393 = smul.u32 3, %s25
        %p394 = scmp.lt.s32.totalorder %s24, 1
        %s395 = scalar_select %p394, %s24, 1
        %p396 = scmp.lt.s32.totalorder %s393, 2
        %s397 = scalar_select %p396, %s393, 2
        %s398 = smul.addr %s395, 3
        %s399 = sadd.s32 %s397, %s398
        %s400 = smul.addr %s399, 4
        %s401 = scalar_lea.vmem %s2, %s400
        %s402 = smul.u32 3, %s25
      $region48: #{rwkv_forward.30} parent=35 // pred_fallthru
        _
      // Predicated region
      $region49: #{rwkv_forward.30} parent=35 // pred_check
        %p403 = pneg %p135
      $region50: #{rwkv_forward.30} parent=35 // pred_check_branch
        %405 = sbr.rel (%p403) target = $region52
      $region51: #{rwkv_forward.30} parent=35 // pred_region
        %s406 = smul.u32 3, %s25
        %p407 = scmp.lt.s32.totalorder %s24, 1
        %s408 = scalar_select %p407, %s24, 1
        %p409 = scmp.lt.s32.totalorder %s406, 2
        %s410 = scalar_select %p409, %s406, 2
        %s411 = smul.addr %s408, 3
        %s412 = sadd.s32 %s410, %s411
        %s413 = smul.addr %s412, 4
        %s414 = scalar_lea.vmem %s3, %s413
        %s415 = smul.u32 3, %s25
      $region52: #{rwkv_forward.30} parent=35 // pred_fallthru
        _
      // Predicated region
      $region53: #{rwkv_forward.30} parent=35 // pred_check
        %p416 = pneg %p163
      $region54: #{rwkv_forward.30} parent=35 // pred_check_branch
        %418 = sbr.rel (%p416) target = $region56
      $region55: #{rwkv_forward.30} parent=35 // pred_region
        %s419 = smul.u32 3, %s25
        %p420 = scmp.lt.s32.totalorder %s24, 1
        %s421 = scalar_select %p420, %s24, 1
        %p422 = scmp.lt.s32.totalorder %s419, 2
        %s423 = scalar_select %p422, %s419, 2
        %s424 = smul.addr %s421, 3
        %s425 = sadd.s32 %s423, %s424
        %s426 = smul.addr %s425, 4
        %s427 = scalar_lea.vmem %s4, %s426
        %s428 = smul.u32 3, %s25
      $region56: #{rwkv_forward.30} parent=35 // pred_fallthru
        _
      // Predicated region
      $region57: #{rwkv_forward.30} parent=35 // pred_check
        %p429 = pneg %p191
      $region58: #{rwkv_forward.30} parent=35 // pred_check_branch
        %431 = sbr.rel (%p429) target = $region60
      $region59: #{rwkv_forward.30} parent=35 // pred_region
        %s432 = smul.u32 3, %s25
        %p433 = scmp.lt.s32.totalorder %s24, 1
        %s434 = scalar_select %p433, %s24, 1
        %p435 = scmp.lt.s32.totalorder %s432, 2
        %s436 = scalar_select %p435, %s432, 2
        %s437 = smul.addr %s434, 3
        %s438 = sadd.s32 %s436, %s437
        %s439 = smul.addr %s438, 4
        %s440 = scalar_lea.vmem %s5, %s439
        %s441 = smul.u32 3, %s25
      $region60: #{rwkv_forward.30} parent=35 // pred_fallthru
        _
    $region36: #{rwkv_forward.30} parent=5 // pred_fallthru
      _
    %p442 = scmp.le.s32.totalorder 1, %s17
    %p443 = scmp.lt.s32.totalorder %s17, 3
    %p444 = pnand %p442, %p443
    %p445 = pneg %p444
    // Predicated region
    $region61: #{rwkv_forward.30} parent=5 // pred_check
      _
    $region62: #{rwkv_forward.30} parent=5 // pred_check_branch
      %447 = sbr.rel (%p444) target = $region64
    $region63: #{rwkv_forward.30} parent=5 // pred_region
      %s448 = ssub.s32 %s17, 1
      %s449 = smul.u32 3, %s27
      %p450 = scmp.lt.s32.totalorder %s26, 1
      %s451 = scalar_select %p450, %s26, 1
      %p452 = scmp.lt.s32.totalorder %s449, 2
      %s453 = scalar_select %p452, %s449, 2
      %s454 = smul.addr %s451, 3
      %s455 = sadd.s32 %s453, %s454
      %s456 = smul.addr %s455, 4
      %s457 = scalar_lea.vmem %s0, %s456
      %p458 = pneg %p57
      %p459 = pneg %p54
      %s460 = smul.u32 3, %s27
      %p461 = scmp.lt.s32.totalorder %s26, 1
      %s462 = scalar_select %p461, %s26, 1
      %p463 = scmp.lt.s32.totalorder %s460, 2
      %s464 = scalar_select %p463, %s460, 2
      %s465 = smul.addr %s462, 3
      %s466 = sadd.s32 %s464, %s465
      %s467 = smul.addr %s466, 4
      %s468 = scalar_lea.vmem %s1, %s467
      %p469 = pneg %p85
      %p470 = pneg %p82
      %s471 = smul.u32 3, %s27
      %p472 = scmp.lt.s32.totalorder %s26, 1
      %s473 = scalar_select %p472, %s26, 1
      %p474 = scmp.lt.s32.totalorder %s471, 2
      %s475 = scalar_select %p474, %s471, 2
      %s476 = smul.addr %s473, 3
      %s477 = sadd.s32 %s475, %s476
      %s478 = smul.addr %s477, 4
      %s479 = scalar_lea.vmem %s2, %s478
      %p480 = pneg %p113
      %p481 = pneg %p110
      %s482 = smul.u32 3, %s27
      %p483 = scmp.lt.s32.totalorder %s26, 1
      %s484 = scalar_select %p483, %s26, 1
      %p485 = scmp.lt.s32.totalorder %s482, 2
      %s486 = scalar_select %p485, %s482, 2
      %s487 = smul.addr %s484, 3
      %s488 = sadd.s32 %s486, %s487
      %s489 = smul.addr %s488, 4
      %s490 = scalar_lea.vmem %s3, %s489
      %p491 = pneg %p141
      %p492 = pneg %p138
      %s493 = smul.u32 3, %s27
      %p494 = scmp.lt.s32.totalorder %s26, 1
      %s495 = scalar_select %p494, %s26, 1
      %p496 = scmp.lt.s32.totalorder %s493, 2
      %s497 = scalar_select %p496, %s493, 2
      %s498 = smul.addr %s495, 3
      %s499 = sadd.s32 %s497, %s498
      %s500 = smul.addr %s499, 4
      %s501 = scalar_lea.vmem %s4, %s500
      %p502 = pneg %p169
      %p503 = pneg %p166
      %s504 = smul.u32 3, %s27
      %p505 = scmp.lt.s32.totalorder %s26, 1
      %s506 = scalar_select %p505, %s26, 1
      %p507 = scmp.lt.s32.totalorder %s504, 2
      %s508 = scalar_select %p507, %s504, 2
      %s509 = smul.addr %s506, 3
      %s510 = sadd.s32 %s508, %s509
      %s511 = smul.addr %s510, 4
      %s512 = scalar_lea.vmem %s5, %s511
      %p513 = pneg %p197
      %p514 = pneg %p194
      %p515 = pneg %p218
      %p516 = pneg %p215
      %p517 = pneg %p239
      %p518 = pneg %p236
      %p519 = pneg %p260
      %p520 = pneg %p257
      %p521 = pneg %p281
      %p522 = pneg %p278
      %p523 = pneg %p302
      %p524 = pneg %p299
      %p525 = pneg %p330
      %p526 = pneg %p327
      %s527 = smul.u32 3, %s27
      %p528 = scmp.lt.s32.totalorder %s26, 1
      %s529 = scalar_select %p528, %s26, 1
      %p530 = scmp.lt.s32.totalorder %s527, 2
      %s531 = scalar_select %p530, %s527, 2
      %s532 = smul.addr %s529, 3
      %s533 = sadd.s32 %s531, %s532
      %s534 = smul.addr %s533, 4
      %s535 = scalar_lea.vmem %s11, %s534
      %s536 = smul.u32 3, %s27
      %p537 = scmp.lt.s32.totalorder %s26, 1
      %s538 = scalar_select %p537, %s26, 1
      %p539 = scmp.lt.s32.totalorder %s536, 2
      %s540 = scalar_select %p539, %s536, 2
      %s541 = smul.addr %s538, 3
      %s542 = sadd.s32 %s540, %s541
      %s543 = smul.addr %s542, 4
      %s544 = scalar_lea.vmem %s0, %s543
      %s545 = smul.u32 3, %s27
      %s546 = smul.u32 3, %s27
      %p547 = scmp.lt.s32.totalorder %s26, 1
      %s548 = scalar_select %p547, %s26, 1
      %p549 = scmp.lt.s32.totalorder %s546, 2
      %s550 = scalar_select %p549, %s546, 2
      %s551 = smul.addr %s548, 3
      %s552 = sadd.s32 %s550, %s551
      %s553 = smul.addr %s552, 4
      %s554 = scalar_lea.vmem %s1, %s553
      %s555 = smul.u32 3, %s27
      %s556 = smul.u32 3, %s27
      %p557 = scmp.lt.s32.totalorder %s26, 1
      %s558 = scalar_select %p557, %s26, 1
      %p559 = scmp.lt.s32.totalorder %s556, 2
      %s560 = scalar_select %p559, %s556, 2
      %s561 = smul.addr %s558, 3
      %s562 = sadd.s32 %s560, %s561
      %s563 = smul.addr %s562, 4
      %s564 = scalar_lea.vmem %s2, %s563
      %s565 = smul.u32 3, %s27
      %s566 = smul.u32 3, %s27
      %p567 = scmp.lt.s32.totalorder %s26, 1
      %s568 = scalar_select %p567, %s26, 1
      %p569 = scmp.lt.s32.totalorder %s566, 2
      %s570 = scalar_select %p569, %s566, 2
      %s571 = smul.addr %s568, 3
      %s572 = sadd.s32 %s570, %s571
      %s573 = smul.addr %s572, 4
      %s574 = scalar_lea.vmem %s3, %s573
      %s575 = smul.u32 3, %s27
      %s576 = smul.u32 3, %s27
      %p577 = scmp.lt.s32.totalorder %s26, 1
      %s578 = scalar_select %p577, %s26, 1
      %p579 = scmp.lt.s32.totalorder %s576, 2
      %s580 = scalar_select %p579, %s576, 2
      %s581 = smul.addr %s578, 3
      %s582 = sadd.s32 %s580, %s581
      %s583 = smul.addr %s582, 4
      %s584 = scalar_lea.vmem %s4, %s583
      %s585 = smul.u32 3, %s27
      %s586 = smul.u32 3, %s27
      %p587 = scmp.lt.s32.totalorder %s26, 1
      %s588 = scalar_select %p587, %s26, 1
      %p589 = scmp.lt.s32.totalorder %s586, 2
      %s590 = scalar_select %p589, %s586, 2
      %s591 = smul.addr %s588, 3
      %s592 = sadd.s32 %s590, %s591
      %s593 = smul.addr %s592, 4
      %s594 = scalar_lea.vmem %s5, %s593
      %s595 = smul.u32 3, %s27
      %s596 = smul.u32 3, %s27
      %p597 = scmp.lt.s32.totalorder %s26, 1
      %s598 = scalar_select %p597, %s26, 1
      %p599 = scmp.lt.s32.totalorder %s596, 2
      %s600 = scalar_select %p599, %s596, 2
      %s601 = smul.addr %s598, 3
      %s602 = sadd.s32 %s600, %s601
      %s603 = smul.addr %s602, 4
      %s604 = scalar_lea.vmem %s11, %s603
      %s605 = smul.u32 3, %s27
      %p606 = scmp.eq.s32.totalorder %s27, 0
      // Predicated region
      $region65: #{rwkv_forward.30} parent=63 // pred_check
        %p607 = pneg %p606
      $region66: #{rwkv_forward.30} parent=63 // pred_check_branch
        %609 = sbr.rel (%p607) target = $region68
      $region67: #{rwkv_forward.30} parent=63 // pred_region
        %vm610 = vcmask 523264
        %611 = vst.msk [vmem:[#allocation2] sm:$0xff] %vm610, 0.0
        %612 = vst.msk [vmem:[#allocation2 + $0x8] sm:$0xff] %vm610, 0.0
        %613 = vst.msk [vmem:[#allocation2 + $0x10] sm:$0xff] %vm610, 0.0
        %614 = vst.msk [vmem:[#allocation2 + $0x18] sm:$0xff] %vm610, 0.0
        %615 = vst.msk [vmem:[#allocation2 + $0x20] sm:$0xff] %vm610, 0.0
        %616 = vst.msk [vmem:[#allocation2 + $0x28] sm:$0xff] %vm610, 0.0
        %617 = vst.msk [vmem:[#allocation2 + $0x30] sm:$0xff] %vm610, 0.0
        %618 = vst.msk [vmem:[#allocation2 + $0x38] sm:$0xff] %vm610, 0.0
        %619 = vst.msk [vmem:[#allocation2 + $0x40] sm:$0xff] %vm610, 0.0
        %620 = vst.msk [vmem:[#allocation2 + $0x48] sm:$0xff] %vm610, 0.0
        %621 = vst.msk [vmem:[#allocation2 + $0x50] sm:$0xff] %vm610, 0.0
        %622 = vst.msk [vmem:[#allocation2 + $0x58] sm:$0xff] %vm610, 0.0
        %623 = vst.msk [vmem:[#allocation2 + $0x60] sm:$0xff] %vm610, 0.0
        %624 = vst.msk [vmem:[#allocation2 + $0x68] sm:$0xff] %vm610, 0.0
        %625 = vst.msk [vmem:[#allocation2 + $0x70] sm:$0xff] %vm610, 0.0
        %626 = vst.msk [vmem:[#allocation2 + $0x78] sm:$0xff] %vm610, 0.0
      $region68: #{rwkv_forward.30} parent=63 // pred_fallthru
        _
      %v627 = vlaneseq
      %v628 = vshrl.u32 %v627, 7
      %v629 = vadd.s32 %v628, 8
      %v630 = vadd.s32 %v628, 16
      %v631 = vlaneseq
      %v632 = vand.u32 %v631, 127
      %vm633 = vcmp.le.s32.totalorder %v632, %v628
      %vm634 = vcmp.le.s32.totalorder %v632, %v629
      %vm635 = vcmp.le.s32.totalorder %v632, %v630
      %v636 = vsel %vm633, 1, 0
      %v637 = vsel %vm634, 1, 0
      %v638 = vsel %vm635, 1, 0
      %v639 = vcvt.s32.f32 %v636
      %v640 = vcvt.s32.f32 %v637
      %v641 = vcvt.s32.f32 %v638
      %vm642 = vcmp.lt.s32.totalorder %v632, %v628
      %vm643 = vcmp.lt.s32.totalorder %v632, %v629
      %vm644 = vcmp.lt.s32.totalorder %v632, %v630
      %v645 = vsel %vm642, 1, 0
      %v646 = vsel %vm643, 1, 0
      %v647 = vsel %vm644, 1, 0
      %v648 = vcvt.s32.f32 %v645
      %v649 = vcvt.s32.f32 %v646
      %v650 = vcvt.s32.f32 %v647
      %v651 = vld [vmem:[%s544] sm:$0xf]
      %v652 = vld [vmem:[%s544 + $0x4] sm:$0xf]
      %v653 = vld [vmem:[%s544 + $0x8] sm:$0xf]
      %v654 = vunpack.c.l.bf16 %v651
      %v655 = vunpack.c.l.bf16 %v652
      %v656 = vunpack.c.l.bf16 %v653
      %v657 = vld [vmem:[%s554] sm:$0xf]
      %v658 = vld [vmem:[%s554 + $0x4] sm:$0xf]
      %v659 = vld [vmem:[%s554 + $0x8] sm:$0xf]
      %v660 = vunpack.c.l.bf16 %v657
      %v661 = vunpack.c.l.bf16 %v658
      %v662 = vunpack.c.l.bf16 %v659
      %v663 = vld [vmem:[%s564] sm:$0xf]
      %v664 = vld [vmem:[%s564 + $0x4] sm:$0xf]
      %v665 = vld [vmem:[%s564 + $0x8] sm:$0xf]
      %v666 = vunpack.c.l.bf16 %v663
      %v667 = vunpack.c.l.bf16 %v664
      %v668 = vunpack.c.l.bf16 %v665
      %v669 = vld [vmem:[%s574] sm:$0xf]
      %v670 = vld [vmem:[%s574 + $0x4] sm:$0xf]
      %v671 = vld [vmem:[%s574 + $0x8] sm:$0xf]
      %v672 = vunpack.c.l.bf16 %v669
      %v673 = vunpack.c.l.bf16 %v670
      %v674 = vunpack.c.l.bf16 %v671
      %v675 = vld [vmem:[%s584] sm:$0xf]
      %v676 = vld [vmem:[%s584 + $0x4] sm:$0xf]
      %v677 = vld [vmem:[%s584 + $0x8] sm:$0xf]
      %v678 = vunpack.c.l.bf16 %v675
      %v679 = vunpack.c.l.bf16 %v676
      %v680 = vunpack.c.l.bf16 %v677
      %v681 = vld [vmem:[%s594] sm:$0xf]
      %v682 = vld [vmem:[%s594 + $0x4] sm:$0xf]
      %v683 = vld [vmem:[%s594 + $0x8] sm:$0xf]
      %v684 = vunpack.c.l.bf16 %v681
      %v685 = vunpack.c.l.bf16 %v682
      %v686 = vunpack.c.l.bf16 %v683
      %v687 = vld [vmem:[%s6] sm:$0x1]
      %v688 = vunpack.c.l.bf16 %v687
      %v689 = vld [vmem:[%s7] sm:$0x1]
      %v690 = vunpack.c.l.bf16 %v689
      %v691 = vld [vmem:[%s8] sm:$0x1]
      %v692 = vunpack.c.l.bf16 %v691
      %v693 = vld [vmem:[%s9] sm:$0x1]
      %v694 = vunpack.c.l.bf16 %v693
      %v695 = vld [vmem:[%s10] sm:$0x1]
      %v696 = vunpack.c.l.bf16 %v695
      %v697 = vld [vmem:[#allocation2] sm:$0xff]
      %v698 = vld [vmem:[#allocation2 + $0x8] sm:$0xff]
      %v699 = vld [vmem:[#allocation2 + $0x10] sm:$0xff]
      %v700 = vld [vmem:[#allocation2 + $0x18] sm:$0xff]
      %v701 = vld [vmem:[#allocation2 + $0x20] sm:$0xff]
      %v702 = vld [vmem:[#allocation2 + $0x28] sm:$0xff]
      %v703 = vld [vmem:[#allocation2 + $0x30] sm:$0xff]
      %v704 = vld [vmem:[#allocation2 + $0x38] sm:$0xff]
      %v705 = vlaneseq
      %v706 = vshrl.u32 %v705, 7
      %v707 = vsub.s32 0, %v706
      %v708 = vrot.slane %v688, %v707
      %v709 = vmul.f32 %v666, %v708
      %v710 = vmul.f32 %v667, %v708
      %v711 = vmul.f32 %v668, %v708
      %v712 = vmul.f32 %v709, %v709
      %v713 = vmul.f32 %v710, %v710
      %v714 = vmul.f32 %v711, %v711
      %vm715 = vcmask 523264
      %v716 = vsel %vm715, %v712, 0.0
      %717 = vadd.xlane.f32.xlu0 %v716
      %v718 = vpop.xlane.xlu0 %717
      %v719 = vsel %vm715, %v713, 0.0
      %720 = vadd.xlane.f32.xlu0 %v719
      %v721 = vpop.xlane.xlu0 %720
      %v722 = vsel %vm715, %v714, 0.0
      %723 = vadd.xlane.f32.xlu0 %v722
      %v724 = vpop.xlane.xlu0 %723
      %v725 = vrsqrt.pop %v718
      %v726 = vmul.f32 %v718, %v725
      %vm727 = vcmp.eq.f32.partialorder %v718, inf
      %v728 = vsel %vm727, %v718, %v726
      %vm729 = vcmp.eq.f32.partialorder %v718, 0.0
      %v730 = vand.u32 %v718, 2147483648
      %v731 = vsel %vm729, %v730, %v728
      %v732 = vrsqrt.pop %v721
      %v733 = vmul.f32 %v721, %v732
      %vm734 = vcmp.eq.f32.partialorder %v721, inf
      %v735 = vsel %vm734, %v721, %v733
      %vm736 = vcmp.eq.f32.partialorder %v721, 0.0
      %v737 = vand.u32 %v721, 2147483648
      %v738 = vsel %vm736, %v737, %v735
      %v739 = vrsqrt.pop %v724
      %v740 = vmul.f32 %v724, %v739
      %vm741 = vcmp.eq.f32.partialorder %v724, inf
      %v742 = vsel %vm741, %v724, %v740
      %vm743 = vcmp.eq.f32.partialorder %v724, 0.0
      %v744 = vand.u32 %v724, 2147483648
      %v745 = vsel %vm743, %v744, %v742
      %v746 = vmax.f32 %v731, 1e-12
      %v747 = vmax.f32 %v738, 1e-12
      %v748 = vmax.f32 %v745, 1e-12
      %v749 = vrcp.pop %v746
      %v750 = vmul.f32 %v709, %v749
      %v751 = vrcp.pop %v747
      %v752 = vmul.f32 %v710, %v751
      %v753 = vrcp.pop %v748
      %v754 = vmul.f32 %v711, %v753
      %v755 = vsub.f32 0.0, %v750
      %v756 = vsub.f32 0.0, %v752
      %v757 = vsub.f32 0.0, %v754
      %v758 = vmul.f32 %v750, %v678
      %v759 = vmul.f32 %v752, %v679
      %v760 = vmul.f32 %v754, %v680
      %v761 = vsub.f32 %v678, 1.0
      %v762 = vsub.f32 %v679, 1.0
      %v763 = vsub.f32 %v680, 1.0
      %v764 = vlaneseq
      %v765 = vshrl.u32 %v764, 7
      %v766 = vsub.s32 0, %v765
      %v767 = vrot.slane %v690, %v766
      %v768 = vmul.f32 %v761, %v767
      %v769 = vmul.f32 %v762, %v767
      %v770 = vmul.f32 %v763, %v767
      %v771 = vadd.f32 %v768, 1.0
      %v772 = vadd.f32 %v769, 1.0
      %v773 = vadd.f32 %v770, 1.0
      %v774 = vmul.f32 %v666, %v771
      %v775 = vmul.f32 %v667, %v772
      %v776 = vmul.f32 %v668, %v773
      %v777 = vmul.f32 %v660, 1.442695
      %v778 = vpow.pop %v777
      %v779 = vmul.f32 %v661, 1.442695
      %v780 = vpow.pop %v779
      %v781 = vmul.f32 %v662, 1.442695
      %v782 = vpow.pop %v781
      %v783 = vsub.f32 0.0, %v778
      %v784 = vsub.f32 0.0, %v780
      %v785 = vsub.f32 0.0, %v782
      %vm786 = vcmask 195584
      %v788 = vsel %vm786, %v639, 0
      %v791 = vsel %vm786, %v640, 0
      %v794 = vsel %vm786, %v641, 0
      %796 = vmatprep.subr.mxu0 0.0
      %797 = vmatpush1.msra.mxu0 %v783
      %798 = vmatprep.subr.mxu0 0.0
      %799 = vmatpush1.msra.mxu0 %v784
      %800 = vmatprep.subr.mxu0 0.0
      %801 = vmatpush1.msra.mxu0 %v785
      %802 = vmatprep.subr.mxu0 0.0
      %803 = vmatpush1.msra.mxu0 0.0
      %804 = vmatprep.subr.mxu0 0.0
      %805 = vmatpush1.msra.mxu0 0.0
      %806 = vmatprep.subr.mxu0 0.0
      %807 = vmatpush1.msra.mxu0 0.0
      %808 = vmatprep.subr.mxu0 0.0
      %809 = vmatpush1.msra.mxu0 0.0
      %810 = vmatprep.subr.mxu0 0.0
      %811 = vmatpush1.msra.mxu0 0.0
      %812 = vmatprep.subr.mxu0 0.0
      %813 = vmatpush1.msra.mxu0 0.0
      %814 = vmatprep.subr.mxu0 0.0
      %815 = vmatpush1.msra.mxu0 0.0
      %816 = vmatprep.subr.mxu0 0.0
      %817 = vmatpush1.msra.mxu0 0.0
      %818 = vmatprep.subr.mxu0 0.0
      %819 = vmatpush1.msra.mxu0 0.0
      %820 = vmatprep.subr.mxu0 0.0
      %821 = vmatpush1.msra.mxu0 0.0
      %822 = vmatprep.subr.mxu0 0.0
      %823 = vmatpush1.msra.mxu0 0.0
      %824 = vmatprep.subr.mxu0 0.0
      %825 = vmatpush1.msra.mxu0 0.0
      %826 = vmatprep.subr.mxu0 0.0
      %827 = vmatpush1.msra.mxu0 0.0
      %828 = vmatprep.subr.mxu0 0.0
      %829 = vmatpush1.msra.mxu0 0.0
      %830 = vmatprep.subr.mxu0 0.0
      %831 = vmatpush1.msra.mxu0 0.0
      %832 = vmatprep.subr.mxu0 0.0
      %833 = vmatpush1.msra.mxu0 0.0
      %834 = vmatprep.subr.mxu0 0.0
      %835 = vmatpush1.msra.mxu0 0.0
      %836 = vmatprep.subr.mxu0 0.0
      %837 = vmatpush1.msra.mxu0 0.0
      %838 = vmatprep.subr.mxu0 0.0
      %839 = vmatpush1.msra.mxu0 0.0
      %840 = vmatprep.subr.mxu0 0.0
      %841 = vmatpush1.msra.mxu0 0.0
      %842 = vmatprep.subr.mxu0 0.0
      %843 = vmatpush1.msra.mxu0 0.0
      %844 = vmatprep.subr.mxu0 0.0
      %845 = vmatpush1.msra.mxu0 0.0
      %846 = vmatprep.subr.mxu0 0.0
      %847 = vmatpush1.msra.mxu0 0.0
      %848 = vmatprep.subr.mxu0 0.0
      %849 = vmatpush1.msra.mxu0 0.0
      %850 = vmatprep.subr.mxu0 0.0
      %851 = vmatpush1.msra.mxu0 0.0
      %852 = vmatprep.subr.mxu0 0.0
      %853 = vmatpush1.msra.mxu0 0.0
      %854 = vmatprep.subr.mxu0 0.0
      %855 = vmatpush1.msra.mxu0 0.0
      %856 = vmatprep.subr.mxu0 0.0
      %857 = vmatpush1.msra.mxu0 0.0
      %858 = vmatprep.subr.mxu0 0.0
      %859 = vmatpush1.msra.mxu0 0.0
      %860 = vmatprep.mubr.f32.mxu0 0.0
      %861 = vmatmul.mubr.f32.gmra.mrb[0].mxu0 %v788
      %v862 = vpop.f32.mrb[0].mxu0
      %v863 = vadd.f32 0.0, %v862
      %v864 = vpop.f32.mrb[0].mxu0
      %865 = vmatprep.mubr.f32.mxu0 0.0
      %866 = vmatmul.mubr.f32.gmra.mrb[0].mxu0 %v791
      %v867 = vpop.f32.mrb[0].mxu0
      %v868 = vadd.f32 0.0, %v867
      %v869 = vpop.f32.mrb[0].mxu0
      %870 = vmatprep.mubr.f32.mxu0 0.0
      %871 = vmatmul.mubr.f32.gmra.mrb[0].mxu0 %v794
      %v872 = vpop.f32.mrb[0].mxu0
      %v873 = vadd.f32 0.0, %v872
      %v874 = vpop.f32.mrb[0].mxu0
      %875 = vdwg.mxu0
      %v876 = vsub.f32 %v863, %v783
      %v877 = vsub.f32 %v868, %v784
      %v878 = vsub.f32 %v873, %v785
      %v879 = vmul.f32 %v863, 1.442695
      %v880 = vpow.pop %v879
      %v881 = vmul.f32 %v868, 1.442695
      %v882 = vpow.pop %v881
      %v883 = vmul.f32 %v873, 1.442695
      %v884 = vpow.pop %v883
      %v885 = vsub.f32 0.0, %v863
      %v886 = vsub.f32 0.0, %v868
      %v887 = vsub.f32 0.0, %v873
      %v888 = vmul.f32 %v885, 1.442695
      %v889 = vpow.pop %v888
      %v890 = vmul.f32 %v886, 1.442695
      %v891 = vpow.pop %v890
      %v892 = vmul.f32 %v887, 1.442695
      %v893 = vpow.pop %v892
      %v894 = vmul.f32 %v876, 1.442695
      %v895 = vpow.pop %v894
      %v896 = vmul.f32 %v877, 1.442695
      %v897 = vpow.pop %v896
      %v898 = vmul.f32 %v878, 1.442695
      %v899 = vpow.pop %v898
      %v900 = vmul.f32 %v654, %v880
      %v901 = vmul.f32 %v655, %v882
      %v902 = vmul.f32 %v656, %v884
      %v903 = vmul.f32 %v774, %v889
      %v904 = vmul.f32 %v775, %v891
      %v905 = vmul.f32 %v776, %v893
      %v906 = vmul.f32 %v758, %v889
      %v907 = vmul.f32 %v759, %v891
      %v908 = vmul.f32 %v760, %v893
      %v909 = vmul.f32 %v755, %v895
      %v910 = vmul.f32 %v756, %v897
      %v911 = vmul.f32 %v757, %v899
      %v913 = vsel %vm715, %v909, 0
      %v916 = vsel %vm715, %v910, 0
      %v919 = vsel %vm715, %v911, 0
      %v922 = vsel %vm715, %v906, 0
      %v925 = vsel %vm715, %v907, 0
      %v928 = vsel %vm715, %v908, 0
      %930 = vmatprep.subr.mxu0 0.0
      %931 = vmatpush1.xpose.msra.mxu0 %v922
      %932 = vmatprep.subr.mxu0 0.0
      %933 = vmatpush1.xpose.msra.mxu0 %v925
      %934 = vmatprep.subr.mxu0 0.0
      %935 = vmatpush1.xpose.msra.mxu0 %v928
      %936 = vmatprep.subr.mxu0 0.0
      %937 = vmatpush1.xpose.msra.mxu0 0.0
      %938 = vmatprep.subr.mxu0 0.0
      %939 = vmatpush1.xpose.msra.mxu0 0.0
      %940 = vmatprep.subr.mxu0 0.0
      %941 = vmatpush1.xpose.msra.mxu0 0.0
      %942 = vmatprep.subr.mxu0 0.0
      %943 = vmatpush1.xpose.msra.mxu0 0.0
      %944 = vmatprep.subr.mxu0 0.0
      %945 = vmatpush1.xpose.msra.mxu0 0.0
      %946 = vmatprep.subr.mxu0 0.0
      %947 = vmatpush1.xpose.msra.mxu0 0.0
      %948 = vmatprep.subr.mxu0 0.0
      %949 = vmatpush1.xpose.msra.mxu0 0.0
      %950 = vmatprep.subr.mxu0 0.0
      %951 = vmatpush1.xpose.msra.mxu0 0.0
      %952 = vmatprep.subr.mxu0 0.0
      %953 = vmatpush1.xpose.msra.mxu0 0.0
      %954 = vmatprep.subr.mxu0 0.0
      %955 = vmatpush1.xpose.msra.mxu0 0.0
      %956 = vmatprep.subr.mxu0 0.0
      %957 = vmatpush1.xpose.msra.mxu0 0.0
      %958 = vmatprep.subr.mxu0 0.0
      %959 = vmatpush1.xpose.msra.mxu0 0.0
      %960 = vmatprep.subr.mxu0 0.0
      %961 = vmatpush1.xpose.msra.mxu0 0.0
      %962 = vmatprep.subr.mxu0 0.0
      %963 = vmatpush1.xpose.msra.mxu0 0.0
      %964 = vmatprep.subr.mxu0 0.0
      %965 = vmatpush1.xpose.msra.mxu0 0.0
      %966 = vmatprep.subr.mxu0 0.0
      %967 = vmatpush1.xpose.msra.mxu0 0.0
      %968 = vmatprep.subr.mxu0 0.0
      %969 = vmatpush1.xpose.msra.mxu0 0.0
      %970 = vmatprep.subr.mxu0 0.0
      %971 = vmatpush1.xpose.msra.mxu0 0.0
      %972 = vmatprep.subr.mxu0 0.0
      %973 = vmatpush1.xpose.msra.mxu0 0.0
      %974 = vmatprep.subr.mxu0 0.0
      %975 = vmatpush1.xpose.msra.mxu0 0.0
      %976 = vmatprep.subr.mxu0 0.0
      %977 = vmatpush1.xpose.msra.mxu0 0.0
      %978 = vmatprep.subr.mxu0 0.0
      %979 = vmatpush1.xpose.msra.mxu0 0.0
      %980 = vmatprep.subr.mxu0 0.0
      %981 = vmatpush1.xpose.msra.mxu0 0.0
      %982 = vmatprep.subr.mxu0 0.0
      %983 = vmatpush1.xpose.msra.mxu0 0.0
      %984 = vmatprep.subr.mxu0 0.0
      %985 = vmatpush1.xpose.msra.mxu0 0.0
      %986 = vmatprep.subr.mxu0 0.0
      %987 = vmatpush1.xpose.msra.mxu0 0.0
      %988 = vmatprep.subr.mxu0 0.0
      %989 = vmatpush1.xpose.msra.mxu0 0.0
      %990 = vmatprep.subr.mxu0 0.0
      %991 = vmatpush1.xpose.msra.mxu0 0.0
      %992 = vmatprep.subr.mxu0 0.0
      %993 = vmatpush1.xpose.msra.mxu0 0.0
      %994 = vmatprep.mubr.f32.mxu0 0.0
      %995 = vmatmul.mubr.f32.gmra.mrb[0].mxu0 %v913
      %v996 = vpop.f32.mrb[0].mxu0
      %v997 = vadd.f32 0.0, %v996
      %v998 = vpop.f32.mrb[0].mxu0
      %999 = vmatprep.mubr.f32.mxu0 0.0
      %1000 = vmatmul.mubr.f32.gmra.mrb[0].mxu0 %v916
      %v1001 = vpop.f32.mrb[0].mxu0
      %v1002 = vadd.f32 0.0, %v1001
      %v1003 = vpop.f32.mrb[0].mxu0
      %1004 = vmatprep.mubr.f32.mxu0 0.0
      %1005 = vmatmul.mubr.f32.gmra.mrb[0].mxu0 %v919
      %v1006 = vpop.f32.mrb[0].mxu0
      %v1007 = vadd.f32 0.0, %v1006
      %v1008 = vpop.f32.mrb[0].mxu0
      %1009 = vdwg.mxu0
      %v1010 = vmul.f32 %v997, %v648
      %v1011 = vmul.f32 %v1002, %v649
      %v1012 = vmul.f32 %v1007, %v650
      %v1014 = vsel %vm715, %v903, 0
      %v1017 = vsel %vm715, %v904, 0
      %v1020 = vsel %vm715, %v905, 0
      %1022 = vmatprep.subr.mxu0 0.0
      %1023 = vmatpush1.xpose.msra.mxu0 %v1014
      %1024 = vmatprep.subr.mxu0 0.0
      %1025 = vmatpush1.xpose.msra.mxu0 %v1017
      %1026 = vmatprep.subr.mxu0 0.0
      %1027 = vmatpush1.xpose.msra.mxu0 %v1020
      %1028 = vmatprep.subr.mxu0 0.0
      %1029 = vmatpush1.xpose.msra.mxu0 0.0
      %1030 = vmatprep.subr.mxu0 0.0
      %1031 = vmatpush1.xpose.msra.mxu0 0.0
      %1032 = vmatprep.subr.mxu0 0.0
      %1033 = vmatpush1.xpose.msra.mxu0 0.0
      %1034 = vmatprep.subr.mxu0 0.0
      %1035 = vmatpush1.xpose.msra.mxu0 0.0
      %1036 = vmatprep.subr.mxu0 0.0
      %1037 = vmatpush1.xpose.msra.mxu0 0.0
      %1038 = vmatprep.subr.mxu0 0.0
      %1039 = vmatpush1.xpose.msra.mxu0 0.0
      %1040 = vmatprep.subr.mxu0 0.0
      %1041 = vmatpush1.xpose.msra.mxu0 0.0
      %1042 = vmatprep.subr.mxu0 0.0
      %1043 = vmatpush1.xpose.msra.mxu0 0.0
      %1044 = vmatprep.subr.mxu0 0.0
      %1045 = vmatpush1.xpose.msra.mxu0 0.0
      %1046 = vmatprep.subr.mxu0 0.0
      %1047 = vmatpush1.xpose.msra.mxu0 0.0
      %1048 = vmatprep.subr.mxu0 0.0
      %1049 = vmatpush1.xpose.msra.mxu0 0.0
      %1050 = vmatprep.subr.mxu0 0.0
      %1051 = vmatpush1.xpose.msra.mxu0 0.0
      %1052 = vmatprep.subr.mxu0 0.0
      %1053 = vmatpush1.xpose.msra.mxu0 0.0
      %1054 = vmatprep.subr.mxu0 0.0
      %1055 = vmatpush1.xpose.msra.mxu0 0.0
      %1056 = vmatprep.subr.mxu0 0.0
      %1057 = vmatpush1.xpose.msra.mxu0 0.0
      %1058 = vmatprep.subr.mxu0 0.0
      %1059 = vmatpush1.xpose.msra.mxu0 0.0
      %1060 = vmatprep.subr.mxu0 0.0
      %1061 = vmatpush1.xpose.msra.mxu0 0.0
      %1062 = vmatprep.subr.mxu0 0.0
      %1063 = vmatpush1.xpose.msra.mxu0 0.0
      %1064 = vmatprep.subr.mxu0 0.0
      %1065 = vmatpush1.xpose.msra.mxu0 0.0
      %1066 = vmatprep.subr.mxu0 0.0
      %1067 = vmatpush1.xpose.msra.mxu0 0.0
      %1068 = vmatprep.subr.mxu0 0.0
      %1069 = vmatpush1.xpose.msra.mxu0 0.0
      %1070 = vmatprep.subr.mxu0 0.0
      %1071 = vmatpush1.xpose.msra.mxu0 0.0
      %1072 = vmatprep.subr.mxu0 0.0
      %1073 = vmatpush1.xpose.msra.mxu0 0.0
      %1074 = vmatprep.subr.mxu0 0.0
      %1075 = vmatpush1.xpose.msra.mxu0 0.0
      %1076 = vmatprep.subr.mxu0 0.0
      %1077 = vmatpush1.xpose.msra.mxu0 0.0
      %1078 = vmatprep.subr.mxu0 0.0
      %1079 = vmatpush1.xpose.msra.mxu0 0.0
      %1080 = vmatprep.subr.mxu0 0.0
      %1081 = vmatpush1.xpose.msra.mxu0 0.0
      %1082 = vmatprep.subr.mxu0 0.0
      %1083 = vmatpush1.xpose.msra.mxu0 0.0
      %1084 = vmatprep.subr.mxu0 0.0
      %1085 = vmatpush1.xpose.msra.mxu0 0.0
      %1086 = vmatprep.mubr.f32.mxu0 0.0
      %1087 = vmatmul.mubr.f32.gmra.mrb[0].mxu0 %v913
      %v1088 = vpop.f32.mrb[0].mxu0
      %v1089 = vadd.f32 0.0, %v1088
      %v1090 = vpop.f32.mrb[0].mxu0
      %1091 = vmatprep.mubr.f32.mxu0 0.0
      %1092 = vmatmul.mubr.f32.gmra.mrb[0].mxu0 %v916
      %v1093 = vpop.f32.mrb[0].mxu0
      %v1094 = vadd.f32 0.0, %v1093
      %v1095 = vpop.f32.mrb[0].mxu0
      %1096 = vmatprep.mubr.f32.mxu0 0.0
      %1097 = vmatmul.mubr.f32.gmra.mrb[0].mxu0 %v919
      %v1098 = vpop.f32.mrb[0].mxu0
      %v1099 = vadd.f32 0.0, %v1098
      %v1100 = vpop.f32.mrb[0].mxu0
      %1101 = vdwg.mxu0
      %v1102 = vmul.f32 %v1089, %v648
      %v1103 = vmul.f32 %v1094, %v649
      %v1104 = vmul.f32 %v1099, %v650
      %v1106 = vsel %vm786, %v1102, 0
      %v1109 = vsel %vm786, %v1103, 0
      %v1112 = vsel %vm786, %v1104, 0
      %1114 = vmatprep.subr.mxu0 0.0
      %1115 = vmatpush1.msra.mxu0 %v672
      %1116 = vmatprep.subr.mxu0 0.0
      %1117 = vmatpush1.msra.mxu0 %v673
      %1118 = vmatprep.subr.mxu0 0.0
      %1119 = vmatpush1.msra.mxu0 %v674
      %1120 = vmatprep.subr.mxu0 0.0
      %1121 = vmatpush1.msra.mxu0 0.0
      %1122 = vmatprep.subr.mxu0 0.0
      %1123 = vmatpush1.msra.mxu0 0.0
      %1124 = vmatprep.subr.mxu0 0.0
      %1125 = vmatpush1.msra.mxu0 0.0
      %1126 = vmatprep.subr.mxu0 0.0
      %1127 = vmatpush1.msra.mxu0 0.0
      %1128 = vmatprep.subr.mxu0 0.0
      %1129 = vmatpush1.msra.mxu0 0.0
      %1130 = vmatprep.subr.mxu0 0.0
      %1131 = vmatpush1.msra.mxu0 0.0
      %1132 = vmatprep.subr.mxu0 0.0
      %1133 = vmatpush1.msra.mxu0 0.0
      %1134 = vmatprep.subr.mxu0 0.0
      %1135 = vmatpush1.msra.mxu0 0.0
      %1136 = vmatprep.subr.mxu0 0.0
      %1137 = vmatpush1.msra.mxu0 0.0
      %1138 = vmatprep.subr.mxu0 0.0
      %1139 = vmatpush1.msra.mxu0 0.0
      %1140 = vmatprep.subr.mxu0 0.0
      %1141 = vmatpush1.msra.mxu0 0.0
      %1142 = vmatprep.subr.mxu0 0.0
      %1143 = vmatpush1.msra.mxu0 0.0
      %1144 = vmatprep.subr.mxu0 0.0
      %1145 = vmatpush1.msra.mxu0 0.0
      %1146 = vmatprep.subr.mxu0 0.0
      %1147 = vmatpush1.msra.mxu0 0.0
      %1148 = vmatprep.subr.mxu0 0.0
      %1149 = vmatpush1.msra.mxu0 0.0
      %1150 = vmatprep.subr.mxu0 0.0
      %1151 = vmatpush1.msra.mxu0 0.0
      %1152 = vmatprep.subr.mxu0 0.0
      %1153 = vmatpush1.msra.mxu0 0.0
      %1154 = vmatprep.subr.mxu0 0.0
      %1155 = vmatpush1.msra.mxu0 0.0
      %1156 = vmatprep.subr.mxu0 0.0
      %1157 = vmatpush1.msra.mxu0 0.0
      %1158 = vmatprep.subr.mxu0 0.0
      %1159 = vmatpush1.msra.mxu0 0.0
      %1160 = vmatprep.subr.mxu0 0.0
      %1161 = vmatpush1.msra.mxu0 0.0
      %1162 = vmatprep.subr.mxu0 0.0
      %1163 = vmatpush1.msra.mxu0 0.0
      %1164 = vmatprep.subr.mxu0 0.0
      %1165 = vmatpush1.msra.mxu0 0.0
      %1166 = vmatprep.subr.mxu0 0.0
      %1167 = vmatpush1.msra.mxu0 0.0
      %1168 = vmatprep.subr.mxu0 0.0
      %1169 = vmatpush1.msra.mxu0 0.0
      %1170 = vmatprep.subr.mxu0 0.0
      %1171 = vmatpush1.msra.mxu0 0.0
      %1172 = vmatprep.subr.mxu0 0.0
      %1173 = vmatpush1.msra.mxu0 0.0
      %1174 = vmatprep.subr.mxu0 0.0
      %1175 = vmatpush1.msra.mxu0 0.0
      %1176 = vmatprep.subr.mxu0 0.0
      %1177 = vmatpush1.msra.mxu0 0.0
      %1178 = vmatprep.mubr.f32.mxu0 0.0
      %1179 = vmatmul.mubr.f32.gmra.mrb[0].mxu0 %v1106
      %v1180 = vpop.f32.mrb[0].mxu0
      %v1181 = vadd.f32 0.0, %v1180
      %v1182 = vpop.f32.mrb[0].mxu0
      %1183 = vmatprep.mubr.f32.mxu0 0.0
      %1184 = vmatmul.mubr.f32.gmra.mrb[0].mxu0 %v1109
      %v1185 = vpop.f32.mrb[0].mxu0
      %v1186 = vadd.f32 0.0, %v1185
      %v1187 = vpop.f32.mrb[0].mxu0
      %1188 = vmatprep.mubr.f32.mxu0 0.0
      %1189 = vmatmul.mubr.f32.gmra.mrb[0].mxu0 %v1112
      %v1190 = vpop.f32.mrb[0].mxu0
      %v1191 = vadd.f32 0.0, %v1190
      %v1192 = vpop.f32.mrb[0].mxu0
      %1193 = vdwg.mxu0
      %v1195 = vsel %vm715, %v697, 0
      %v1198 = vsel %vm715, %v698, 0
      %v1201 = vsel %vm715, %v699, 0
      %v1204 = vsel %vm715, %v700, 0
      %v1207 = vsel %vm715, %v701, 0
      %v1210 = vsel %vm715, %v702, 0
      %v1213 = vsel %vm715, %v703, 0
      %v1216 = vsel %vm715, %v704, 0
      %1218 = vmatprep.subr.mxu0 0.0
      %1219 = vmatpush1.xpose.msra.mxu0 %v1195
      %1220 = vmatprep.subr.mxu0 0.0
      %1221 = vmatpush1.xpose.msra.mxu0 %v1198
      %1222 = vmatprep.subr.mxu0 0.0
      %1223 = vmatpush1.xpose.msra.mxu0 %v1201
      %1224 = vmatprep.subr.mxu0 0.0
      %1225 = vmatpush1.xpose.msra.mxu0 %v1204
      %1226 = vmatprep.subr.mxu0 0.0
      %1227 = vmatpush1.xpose.msra.mxu0 %v1207
      %1228 = vmatprep.subr.mxu0 0.0
      %1229 = vmatpush1.xpose.msra.mxu0 %v1210
      %1230 = vmatprep.subr.mxu0 0.0
      %1231 = vmatpush1.xpose.msra.mxu0 %v1213
      %1232 = vmatprep.subr.mxu0 0.0
      %1233 = vmatpush1.xpose.msra.mxu0 %v1216
      %1234 = vmatprep.subr.mxu0 0.0
      %1235 = vmatpush1.xpose.msra.mxu0 0.0
      %1236 = vmatprep.subr.mxu0 0.0
      %1237 = vmatpush1.xpose.msra.mxu0 0.0
      %1238 = vmatprep.subr.mxu0 0.0
      %1239 = vmatpush1.xpose.msra.mxu0 0.0
      %1240 = vmatprep.subr.mxu0 0.0
      %1241 = vmatpush1.xpose.msra.mxu0 0.0
      %1242 = vmatprep.subr.mxu0 0.0
      %1243 = vmatpush1.xpose.msra.mxu0 0.0
      %1244 = vmatprep.subr.mxu0 0.0
      %1245 = vmatpush1.xpose.msra.mxu0 0.0
      %1246 = vmatprep.subr.mxu0 0.0
      %1247 = vmatpush1.xpose.msra.mxu0 0.0
      %1248 = vmatprep.subr.mxu0 0.0
      %1249 = vmatpush1.xpose.msra.mxu0 0.0
      %1250 = vmatprep.subr.mxu0 0.0
      %1251 = vmatpush1.xpose.msra.mxu0 0.0
      %1252 = vmatprep.subr.mxu0 0.0
      %1253 = vmatpush1.xpose.msra.mxu0 0.0
      %1254 = vmatprep.subr.mxu0 0.0
      %1255 = vmatpush1.xpose.msra.mxu0 0.0
      %1256 = vmatprep.subr.mxu0 0.0
      %1257 = vmatpush1.xpose.msra.mxu0 0.0
      %1258 = vmatprep.subr.mxu0 0.0
      %1259 = vmatpush1.xpose.msra.mxu0 0.0
      %1260 = vmatprep.subr.mxu0 0.0
      %1261 = vmatpush1.xpose.msra.mxu0 0.0
      %1262 = vmatprep.subr.mxu0 0.0
      %1263 = vmatpush1.xpose.msra.mxu0 0.0
      %1264 = vmatprep.subr.mxu0 0.0
      %1265 = vmatpush1.xpose.msra.mxu0 0.0
      %1266 = vmatprep.subr.mxu0 0.0
      %1267 = vmatpush1.xpose.msra.mxu0 0.0
      %1268 = vmatprep.subr.mxu0 0.0
      %1269 = vmatpush1.xpose.msra.mxu0 0.0
      %1270 = vmatprep.subr.mxu0 0.0
      %1271 = vmatpush1.xpose.msra.mxu0 0.0
      %1272 = vmatprep.subr.mxu0 0.0
      %1273 = vmatpush1.xpose.msra.mxu0 0.0
      %1274 = vmatprep.subr.mxu0 0.0
      %1275 = vmatpush1.xpose.msra.mxu0 0.0
      %1276 = vmatprep.subr.mxu0 0.0
      %1277 = vmatpush1.xpose.msra.mxu0 0.0
      %1278 = vmatprep.subr.mxu0 0.0
      %1279 = vmatpush1.xpose.msra.mxu0 0.0
      %1280 = vmatprep.subr.mxu0 0.0
      %1281 = vmatpush1.xpose.msra.mxu0 0.0
      %1282 = vmatprep.mubr.f32.mxu0 0.0
      %1283 = vmatmul.mubr.f32.gmra.mrb[0].mxu0 %v913
      %v1284 = vpop.f32.mrb[0].mxu0
      %v1285 = vadd.f32 %v1181, %v1284
      %v1286 = vpop.f32.mrb[0].mxu0
      %1287 = vmatprep.mubr.f32.mxu0 0.0
      %1288 = vmatmul.mubr.f32.gmra.mrb[0].mxu0 %v916
      %v1289 = vpop.f32.mrb[0].mxu0
      %v1290 = vadd.f32 %v1186, %v1289
      %v1291 = vpop.f32.mrb[0].mxu0
      %1292 = vmatprep.mubr.f32.mxu0 0.0
      %1293 = vmatmul.mubr.f32.gmra.mrb[0].mxu0 %v919
      %v1294 = vpop.f32.mrb[0].mxu0
      %v1295 = vadd.f32 %v1191, %v1294
      %v1296 = vpop.f32.mrb[0].mxu0
      %1297 = vdwg.mxu0
      %v1299 = vsel %vm786, %v1010, 0
      %v1302 = vsel %vm786, %v1011, 0
      %v1305 = vsel %vm786, %v1012, 0
      %1307 = vmatprep.subr.mxu0 0.0
      %1308 = vmatpush1.msra.mxu0 %v1285
      %1309 = vmatprep.subr.mxu0 0.0
      %1310 = vmatpush1.msra.mxu0 %v1290
      %1311 = vmatprep.subr.mxu0 0.0
      %1312 = vmatpush1.msra.mxu0 %v1295
      %1313 = vmatprep.subr.mxu0 0.0
      %1314 = vmatpush1.msra.mxu0 0.0
      %1315 = vmatprep.subr.mxu0 0.0
      %1316 = vmatpush1.msra.mxu0 0.0
      %1317 = vmatprep.subr.mxu0 0.0
      %1318 = vmatpush1.msra.mxu0 0.0
      %1319 = vmatprep.subr.mxu0 0.0
      %1320 = vmatpush1.msra.mxu0 0.0
      %1321 = vmatprep.subr.mxu0 0.0
      %1322 = vmatpush1.msra.mxu0 0.0
      %1323 = vmatprep.subr.mxu0 0.0
      %1324 = vmatpush1.msra.mxu0 0.0
      %1325 = vmatprep.subr.mxu0 0.0
      %1326 = vmatpush1.msra.mxu0 0.0
      %1327 = vmatprep.subr.mxu0 0.0
      %1328 = vmatpush1.msra.mxu0 0.0
      %1329 = vmatprep.subr.mxu0 0.0
      %1330 = vmatpush1.msra.mxu0 0.0
      %1331 = vmatprep.subr.mxu0 0.0
      %1332 = vmatpush1.msra.mxu0 0.0
      %1333 = vmatprep.subr.mxu0 0.0
      %1334 = vmatpush1.msra.mxu0 0.0
      %1335 = vmatprep.subr.mxu0 0.0
      %1336 = vmatpush1.msra.mxu0 0.0
      %1337 = vmatprep.subr.mxu0 0.0
      %1338 = vmatpush1.msra.mxu0 0.0
      %1339 = vmatprep.subr.mxu0 0.0
      %1340 = vmatpush1.msra.mxu0 0.0
      %1341 = vmatprep.subr.mxu0 0.0
      %1342 = vmatpush1.msra.mxu0 0.0
      %1343 = vmatprep.subr.mxu0 0.0
      %1344 = vmatpush1.msra.mxu0 0.0
      %1345 = vmatprep.subr.mxu0 0.0
      %1346 = vmatpush1.msra.mxu0 0.0
      %1347 = vmatprep.subr.mxu0 0.0
      %1348 = vmatpush1.msra.mxu0 0.0
      %1349 = vmatprep.subr.mxu0 0.0
      %1350 = vmatpush1.msra.mxu0 0.0
      %1351 = vmatprep.subr.mxu0 0.0
      %1352 = vmatpush1.msra.mxu0 0.0
      %1353 = vmatprep.subr.mxu0 0.0
      %1354 = vmatpush1.msra.mxu0 0.0
      %1355 = vmatprep.subr.mxu0 0.0
      %1356 = vmatpush1.msra.mxu0 0.0
      %1357 = vmatprep.subr.mxu0 0.0
      %1358 = vmatpush1.msra.mxu0 0.0
      %1359 = vmatprep.subr.mxu0 0.0
      %1360 = vmatpush1.msra.mxu0 0.0
      %1361 = vmatprep.subr.mxu0 0.0
      %1362 = vmatpush1.msra.mxu0 0.0
      %1363 = vmatprep.subr.mxu0 0.0
      %1364 = vmatpush1.msra.mxu0 0.0
      %1365 = vmatprep.subr.mxu0 0.0
      %1366 = vmatpush1.msra.mxu0 0.0
      %1367 = vmatprep.subr.mxu0 0.0
      %1368 = vmatpush1.msra.mxu0 0.0
      %1369 = vmatprep.subr.mxu0 0.0
      %1370 = vmatpush1.msra.mxu0 0.0
      %1371 = vmatprep.mubr.f32.mxu0 0.0
      %1372 = vmatmul.mubr.f32.gmra.mrb[0].mxu0 %v1299
      %v1373 = vpop.f32.mrb[0].mxu0
      %v1374 = vadd.f32 0.0, %v1373
      %v1375 = vpop.f32.mrb[0].mxu0
      %1376 = vmatprep.mubr.f32.mxu0 0.0
      %1377 = vmatmul.mubr.f32.gmra.mrb[0].mxu0 %v1302
      %v1378 = vpop.f32.mrb[0].mxu0
      %v1379 = vadd.f32 0.0, %v1378
      %v1380 = vpop.f32.mrb[0].mxu0
      %1381 = vmatprep.mubr.f32.mxu0 0.0
      %1382 = vmatmul.mubr.f32.gmra.mrb[0].mxu0 %v1305
      %v1383 = vpop.f32.mrb[0].mxu0
      %v1384 = vadd.f32 0.0, %v1383
      %v1385 = vpop.f32.mrb[0].mxu0
      %1386 = vdwg.mxu0
      %v1387 = vadd.f32 %v1285, %v1374
      %v1388 = vadd.f32 %v1290, %v1379
      %v1389 = vadd.f32 %v1295, %v1384
      %1390 = vmatprep.subr.mxu0 0.0
      %1391 = vmatpush1.msra.mxu0 %v1010
      %1392 = vmatprep.subr.mxu0 0.0
      %1393 = vmatpush1.msra.mxu0 %v1011
      %1394 = vmatprep.subr.mxu0 0.0
      %1395 = vmatpush1.msra.mxu0 %v1012
      %1396 = vmatprep.subr.mxu0 0.0
      %1397 = vmatpush1.msra.mxu0 0.0
      %1398 = vmatprep.subr.mxu0 0.0
      %1399 = vmatpush1.msra.mxu0 0.0
      %1400 = vmatprep.subr.mxu0 0.0
      %1401 = vmatpush1.msra.mxu0 0.0
      %1402 = vmatprep.subr.mxu0 0.0
      %1403 = vmatpush1.msra.mxu0 0.0
      %1404 = vmatprep.subr.mxu0 0.0
      %1405 = vmatpush1.msra.mxu0 0.0
      %1406 = vmatprep.subr.mxu0 0.0
      %1407 = vmatpush1.msra.mxu0 0.0
      %1408 = vmatprep.subr.mxu0 0.0
      %1409 = vmatpush1.msra.mxu0 0.0
      %1410 = vmatprep.subr.mxu0 0.0
      %1411 = vmatpush1.msra.mxu0 0.0
      %1412 = vmatprep.subr.mxu0 0.0
      %1413 = vmatpush1.msra.mxu0 0.0
      %1414 = vmatprep.subr.mxu0 0.0
      %1415 = vmatpush1.msra.mxu0 0.0
      %1416 = vmatprep.subr.mxu0 0.0
      %1417 = vmatpush1.msra.mxu0 0.0
      %1418 = vmatprep.subr.mxu0 0.0
      %1419 = vmatpush1.msra.mxu0 0.0
      %1420 = vmatprep.subr.mxu0 0.0
      %1421 = vmatpush1.msra.mxu0 0.0
      %1422 = vmatprep.subr.mxu0 0.0
      %1423 = vmatpush1.msra.mxu0 0.0
      %1424 = vmatprep.subr.mxu0 0.0
      %1425 = vmatpush1.msra.mxu0 0.0
      %1426 = vmatprep.subr.mxu0 0.0
      %1427 = vmatpush1.msra.mxu0 0.0
      %1428 = vmatprep.subr.mxu0 0.0
      %1429 = vmatpush1.msra.mxu0 0.0
      %1430 = vmatprep.subr.mxu0 0.0
      %1431 = vmatpush1.msra.mxu0 0.0
      %1432 = vmatprep.subr.mxu0 0.0
      %1433 = vmatpush1.msra.mxu0 0.0
      %1434 = vmatprep.subr.mxu0 0.0
      %1435 = vmatpush1.msra.mxu0 0.0
      %1436 = vmatprep.subr.mxu0 0.0
      %1437 = vmatpush1.msra.mxu0 0.0
      %1438 = vmatprep.subr.mxu0 0.0
      %1439 = vmatpush1.msra.mxu0 0.0
      %1440 = vmatprep.subr.mxu0 0.0
      %1441 = vmatpush1.msra.mxu0 0.0
      %1442 = vmatprep.subr.mxu0 0.0
      %1443 = vmatpush1.msra.mxu0 0.0
      %1444 = vmatprep.subr.mxu0 0.0
      %1445 = vmatpush1.msra.mxu0 0.0
      %1446 = vmatprep.subr.mxu0 0.0
      %1447 = vmatpush1.msra.mxu0 0.0
      %1448 = vmatprep.subr.mxu0 0.0
      %1449 = vmatpush1.msra.mxu0 0.0
      %1450 = vmatprep.subr.mxu0 0.0
      %1451 = vmatpush1.msra.mxu0 0.0
      %1452 = vmatprep.subr.mxu0 0.0
      %1453 = vmatpush1.msra.mxu0 0.0
      %1454 = vmatprep.mubr.f32.mxu0 0.0
      %1455 = vmatmul.mubr.f32.gmra.mrb[0].mxu0 %v1299
      %v1456 = vpop.f32.mrb[0].mxu0
      %v1457 = vadd.f32 0.0, %v1456
      %v1458 = vpop.f32.mrb[0].mxu0
      %1459 = vmatprep.mubr.f32.mxu0 0.0
      %1460 = vmatmul.mubr.f32.gmra.mrb[0].mxu0 %v1302
      %v1461 = vpop.f32.mrb[0].mxu0
      %v1462 = vadd.f32 0.0, %v1461
      %v1463 = vpop.f32.mrb[0].mxu0
      %1464 = vmatprep.mubr.f32.mxu0 0.0
      %1465 = vmatmul.mubr.f32.gmra.mrb[0].mxu0 %v1305
      %v1466 = vpop.f32.mrb[0].mxu0
      %v1467 = vadd.f32 0.0, %v1466
      %v1468 = vpop.f32.mrb[0].mxu0
      %1469 = vdwg.mxu0
      %v1471 = vsel %vm786, %v1457, 0
      %v1474 = vsel %vm786, %v1462, 0
      %v1477 = vsel %vm786, %v1467, 0
      %1479 = vmatprep.subr.mxu0 0.0
      %1480 = vmatpush1.msra.mxu0 %v1387
      %1481 = vmatprep.subr.mxu0 0.0
      %1482 = vmatpush1.msra.mxu0 %v1388
      %1483 = vmatprep.subr.mxu0 0.0
      %1484 = vmatpush1.msra.mxu0 %v1389
      %1485 = vmatprep.subr.mxu0 0.0
      %1486 = vmatpush1.msra.mxu0 0.0
      %1487 = vmatprep.subr.mxu0 0.0
      %1488 = vmatpush1.msra.mxu0 0.0
      %1489 = vmatprep.subr.mxu0 0.0
      %1490 = vmatpush1.msra.mxu0 0.0
      %1491 = vmatprep.subr.mxu0 0.0
      %1492 = vmatpush1.msra.mxu0 0.0
      %1493 = vmatprep.subr.mxu0 0.0
      %1494 = vmatpush1.msra.mxu0 0.0
      %1495 = vmatprep.subr.mxu0 0.0
      %1496 = vmatpush1.msra.mxu0 0.0
      %1497 = vmatprep.subr.mxu0 0.0
      %1498 = vmatpush1.msra.mxu0 0.0
      %1499 = vmatprep.subr.mxu0 0.0
      %1500 = vmatpush1.msra.mxu0 0.0
      %1501 = vmatprep.subr.mxu0 0.0
      %1502 = vmatpush1.msra.mxu0 0.0
      %1503 = vmatprep.subr.mxu0 0.0
      %1504 = vmatpush1.msra.mxu0 0.0
      %1505 = vmatprep.subr.mxu0 0.0
      %1506 = vmatpush1.msra.mxu0 0.0
      %1507 = vmatprep.subr.mxu0 0.0
      %1508 = vmatpush1.msra.mxu0 0.0
      %1509 = vmatprep.subr.mxu0 0.0
      %1510 = vmatpush1.msra.mxu0 0.0
      %1511 = vmatprep.subr.mxu0 0.0
      %1512 = vmatpush1.msra.mxu0 0.0
      %1513 = vmatprep.subr.mxu0 0.0
      %1514 = vmatpush1.msra.mxu0 0.0
      %1515 = vmatprep.subr.mxu0 0.0
      %1516 = vmatpush1.msra.mxu0 0.0
      %1517 = vmatprep.subr.mxu0 0.0
      %1518 = vmatpush1.msra.mxu0 0.0
      %1519 = vmatprep.subr.mxu0 0.0
      %1520 = vmatpush1.msra.mxu0 0.0
      %1521 = vmatprep.subr.mxu0 0.0
      %1522 = vmatpush1.msra.mxu0 0.0
      %1523 = vmatprep.subr.mxu0 0.0
      %1524 = vmatpush1.msra.mxu0 0.0
      %1525 = vmatprep.subr.mxu0 0.0
      %1526 = vmatpush1.msra.mxu0 0.0
      %1527 = vmatprep.subr.mxu0 0.0
      %1528 = vmatpush1.msra.mxu0 0.0
      %1529 = vmatprep.subr.mxu0 0.0
      %1530 = vmatpush1.msra.mxu0 0.0
      %1531 = vmatprep.subr.mxu0 0.0
      %1532 = vmatpush1.msra.mxu0 0.0
      %1533 = vmatprep.subr.mxu0 0.0
      %1534 = vmatpush1.msra.mxu0 0.0
      %1535 = vmatprep.subr.mxu0 0.0
      %1536 = vmatpush1.msra.mxu0 0.0
      %1537 = vmatprep.subr.mxu0 0.0
      %1538 = vmatpush1.msra.mxu0 0.0
      %1539 = vmatprep.subr.mxu0 0.0
      %1540 = vmatpush1.msra.mxu0 0.0
      %1541 = vmatprep.subr.mxu0 0.0
      %1542 = vmatpush1.msra.mxu0 0.0
      %1543 = vmatprep.mubr.f32.mxu0 0.0
      %1544 = vmatmul.mubr.f32.gmra.mrb[0].mxu0 %v1471
      %v1545 = vpop.f32.mrb[0].mxu0
      %v1546 = vadd.f32 0.0, %v1545
      %v1547 = vpop.f32.mrb[0].mxu0
      %1548 = vmatprep.mubr.f32.mxu0 0.0
      %1549 = vmatmul.mubr.f32.gmra.mrb[0].mxu0 %v1474
      %v1550 = vpop.f32.mrb[0].mxu0
      %v1551 = vadd.f32 0.0, %v1550
      %v1552 = vpop.f32.mrb[0].mxu0
      %1553 = vmatprep.mubr.f32.mxu0 0.0
      %1554 = vmatmul.mubr.f32.gmra.mrb[0].mxu0 %v1477
      %v1555 = vpop.f32.mrb[0].mxu0
      %v1556 = vadd.f32 0.0, %v1555
      %v1557 = vpop.f32.mrb[0].mxu0
      %1558 = vdwg.mxu0
      %v1559 = vadd.f32 %v1387, %v1546
      %v1560 = vadd.f32 %v1388, %v1551
      %v1561 = vadd.f32 %v1389, %v1556
      %1562 = vmatprep.subr.mxu0 0.0
      %1563 = vmatpush1.msra.mxu0 %v1457
      %1564 = vmatprep.subr.mxu0 0.0
      %1565 = vmatpush1.msra.mxu0 %v1462
      %1566 = vmatprep.subr.mxu0 0.0
      %1567 = vmatpush1.msra.mxu0 %v1467
      %1568 = vmatprep.subr.mxu0 0.0
      %1569 = vmatpush1.msra.mxu0 0.0
      %1570 = vmatprep.subr.mxu0 0.0
      %1571 = vmatpush1.msra.mxu0 0.0
      %1572 = vmatprep.subr.mxu0 0.0
      %1573 = vmatpush1.msra.mxu0 0.0
      %1574 = vmatprep.subr.mxu0 0.0
      %1575 = vmatpush1.msra.mxu0 0.0
      %1576 = vmatprep.subr.mxu0 0.0
      %1577 = vmatpush1.msra.mxu0 0.0
      %1578 = vmatprep.subr.mxu0 0.0
      %1579 = vmatpush1.msra.mxu0 0.0
      %1580 = vmatprep.subr.mxu0 0.0
      %1581 = vmatpush1.msra.mxu0 0.0
      %1582 = vmatprep.subr.mxu0 0.0
      %1583 = vmatpush1.msra.mxu0 0.0
      %1584 = vmatprep.subr.mxu0 0.0
      %1585 = vmatpush1.msra.mxu0 0.0
      %1586 = vmatprep.subr.mxu0 0.0
      %1587 = vmatpush1.msra.mxu0 0.0
      %1588 = vmatprep.subr.mxu0 0.0
      %1589 = vmatpush1.msra.mxu0 0.0
      %1590 = vmatprep.subr.mxu0 0.0
      %1591 = vmatpush1.msra.mxu0 0.0
      %1592 = vmatprep.subr.mxu0 0.0
      %1593 = vmatpush1.msra.mxu0 0.0
      %1594 = vmatprep.subr.mxu0 0.0
      %1595 = vmatpush1.msra.mxu0 0.0
      %1596 = vmatprep.subr.mxu0 0.0
      %1597 = vmatpush1.msra.mxu0 0.0
      %1598 = vmatprep.subr.mxu0 0.0
      %1599 = vmatpush1.msra.mxu0 0.0
      %1600 = vmatprep.subr.mxu0 0.0
      %1601 = vmatpush1.msra.mxu0 0.0
      %1602 = vmatprep.subr.mxu0 0.0
      %1603 = vmatpush1.msra.mxu0 0.0
      %1604 = vmatprep.subr.mxu0 0.0
      %1605 = vmatpush1.msra.mxu0 0.0
      %1606 = vmatprep.subr.mxu0 0.0
      %1607 = vmatpush1.msra.mxu0 0.0
      %1608 = vmatprep.subr.mxu0 0.0
      %1609 = vmatpush1.msra.mxu0 0.0
      %1610 = vmatprep.subr.mxu0 0.0
      %1611 = vmatpush1.msra.mxu0 0.0
      %1612 = vmatprep.subr.mxu0 0.0
      %1613 = vmatpush1.msra.mxu0 0.0
      %1614 = vmatprep.subr.mxu0 0.0
      %1615 = vmatpush1.msra.mxu0 0.0
      %1616 = vmatprep.subr.mxu0 0.0
      %1617 = vmatpush1.msra.mxu0 0.0
      %1618 = vmatprep.subr.mxu0 0.0
      %1619 = vmatpush1.msra.mxu0 0.0
      %1620 = vmatprep.subr.mxu0 0.0
      %1621 = vmatpush1.msra.mxu0 0.0
      %1622 = vmatprep.subr.mxu0 0.0
      %1623 = vmatpush1.msra.mxu0 0.0
      %1624 = vmatprep.subr.mxu0 0.0
      %1625 = vmatpush1.msra.mxu0 0.0
      %1626 = vmatprep.mubr.f32.mxu0 0.0
      %1627 = vmatmul.mubr.f32.gmra.mrb[0].mxu0 %v1471
      %v1628 = vpop.f32.mrb[0].mxu0
      %v1629 = vadd.f32 0.0, %v1628
      %v1630 = vpop.f32.mrb[0].mxu0
      %1631 = vmatprep.mubr.f32.mxu0 0.0
      %1632 = vmatmul.mubr.f32.gmra.mrb[0].mxu0 %v1474
      %v1633 = vpop.f32.mrb[0].mxu0
      %v1634 = vadd.f32 0.0, %v1633
      %v1635 = vpop.f32.mrb[0].mxu0
      %1636 = vmatprep.mubr.f32.mxu0 0.0
      %1637 = vmatmul.mubr.f32.gmra.mrb[0].mxu0 %v1477
      %v1638 = vpop.f32.mrb[0].mxu0
      %v1639 = vadd.f32 0.0, %v1638
      %v1640 = vpop.f32.mrb[0].mxu0
      %1641 = vdwg.mxu0
      %v1643 = vsel %vm786, %v1629, 0
      %v1646 = vsel %vm786, %v1634, 0
      %v1649 = vsel %vm786, %v1639, 0
      %1651 = vmatprep.subr.mxu0 0.0
      %1652 = vmatpush1.msra.mxu0 %v1559
      %1653 = vmatprep.subr.mxu0 0.0
      %1654 = vmatpush1.msra.mxu0 %v1560
      %1655 = vmatprep.subr.mxu0 0.0
      %1656 = vmatpush1.msra.mxu0 %v1561
      %1657 = vmatprep.subr.mxu0 0.0
      %1658 = vmatpush1.msra.mxu0 0.0
      %1659 = vmatprep.subr.mxu0 0.0
      %1660 = vmatpush1.msra.mxu0 0.0
      %1661 = vmatprep.subr.mxu0 0.0
      %1662 = vmatpush1.msra.mxu0 0.0
      %1663 = vmatprep.subr.mxu0 0.0
      %1664 = vmatpush1.msra.mxu0 0.0
      %1665 = vmatprep.subr.mxu0 0.0
      %1666 = vmatpush1.msra.mxu0 0.0
      %1667 = vmatprep.subr.mxu0 0.0
      %1668 = vmatpush1.msra.mxu0 0.0
      %1669 = vmatprep.subr.mxu0 0.0
      %1670 = vmatpush1.msra.mxu0 0.0
      %1671 = vmatprep.subr.mxu0 0.0
      %1672 = vmatpush1.msra.mxu0 0.0
      %1673 = vmatprep.subr.mxu0 0.0
      %1674 = vmatpush1.msra.mxu0 0.0
      %1675 = vmatprep.subr.mxu0 0.0
      %1676 = vmatpush1.msra.mxu0 0.0
      %1677 = vmatprep.subr.mxu0 0.0
      %1678 = vmatpush1.msra.mxu0 0.0
      %1679 = vmatprep.subr.mxu0 0.0
      %1680 = vmatpush1.msra.mxu0 0.0
      %1681 = vmatprep.subr.mxu0 0.0
      %1682 = vmatpush1.msra.mxu0 0.0
      %1683 = vmatprep.subr.mxu0 0.0
      %1684 = vmatpush1.msra.mxu0 0.0
      %1685 = vmatprep.subr.mxu0 0.0
      %1686 = vmatpush1.msra.mxu0 0.0
      %1687 = vmatprep.subr.mxu0 0.0
      %1688 = vmatpush1.msra.mxu0 0.0
      %1689 = vmatprep.subr.mxu0 0.0
      %1690 = vmatpush1.msra.mxu0 0.0
      %1691 = vmatprep.subr.mxu0 0.0
      %1692 = vmatpush1.msra.mxu0 0.0
      %1693 = vmatprep.subr.mxu0 0.0
      %1694 = vmatpush1.msra.mxu0 0.0
      %1695 = vmatprep.subr.mxu0 0.0
      %1696 = vmatpush1.msra.mxu0 0.0
      %1697 = vmatprep.subr.mxu0 0.0
      %1698 = vmatpush1.msra.mxu0 0.0
      %1699 = vmatprep.subr.mxu0 0.0
      %1700 = vmatpush1.msra.mxu0 0.0
      %1701 = vmatprep.subr.mxu0 0.0
      %1702 = vmatpush1.msra.mxu0 0.0
      %1703 = vmatprep.subr.mxu0 0.0
      %1704 = vmatpush1.msra.mxu0 0.0
      %1705 = vmatprep.subr.mxu0 0.0
      %1706 = vmatpush1.msra.mxu0 0.0
      %1707 = vmatprep.subr.mxu0 0.0
      %1708 = vmatpush1.msra.mxu0 0.0
      %1709 = vmatprep.subr.mxu0 0.0
      %1710 = vmatpush1.msra.mxu0 0.0
      %1711 = vmatprep.subr.mxu0 0.0
      %1712 = vmatpush1.msra.mxu0 0.0
      %1713 = vmatprep.subr.mxu0 0.0
      %1714 = vmatpush1.msra.mxu0 0.0
      %1715 = vmatprep.mubr.f32.mxu0 0.0
      %1716 = vmatmul.mubr.f32.gmra.mrb[0].mxu0 %v1643
      %v1717 = vpop.f32.mrb[0].mxu0
      %v1718 = vadd.f32 0.0, %v1717
      %v1719 = vpop.f32.mrb[0].mxu0
      %1720 = vmatprep.mubr.f32.mxu0 0.0
      %1721 = vmatmul.mubr.f32.gmra.mrb[0].mxu0 %v1646
      %v1722 = vpop.f32.mrb[0].mxu0
      %v1723 = vadd.f32 0.0, %v1722
      %v1724 = vpop.f32.mrb[0].mxu0
      %1725 = vmatprep.mubr.f32.mxu0 0.0
      %1726 = vmatmul.mubr.f32.gmra.mrb[0].mxu0 %v1649
      %v1727 = vpop.f32.mrb[0].mxu0
      %v1728 = vadd.f32 0.0, %v1727
      %v1729 = vpop.f32.mrb[0].mxu0
      %1730 = vdwg.mxu0
      %v1731 = vadd.f32 %v1559, %v1718
      %v1732 = vadd.f32 %v1560, %v1723
      %v1733 = vadd.f32 %v1561, %v1728
      %1734 = vmatprep.subr.mxu0 0.0
      %1735 = vmatpush1.msra.mxu0 %v1629
      %1736 = vmatprep.subr.mxu0 0.0
      %1737 = vmatpush1.msra.mxu0 %v1634
      %1738 = vmatprep.subr.mxu0 0.0
      %1739 = vmatpush1.msra.mxu0 %v1639
      %1740 = vmatprep.subr.mxu0 0.0
      %1741 = vmatpush1.msra.mxu0 0.0
      %1742 = vmatprep.subr.mxu0 0.0
      %1743 = vmatpush1.msra.mxu0 0.0
      %1744 = vmatprep.subr.mxu0 0.0
      %1745 = vmatpush1.msra.mxu0 0.0
      %1746 = vmatprep.subr.mxu0 0.0
      %1747 = vmatpush1.msra.mxu0 0.0
      %1748 = vmatprep.subr.mxu0 0.0
      %1749 = vmatpush1.msra.mxu0 0.0
      %1750 = vmatprep.subr.mxu0 0.0
      %1751 = vmatpush1.msra.mxu0 0.0
      %1752 = vmatprep.subr.mxu0 0.0
      %1753 = vmatpush1.msra.mxu0 0.0
      %1754 = vmatprep.subr.mxu0 0.0
      %1755 = vmatpush1.msra.mxu0 0.0
      %1756 = vmatprep.subr.mxu0 0.0
      %1757 = vmatpush1.msra.mxu0 0.0
      %1758 = vmatprep.subr.mxu0 0.0
      %1759 = vmatpush1.msra.mxu0 0.0
      %1760 = vmatprep.subr.mxu0 0.0
      %1761 = vmatpush1.msra.mxu0 0.0
      %1762 = vmatprep.subr.mxu0 0.0
      %1763 = vmatpush1.msra.mxu0 0.0
      %1764 = vmatprep.subr.mxu0 0.0
      %1765 = vmatpush1.msra.mxu0 0.0
      %1766 = vmatprep.subr.mxu0 0.0
      %1767 = vmatpush1.msra.mxu0 0.0
      %1768 = vmatprep.subr.mxu0 0.0
      %1769 = vmatpush1.msra.mxu0 0.0
      %1770 = vmatprep.subr.mxu0 0.0
      %1771 = vmatpush1.msra.mxu0 0.0
      %1772 = vmatprep.subr.mxu0 0.0
      %1773 = vmatpush1.msra.mxu0 0.0
      %1774 = vmatprep.subr.mxu0 0.0
      %1775 = vmatpush1.msra.mxu0 0.0
      %1776 = vmatprep.subr.mxu0 0.0
      %1777 = vmatpush1.msra.mxu0 0.0
      %1778 = vmatprep.subr.mxu0 0.0
      %1779 = vmatpush1.msra.mxu0 0.0
      %1780 = vmatprep.subr.mxu0 0.0
      %1781 = vmatpush1.msra.mxu0 0.0
      %1782 = vmatprep.subr.mxu0 0.0
      %1783 = vmatpush1.msra.mxu0 0.0
      %1784 = vmatprep.subr.mxu0 0.0
      %1785 = vmatpush1.msra.mxu0 0.0
      %1786 = vmatprep.subr.mxu0 0.0
      %1787 = vmatpush1.msra.mxu0 0.0
      %1788 = vmatprep.subr.mxu0 0.0
      %1789 = vmatpush1.msra.mxu0 0.0
      %1790 = vmatprep.subr.mxu0 0.0
      %1791 = vmatpush1.msra.mxu0 0.0
      %1792 = vmatprep.subr.mxu0 0.0
      %1793 = vmatpush1.msra.mxu0 0.0
      %1794 = vmatprep.subr.mxu0 0.0
      %1795 = vmatpush1.msra.mxu0 0.0
      %1796 = vmatprep.subr.mxu0 0.0
      %1797 = vmatpush1.msra.mxu0 0.0
      %1798 = vmatprep.mubr.f32.mxu0 0.0
      %1799 = vmatmul.mubr.f32.gmra.mrb[0].mxu0 %v1643
      %v1800 = vpop.f32.mrb[0].mxu0
      %v1801 = vadd.f32 0.0, %v1800
      %v1802 = vpop.f32.mrb[0].mxu0
      %1803 = vmatprep.mubr.f32.mxu0 0.0
      %1804 = vmatmul.mubr.f32.gmra.mrb[0].mxu0 %v1646
      %v1805 = vpop.f32.mrb[0].mxu0
      %v1806 = vadd.f32 0.0, %v1805
      %v1807 = vpop.f32.mrb[0].mxu0
      %1808 = vmatprep.mubr.f32.mxu0 0.0
      %1809 = vmatmul.mubr.f32.gmra.mrb[0].mxu0 %v1649
      %v1810 = vpop.f32.mrb[0].mxu0
      %v1811 = vadd.f32 0.0, %v1810
      %v1812 = vpop.f32.mrb[0].mxu0
      %1813 = vdwg.mxu0
      %v1815 = vsel %vm786, %v1801, 0
      %v1818 = vsel %vm786, %v1806, 0
      %v1821 = vsel %vm786, %v1811, 0
      %1823 = vmatprep.subr.mxu0 0.0
      %1824 = vmatpush1.msra.mxu0 %v1731
      %1825 = vmatprep.subr.mxu0 0.0
      %1826 = vmatpush1.msra.mxu0 %v1732
      %1827 = vmatprep.subr.mxu0 0.0
      %1828 = vmatpush1.msra.mxu0 %v1733
      %1829 = vmatprep.subr.mxu0 0.0
      %1830 = vmatpush1.msra.mxu0 0.0
      %1831 = vmatprep.subr.mxu0 0.0
      %1832 = vmatpush1.msra.mxu0 0.0
      %1833 = vmatprep.subr.mxu0 0.0
      %1834 = vmatpush1.msra.mxu0 0.0
      %1835 = vmatprep.subr.mxu0 0.0
      %1836 = vmatpush1.msra.mxu0 0.0
      %1837 = vmatprep.subr.mxu0 0.0
      %1838 = vmatpush1.msra.mxu0 0.0
      %1839 = vmatprep.subr.mxu0 0.0
      %1840 = vmatpush1.msra.mxu0 0.0
      %1841 = vmatprep.subr.mxu0 0.0
      %1842 = vmatpush1.msra.mxu0 0.0
      %1843 = vmatprep.subr.mxu0 0.0
      %1844 = vmatpush1.msra.mxu0 0.0
      %1845 = vmatprep.subr.mxu0 0.0
      %1846 = vmatpush1.msra.mxu0 0.0
      %1847 = vmatprep.subr.mxu0 0.0
      %1848 = vmatpush1.msra.mxu0 0.0
      %1849 = vmatprep.subr.mxu0 0.0
      %1850 = vmatpush1.msra.mxu0 0.0
      %1851 = vmatprep.subr.mxu0 0.0
      %1852 = vmatpush1.msra.mxu0 0.0
      %1853 = vmatprep.subr.mxu0 0.0
      %1854 = vmatpush1.msra.mxu0 0.0
      %1855 = vmatprep.subr.mxu0 0.0
      %1856 = vmatpush1.msra.mxu0 0.0
      %1857 = vmatprep.subr.mxu0 0.0
      %1858 = vmatpush1.msra.mxu0 0.0
      %1859 = vmatprep.subr.mxu0 0.0
      %1860 = vmatpush1.msra.mxu0 0.0
      %1861 = vmatprep.subr.mxu0 0.0
      %1862 = vmatpush1.msra.mxu0 0.0
      %1863 = vmatprep.subr.mxu0 0.0
      %1864 = vmatpush1.msra.mxu0 0.0
      %1865 = vmatprep.subr.mxu0 0.0
      %1866 = vmatpush1.msra.mxu0 0.0
      %1867 = vmatprep.subr.mxu0 0.0
      %1868 = vmatpush1.msra.mxu0 0.0
      %1869 = vmatprep.subr.mxu0 0.0
      %1870 = vmatpush1.msra.mxu0 0.0
      %1871 = vmatprep.subr.mxu0 0.0
      %1872 = vmatpush1.msra.mxu0 0.0
      %1873 = vmatprep.subr.mxu0 0.0
      %1874 = vmatpush1.msra.mxu0 0.0
      %1875 = vmatprep.subr.mxu0 0.0
      %1876 = vmatpush1.msra.mxu0 0.0
      %1877 = vmatprep.subr.mxu0 0.0
      %1878 = vmatpush1.msra.mxu0 0.0
      %1879 = vmatprep.subr.mxu0 0.0
      %1880 = vmatpush1.msra.mxu0 0.0
      %1881 = vmatprep.subr.mxu0 0.0
      %1882 = vmatpush1.msra.mxu0 0.0
      %1883 = vmatprep.subr.mxu0 0.0
      %1884 = vmatpush1.msra.mxu0 0.0
      %1885 = vmatprep.subr.mxu0 0.0
      %1886 = vmatpush1.msra.mxu0 0.0
      %1887 = vmatprep.mubr.f32.mxu0 0.0
      %1888 = vmatmul.mubr.f32.gmra.mrb[0].mxu0 %v1815
      %v1889 = vpop.f32.mrb[0].mxu0
      %v1890 = vadd.f32 0.0, %v1889
      %v1891 = vpop.f32.mrb[0].mxu0
      %1892 = vmatprep.mubr.f32.mxu0 0.0
      %1893 = vmatmul.mubr.f32.gmra.mrb[0].mxu0 %v1818
      %v1894 = vpop.f32.mrb[0].mxu0
      %v1895 = vadd.f32 0.0, %v1894
      %v1896 = vpop.f32.mrb[0].mxu0
      %1897 = vmatprep.mubr.f32.mxu0 0.0
      %1898 = vmatmul.mubr.f32.gmra.mrb[0].mxu0 %v1821
      %v1899 = vpop.f32.mrb[0].mxu0
      %v1900 = vadd.f32 0.0, %v1899
      %v1901 = vpop.f32.mrb[0].mxu0
      %1902 = vdwg.mxu0
      %v1903 = vadd.f32 %v1731, %v1890
      %v1904 = vadd.f32 %v1732, %v1895
      %v1905 = vadd.f32 %v1733, %v1900
      %1906 = vmatprep.subr.mxu0 0.0
      %1907 = vmatpush1.msra.mxu0 %v1801
      %1908 = vmatprep.subr.mxu0 0.0
      %1909 = vmatpush1.msra.mxu0 %v1806
      %1910 = vmatprep.subr.mxu0 0.0
      %1911 = vmatpush1.msra.mxu0 %v1811
      %1912 = vmatprep.subr.mxu0 0.0
      %1913 = vmatpush1.msra.mxu0 0.0
      %1914 = vmatprep.subr.mxu0 0.0
      %1915 = vmatpush1.msra.mxu0 0.0
      %1916 = vmatprep.subr.mxu0 0.0
      %1917 = vmatpush1.msra.mxu0 0.0
      %1918 = vmatprep.subr.mxu0 0.0
      %1919 = vmatpush1.msra.mxu0 0.0
      %1920 = vmatprep.subr.mxu0 0.0
      %1921 = vmatpush1.msra.mxu0 0.0
      %1922 = vmatprep.subr.mxu0 0.0
      %1923 = vmatpush1.msra.mxu0 0.0
      %1924 = vmatprep.subr.mxu0 0.0
      %1925 = vmatpush1.msra.mxu0 0.0
      %1926 = vmatprep.subr.mxu0 0.0
      %1927 = vmatpush1.msra.mxu0 0.0
      %1928 = vmatprep.subr.mxu0 0.0
      %1929 = vmatpush1.msra.mxu0 0.0
      %1930 = vmatprep.subr.mxu0 0.0
      %1931 = vmatpush1.msra.mxu0 0.0
      %1932 = vmatprep.subr.mxu0 0.0
      %1933 = vmatpush1.msra.mxu0 0.0
      %1934 = vmatprep.subr.mxu0 0.0
      %1935 = vmatpush1.msra.mxu0 0.0
      %1936 = vmatprep.subr.mxu0 0.0
      %1937 = vmatpush1.msra.mxu0 0.0
      %1938 = vmatprep.subr.mxu0 0.0
      %1939 = vmatpush1.msra.mxu0 0.0
      %1940 = vmatprep.subr.mxu0 0.0
      %1941 = vmatpush1.msra.mxu0 0.0
      %1942 = vmatprep.subr.mxu0 0.0
      %1943 = vmatpush1.msra.mxu0 0.0
      %1944 = vmatprep.subr.mxu0 0.0
      %1945 = vmatpush1.msra.mxu0 0.0
      %1946 = vmatprep.subr.mxu0 0.0
      %1947 = vmatpush1.msra.mxu0 0.0
      %1948 = vmatprep.subr.mxu0 0.0
      %1949 = vmatpush1.msra.mxu0 0.0
      %1950 = vmatprep.subr.mxu0 0.0
      %1951 = vmatpush1.msra.mxu0 0.0
      %1952 = vmatprep.subr.mxu0 0.0
      %1953 = vmatpush1.msra.mxu0 0.0
      %1954 = vmatprep.subr.mxu0 0.0
      %1955 = vmatpush1.msra.mxu0 0.0
      %1956 = vmatprep.subr.mxu0 0.0
      %1957 = vmatpush1.msra.mxu0 0.0
      %1958 = vmatprep.subr.mxu0 0.0
      %1959 = vmatpush1.msra.mxu0 0.0
      %1960 = vmatprep.subr.mxu0 0.0
      %1961 = vmatpush1.msra.mxu0 0.0
      %1962 = vmatprep.subr.mxu0 0.0
      %1963 = vmatpush1.msra.mxu0 0.0
      %1964 = vmatprep.subr.mxu0 0.0
      %1965 = vmatpush1.msra.mxu0 0.0
      %1966 = vmatprep.subr.mxu0 0.0
      %1967 = vmatpush1.msra.mxu0 0.0
      %1968 = vmatprep.subr.mxu0 0.0
      %1969 = vmatpush1.msra.mxu0 0.0
      %1970 = vmatprep.mubr.f32.mxu0 0.0
      %1971 = vmatmul.mubr.f32.gmra.mrb[0].mxu0 %v1815
      %v1972 = vpop.f32.mrb[0].mxu0
      %v1973 = vadd.f32 0.0, %v1972
      %v1974 = vpop.f32.mrb[0].mxu0
      %1975 = vmatprep.mubr.f32.mxu0 0.0
      %1976 = vmatmul.mubr.f32.gmra.mrb[0].mxu0 %v1818
      %v1977 = vpop.f32.mrb[0].mxu0
      %v1978 = vadd.f32 0.0, %v1977
      %v1979 = vpop.f32.mrb[0].mxu0
      %1980 = vmatprep.mubr.f32.mxu0 0.0
      %1981 = vmatmul.mubr.f32.gmra.mrb[0].mxu0 %v1821
      %v1982 = vpop.f32.mrb[0].mxu0
      %v1983 = vadd.f32 0.0, %v1982
      %v1984 = vpop.f32.mrb[0].mxu0
      %1985 = vdwg.mxu0
      %v1987 = vsel %vm786, %v1973, 0
      %v1990 = vsel %vm786, %v1978, 0
      %v1993 = vsel %vm786, %v1983, 0
      %1995 = vmatprep.subr.mxu0 0.0
      %1996 = vmatpush1.msra.mxu0 %v1903
      %1997 = vmatprep.subr.mxu0 0.0
      %1998 = vmatpush1.msra.mxu0 %v1904
      %1999 = vmatprep.subr.mxu0 0.0
      %2000 = vmatpush1.msra.mxu0 %v1905
      %2001 = vmatprep.subr.mxu0 0.0
      %2002 = vmatpush1.msra.mxu0 0.0
      %2003 = vmatprep.subr.mxu0 0.0
      %2004 = vmatpush1.msra.mxu0 0.0
      %2005 = vmatprep.subr.mxu0 0.0
      %2006 = vmatpush1.msra.mxu0 0.0
      %2007 = vmatprep.subr.mxu0 0.0
      %2008 = vmatpush1.msra.mxu0 0.0
      %2009 = vmatprep.subr.mxu0 0.0
      %2010 = vmatpush1.msra.mxu0 0.0
      %2011 = vmatprep.subr.mxu0 0.0
      %2012 = vmatpush1.msra.mxu0 0.0
      %2013 = vmatprep.subr.mxu0 0.0
      %2014 = vmatpush1.msra.mxu0 0.0
      %2015 = vmatprep.subr.mxu0 0.0
      %2016 = vmatpush1.msra.mxu0 0.0
      %2017 = vmatprep.subr.mxu0 0.0
      %2018 = vmatpush1.msra.mxu0 0.0
      %2019 = vmatprep.subr.mxu0 0.0
      %2020 = vmatpush1.msra.mxu0 0.0
      %2021 = vmatprep.subr.mxu0 0.0
      %2022 = vmatpush1.msra.mxu0 0.0
      %2023 = vmatprep.subr.mxu0 0.0
      %2024 = vmatpush1.msra.mxu0 0.0
      %2025 = vmatprep.subr.mxu0 0.0
      %2026 = vmatpush1.msra.mxu0 0.0
      %2027 = vmatprep.subr.mxu0 0.0
      %2028 = vmatpush1.msra.mxu0 0.0
      %2029 = vmatprep.subr.mxu0 0.0
      %2030 = vmatpush1.msra.mxu0 0.0
      %2031 = vmatprep.subr.mxu0 0.0
      %2032 = vmatpush1.msra.mxu0 0.0
      %2033 = vmatprep.subr.mxu0 0.0
      %2034 = vmatpush1.msra.mxu0 0.0
      %2035 = vmatprep.subr.mxu0 0.0
      %2036 = vmatpush1.msra.mxu0 0.0
      %2037 = vmatprep.subr.mxu0 0.0
      %2038 = vmatpush1.msra.mxu0 0.0
      %2039 = vmatprep.subr.mxu0 0.0
      %2040 = vmatpush1.msra.mxu0 0.0
      %2041 = vmatprep.subr.mxu0 0.0
      %2042 = vmatpush1.msra.mxu0 0.0
      %2043 = vmatprep.subr.mxu0 0.0
      %2044 = vmatpush1.msra.mxu0 0.0
      %2045 = vmatprep.subr.mxu0 0.0
      %2046 = vmatpush1.msra.mxu0 0.0
      %2047 = vmatprep.subr.mxu0 0.0
      %2048 = vmatpush1.msra.mxu0 0.0
      %2049 = vmatprep.subr.mxu0 0.0
      %2050 = vmatpush1.msra.mxu0 0.0
      %2051 = vmatprep.subr.mxu0 0.0
      %2052 = vmatpush1.msra.mxu0 0.0
      %2053 = vmatprep.subr.mxu0 0.0
      %2054 = vmatpush1.msra.mxu0 0.0
      %2055 = vmatprep.subr.mxu0 0.0
      %2056 = vmatpush1.msra.mxu0 0.0
      %2057 = vmatprep.subr.mxu0 0.0
      %2058 = vmatpush1.msra.mxu0 0.0
      %2059 = vmatprep.mubr.f32.mxu0 0.0
      %2060 = vmatmul.mubr.f32.gmra.mrb[0].mxu0 %v1987
      %v2061 = vpop.f32.mrb[0].mxu0
      %v2062 = vadd.f32 0.0, %v2061
      %v2063 = vpop.f32.mrb[0].mxu0
      %2064 = vmatprep.mubr.f32.mxu0 0.0
      %2065 = vmatmul.mubr.f32.gmra.mrb[0].mxu0 %v1990
      %v2066 = vpop.f32.mrb[0].mxu0
      %v2067 = vadd.f32 0.0, %v2066
      %v2068 = vpop.f32.mrb[0].mxu0
      %2069 = vmatprep.mubr.f32.mxu0 0.0
      %2070 = vmatmul.mubr.f32.gmra.mrb[0].mxu0 %v1993
      %v2071 = vpop.f32.mrb[0].mxu0
      %v2072 = vadd.f32 0.0, %v2071
      %v2073 = vpop.f32.mrb[0].mxu0
      %2074 = vdwg.mxu0
      %v2075 = vadd.f32 %v1903, %v2062
      %v2076 = vadd.f32 %v1904, %v2067
      %v2077 = vadd.f32 %v1905, %v2072
      %v2079 = vsel %vm715, %v900, 0
      %v2082 = vsel %vm715, %v901, 0
      %v2085 = vsel %vm715, %v902, 0
      %2087 = vmatprep.subr.mxu0 0.0
      %2088 = vmatpush1.xpose.msra.mxu0 %v1014
      %2089 = vmatprep.subr.mxu0 0.0
      %2090 = vmatpush1.xpose.msra.mxu0 %v1017
      %2091 = vmatprep.subr.mxu0 0.0
      %2092 = vmatpush1.xpose.msra.mxu0 %v1020
      %2093 = vmatprep.subr.mxu0 0.0
      %2094 = vmatpush1.xpose.msra.mxu0 0.0
      %2095 = vmatprep.subr.mxu0 0.0
      %2096 = vmatpush1.xpose.msra.mxu0 0.0
      %2097 = vmatprep.subr.mxu0 0.0
      %2098 = vmatpush1.xpose.msra.mxu0 0.0
      %2099 = vmatprep.subr.mxu0 0.0
      %2100 = vmatpush1.xpose.msra.mxu0 0.0
      %2101 = vmatprep.subr.mxu0 0.0
      %2102 = vmatpush1.xpose.msra.mxu0 0.0
      %2103 = vmatprep.subr.mxu0 0.0
      %2104 = vmatpush1.xpose.msra.mxu0 0.0
      %2105 = vmatprep.subr.mxu0 0.0
      %2106 = vmatpush1.xpose.msra.mxu0 0.0
      %2107 = vmatprep.subr.mxu0 0.0
      %2108 = vmatpush1.xpose.msra.mxu0 0.0
      %2109 = vmatprep.subr.mxu0 0.0
      %2110 = vmatpush1.xpose.msra.mxu0 0.0
      %2111 = vmatprep.subr.mxu0 0.0
      %2112 = vmatpush1.xpose.msra.mxu0 0.0
      %2113 = vmatprep.subr.mxu0 0.0
      %2114 = vmatpush1.xpose.msra.mxu0 0.0
      %2115 = vmatprep.subr.mxu0 0.0
      %2116 = vmatpush1.xpose.msra.mxu0 0.0
      %2117 = vmatprep.subr.mxu0 0.0
      %2118 = vmatpush1.xpose.msra.mxu0 0.0
      %2119 = vmatprep.subr.mxu0 0.0
      %2120 = vmatpush1.xpose.msra.mxu0 0.0
      %2121 = vmatprep.subr.mxu0 0.0
      %2122 = vmatpush1.xpose.msra.mxu0 0.0
      %2123 = vmatprep.subr.mxu0 0.0
      %2124 = vmatpush1.xpose.msra.mxu0 0.0
      %2125 = vmatprep.subr.mxu0 0.0
      %2126 = vmatpush1.xpose.msra.mxu0 0.0
      %2127 = vmatprep.subr.mxu0 0.0
      %2128 = vmatpush1.xpose.msra.mxu0 0.0
      %2129 = vmatprep.subr.mxu0 0.0
      %2130 = vmatpush1.xpose.msra.mxu0 0.0
      %2131 = vmatprep.subr.mxu0 0.0
      %2132 = vmatpush1.xpose.msra.mxu0 0.0
      %2133 = vmatprep.subr.mxu0 0.0
      %2134 = vmatpush1.xpose.msra.mxu0 0.0
      %2135 = vmatprep.subr.mxu0 0.0
      %2136 = vmatpush1.xpose.msra.mxu0 0.0
      %2137 = vmatprep.subr.mxu0 0.0
      %2138 = vmatpush1.xpose.msra.mxu0 0.0
      %2139 = vmatprep.subr.mxu0 0.0
      %2140 = vmatpush1.xpose.msra.mxu0 0.0
      %2141 = vmatprep.subr.mxu0 0.0
      %2142 = vmatpush1.xpose.msra.mxu0 0.0
      %2143 = vmatprep.subr.mxu0 0.0
      %2144 = vmatpush1.xpose.msra.mxu0 0.0
      %2145 = vmatprep.subr.mxu0 0.0
      %2146 = vmatpush1.xpose.msra.mxu0 0.0
      %2147 = vmatprep.subr.mxu0 0.0
      %2148 = vmatpush1.xpose.msra.mxu0 0.0
      %2149 = vmatprep.subr.mxu0 0.0
      %2150 = vmatpush1.xpose.msra.mxu0 0.0
      %2151 = vmatprep.mubr.f32.mxu0 0.0
      %2152 = vmatmul.mubr.f32.gmra.mrb[0].mxu0 %v2079
      %v2153 = vpop.f32.mrb[0].mxu0
      %v2154 = vadd.f32 0.0, %v2153
      %v2155 = vpop.f32.mrb[0].mxu0
      %2156 = vmatprep.mubr.f32.mxu0 0.0
      %2157 = vmatmul.mubr.f32.gmra.mrb[0].mxu0 %v2082
      %v2158 = vpop.f32.mrb[0].mxu0
      %v2159 = vadd.f32 0.0, %v2158
      %v2160 = vpop.f32.mrb[0].mxu0
      %2161 = vmatprep.mubr.f32.mxu0 0.0
      %2162 = vmatmul.mubr.f32.gmra.mrb[0].mxu0 %v2085
      %v2163 = vpop.f32.mrb[0].mxu0
      %v2164 = vadd.f32 0.0, %v2163
      %v2165 = vpop.f32.mrb[0].mxu0
      %2166 = vdwg.mxu0
      %v2167 = vmul.f32 %v2154, %v639
      %v2168 = vmul.f32 %v2159, %v640
      %v2169 = vmul.f32 %v2164, %v641
      %2170 = vmatprep.subr.mxu0 0.0
      %2171 = vmatpush1.xpose.msra.mxu0 %v922
      %2172 = vmatprep.subr.mxu0 0.0
      %2173 = vmatpush1.xpose.msra.mxu0 %v925
      %2174 = vmatprep.subr.mxu0 0.0
      %2175 = vmatpush1.xpose.msra.mxu0 %v928
      %2176 = vmatprep.subr.mxu0 0.0
      %2177 = vmatpush1.xpose.msra.mxu0 0.0
      %2178 = vmatprep.subr.mxu0 0.0
      %2179 = vmatpush1.xpose.msra.mxu0 0.0
      %2180 = vmatprep.subr.mxu0 0.0
      %2181 = vmatpush1.xpose.msra.mxu0 0.0
      %2182 = vmatprep.subr.mxu0 0.0
      %2183 = vmatpush1.xpose.msra.mxu0 0.0
      %2184 = vmatprep.subr.mxu0 0.0
      %2185 = vmatpush1.xpose.msra.mxu0 0.0
      %2186 = vmatprep.subr.mxu0 0.0
      %2187 = vmatpush1.xpose.msra.mxu0 0.0
      %2188 = vmatprep.subr.mxu0 0.0
      %2189 = vmatpush1.xpose.msra.mxu0 0.0
      %2190 = vmatprep.subr.mxu0 0.0
      %2191 = vmatpush1.xpose.msra.mxu0 0.0
      %2192 = vmatprep.subr.mxu0 0.0
      %2193 = vmatpush1.xpose.msra.mxu0 0.0
      %2194 = vmatprep.subr.mxu0 0.0
      %2195 = vmatpush1.xpose.msra.mxu0 0.0
      %2196 = vmatprep.subr.mxu0 0.0
      %2197 = vmatpush1.xpose.msra.mxu0 0.0
      %2198 = vmatprep.subr.mxu0 0.0
      %2199 = vmatpush1.xpose.msra.mxu0 0.0
      %2200 = vmatprep.subr.mxu0 0.0
      %2201 = vmatpush1.xpose.msra.mxu0 0.0
      %2202 = vmatprep.subr.mxu0 0.0
      %2203 = vmatpush1.xpose.msra.mxu0 0.0
      %2204 = vmatprep.subr.mxu0 0.0
      %2205 = vmatpush1.xpose.msra.mxu0 0.0
      %2206 = vmatprep.subr.mxu0 0.0
      %2207 = vmatpush1.xpose.msra.mxu0 0.0
      %2208 = vmatprep.subr.mxu0 0.0
      %2209 = vmatpush1.xpose.msra.mxu0 0.0
      %2210 = vmatprep.subr.mxu0 0.0
      %2211 = vmatpush1.xpose.msra.mxu0 0.0
      %2212 = vmatprep.subr.mxu0 0.0
      %2213 = vmatpush1.xpose.msra.mxu0 0.0
      %2214 = vmatprep.subr.mxu0 0.0
      %2215 = vmatpush1.xpose.msra.mxu0 0.0
      %2216 = vmatprep.subr.mxu0 0.0
      %2217 = vmatpush1.xpose.msra.mxu0 0.0
      %2218 = vmatprep.subr.mxu0 0.0
      %2219 = vmatpush1.xpose.msra.mxu0 0.0
      %2220 = vmatprep.subr.mxu0 0.0
      %2221 = vmatpush1.xpose.msra.mxu0 0.0
      %2222 = vmatprep.subr.mxu0 0.0
      %2223 = vmatpush1.xpose.msra.mxu0 0.0
      %2224 = vmatprep.subr.mxu0 0.0
      %2225 = vmatpush1.xpose.msra.mxu0 0.0
      %2226 = vmatprep.subr.mxu0 0.0
      %2227 = vmatpush1.xpose.msra.mxu0 0.0
      %2228 = vmatprep.subr.mxu0 0.0
      %2229 = vmatpush1.xpose.msra.mxu0 0.0
      %2230 = vmatprep.subr.mxu0 0.0
      %2231 = vmatpush1.xpose.msra.mxu0 0.0
      %2232 = vmatprep.subr.mxu0 0.0
      %2233 = vmatpush1.xpose.msra.mxu0 0.0
      %2234 = vmatprep.mubr.f32.mxu0 0.0
      %2235 = vmatmul.mubr.f32.gmra.mrb[0].mxu0 %v2079
      %v2236 = vpop.f32.mrb[0].mxu0
      %v2237 = vadd.f32 0.0, %v2236
      %v2238 = vpop.f32.mrb[0].mxu0
      %2239 = vmatprep.mubr.f32.mxu0 0.0
      %2240 = vmatmul.mubr.f32.gmra.mrb[0].mxu0 %v2082
      %v2241 = vpop.f32.mrb[0].mxu0
      %v2242 = vadd.f32 0.0, %v2241
      %v2243 = vpop.f32.mrb[0].mxu0
      %2244 = vmatprep.mubr.f32.mxu0 0.0
      %2245 = vmatmul.mubr.f32.gmra.mrb[0].mxu0 %v2085
      %v2246 = vpop.f32.mrb[0].mxu0
      %v2247 = vadd.f32 0.0, %v2246
      %v2248 = vpop.f32.mrb[0].mxu0
      %2249 = vdwg.mxu0
      %v2250 = vmul.f32 %v2237, %v639
      %v2251 = vmul.f32 %v2242, %v640
      %v2252 = vmul.f32 %v2247, %v641
      %v2254 = vsel %vm786, %v2167, 0
      %v2257 = vsel %vm786, %v2168, 0
      %v2260 = vsel %vm786, %v2169, 0
      %2262 = vmatprep.subr.mxu0 0.0
      %2263 = vmatpush1.msra.mxu0 %v672
      %2264 = vmatprep.subr.mxu0 0.0
      %2265 = vmatpush1.msra.mxu0 %v673
      %2266 = vmatprep.subr.mxu0 0.0
      %2267 = vmatpush1.msra.mxu0 %v674
      %2268 = vmatprep.subr.mxu0 0.0
      %2269 = vmatpush1.msra.mxu0 0.0
      %2270 = vmatprep.subr.mxu0 0.0
      %2271 = vmatpush1.msra.mxu0 0.0
      %2272 = vmatprep.subr.mxu0 0.0
      %2273 = vmatpush1.msra.mxu0 0.0
      %2274 = vmatprep.subr.mxu0 0.0
      %2275 = vmatpush1.msra.mxu0 0.0
      %2276 = vmatprep.subr.mxu0 0.0
      %2277 = vmatpush1.msra.mxu0 0.0
      %2278 = vmatprep.subr.mxu0 0.0
      %2279 = vmatpush1.msra.mxu0 0.0
      %2280 = vmatprep.subr.mxu0 0.0
      %2281 = vmatpush1.msra.mxu0 0.0
      %2282 = vmatprep.subr.mxu0 0.0
      %2283 = vmatpush1.msra.mxu0 0.0
      %2284 = vmatprep.subr.mxu0 0.0
      %2285 = vmatpush1.msra.mxu0 0.0
      %2286 = vmatprep.subr.mxu0 0.0
      %2287 = vmatpush1.msra.mxu0 0.0
      %2288 = vmatprep.subr.mxu0 0.0
      %2289 = vmatpush1.msra.mxu0 0.0
      %2290 = vmatprep.subr.mxu0 0.0
      %2291 = vmatpush1.msra.mxu0 0.0
      %2292 = vmatprep.subr.mxu0 0.0
      %2293 = vmatpush1.msra.mxu0 0.0
      %2294 = vmatprep.subr.mxu0 0.0
      %2295 = vmatpush1.msra.mxu0 0.0
      %2296 = vmatprep.subr.mxu0 0.0
      %2297 = vmatpush1.msra.mxu0 0.0
      %2298 = vmatprep.subr.mxu0 0.0
      %2299 = vmatpush1.msra.mxu0 0.0
      %2300 = vmatprep.subr.mxu0 0.0
      %2301 = vmatpush1.msra.mxu0 0.0
      %2302 = vmatprep.subr.mxu0 0.0
      %2303 = vmatpush1.msra.mxu0 0.0
      %2304 = vmatprep.subr.mxu0 0.0
      %2305 = vmatpush1.msra.mxu0 0.0
      %2306 = vmatprep.subr.mxu0 0.0
      %2307 = vmatpush1.msra.mxu0 0.0
      %2308 = vmatprep.subr.mxu0 0.0
      %2309 = vmatpush1.msra.mxu0 0.0
      %2310 = vmatprep.subr.mxu0 0.0
      %2311 = vmatpush1.msra.mxu0 0.0
      %2312 = vmatprep.subr.mxu0 0.0
      %2313 = vmatpush1.msra.mxu0 0.0
      %2314 = vmatprep.subr.mxu0 0.0
      %2315 = vmatpush1.msra.mxu0 0.0
      %2316 = vmatprep.subr.mxu0 0.0
      %2317 = vmatpush1.msra.mxu0 0.0
      %2318 = vmatprep.subr.mxu0 0.0
      %2319 = vmatpush1.msra.mxu0 0.0
      %2320 = vmatprep.subr.mxu0 0.0
      %2321 = vmatpush1.msra.mxu0 0.0
      %2322 = vmatprep.subr.mxu0 0.0
      %2323 = vmatpush1.msra.mxu0 0.0
      %2324 = vmatprep.subr.mxu0 0.0
      %2325 = vmatpush1.msra.mxu0 0.0
      %2326 = vmatprep.mubr.f32.mxu0 0.0
      %2327 = vmatmul.mubr.f32.gmra.mrb[0].mxu0 %v2254
      %v2328 = vpop.f32.mrb[0].mxu0
      %v2329 = vadd.f32 0.0, %v2328
      %v2330 = vpop.f32.mrb[0].mxu0
      %2331 = vmatprep.mubr.f32.mxu0 0.0
      %2332 = vmatmul.mubr.f32.gmra.mrb[0].mxu0 %v2257
      %v2333 = vpop.f32.mrb[0].mxu0
      %v2334 = vadd.f32 0.0, %v2333
      %v2335 = vpop.f32.mrb[0].mxu0
      %2336 = vmatprep.mubr.f32.mxu0 0.0
      %2337 = vmatmul.mubr.f32.gmra.mrb[0].mxu0 %v2260
      %v2338 = vpop.f32.mrb[0].mxu0
      %v2339 = vadd.f32 0.0, %v2338
      %v2340 = vpop.f32.mrb[0].mxu0
      %2341 = vdwg.mxu0
      %2342 = vmatprep.subr.mxu0 0.0
      %2343 = vmatpush1.xpose.msra.mxu0 %v1195
      %2344 = vmatprep.subr.mxu0 0.0
      %2345 = vmatpush1.xpose.msra.mxu0 %v1198
      %2346 = vmatprep.subr.mxu0 0.0
      %2347 = vmatpush1.xpose.msra.mxu0 %v1201
      %2348 = vmatprep.subr.mxu0 0.0
      %2349 = vmatpush1.xpose.msra.mxu0 %v1204
      %2350 = vmatprep.subr.mxu0 0.0
      %2351 = vmatpush1.xpose.msra.mxu0 %v1207
      %2352 = vmatprep.subr.mxu0 0.0
      %2353 = vmatpush1.xpose.msra.mxu0 %v1210
      %2354 = vmatprep.subr.mxu0 0.0
      %2355 = vmatpush1.xpose.msra.mxu0 %v1213
      %2356 = vmatprep.subr.mxu0 0.0
      %2357 = vmatpush1.xpose.msra.mxu0 %v1216
      %2358 = vmatprep.subr.mxu0 0.0
      %2359 = vmatpush1.xpose.msra.mxu0 0.0
      %2360 = vmatprep.subr.mxu0 0.0
      %2361 = vmatpush1.xpose.msra.mxu0 0.0
      %2362 = vmatprep.subr.mxu0 0.0
      %2363 = vmatpush1.xpose.msra.mxu0 0.0
      %2364 = vmatprep.subr.mxu0 0.0
      %2365 = vmatpush1.xpose.msra.mxu0 0.0
      %2366 = vmatprep.subr.mxu0 0.0
      %2367 = vmatpush1.xpose.msra.mxu0 0.0
      %2368 = vmatprep.subr.mxu0 0.0
      %2369 = vmatpush1.xpose.msra.mxu0 0.0
      %2370 = vmatprep.subr.mxu0 0.0
      %2371 = vmatpush1.xpose.msra.mxu0 0.0
      %2372 = vmatprep.subr.mxu0 0.0
      %2373 = vmatpush1.xpose.msra.mxu0 0.0
      %2374 = vmatprep.subr.mxu0 0.0
      %2375 = vmatpush1.xpose.msra.mxu0 0.0
      %2376 = vmatprep.subr.mxu0 0.0
      %2377 = vmatpush1.xpose.msra.mxu0 0.0
      %2378 = vmatprep.subr.mxu0 0.0
      %2379 = vmatpush1.xpose.msra.mxu0 0.0
      %2380 = vmatprep.subr.mxu0 0.0
      %2381 = vmatpush1.xpose.msra.mxu0 0.0
      %2382 = vmatprep.subr.mxu0 0.0
      %2383 = vmatpush1.xpose.msra.mxu0 0.0
      %2384 = vmatprep.subr.mxu0 0.0
      %2385 = vmatpush1.xpose.msra.mxu0 0.0
      %2386 = vmatprep.subr.mxu0 0.0
      %2387 = vmatpush1.xpose.msra.mxu0 0.0
      %2388 = vmatprep.subr.mxu0 0.0
      %2389 = vmatpush1.xpose.msra.mxu0 0.0
      %2390 = vmatprep.subr.mxu0 0.0
      %2391 = vmatpush1.xpose.msra.mxu0 0.0
      %2392 = vmatprep.subr.mxu0 0.0
      %2393 = vmatpush1.xpose.msra.mxu0 0.0
      %2394 = vmatprep.subr.mxu0 0.0
      %2395 = vmatpush1.xpose.msra.mxu0 0.0
      %2396 = vmatprep.subr.mxu0 0.0
      %2397 = vmatpush1.xpose.msra.mxu0 0.0
      %2398 = vmatprep.subr.mxu0 0.0
      %2399 = vmatpush1.xpose.msra.mxu0 0.0
      %2400 = vmatprep.subr.mxu0 0.0
      %2401 = vmatpush1.xpose.msra.mxu0 0.0
      %2402 = vmatprep.subr.mxu0 0.0
      %2403 = vmatpush1.xpose.msra.mxu0 0.0
      %2404 = vmatprep.subr.mxu0 0.0
      %2405 = vmatpush1.xpose.msra.mxu0 0.0
      %2406 = vmatprep.mubr.f32.mxu0 0.0
      %2407 = vmatmul.mubr.f32.gmra.mrb[0].mxu0 %v2079
      %v2408 = vpop.f32.mrb[0].mxu0
      %v2409 = vadd.f32 %v2329, %v2408
      %v2410 = vpop.f32.mrb[0].mxu0
      %2411 = vmatprep.mubr.f32.mxu0 0.0
      %2412 = vmatmul.mubr.f32.gmra.mrb[0].mxu0 %v2082
      %v2413 = vpop.f32.mrb[0].mxu0
      %v2414 = vadd.f32 %v2334, %v2413
      %v2415 = vpop.f32.mrb[0].mxu0
      %2416 = vmatprep.mubr.f32.mxu0 0.0
      %2417 = vmatmul.mubr.f32.gmra.mrb[0].mxu0 %v2085
      %v2418 = vpop.f32.mrb[0].mxu0
      %v2419 = vadd.f32 %v2339, %v2418
      %v2420 = vpop.f32.mrb[0].mxu0
      %2421 = vdwg.mxu0
      %v2423 = vsel %vm786, %v2250, 0
      %v2426 = vsel %vm786, %v2251, 0
      %v2429 = vsel %vm786, %v2252, 0
      %2431 = vmatprep.subr.mxu0 0.0
      %2432 = vmatpush1.msra.mxu0 %v2075
      %2433 = vmatprep.subr.mxu0 0.0
      %2434 = vmatpush1.msra.mxu0 %v2076
      %2435 = vmatprep.subr.mxu0 0.0
      %2436 = vmatpush1.msra.mxu0 %v2077
      %2437 = vmatprep.subr.mxu0 0.0
      %2438 = vmatpush1.msra.mxu0 0.0
      %2439 = vmatprep.subr.mxu0 0.0
      %2440 = vmatpush1.msra.mxu0 0.0
      %2441 = vmatprep.subr.mxu0 0.0
      %2442 = vmatpush1.msra.mxu0 0.0
      %2443 = vmatprep.subr.mxu0 0.0
      %2444 = vmatpush1.msra.mxu0 0.0
      %2445 = vmatprep.subr.mxu0 0.0
      %2446 = vmatpush1.msra.mxu0 0.0
      %2447 = vmatprep.subr.mxu0 0.0
      %2448 = vmatpush1.msra.mxu0 0.0
      %2449 = vmatprep.subr.mxu0 0.0
      %2450 = vmatpush1.msra.mxu0 0.0
      %2451 = vmatprep.subr.mxu0 0.0
      %2452 = vmatpush1.msra.mxu0 0.0
      %2453 = vmatprep.subr.mxu0 0.0
      %2454 = vmatpush1.msra.mxu0 0.0
      %2455 = vmatprep.subr.mxu0 0.0
      %2456 = vmatpush1.msra.mxu0 0.0
      %2457 = vmatprep.subr.mxu0 0.0
      %2458 = vmatpush1.msra.mxu0 0.0
      %2459 = vmatprep.subr.mxu0 0.0
      %2460 = vmatpush1.msra.mxu0 0.0
      %2461 = vmatprep.subr.mxu0 0.0
      %2462 = vmatpush1.msra.mxu0 0.0
      %2463 = vmatprep.subr.mxu0 0.0
      %2464 = vmatpush1.msra.mxu0 0.0
      %2465 = vmatprep.subr.mxu0 0.0
      %2466 = vmatpush1.msra.mxu0 0.0
      %2467 = vmatprep.subr.mxu0 0.0
      %2468 = vmatpush1.msra.mxu0 0.0
      %2469 = vmatprep.subr.mxu0 0.0
      %2470 = vmatpush1.msra.mxu0 0.0
      %2471 = vmatprep.subr.mxu0 0.0
      %2472 = vmatpush1.msra.mxu0 0.0
      %2473 = vmatprep.subr.mxu0 0.0
      %2474 = vmatpush1.msra.mxu0 0.0
      %2475 = vmatprep.subr.mxu0 0.0
      %2476 = vmatpush1.msra.mxu0 0.0
      %2477 = vmatprep.subr.mxu0 0.0
      %2478 = vmatpush1.msra.mxu0 0.0
      %2479 = vmatprep.subr.mxu0 0.0
      %2480 = vmatpush1.msra.mxu0 0.0
      %2481 = vmatprep.subr.mxu0 0.0
      %2482 = vmatpush1.msra.mxu0 0.0
      %2483 = vmatprep.subr.mxu0 0.0
      %2484 = vmatpush1.msra.mxu0 0.0
      %2485 = vmatprep.subr.mxu0 0.0
      %2486 = vmatpush1.msra.mxu0 0.0
      %2487 = vmatprep.subr.mxu0 0.0
      %2488 = vmatpush1.msra.mxu0 0.0
      %2489 = vmatprep.subr.mxu0 0.0
      %2490 = vmatpush1.msra.mxu0 0.0
      %2491 = vmatprep.subr.mxu0 0.0
      %2492 = vmatpush1.msra.mxu0 0.0
      %2493 = vmatprep.subr.mxu0 0.0
      %2494 = vmatpush1.msra.mxu0 0.0
      %2495 = vmatprep.mubr.f32.mxu0 0.0
      %2496 = vmatmul.mubr.f32.gmra.mrb[0].mxu0 %v2423
      %v2497 = vpop.f32.mrb[0].mxu0
      %v2498 = vadd.f32 0.0, %v2497
      %v2499 = vpop.f32.mrb[0].mxu0
      %2500 = vmatprep.mubr.f32.mxu0 0.0
      %2501 = vmatmul.mubr.f32.gmra.mrb[0].mxu0 %v2426
      %v2502 = vpop.f32.mrb[0].mxu0
      %v2503 = vadd.f32 0.0, %v2502
      %v2504 = vpop.f32.mrb[0].mxu0
      %2505 = vmatprep.mubr.f32.mxu0 0.0
      %2506 = vmatmul.mubr.f32.gmra.mrb[0].mxu0 %v2429
      %v2507 = vpop.f32.mrb[0].mxu0
      %v2508 = vadd.f32 0.0, %v2507
      %v2509 = vpop.f32.mrb[0].mxu0
      %2510 = vdwg.mxu0
      %v2511 = vadd.f32 %v2409, %v2498
      %v2512 = vadd.f32 %v2414, %v2503
      %v2513 = vadd.f32 %v2419, %v2508
      %v2514 = vlaneseq
      %v2515 = vshrl.u32 %v2514, 7
      %v2516 = vsub.s32 7, %v2515
      %v2517 = vrot.slane %v884, %v2516
      %v2518 = vmul.f32 %v697, %v2517
      %v2519 = vmul.f32 %v698, %v2517
      %v2520 = vmul.f32 %v699, %v2517
      %v2521 = vmul.f32 %v700, %v2517
      %v2522 = vmul.f32 %v701, %v2517
      %v2523 = vmul.f32 %v702, %v2517
      %v2524 = vmul.f32 %v703, %v2517
      %v2525 = vmul.f32 %v704, %v2517
      %v2526 = vmul.f32 %v903, %v2517
      %v2527 = vmul.f32 %v904, %v2517
      %v2528 = vmul.f32 %v905, %v2517
      %2529 = vxpose.xlu0.b32.start [1/16] %v672, 128
      %2530 = vxpose.xlu0.b32.cont [2/16] %v673, 128
      %2531 = vxpose.xlu0.b32.cont [3/16] %v674, 128
      %2532 = vxpose.xlu0.b32.cont [4/16] 0.0, 128
      %2533 = vxpose.xlu0.b32.cont [5/16] 0.0, 128
      %2534 = vxpose.xlu0.b32.cont [6/16] 0.0, 128
      %2535 = vxpose.xlu0.b32.cont [7/16] 0.0, 128
      %2536 = vxpose.xlu0.b32.cont [8/16] 0.0, 128
      %2537 = vxpose.xlu0.b32.cont [9/16] 0.0, 128
      %2538 = vxpose.xlu0.b32.cont [10/16] 0.0, 128
      %2539 = vxpose.xlu0.b32.cont [11/16] 0.0, 128
      %2540 = vxpose.xlu0.b32.cont [12/16] 0.0, 128
      %2541 = vxpose.xlu0.b32.cont [13/16] 0.0, 128
      %2542 = vxpose.xlu0.b32.cont [14/16] 0.0, 128
      %2543 = vxpose.xlu0.b32.cont [15/16] 0.0, 128
      %2544 = vxpose.xlu0.b32.end [16/16] 0.0, 128
      %v2545 = vpop.trf.xlu0
      %v2546 = vpop.trf.xlu0
      %v2547 = vpop.trf.xlu0
      %v2548 = vpop.trf.xlu0
      %v2549 = vpop.trf.xlu0
      %v2550 = vpop.trf.xlu0
      %v2551 = vpop.trf.xlu0
      %v2552 = vpop.trf.xlu0
      %v2553 = vpop.trf.xlu0
      %v2554 = vpop.trf.xlu0
      %v2555 = vpop.trf.xlu0
      %v2556 = vpop.trf.xlu0
      %v2557 = vpop.trf.xlu0
      %v2558 = vpop.trf.xlu0
      %v2559 = vpop.trf.xlu0
      %v2560 = vpop.trf.xlu0
      %v2562 = vsel %vm786, %v2545, 0
      %v2565 = vsel %vm786, %v2546, 0
      %v2568 = vsel %vm786, %v2547, 0
      %v2571 = vsel %vm786, %v2548, 0
      %v2574 = vsel %vm786, %v2549, 0
      %v2577 = vsel %vm786, %v2550, 0
      %v2580 = vsel %vm786, %v2551, 0
      %v2583 = vsel %vm786, %v2552, 0
      %2585 = vmatprep.subr.mxu0 0.0
      %2586 = vmatpush1.msra.mxu0 %v2526
      %2587 = vmatprep.subr.mxu0 0.0
      %2588 = vmatpush1.msra.mxu0 %v2527
      %2589 = vmatprep.subr.mxu0 0.0
      %2590 = vmatpush1.msra.mxu0 %v2528
      %2591 = vmatprep.subr.mxu0 0.0
      %2592 = vmatpush1.msra.mxu0 0.0
      %2593 = vmatprep.subr.mxu0 0.0
      %2594 = vmatpush1.msra.mxu0 0.0
      %2595 = vmatprep.subr.mxu0 0.0
      %2596 = vmatpush1.msra.mxu0 0.0
      %2597 = vmatprep.subr.mxu0 0.0
      %2598 = vmatpush1.msra.mxu0 0.0
      %2599 = vmatprep.subr.mxu0 0.0
      %2600 = vmatpush1.msra.mxu0 0.0
      %2601 = vmatprep.subr.mxu0 0.0
      %2602 = vmatpush1.msra.mxu0 0.0
      %2603 = vmatprep.subr.mxu0 0.0
      %2604 = vmatpush1.msra.mxu0 0.0
      %2605 = vmatprep.subr.mxu0 0.0
      %2606 = vmatpush1.msra.mxu0 0.0
      %2607 = vmatprep.subr.mxu0 0.0
      %2608 = vmatpush1.msra.mxu0 0.0
      %2609 = vmatprep.subr.mxu0 0.0
      %2610 = vmatpush1.msra.mxu0 0.0
      %2611 = vmatprep.subr.mxu0 0.0
      %2612 = vmatpush1.msra.mxu0 0.0
      %2613 = vmatprep.subr.mxu0 0.0
      %2614 = vmatpush1.msra.mxu0 0.0
      %2615 = vmatprep.subr.mxu0 0.0
      %2616 = vmatpush1.msra.mxu0 0.0
      %2617 = vmatprep.subr.mxu0 0.0
      %2618 = vmatpush1.msra.mxu0 0.0
      %2619 = vmatprep.subr.mxu0 0.0
      %2620 = vmatpush1.msra.mxu0 0.0
      %2621 = vmatprep.subr.mxu0 0.0
      %2622 = vmatpush1.msra.mxu0 0.0
      %2623 = vmatprep.subr.mxu0 0.0
      %2624 = vmatpush1.msra.mxu0 0.0
      %2625 = vmatprep.subr.mxu0 0.0
      %2626 = vmatpush1.msra.mxu0 0.0
      %2627 = vmatprep.subr.mxu0 0.0
      %2628 = vmatpush1.msra.mxu0 0.0
      %2629 = vmatprep.subr.mxu0 0.0
      %2630 = vmatpush1.msra.mxu0 0.0
      %2631 = vmatprep.subr.mxu0 0.0
      %2632 = vmatpush1.msra.mxu0 0.0
      %2633 = vmatprep.subr.mxu0 0.0
      %2634 = vmatpush1.msra.mxu0 0.0
      %2635 = vmatprep.subr.mxu0 0.0
      %2636 = vmatpush1.msra.mxu0 0.0
      %2637 = vmatprep.subr.mxu0 0.0
      %2638 = vmatpush1.msra.mxu0 0.0
      %2639 = vmatprep.subr.mxu0 0.0
      %2640 = vmatpush1.msra.mxu0 0.0
      %2641 = vmatprep.subr.mxu0 0.0
      %2642 = vmatpush1.msra.mxu0 0.0
      %2643 = vmatprep.subr.mxu0 0.0
      %2644 = vmatpush1.msra.mxu0 0.0
      %2645 = vmatprep.subr.mxu0 0.0
      %2646 = vmatpush1.msra.mxu0 0.0
      %2647 = vmatprep.subr.mxu0 0.0
      %2648 = vmatpush1.msra.mxu0 0.0
      %2649 = vmatprep.mubr.f32.mxu0 0.0
      %2650 = vmatmul.mubr.f32.gmra.mrb[0].mxu0 %v2562
      %v2651 = vpop.f32.mrb[0].mxu0
      %v2652 = vadd.f32 0.0, %v2651
      %v2653 = vpop.f32.mrb[0].mxu0
      %2654 = vmatprep.mubr.f32.mxu0 0.0
      %2655 = vmatmul.mubr.f32.gmra.mrb[0].mxu0 %v2565
      %v2656 = vpop.f32.mrb[0].mxu0
      %v2657 = vadd.f32 0.0, %v2656
      %v2658 = vpop.f32.mrb[0].mxu0
      %2659 = vmatprep.mubr.f32.mxu0 0.0
      %2660 = vmatmul.mubr.f32.gmra.mrb[0].mxu0 %v2568
      %v2661 = vpop.f32.mrb[0].mxu0
      %v2662 = vadd.f32 0.0, %v2661
      %v2663 = vpop.f32.mrb[0].mxu0
      %2664 = vmatprep.mubr.f32.mxu0 0.0
      %2665 = vmatmul.mubr.f32.gmra.mrb[0].mxu0 %v2571
      %v2666 = vpop.f32.mrb[0].mxu0
      %v2667 = vadd.f32 0.0, %v2666
      %v2668 = vpop.f32.mrb[0].mxu0
      %2669 = vmatprep.mubr.f32.mxu0 0.0
      %2670 = vmatmul.mubr.f32.gmra.mrb[0].mxu0 %v2574
      %v2671 = vpop.f32.mrb[0].mxu0
      %v2672 = vadd.f32 0.0, %v2671
      %v2673 = vpop.f32.mrb[0].mxu0
      %2674 = vmatprep.mubr.f32.mxu0 0.0
      %2675 = vmatmul.mubr.f32.gmra.mrb[0].mxu0 %v2577
      %v2676 = vpop.f32.mrb[0].mxu0
      %v2677 = vadd.f32 0.0, %v2676
      %v2678 = vpop.f32.mrb[0].mxu0
      %2679 = vmatprep.mubr.f32.mxu0 0.0
      %2680 = vmatmul.mubr.f32.gmra.mrb[0].mxu0 %v2580
      %v2681 = vpop.f32.mrb[0].mxu0
      %v2682 = vadd.f32 0.0, %v2681
      %v2683 = vpop.f32.mrb[0].mxu0
      %2684 = vmatprep.mubr.f32.mxu0 0.0
      %2685 = vmatmul.mubr.f32.gmra.mrb[0].mxu0 %v2583
      %v2686 = vpop.f32.mrb[0].mxu0
      %v2687 = vadd.f32 0.0, %v2686
      %v2688 = vpop.f32.mrb[0].mxu0
      %2689 = vdwg.mxu0
      %v2690 = vadd.f32 %v2518, %v2652
      %v2691 = vadd.f32 %v2519, %v2657
      %v2692 = vadd.f32 %v2520, %v2662
      %v2693 = vadd.f32 %v2521, %v2667
      %v2694 = vadd.f32 %v2522, %v2672
      %v2695 = vadd.f32 %v2523, %v2677
      %v2696 = vadd.f32 %v2524, %v2682
      %v2697 = vadd.f32 %v2525, %v2687
      %v2698 = vmul.f32 %v906, %v2517
      %v2699 = vmul.f32 %v907, %v2517
      %v2700 = vmul.f32 %v908, %v2517
      %2701 = vxpose.xlu0.b32.start [1/16] %v2075, 128
      %2702 = vxpose.xlu0.b32.cont [2/16] %v2076, 128
      %2703 = vxpose.xlu0.b32.cont [3/16] %v2077, 128
      %2704 = vxpose.xlu0.b32.cont [4/16] 0.0, 128
      %2705 = vxpose.xlu0.b32.cont [5/16] 0.0, 128
      %2706 = vxpose.xlu0.b32.cont [6/16] 0.0, 128
      %2707 = vxpose.xlu0.b32.cont [7/16] 0.0, 128
      %2708 = vxpose.xlu0.b32.cont [8/16] 0.0, 128
      %2709 = vxpose.xlu0.b32.cont [9/16] 0.0, 128
      %2710 = vxpose.xlu0.b32.cont [10/16] 0.0, 128
      %2711 = vxpose.xlu0.b32.cont [11/16] 0.0, 128
      %2712 = vxpose.xlu0.b32.cont [12/16] 0.0, 128
      %2713 = vxpose.xlu0.b32.cont [13/16] 0.0, 128
      %2714 = vxpose.xlu0.b32.cont [14/16] 0.0, 128
      %2715 = vxpose.xlu0.b32.cont [15/16] 0.0, 128
      %2716 = vxpose.xlu0.b32.end [16/16] 0.0, 128
      %v2717 = vpop.trf.xlu0
      %v2718 = vpop.trf.xlu0
      %v2719 = vpop.trf.xlu0
      %v2720 = vpop.trf.xlu0
      %v2721 = vpop.trf.xlu0
      %v2722 = vpop.trf.xlu0
      %v2723 = vpop.trf.xlu0
      %v2724 = vpop.trf.xlu0
      %v2725 = vpop.trf.xlu0
      %v2726 = vpop.trf.xlu0
      %v2727 = vpop.trf.xlu0
      %v2728 = vpop.trf.xlu0
      %v2729 = vpop.trf.xlu0
      %v2730 = vpop.trf.xlu0
      %v2731 = vpop.trf.xlu0
      %v2732 = vpop.trf.xlu0
      %v2734 = vsel %vm786, %v2717, 0
      %v2737 = vsel %vm786, %v2718, 0
      %v2740 = vsel %vm786, %v2719, 0
      %v2743 = vsel %vm786, %v2720, 0
      %v2746 = vsel %vm786, %v2721, 0
      %v2749 = vsel %vm786, %v2722, 0
      %v2752 = vsel %vm786, %v2723, 0
      %v2755 = vsel %vm786, %v2724, 0
      %2757 = vmatprep.subr.mxu0 0.0
      %2758 = vmatpush1.msra.mxu0 %v2698
      %2759 = vmatprep.subr.mxu0 0.0
      %2760 = vmatpush1.msra.mxu0 %v2699
      %2761 = vmatprep.subr.mxu0 0.0
      %2762 = vmatpush1.msra.mxu0 %v2700
      %2763 = vmatprep.subr.mxu0 0.0
      %2764 = vmatpush1.msra.mxu0 0.0
      %2765 = vmatprep.subr.mxu0 0.0
      %2766 = vmatpush1.msra.mxu0 0.0
      %2767 = vmatprep.subr.mxu0 0.0
      %2768 = vmatpush1.msra.mxu0 0.0
      %2769 = vmatprep.subr.mxu0 0.0
      %2770 = vmatpush1.msra.mxu0 0.0
      %2771 = vmatprep.subr.mxu0 0.0
      %2772 = vmatpush1.msra.mxu0 0.0
      %2773 = vmatprep.subr.mxu0 0.0
      %2774 = vmatpush1.msra.mxu0 0.0
      %2775 = vmatprep.subr.mxu0 0.0
      %2776 = vmatpush1.msra.mxu0 0.0
      %2777 = vmatprep.subr.mxu0 0.0
      %2778 = vmatpush1.msra.mxu0 0.0
      %2779 = vmatprep.subr.mxu0 0.0
      %2780 = vmatpush1.msra.mxu0 0.0
      %2781 = vmatprep.subr.mxu0 0.0
      %2782 = vmatpush1.msra.mxu0 0.0
      %2783 = vmatprep.subr.mxu0 0.0
      %2784 = vmatpush1.msra.mxu0 0.0
      %2785 = vmatprep.subr.mxu0 0.0
      %2786 = vmatpush1.msra.mxu0 0.0
      %2787 = vmatprep.subr.mxu0 0.0
      %2788 = vmatpush1.msra.mxu0 0.0
      %2789 = vmatprep.subr.mxu0 0.0
      %2790 = vmatpush1.msra.mxu0 0.0
      %2791 = vmatprep.subr.mxu0 0.0
      %2792 = vmatpush1.msra.mxu0 0.0
      %2793 = vmatprep.subr.mxu0 0.0
      %2794 = vmatpush1.msra.mxu0 0.0
      %2795 = vmatprep.subr.mxu0 0.0
      %2796 = vmatpush1.msra.mxu0 0.0
      %2797 = vmatprep.subr.mxu0 0.0
      %2798 = vmatpush1.msra.mxu0 0.0
      %2799 = vmatprep.subr.mxu0 0.0
      %2800 = vmatpush1.msra.mxu0 0.0
      %2801 = vmatprep.subr.mxu0 0.0
      %2802 = vmatpush1.msra.mxu0 0.0
      %2803 = vmatprep.subr.mxu0 0.0
      %2804 = vmatpush1.msra.mxu0 0.0
      %2805 = vmatprep.subr.mxu0 0.0
      %2806 = vmatpush1.msra.mxu0 0.0
      %2807 = vmatprep.subr.mxu0 0.0
      %2808 = vmatpush1.msra.mxu0 0.0
      %2809 = vmatprep.subr.mxu0 0.0
      %2810 = vmatpush1.msra.mxu0 0.0
      %2811 = vmatprep.subr.mxu0 0.0
      %2812 = vmatpush1.msra.mxu0 0.0
      %2813 = vmatprep.subr.mxu0 0.0
      %2814 = vmatpush1.msra.mxu0 0.0
      %2815 = vmatprep.subr.mxu0 0.0
      %2816 = vmatpush1.msra.mxu0 0.0
      %2817 = vmatprep.subr.mxu0 0.0
      %2818 = vmatpush1.msra.mxu0 0.0
      %2819 = vmatprep.subr.mxu0 0.0
      %2820 = vmatpush1.msra.mxu0 0.0
      %2821 = vmatprep.mubr.f32.mxu0 0.0
      %2822 = vmatmul.mubr.f32.gmra.mrb[0].mxu0 %v2734
      %v2823 = vpop.f32.mrb[0].mxu0
      %v2824 = vadd.f32 0.0, %v2823
      %v2825 = vpop.f32.mrb[0].mxu0
      %2826 = vmatprep.mubr.f32.mxu0 0.0
      %2827 = vmatmul.mubr.f32.gmra.mrb[0].mxu0 %v2737
      %v2828 = vpop.f32.mrb[0].mxu0
      %v2829 = vadd.f32 0.0, %v2828
      %v2830 = vpop.f32.mrb[0].mxu0
      %2831 = vmatprep.mubr.f32.mxu0 0.0
      %2832 = vmatmul.mubr.f32.gmra.mrb[0].mxu0 %v2740
      %v2833 = vpop.f32.mrb[0].mxu0
      %v2834 = vadd.f32 0.0, %v2833
      %v2835 = vpop.f32.mrb[0].mxu0
      %2836 = vmatprep.mubr.f32.mxu0 0.0
      %2837 = vmatmul.mubr.f32.gmra.mrb[0].mxu0 %v2743
      %v2838 = vpop.f32.mrb[0].mxu0
      %v2839 = vadd.f32 0.0, %v2838
      %v2840 = vpop.f32.mrb[0].mxu0
      %2841 = vmatprep.mubr.f32.mxu0 0.0
      %2842 = vmatmul.mubr.f32.gmra.mrb[0].mxu0 %v2746
      %v2843 = vpop.f32.mrb[0].mxu0
      %v2844 = vadd.f32 0.0, %v2843
      %v2845 = vpop.f32.mrb[0].mxu0
      %2846 = vmatprep.mubr.f32.mxu0 0.0
      %2847 = vmatmul.mubr.f32.gmra.mrb[0].mxu0 %v2749
      %v2848 = vpop.f32.mrb[0].mxu0
      %v2849 = vadd.f32 0.0, %v2848
      %v2850 = vpop.f32.mrb[0].mxu0
      %2851 = vmatprep.mubr.f32.mxu0 0.0
      %2852 = vmatmul.mubr.f32.gmra.mrb[0].mxu0 %v2752
      %v2853 = vpop.f32.mrb[0].mxu0
      %v2854 = vadd.f32 0.0, %v2853
      %v2855 = vpop.f32.mrb[0].mxu0
      %2856 = vmatprep.mubr.f32.mxu0 0.0
      %2857 = vmatmul.mubr.f32.gmra.mrb[0].mxu0 %v2755
      %v2858 = vpop.f32.mrb[0].mxu0
      %v2859 = vadd.f32 0.0, %v2858
      %v2860 = vpop.f32.mrb[0].mxu0
      %2861 = vdwg.mxu0
      %v2862 = vadd.f32 %v2690, %v2824
      %v2863 = vadd.f32 %v2691, %v2829
      %v2864 = vadd.f32 %v2692, %v2834
      %v2865 = vadd.f32 %v2693, %v2839
      %v2866 = vadd.f32 %v2694, %v2844
      %v2867 = vadd.f32 %v2695, %v2849
      %v2868 = vadd.f32 %v2696, %v2854
      %v2869 = vadd.f32 %v2697, %v2859
      %v2870 = vsel %vm715, %v2511, 0.0
      %2871 = vadd.xlane.f32.xlu0 %v2870
      %v2872 = vpop.xlane.xlu0 %2871
      %v2873 = vsel %vm715, %v2512, 0.0
      %2874 = vadd.xlane.f32.xlu0 %v2873
      %v2875 = vpop.xlane.xlu0 %2874
      %v2876 = vsel %vm715, %v2513, 0.0
      %2877 = vadd.xlane.f32.xlu0 %v2876
      %v2878 = vpop.xlane.xlu0 %2877
      %v2879 = vrcp.pop 64.0
      %v2880 = vmul.f32 %v2872, %v2879
      %v2881 = vmul.f32 %v2875, %v2879
      %v2882 = vmul.f32 %v2878, %v2879
      %v2883 = vsub.f32 %v2511, %v2880
      %v2884 = vsub.f32 %v2512, %v2881
      %v2885 = vsub.f32 %v2513, %v2882
      %v2886 = vmul.f32 %v2883, %v2883
      %v2887 = vmul.f32 %v2884, %v2884
      %v2888 = vmul.f32 %v2885, %v2885
      %v2889 = vsel %vm715, %v2886, 0.0
      %2890 = vadd.xlane.f32.xlu0 %v2889
      %v2891 = vpop.xlane.xlu0 %2890
      %v2892 = vsel %vm715, %v2887, 0.0
      %2893 = vadd.xlane.f32.xlu0 %v2892
      %v2894 = vpop.xlane.xlu0 %2893
      %v2895 = vsel %vm715, %v2888, 0.0
      %2896 = vadd.xlane.f32.xlu0 %v2895
      %v2897 = vpop.xlane.xlu0 %2896
      %v2898 = vmul.f32 %v2891, %v2879
      %v2899 = vmul.f32 %v2894, %v2879
      %v2900 = vmul.f32 %v2897, %v2879
      %v2901 = vadd.f32 %v2898, 0.00064
      %v2902 = vadd.f32 %v2899, 0.00064
      %v2903 = vadd.f32 %v2900, 0.00064
      %v2904 = vrsqrt.pop %v2901
      %v2905 = vrsqrt.pop %v2902
      %v2906 = vrsqrt.pop %v2903
      %v2907 = vmul.f32 %v2883, %v2904
      %v2908 = vmul.f32 %v2884, %v2905
      %v2909 = vmul.f32 %v2885, %v2906
      %v2910 = vlaneseq
      %v2911 = vshrl.u32 %v2910, 7
      %v2912 = vsub.s32 0, %v2911
      %v2913 = vrot.slane %v694, %v2912
      %v2914 = vmul.f32 %v2907, %v2913
      %v2915 = vmul.f32 %v2908, %v2913
      %v2916 = vmul.f32 %v2909, %v2913
      %v2917 = vlaneseq
      %v2918 = vshrl.u32 %v2917, 7
      %v2919 = vsub.s32 0, %v2918
      %v2920 = vrot.slane %v696, %v2919
      %v2921 = vadd.f32 %v2914, %v2920
      %v2922 = vadd.f32 %v2915, %v2920
      %v2923 = vadd.f32 %v2916, %v2920
      %v2924 = vmul.f32 %v654, %v774
      %v2925 = vmul.f32 %v655, %v775
      %v2926 = vmul.f32 %v656, %v776
      %v2927 = vlaneseq
      %v2928 = vshrl.u32 %v2927, 7
      %v2929 = vsub.s32 0, %v2928
      %v2930 = vrot.slane %v692, %v2929
      %v2931 = vmul.f32 %v2924, %v2930
      %v2932 = vmul.f32 %v2925, %v2930
      %v2933 = vmul.f32 %v2926, %v2930
      %v2934 = vsel %vm715, %v2931, 0.0
      %2935 = vadd.xlane.f32.xlu0 %v2934
      %v2936 = vpop.xlane.xlu0 %2935
      %v2937 = vsel %vm715, %v2932, 0.0
      %2938 = vadd.xlane.f32.xlu0 %v2937
      %v2939 = vpop.xlane.xlu0 %2938
      %v2940 = vsel %vm715, %v2933, 0.0
      %2941 = vadd.xlane.f32.xlu0 %v2940
      %v2942 = vpop.xlane.xlu0 %2941
      %v2943 = vmul.f32 %v2936, %v672
      %v2944 = vmul.f32 %v2939, %v673
      %v2945 = vmul.f32 %v2942, %v674
      %v2946 = vadd.f32 %v2921, %v2943
      %v2947 = vadd.f32 %v2922, %v2944
      %v2948 = vadd.f32 %v2923, %v2945
      %v2949 = vmul.f32 %v2946, %v684
      %v2950 = vmul.f32 %v2947, %v685
      %v2951 = vmul.f32 %v2948, %v686
      %2952 = vst.msk [vmem:[#allocation2] sm:$0xff] %vm715, %v2862
      %2953 = vst.msk [vmem:[#allocation2 + $0x8] sm:$0xff] %vm715, %v2863
      %2954 = vst.msk [vmem:[#allocation2 + $0x10] sm:$0xff] %vm715, %v2864
      %2955 = vst.msk [vmem:[#allocation2 + $0x18] sm:$0xff] %vm715, %v2865
      %2956 = vst.msk [vmem:[#allocation2 + $0x20] sm:$0xff] %vm715, %v2866
      %2957 = vst.msk [vmem:[#allocation2 + $0x28] sm:$0xff] %vm715, %v2867
      %2958 = vst.msk [vmem:[#allocation2 + $0x30] sm:$0xff] %vm715, %v2868
      %2959 = vst.msk [vmem:[#allocation2 + $0x38] sm:$0xff] %vm715, %v2869
      %s2960 = scalar_lea.vmem [#allocation2], 64
      %v2961 = vld [vmem:[%s2960] sm:$0xff]
      %v2962 = vld [vmem:[%s2960 + $0x8] sm:$0xff]
      %v2963 = vld [vmem:[%s2960 + $0x10] sm:$0xff]
      %v2964 = vld [vmem:[%s2960 + $0x18] sm:$0xff]
      %v2965 = vld [vmem:[%s2960 + $0x20] sm:$0xff]
      %v2966 = vld [vmem:[%s2960 + $0x28] sm:$0xff]
      %v2967 = vld [vmem:[%s2960 + $0x30] sm:$0xff]
      %v2968 = vld [vmem:[%s2960 + $0x38] sm:$0xff]
      %2972 = vrot.lane.b32.xlu0 %v712, 64
      %v2973 = vpop.permute.xlu0 %2972
      %2974 = vrot.lane.b32.xlu0 %v713, 64
      %v2975 = vpop.permute.xlu0 %2974
      %2976 = vrot.lane.b32.xlu0 %v714, 64
      %v2977 = vpop.permute.xlu0 %2976
      %v2981 = vsel %vm715, %v2973, 0.0
      %2982 = vadd.xlane.f32.xlu0 %v2981
      %v2983 = vpop.xlane.xlu0 %2982
      %v2984 = vsel %vm715, %v2975, 0.0
      %2985 = vadd.xlane.f32.xlu0 %v2984
      %v2986 = vpop.xlane.xlu0 %2985
      %v2987 = vsel %vm715, %v2977, 0.0
      %2988 = vadd.xlane.f32.xlu0 %v2987
      %v2989 = vpop.xlane.xlu0 %2988
      %v2990 = vrsqrt.pop %v2983
      %v2991 = vmul.f32 %v2983, %v2990
      %vm2992 = vcmp.eq.f32.partialorder %v2983, inf
      %v2993 = vsel %vm2992, %v2983, %v2991
      %vm2994 = vcmp.eq.f32.partialorder %v2983, 0.0
      %v2995 = vand.u32 %v2983, 2147483648
      %v2996 = vsel %vm2994, %v2995, %v2993
      %v2997 = vrsqrt.pop %v2986
      %v2998 = vmul.f32 %v2986, %v2997
      %vm2999 = vcmp.eq.f32.partialorder %v2986, inf
      %v3000 = vsel %vm2999, %v2986, %v2998
      %vm3001 = vcmp.eq.f32.partialorder %v2986, 0.0
      %v3002 = vand.u32 %v2986, 2147483648
      %v3003 = vsel %vm3001, %v3002, %v3000
      %v3004 = vrsqrt.pop %v2989
      %v3005 = vmul.f32 %v2989, %v3004
      %vm3006 = vcmp.eq.f32.partialorder %v2989, inf
      %v3007 = vsel %vm3006, %v2989, %v3005
      %vm3008 = vcmp.eq.f32.partialorder %v2989, 0.0
      %v3009 = vand.u32 %v2989, 2147483648
      %v3010 = vsel %vm3008, %v3009, %v3007
      %v3011 = vmax.f32 %v2996, 1e-12
      %v3012 = vmax.f32 %v3003, 1e-12
      %v3013 = vmax.f32 %v3010, 1e-12
      %v3014 = vrcp.pop %v3011
      %v3015 = vmul.f32 %v709, %v3014
      %v3016 = vrcp.pop %v3012
      %v3017 = vmul.f32 %v710, %v3016
      %v3018 = vrcp.pop %v3013
      %v3019 = vmul.f32 %v711, %v3018
      %v3020 = vsub.f32 0.0, %v3015
      %v3021 = vsub.f32 0.0, %v3017
      %v3022 = vsub.f32 0.0, %v3019
      %v3023 = vmul.f32 %v3015, %v678
      %v3024 = vmul.f32 %v3017, %v679
      %v3025 = vmul.f32 %v3019, %v680
      %3029 = vrot.lane.b32.xlu0 %v783, 64
      %v3030 = vpop.permute.xlu0 %3029
      %3031 = vrot.lane.b32.xlu0 %v784, 64
      %v3032 = vpop.permute.xlu0 %3031
      %3033 = vrot.lane.b32.xlu0 %v785, 64
      %v3034 = vpop.permute.xlu0 %3033
      %3038 = vmatprep.subr.mxu0 0.0
      %3039 = vmatpush1.msra.mxu0 %v3030
      %3040 = vmatprep.subr.mxu0 0.0
      %3041 = vmatpush1.msra.mxu0 %v3032
      %3042 = vmatprep.subr.mxu0 0.0
      %3043 = vmatpush1.msra.mxu0 %v3034
      %3044 = vmatprep.subr.mxu0 0.0
      %3045 = vmatpush1.msra.mxu0 0.0
      %3046 = vmatprep.subr.mxu0 0.0
      %3047 = vmatpush1.msra.mxu0 0.0
      %3048 = vmatprep.subr.mxu0 0.0
      %3049 = vmatpush1.msra.mxu0 0.0
      %3050 = vmatprep.subr.mxu0 0.0
      %3051 = vmatpush1.msra.mxu0 0.0
      %3052 = vmatprep.subr.mxu0 0.0
      %3053 = vmatpush1.msra.mxu0 0.0
      %3054 = vmatprep.subr.mxu0 0.0
      %3055 = vmatpush1.msra.mxu0 0.0
      %3056 = vmatprep.subr.mxu0 0.0
      %3057 = vmatpush1.msra.mxu0 0.0
      %3058 = vmatprep.subr.mxu0 0.0
      %3059 = vmatpush1.msra.mxu0 0.0
      %3060 = vmatprep.subr.mxu0 0.0
      %3061 = vmatpush1.msra.mxu0 0.0
      %3062 = vmatprep.subr.mxu0 0.0
      %3063 = vmatpush1.msra.mxu0 0.0
      %3064 = vmatprep.subr.mxu0 0.0
      %3065 = vmatpush1.msra.mxu0 0.0
      %3066 = vmatprep.subr.mxu0 0.0
      %3067 = vmatpush1.msra.mxu0 0.0
      %3068 = vmatprep.subr.mxu0 0.0
      %3069 = vmatpush1.msra.mxu0 0.0
      %3070 = vmatprep.subr.mxu0 0.0
      %3071 = vmatpush1.msra.mxu0 0.0
      %3072 = vmatprep.subr.mxu0 0.0
      %3073 = vmatpush1.msra.mxu0 0.0
      %3074 = vmatprep.subr.mxu0 0.0
      %3075 = vmatpush1.msra.mxu0 0.0
      %3076 = vmatprep.subr.mxu0 0.0
      %3077 = vmatpush1.msra.mxu0 0.0
      %3078 = vmatprep.subr.mxu0 0.0
      %3079 = vmatpush1.msra.mxu0 0.0
      %3080 = vmatprep.subr.mxu0 0.0
      %3081 = vmatpush1.msra.mxu0 0.0
      %3082 = vmatprep.subr.mxu0 0.0
      %3083 = vmatpush1.msra.mxu0 0.0
      %3084 = vmatprep.subr.mxu0 0.0
      %3085 = vmatpush1.msra.mxu0 0.0
      %3086 = vmatprep.subr.mxu0 0.0
      %3087 = vmatpush1.msra.mxu0 0.0
      %3088 = vmatprep.subr.mxu0 0.0
      %3089 = vmatpush1.msra.mxu0 0.0
      %3090 = vmatprep.subr.mxu0 0.0
      %3091 = vmatpush1.msra.mxu0 0.0
      %3092 = vmatprep.subr.mxu0 0.0
      %3093 = vmatpush1.msra.mxu0 0.0
      %3094 = vmatprep.subr.mxu0 0.0
      %3095 = vmatpush1.msra.mxu0 0.0
      %3096 = vmatprep.subr.mxu0 0.0
      %3097 = vmatpush1.msra.mxu0 0.0
      %3098 = vmatprep.subr.mxu0 0.0
      %3099 = vmatpush1.msra.mxu0 0.0
      %3100 = vmatprep.subr.mxu0 0.0
      %3101 = vmatpush1.msra.mxu0 0.0
      %3102 = vmatprep.mubr.f32.mxu0 0.0
      %3103 = vmatmul.mubr.f32.gmra.mrb[0].mxu0 %v788
      %v3104 = vpop.f32.mrb[0].mxu0
      %v3105 = vadd.f32 0.0, %v3104
      %v3106 = vpop.f32.mrb[0].mxu0
      %3107 = vmatprep.mubr.f32.mxu0 0.0
      %3108 = vmatmul.mubr.f32.gmra.mrb[0].mxu0 %v791
      %v3109 = vpop.f32.mrb[0].mxu0
      %v3110 = vadd.f32 0.0, %v3109
      %v3111 = vpop.f32.mrb[0].mxu0
      %3112 = vmatprep.mubr.f32.mxu0 0.0
      %3113 = vmatmul.mubr.f32.gmra.mrb[0].mxu0 %v794
      %v3114 = vpop.f32.mrb[0].mxu0
      %v3115 = vadd.f32 0.0, %v3114
      %v3116 = vpop.f32.mrb[0].mxu0
      %3117 = vdwg.mxu0
      %v3118 = vsub.f32 %v3105, %v3030
      %v3119 = vsub.f32 %v3110, %v3032
      %v3120 = vsub.f32 %v3115, %v3034
      %v3121 = vmul.f32 %v3105, 1.442695
      %v3122 = vpow.pop %v3121
      %v3123 = vmul.f32 %v3110, 1.442695
      %v3124 = vpow.pop %v3123
      %v3125 = vmul.f32 %v3115, 1.442695
      %v3126 = vpow.pop %v3125
      %v3127 = vsub.f32 0.0, %v3105
      %v3128 = vsub.f32 0.0, %v3110
      %v3129 = vsub.f32 0.0, %v3115
      %v3130 = vmul.f32 %v3127, 1.442695
      %v3131 = vpow.pop %v3130
      %v3132 = vmul.f32 %v3128, 1.442695
      %v3133 = vpow.pop %v3132
      %v3134 = vmul.f32 %v3129, 1.442695
      %v3135 = vpow.pop %v3134
      %v3136 = vmul.f32 %v3118, 1.442695
      %v3137 = vpow.pop %v3136
      %v3138 = vmul.f32 %v3119, 1.442695
      %v3139 = vpow.pop %v3138
      %v3140 = vmul.f32 %v3120, 1.442695
      %v3141 = vpow.pop %v3140
      %3145 = vrot.lane.b32.xlu0 %v3122, 64
      %v3146 = vpop.permute.xlu0 %3145
      %3147 = vrot.lane.b32.xlu0 %v3124, 64
      %v3148 = vpop.permute.xlu0 %3147
      %3149 = vrot.lane.b32.xlu0 %v3126, 64
      %v3150 = vpop.permute.xlu0 %3149
      %v3154 = vmul.f32 %v654, %v3146
      %v3155 = vmul.f32 %v655, %v3148
      %v3156 = vmul.f32 %v656, %v3150
      %3160 = vrot.lane.b32.xlu0 %v3131, 64
      %v3161 = vpop.permute.xlu0 %3160
      %3162 = vrot.lane.b32.xlu0 %v3133, 64
      %v3163 = vpop.permute.xlu0 %3162
      %3164 = vrot.lane.b32.xlu0 %v3135, 64
      %v3165 = vpop.permute.xlu0 %3164
      %v3169 = vmul.f32 %v774, %v3161
      %v3170 = vmul.f32 %v775, %v3163
      %v3171 = vmul.f32 %v776, %v3165
      %v3172 = vmul.f32 %v3023, %v3161
      %v3173 = vmul.f32 %v3024, %v3163
      %v3174 = vmul.f32 %v3025, %v3165
      %3178 = vrot.lane.b32.xlu0 %v3137, 64
      %v3179 = vpop.permute.xlu0 %3178
      %3180 = vrot.lane.b32.xlu0 %v3139, 64
      %v3181 = vpop.permute.xlu0 %3180
      %3182 = vrot.lane.b32.xlu0 %v3141, 64
      %v3183 = vpop.permute.xlu0 %3182
      %v3187 = vmul.f32 %v3020, %v3179
      %v3188 = vmul.f32 %v3021, %v3181
      %v3189 = vmul.f32 %v3022, %v3183
      %3193 = vrot.lane.b32.xlu0 %v3187, 64
      %v3194 = vpop.permute.xlu0 %3193
      %3195 = vrot.lane.b32.xlu0 %v3188, 64
      %v3196 = vpop.permute.xlu0 %3195
      %3197 = vrot.lane.b32.xlu0 %v3189, 64
      %v3198 = vpop.permute.xlu0 %3197
      %3202 = vrot.lane.b32.xlu0 %v3172, 64
      %v3203 = vpop.permute.xlu0 %3202
      %3204 = vrot.lane.b32.xlu0 %v3173, 64
      %v3205 = vpop.permute.xlu0 %3204
      %3206 = vrot.lane.b32.xlu0 %v3174, 64
      %v3207 = vpop.permute.xlu0 %3206
      %v3208 = vsel %vm715, %v3194, 0
      %v3210 = vsel %vm715, %v3196, 0
      %v3212 = vsel %vm715, %v3198, 0
      %v3214 = vsel %vm715, %v3203, 0
      %v3216 = vsel %vm715, %v3205, 0
      %v3218 = vsel %vm715, %v3207, 0
      %3220 = vmatprep.subr.mxu0 0.0
      %3221 = vmatpush1.xpose.msra.mxu0 %v3214
      %3222 = vmatprep.subr.mxu0 0.0
      %3223 = vmatpush1.xpose.msra.mxu0 %v3216
      %3224 = vmatprep.subr.mxu0 0.0
      %3225 = vmatpush1.xpose.msra.mxu0 %v3218
      %3226 = vmatprep.subr.mxu0 0.0
      %3227 = vmatpush1.xpose.msra.mxu0 0.0
      %3228 = vmatprep.subr.mxu0 0.0
      %3229 = vmatpush1.xpose.msra.mxu0 0.0
      %3230 = vmatprep.subr.mxu0 0.0
      %3231 = vmatpush1.xpose.msra.mxu0 0.0
      %3232 = vmatprep.subr.mxu0 0.0
      %3233 = vmatpush1.xpose.msra.mxu0 0.0
      %3234 = vmatprep.subr.mxu0 0.0
      %3235 = vmatpush1.xpose.msra.mxu0 0.0
      %3236 = vmatprep.subr.mxu0 0.0
      %3237 = vmatpush1.xpose.msra.mxu0 0.0
      %3238 = vmatprep.subr.mxu0 0.0
      %3239 = vmatpush1.xpose.msra.mxu0 0.0
      %3240 = vmatprep.subr.mxu0 0.0
      %3241 = vmatpush1.xpose.msra.mxu0 0.0
      %3242 = vmatprep.subr.mxu0 0.0
      %3243 = vmatpush1.xpose.msra.mxu0 0.0
      %3244 = vmatprep.subr.mxu0 0.0
      %3245 = vmatpush1.xpose.msra.mxu0 0.0
      %3246 = vmatprep.subr.mxu0 0.0
      %3247 = vmatpush1.xpose.msra.mxu0 0.0
      %3248 = vmatprep.subr.mxu0 0.0
      %3249 = vmatpush1.xpose.msra.mxu0 0.0
      %3250 = vmatprep.subr.mxu0 0.0
      %3251 = vmatpush1.xpose.msra.mxu0 0.0
      %3252 = vmatprep.subr.mxu0 0.0
      %3253 = vmatpush1.xpose.msra.mxu0 0.0
      %3254 = vmatprep.subr.mxu0 0.0
      %3255 = vmatpush1.xpose.msra.mxu0 0.0
      %3256 = vmatprep.subr.mxu0 0.0
      %3257 = vmatpush1.xpose.msra.mxu0 0.0
      %3258 = vmatprep.subr.mxu0 0.0
      %3259 = vmatpush1.xpose.msra.mxu0 0.0
      %3260 = vmatprep.subr.mxu0 0.0
      %3261 = vmatpush1.xpose.msra.mxu0 0.0
      %3262 = vmatprep.subr.mxu0 0.0
      %3263 = vmatpush1.xpose.msra.mxu0 0.0
      %3264 = vmatprep.subr.mxu0 0.0
      %3265 = vmatpush1.xpose.msra.mxu0 0.0
      %3266 = vmatprep.subr.mxu0 0.0
      %3267 = vmatpush1.xpose.msra.mxu0 0.0
      %3268 = vmatprep.subr.mxu0 0.0
      %3269 = vmatpush1.xpose.msra.mxu0 0.0
      %3270 = vmatprep.subr.mxu0 0.0
      %3271 = vmatpush1.xpose.msra.mxu0 0.0
      %3272 = vmatprep.subr.mxu0 0.0
      %3273 = vmatpush1.xpose.msra.mxu0 0.0
      %3274 = vmatprep.subr.mxu0 0.0
      %3275 = vmatpush1.xpose.msra.mxu0 0.0
      %3276 = vmatprep.subr.mxu0 0.0
      %3277 = vmatpush1.xpose.msra.mxu0 0.0
      %3278 = vmatprep.subr.mxu0 0.0
      %3279 = vmatpush1.xpose.msra.mxu0 0.0
      %3280 = vmatprep.subr.mxu0 0.0
      %3281 = vmatpush1.xpose.msra.mxu0 0.0
      %3282 = vmatprep.subr.mxu0 0.0
      %3283 = vmatpush1.xpose.msra.mxu0 0.0
      %3284 = vmatprep.mubr.f32.mxu0 0.0
      %3285 = vmatmul.mubr.f32.gmra.mrb[0].mxu0 %v3208
      %v3286 = vpop.f32.mrb[0].mxu0
      %v3287 = vadd.f32 0.0, %v3286
      %v3288 = vpop.f32.mrb[0].mxu0
      %3289 = vmatprep.mubr.f32.mxu0 0.0
      %3290 = vmatmul.mubr.f32.gmra.mrb[0].mxu0 %v3210
      %v3291 = vpop.f32.mrb[0].mxu0
      %v3292 = vadd.f32 0.0, %v3291
      %v3293 = vpop.f32.mrb[0].mxu0
      %3294 = vmatprep.mubr.f32.mxu0 0.0
      %3295 = vmatmul.mubr.f32.gmra.mrb[0].mxu0 %v3212
      %v3296 = vpop.f32.mrb[0].mxu0
      %v3297 = vadd.f32 0.0, %v3296
      %v3298 = vpop.f32.mrb[0].mxu0
      %3299 = vdwg.mxu0
      %v3300 = vmul.f32 %v3287, %v648
      %v3301 = vmul.f32 %v3292, %v649
      %v3302 = vmul.f32 %v3297, %v650
      %3306 = vrot.lane.b32.xlu0 %v3169, 64
      %v3307 = vpop.permute.xlu0 %3306
      %3308 = vrot.lane.b32.xlu0 %v3170, 64
      %v3309 = vpop.permute.xlu0 %3308
      %3310 = vrot.lane.b32.xlu0 %v3171, 64
      %v3311 = vpop.permute.xlu0 %3310
      %v3312 = vsel %vm715, %v3307, 0
      %v3314 = vsel %vm715, %v3309, 0
      %v3316 = vsel %vm715, %v3311, 0
      %3318 = vmatprep.subr.mxu0 0.0
      %3319 = vmatpush1.xpose.msra.mxu0 %v3312
      %3320 = vmatprep.subr.mxu0 0.0
      %3321 = vmatpush1.xpose.msra.mxu0 %v3314
      %3322 = vmatprep.subr.mxu0 0.0
      %3323 = vmatpush1.xpose.msra.mxu0 %v3316
      %3324 = vmatprep.subr.mxu0 0.0
      %3325 = vmatpush1.xpose.msra.mxu0 0.0
      %3326 = vmatprep.subr.mxu0 0.0
      %3327 = vmatpush1.xpose.msra.mxu0 0.0
      %3328 = vmatprep.subr.mxu0 0.0
      %3329 = vmatpush1.xpose.msra.mxu0 0.0
      %3330 = vmatprep.subr.mxu0 0.0
      %3331 = vmatpush1.xpose.msra.mxu0 0.0
      %3332 = vmatprep.subr.mxu0 0.0
      %3333 = vmatpush1.xpose.msra.mxu0 0.0
      %3334 = vmatprep.subr.mxu0 0.0
      %3335 = vmatpush1.xpose.msra.mxu0 0.0
      %3336 = vmatprep.subr.mxu0 0.0
      %3337 = vmatpush1.xpose.msra.mxu0 0.0
      %3338 = vmatprep.subr.mxu0 0.0
      %3339 = vmatpush1.xpose.msra.mxu0 0.0
      %3340 = vmatprep.subr.mxu0 0.0
      %3341 = vmatpush1.xpose.msra.mxu0 0.0
      %3342 = vmatprep.subr.mxu0 0.0
      %3343 = vmatpush1.xpose.msra.mxu0 0.0
      %3344 = vmatprep.subr.mxu0 0.0
      %3345 = vmatpush1.xpose.msra.mxu0 0.0
      %3346 = vmatprep.subr.mxu0 0.0
      %3347 = vmatpush1.xpose.msra.mxu0 0.0
      %3348 = vmatprep.subr.mxu0 0.0
      %3349 = vmatpush1.xpose.msra.mxu0 0.0
      %3350 = vmatprep.subr.mxu0 0.0
      %3351 = vmatpush1.xpose.msra.mxu0 0.0
      %3352 = vmatprep.subr.mxu0 0.0
      %3353 = vmatpush1.xpose.msra.mxu0 0.0
      %3354 = vmatprep.subr.mxu0 0.0
      %3355 = vmatpush1.xpose.msra.mxu0 0.0
      %3356 = vmatprep.subr.mxu0 0.0
      %3357 = vmatpush1.xpose.msra.mxu0 0.0
      %3358 = vmatprep.subr.mxu0 0.0
      %3359 = vmatpush1.xpose.msra.mxu0 0.0
      %3360 = vmatprep.subr.mxu0 0.0
      %3361 = vmatpush1.xpose.msra.mxu0 0.0
      %3362 = vmatprep.subr.mxu0 0.0
      %3363 = vmatpush1.xpose.msra.mxu0 0.0
      %3364 = vmatprep.subr.mxu0 0.0
      %3365 = vmatpush1.xpose.msra.mxu0 0.0
      %3366 = vmatprep.subr.mxu0 0.0
      %3367 = vmatpush1.xpose.msra.mxu0 0.0
      %3368 = vmatprep.subr.mxu0 0.0
      %3369 = vmatpush1.xpose.msra.mxu0 0.0
      %3370 = vmatprep.subr.mxu0 0.0
      %3371 = vmatpush1.xpose.msra.mxu0 0.0
      %3372 = vmatprep.subr.mxu0 0.0
      %3373 = vmatpush1.xpose.msra.mxu0 0.0
      %3374 = vmatprep.subr.mxu0 0.0
      %3375 = vmatpush1.xpose.msra.mxu0 0.0
      %3376 = vmatprep.subr.mxu0 0.0
      %3377 = vmatpush1.xpose.msra.mxu0 0.0
      %3378 = vmatprep.subr.mxu0 0.0
      %3379 = vmatpush1.xpose.msra.mxu0 0.0
      %3380 = vmatprep.subr.mxu0 0.0
      %3381 = vmatpush1.xpose.msra.mxu0 0.0
      %3382 = vmatprep.mubr.f32.mxu0 0.0
      %3383 = vmatmul.mubr.f32.gmra.mrb[0].mxu0 %v3208
      %v3384 = vpop.f32.mrb[0].mxu0
      %v3385 = vadd.f32 0.0, %v3384
      %v3386 = vpop.f32.mrb[0].mxu0
      %3387 = vmatprep.mubr.f32.mxu0 0.0
      %3388 = vmatmul.mubr.f32.gmra.mrb[0].mxu0 %v3210
      %v3389 = vpop.f32.mrb[0].mxu0
      %v3390 = vadd.f32 0.0, %v3389
      %v3391 = vpop.f32.mrb[0].mxu0
      %3392 = vmatprep.mubr.f32.mxu0 0.0
      %3393 = vmatmul.mubr.f32.gmra.mrb[0].mxu0 %v3212
      %v3394 = vpop.f32.mrb[0].mxu0
      %v3395 = vadd.f32 0.0, %v3394
      %v3396 = vpop.f32.mrb[0].mxu0
      %3397 = vdwg.mxu0
      %v3398 = vmul.f32 %v3385, %v648
      %v3399 = vmul.f32 %v3390, %v649
      %v3400 = vmul.f32 %v3395, %v650
      %3404 = vrot.lane.b32.xlu0 %v672, 64
      %v3405 = vpop.permute.xlu0 %3404
      %3406 = vrot.lane.b32.xlu0 %v673, 64
      %v3407 = vpop.permute.xlu0 %3406
      %3408 = vrot.lane.b32.xlu0 %v674, 64
      %v3409 = vpop.permute.xlu0 %3408
      %v3414 = vsel %vm786, %v3398, 0
      %v3417 = vsel %vm786, %v3399, 0
      %v3420 = vsel %vm786, %v3400, 0
      %3422 = vmatprep.subr.mxu0 0.0
      %3423 = vmatpush1.msra.mxu0 %v3405
      %3424 = vmatprep.subr.mxu0 0.0
      %3425 = vmatpush1.msra.mxu0 %v3407
      %3426 = vmatprep.subr.mxu0 0.0
      %3427 = vmatpush1.msra.mxu0 %v3409
      %3428 = vmatprep.subr.mxu0 0.0
      %3429 = vmatpush1.msra.mxu0 0.0
      %3430 = vmatprep.subr.mxu0 0.0
      %3431 = vmatpush1.msra.mxu0 0.0
      %3432 = vmatprep.subr.mxu0 0.0
      %3433 = vmatpush1.msra.mxu0 0.0
      %3434 = vmatprep.subr.mxu0 0.0
      %3435 = vmatpush1.msra.mxu0 0.0
      %3436 = vmatprep.subr.mxu0 0.0
      %3437 = vmatpush1.msra.mxu0 0.0
      %3438 = vmatprep.subr.mxu0 0.0
      %3439 = vmatpush1.msra.mxu0 0.0
      %3440 = vmatprep.subr.mxu0 0.0
      %3441 = vmatpush1.msra.mxu0 0.0
      %3442 = vmatprep.subr.mxu0 0.0
      %3443 = vmatpush1.msra.mxu0 0.0
      %3444 = vmatprep.subr.mxu0 0.0
      %3445 = vmatpush1.msra.mxu0 0.0
      %3446 = vmatprep.subr.mxu0 0.0
      %3447 = vmatpush1.msra.mxu0 0.0
      %3448 = vmatprep.subr.mxu0 0.0
      %3449 = vmatpush1.msra.mxu0 0.0
      %3450 = vmatprep.subr.mxu0 0.0
      %3451 = vmatpush1.msra.mxu0 0.0
      %3452 = vmatprep.subr.mxu0 0.0
      %3453 = vmatpush1.msra.mxu0 0.0
      %3454 = vmatprep.subr.mxu0 0.0
      %3455 = vmatpush1.msra.mxu0 0.0
      %3456 = vmatprep.subr.mxu0 0.0
      %3457 = vmatpush1.msra.mxu0 0.0
      %3458 = vmatprep.subr.mxu0 0.0
      %3459 = vmatpush1.msra.mxu0 0.0
      %3460 = vmatprep.subr.mxu0 0.0
      %3461 = vmatpush1.msra.mxu0 0.0
      %3462 = vmatprep.subr.mxu0 0.0
      %3463 = vmatpush1.msra.mxu0 0.0
      %3464 = vmatprep.subr.mxu0 0.0
      %3465 = vmatpush1.msra.mxu0 0.0
      %3466 = vmatprep.subr.mxu0 0.0
      %3467 = vmatpush1.msra.mxu0 0.0
      %3468 = vmatprep.subr.mxu0 0.0
      %3469 = vmatpush1.msra.mxu0 0.0
      %3470 = vmatprep.subr.mxu0 0.0
      %3471 = vmatpush1.msra.mxu0 0.0
      %3472 = vmatprep.subr.mxu0 0.0
      %3473 = vmatpush1.msra.mxu0 0.0
      %3474 = vmatprep.subr.mxu0 0.0
      %3475 = vmatpush1.msra.mxu0 0.0
      %3476 = vmatprep.subr.mxu0 0.0
      %3477 = vmatpush1.msra.mxu0 0.0
      %3478 = vmatprep.subr.mxu0 0.0
      %3479 = vmatpush1.msra.mxu0 0.0
      %3480 = vmatprep.subr.mxu0 0.0
      %3481 = vmatpush1.msra.mxu0 0.0
      %3482 = vmatprep.subr.mxu0 0.0
      %3483 = vmatpush1.msra.mxu0 0.0
      %3484 = vmatprep.subr.mxu0 0.0
      %3485 = vmatpush1.msra.mxu0 0.0
      %3486 = vmatprep.mubr.f32.mxu0 0.0
      %3487 = vmatmul.mubr.f32.gmra.mrb[0].mxu0 %v3414
      %v3488 = vpop.f32.mrb[0].mxu0
      %v3489 = vadd.f32 0.0, %v3488
      %v3490 = vpop.f32.mrb[0].mxu0
      %3491 = vmatprep.mubr.f32.mxu0 0.0
      %3492 = vmatmul.mubr.f32.gmra.mrb[0].mxu0 %v3417
      %v3493 = vpop.f32.mrb[0].mxu0
      %v3494 = vadd.f32 0.0, %v3493
      %v3495 = vpop.f32.mrb[0].mxu0
      %3496 = vmatprep.mubr.f32.mxu0 0.0
      %3497 = vmatmul.mubr.f32.gmra.mrb[0].mxu0 %v3420
      %v3498 = vpop.f32.mrb[0].mxu0
      %v3499 = vadd.f32 0.0, %v3498
      %v3500 = vpop.f32.mrb[0].mxu0
      %3501 = vdwg.mxu0
      %v3503 = vsel %vm715, %v2961, 0
      %v3506 = vsel %vm715, %v2962, 0
      %v3509 = vsel %vm715, %v2963, 0
      %v3512 = vsel %vm715, %v2964, 0
      %v3515 = vsel %vm715, %v2965, 0
      %v3518 = vsel %vm715, %v2966, 0
      %v3521 = vsel %vm715, %v2967, 0
      %v3524 = vsel %vm715, %v2968, 0
      %3526 = vmatprep.subr.mxu0 0.0
      %3527 = vmatpush1.xpose.msra.mxu0 %v3503
      %3528 = vmatprep.subr.mxu0 0.0
      %3529 = vmatpush1.xpose.msra.mxu0 %v3506
      %3530 = vmatprep.subr.mxu0 0.0
      %3531 = vmatpush1.xpose.msra.mxu0 %v3509
      %3532 = vmatprep.subr.mxu0 0.0
      %3533 = vmatpush1.xpose.msra.mxu0 %v3512
      %3534 = vmatprep.subr.mxu0 0.0
      %3535 = vmatpush1.xpose.msra.mxu0 %v3515
      %3536 = vmatprep.subr.mxu0 0.0
      %3537 = vmatpush1.xpose.msra.mxu0 %v3518
      %3538 = vmatprep.subr.mxu0 0.0
      %3539 = vmatpush1.xpose.msra.mxu0 %v3521
      %3540 = vmatprep.subr.mxu0 0.0
      %3541 = vmatpush1.xpose.msra.mxu0 %v3524
      %3542 = vmatprep.subr.mxu0 0.0
      %3543 = vmatpush1.xpose.msra.mxu0 0.0
      %3544 = vmatprep.subr.mxu0 0.0
      %3545 = vmatpush1.xpose.msra.mxu0 0.0
      %3546 = vmatprep.subr.mxu0 0.0
      %3547 = vmatpush1.xpose.msra.mxu0 0.0
      %3548 = vmatprep.subr.mxu0 0.0
      %3549 = vmatpush1.xpose.msra.mxu0 0.0
      %3550 = vmatprep.subr.mxu0 0.0
      %3551 = vmatpush1.xpose.msra.mxu0 0.0
      %3552 = vmatprep.subr.mxu0 0.0
      %3553 = vmatpush1.xpose.msra.mxu0 0.0
      %3554 = vmatprep.subr.mxu0 0.0
      %3555 = vmatpush1.xpose.msra.mxu0 0.0
      %3556 = vmatprep.subr.mxu0 0.0
      %3557 = vmatpush1.xpose.msra.mxu0 0.0
      %3558 = vmatprep.subr.mxu0 0.0
      %3559 = vmatpush1.xpose.msra.mxu0 0.0
      %3560 = vmatprep.subr.mxu0 0.0
      %3561 = vmatpush1.xpose.msra.mxu0 0.0
      %3562 = vmatprep.subr.mxu0 0.0
      %3563 = vmatpush1.xpose.msra.mxu0 0.0
      %3564 = vmatprep.subr.mxu0 0.0
      %3565 = vmatpush1.xpose.msra.mxu0 0.0
      %3566 = vmatprep.subr.mxu0 0.0
      %3567 = vmatpush1.xpose.msra.mxu0 0.0
      %3568 = vmatprep.subr.mxu0 0.0
      %3569 = vmatpush1.xpose.msra.mxu0 0.0
      %3570 = vmatprep.subr.mxu0 0.0
      %3571 = vmatpush1.xpose.msra.mxu0 0.0
      %3572 = vmatprep.subr.mxu0 0.0
      %3573 = vmatpush1.xpose.msra.mxu0 0.0
      %3574 = vmatprep.subr.mxu0 0.0
      %3575 = vmatpush1.xpose.msra.mxu0 0.0
      %3576 = vmatprep.subr.mxu0 0.0
      %3577 = vmatpush1.xpose.msra.mxu0 0.0
      %3578 = vmatprep.subr.mxu0 0.0
      %3579 = vmatpush1.xpose.msra.mxu0 0.0
      %3580 = vmatprep.subr.mxu0 0.0
      %3581 = vmatpush1.xpose.msra.mxu0 0.0
      %3582 = vmatprep.subr.mxu0 0.0
      %3583 = vmatpush1.xpose.msra.mxu0 0.0
      %3584 = vmatprep.subr.mxu0 0.0
      %3585 = vmatpush1.xpose.msra.mxu0 0.0
      %3586 = vmatprep.subr.mxu0 0.0
      %3587 = vmatpush1.xpose.msra.mxu0 0.0
      %3588 = vmatprep.subr.mxu0 0.0
      %3589 = vmatpush1.xpose.msra.mxu0 0.0
      %3590 = vmatprep.mubr.f32.mxu0 0.0
      %3591 = vmatmul.mubr.f32.gmra.mrb[0].mxu0 %v3208
      %v3592 = vpop.f32.mrb[0].mxu0
      %v3593 = vadd.f32 %v3489, %v3592
      %v3594 = vpop.f32.mrb[0].mxu0
      %3595 = vmatprep.mubr.f32.mxu0 0.0
      %3596 = vmatmul.mubr.f32.gmra.mrb[0].mxu0 %v3210
      %v3597 = vpop.f32.mrb[0].mxu0
      %v3598 = vadd.f32 %v3494, %v3597
      %v3599 = vpop.f32.mrb[0].mxu0
      %3600 = vmatprep.mubr.f32.mxu0 0.0
      %3601 = vmatmul.mubr.f32.gmra.mrb[0].mxu0 %v3212
      %v3602 = vpop.f32.mrb[0].mxu0
      %v3603 = vadd.f32 %v3499, %v3602
      %v3604 = vpop.f32.mrb[0].mxu0
      %3605 = vdwg.mxu0
      %v3607 = vsel %vm786, %v3300, 0
      %v3610 = vsel %vm786, %v3301, 0
      %v3613 = vsel %vm786, %v3302, 0
      %3615 = vmatprep.subr.mxu0 0.0
      %3616 = vmatpush1.msra.mxu0 %v3593
      %3617 = vmatprep.subr.mxu0 0.0
      %3618 = vmatpush1.msra.mxu0 %v3598
      %3619 = vmatprep.subr.mxu0 0.0
      %3620 = vmatpush1.msra.mxu0 %v3603
      %3621 = vmatprep.subr.mxu0 0.0
      %3622 = vmatpush1.msra.mxu0 0.0
      %3623 = vmatprep.subr.mxu0 0.0
      %3624 = vmatpush1.msra.mxu0 0.0
      %3625 = vmatprep.subr.mxu0 0.0
      %3626 = vmatpush1.msra.mxu0 0.0
      %3627 = vmatprep.subr.mxu0 0.0
      %3628 = vmatpush1.msra.mxu0 0.0
      %3629 = vmatprep.subr.mxu0 0.0
      %3630 = vmatpush1.msra.mxu0 0.0
      %3631 = vmatprep.subr.mxu0 0.0
      %3632 = vmatpush1.msra.mxu0 0.0
      %3633 = vmatprep.subr.mxu0 0.0
      %3634 = vmatpush1.msra.mxu0 0.0
      %3635 = vmatprep.subr.mxu0 0.0
      %3636 = vmatpush1.msra.mxu0 0.0
      %3637 = vmatprep.subr.mxu0 0.0
      %3638 = vmatpush1.msra.mxu0 0.0
      %3639 = vmatprep.subr.mxu0 0.0
      %3640 = vmatpush1.msra.mxu0 0.0
      %3641 = vmatprep.subr.mxu0 0.0
      %3642 = vmatpush1.msra.mxu0 0.0
      %3643 = vmatprep.subr.mxu0 0.0
      %3644 = vmatpush1.msra.mxu0 0.0
      %3645 = vmatprep.subr.mxu0 0.0
      %3646 = vmatpush1.msra.mxu0 0.0
      %3647 = vmatprep.subr.mxu0 0.0
      %3648 = vmatpush1.msra.mxu0 0.0
      %3649 = vmatprep.subr.mxu0 0.0
      %3650 = vmatpush1.msra.mxu0 0.0
      %3651 = vmatprep.subr.mxu0 0.0
      %3652 = vmatpush1.msra.mxu0 0.0
      %3653 = vmatprep.subr.mxu0 0.0
      %3654 = vmatpush1.msra.mxu0 0.0
      %3655 = vmatprep.subr.mxu0 0.0
      %3656 = vmatpush1.msra.mxu0 0.0
      %3657 = vmatprep.subr.mxu0 0.0
      %3658 = vmatpush1.msra.mxu0 0.0
      %3659 = vmatprep.subr.mxu0 0.0
      %3660 = vmatpush1.msra.mxu0 0.0
      %3661 = vmatprep.subr.mxu0 0.0
      %3662 = vmatpush1.msra.mxu0 0.0
      %3663 = vmatprep.subr.mxu0 0.0
      %3664 = vmatpush1.msra.mxu0 0.0
      %3665 = vmatprep.subr.mxu0 0.0
      %3666 = vmatpush1.msra.mxu0 0.0
      %3667 = vmatprep.subr.mxu0 0.0
      %3668 = vmatpush1.msra.mxu0 0.0
      %3669 = vmatprep.subr.mxu0 0.0
      %3670 = vmatpush1.msra.mxu0 0.0
      %3671 = vmatprep.subr.mxu0 0.0
      %3672 = vmatpush1.msra.mxu0 0.0
      %3673 = vmatprep.subr.mxu0 0.0
      %3674 = vmatpush1.msra.mxu0 0.0
      %3675 = vmatprep.subr.mxu0 0.0
      %3676 = vmatpush1.msra.mxu0 0.0
      %3677 = vmatprep.subr.mxu0 0.0
      %3678 = vmatpush1.msra.mxu0 0.0
      %3679 = vmatprep.mubr.f32.mxu0 0.0
      %3680 = vmatmul.mubr.f32.gmra.mrb[0].mxu0 %v3607
      %v3681 = vpop.f32.mrb[0].mxu0
      %v3682 = vadd.f32 0.0, %v3681
      %v3683 = vpop.f32.mrb[0].mxu0
      %3684 = vmatprep.mubr.f32.mxu0 0.0
      %3685 = vmatmul.mubr.f32.gmra.mrb[0].mxu0 %v3610
      %v3686 = vpop.f32.mrb[0].mxu0
      %v3687 = vadd.f32 0.0, %v3686
      %v3688 = vpop.f32.mrb[0].mxu0
      %3689 = vmatprep.mubr.f32.mxu0 0.0
      %3690 = vmatmul.mubr.f32.gmra.mrb[0].mxu0 %v3613
      %v3691 = vpop.f32.mrb[0].mxu0
      %v3692 = vadd.f32 0.0, %v3691
      %v3693 = vpop.f32.mrb[0].mxu0
      %3694 = vdwg.mxu0
      %v3695 = vadd.f32 %v3593, %v3682
      %v3696 = vadd.f32 %v3598, %v3687
      %v3697 = vadd.f32 %v3603, %v3692
      %3698 = vmatprep.subr.mxu0 0.0
      %3699 = vmatpush1.msra.mxu0 %v3300
      %3700 = vmatprep.subr.mxu0 0.0
      %3701 = vmatpush1.msra.mxu0 %v3301
      %3702 = vmatprep.subr.mxu0 0.0
      %3703 = vmatpush1.msra.mxu0 %v3302
      %3704 = vmatprep.subr.mxu0 0.0
      %3705 = vmatpush1.msra.mxu0 0.0
      %3706 = vmatprep.subr.mxu0 0.0
      %3707 = vmatpush1.msra.mxu0 0.0
      %3708 = vmatprep.subr.mxu0 0.0
      %3709 = vmatpush1.msra.mxu0 0.0
      %3710 = vmatprep.subr.mxu0 0.0
      %3711 = vmatpush1.msra.mxu0 0.0
      %3712 = vmatprep.subr.mxu0 0.0
      %3713 = vmatpush1.msra.mxu0 0.0
      %3714 = vmatprep.subr.mxu0 0.0
      %3715 = vmatpush1.msra.mxu0 0.0
      %3716 = vmatprep.subr.mxu0 0.0
      %3717 = vmatpush1.msra.mxu0 0.0
      %3718 = vmatprep.subr.mxu0 0.0
      %3719 = vmatpush1.msra.mxu0 0.0
      %3720 = vmatprep.subr.mxu0 0.0
      %3721 = vmatpush1.msra.mxu0 0.0
      %3722 = vmatprep.subr.mxu0 0.0
      %3723 = vmatpush1.msra.mxu0 0.0
      %3724 = vmatprep.subr.mxu0 0.0
      %3725 = vmatpush1.msra.mxu0 0.0
      %3726 = vmatprep.subr.mxu0 0.0
      %3727 = vmatpush1.msra.mxu0 0.0
      %3728 = vmatprep.subr.mxu0 0.0
      %3729 = vmatpush1.msra.mxu0 0.0
      %3730 = vmatprep.subr.mxu0 0.0
      %3731 = vmatpush1.msra.mxu0 0.0
      %3732 = vmatprep.subr.mxu0 0.0
      %3733 = vmatpush1.msra.mxu0 0.0
      %3734 = vmatprep.subr.mxu0 0.0
      %3735 = vmatpush1.msra.mxu0 0.0
      %3736 = vmatprep.subr.mxu0 0.0
      %3737 = vmatpush1.msra.mxu0 0.0
      %3738 = vmatprep.subr.mxu0 0.0
      %3739 = vmatpush1.msra.mxu0 0.0
      %3740 = vmatprep.subr.mxu0 0.0
      %3741 = vmatpush1.msra.mxu0 0.0
      %3742 = vmatprep.subr.mxu0 0.0
      %3743 = vmatpush1.msra.mxu0 0.0
      %3744 = vmatprep.subr.mxu0 0.0
      %3745 = vmatpush1.msra.mxu0 0.0
      %3746 = vmatprep.subr.mxu0 0.0
      %3747 = vmatpush1.msra.mxu0 0.0
      %3748 = vmatprep.subr.mxu0 0.0
      %3749 = vmatpush1.msra.mxu0 0.0
      %3750 = vmatprep.subr.mxu0 0.0
      %3751 = vmatpush1.msra.mxu0 0.0
      %3752 = vmatprep.subr.mxu0 0.0
      %3753 = vmatpush1.msra.mxu0 0.0
      %3754 = vmatprep.subr.mxu0 0.0
      %3755 = vmatpush1.msra.mxu0 0.0
      %3756 = vmatprep.subr.mxu0 0.0
      %3757 = vmatpush1.msra.mxu0 0.0
      %3758 = vmatprep.subr.mxu0 0.0
      %3759 = vmatpush1.msra.mxu0 0.0
      %3760 = vmatprep.subr.mxu0 0.0
      %3761 = vmatpush1.msra.mxu0 0.0
      %3762 = vmatprep.mubr.f32.mxu0 0.0
      %3763 = vmatmul.mubr.f32.gmra.mrb[0].mxu0 %v3607
      %v3764 = vpop.f32.mrb[0].mxu0
      %v3765 = vadd.f32 0.0, %v3764
      %v3766 = vpop.f32.mrb[0].mxu0
      %3767 = vmatprep.mubr.f32.mxu0 0.0
      %3768 = vmatmul.mubr.f32.gmra.mrb[0].mxu0 %v3610
      %v3769 = vpop.f32.mrb[0].mxu0
      %v3770 = vadd.f32 0.0, %v3769
      %v3771 = vpop.f32.mrb[0].mxu0
      %3772 = vmatprep.mubr.f32.mxu0 0.0
      %3773 = vmatmul.mubr.f32.gmra.mrb[0].mxu0 %v3613
      %v3774 = vpop.f32.mrb[0].mxu0
      %v3775 = vadd.f32 0.0, %v3774
      %v3776 = vpop.f32.mrb[0].mxu0
      %3777 = vdwg.mxu0
      %v3779 = vsel %vm786, %v3765, 0
      %v3782 = vsel %vm786, %v3770, 0
      %v3785 = vsel %vm786, %v3775, 0
      %3787 = vmatprep.subr.mxu0 0.0
      %3788 = vmatpush1.msra.mxu0 %v3695
      %3789 = vmatprep.subr.mxu0 0.0
      %3790 = vmatpush1.msra.mxu0 %v3696
      %3791 = vmatprep.subr.mxu0 0.0
      %3792 = vmatpush1.msra.mxu0 %v3697
      %3793 = vmatprep.subr.mxu0 0.0
      %3794 = vmatpush1.msra.mxu0 0.0
      %3795 = vmatprep.subr.mxu0 0.0
      %3796 = vmatpush1.msra.mxu0 0.0
      %3797 = vmatprep.subr.mxu0 0.0
      %3798 = vmatpush1.msra.mxu0 0.0
      %3799 = vmatprep.subr.mxu0 0.0
      %3800 = vmatpush1.msra.mxu0 0.0
      %3801 = vmatprep.subr.mxu0 0.0
      %3802 = vmatpush1.msra.mxu0 0.0
      %3803 = vmatprep.subr.mxu0 0.0
      %3804 = vmatpush1.msra.mxu0 0.0
      %3805 = vmatprep.subr.mxu0 0.0
      %3806 = vmatpush1.msra.mxu0 0.0
      %3807 = vmatprep.subr.mxu0 0.0
      %3808 = vmatpush1.msra.mxu0 0.0
      %3809 = vmatprep.subr.mxu0 0.0
      %3810 = vmatpush1.msra.mxu0 0.0
      %3811 = vmatprep.subr.mxu0 0.0
      %3812 = vmatpush1.msra.mxu0 0.0
      %3813 = vmatprep.subr.mxu0 0.0
      %3814 = vmatpush1.msra.mxu0 0.0
      %3815 = vmatprep.subr.mxu0 0.0
      %3816 = vmatpush1.msra.mxu0 0.0
      %3817 = vmatprep.subr.mxu0 0.0
      %3818 = vmatpush1.msra.mxu0 0.0
      %3819 = vmatprep.subr.mxu0 0.0
      %3820 = vmatpush1.msra.mxu0 0.0
      %3821 = vmatprep.subr.mxu0 0.0
      %3822 = vmatpush1.msra.mxu0 0.0
      %3823 = vmatprep.subr.mxu0 0.0
      %3824 = vmatpush1.msra.mxu0 0.0
      %3825 = vmatprep.subr.mxu0 0.0
      %3826 = vmatpush1.msra.mxu0 0.0
      %3827 = vmatprep.subr.mxu0 0.0
      %3828 = vmatpush1.msra.mxu0 0.0
      %3829 = vmatprep.subr.mxu0 0.0
      %3830 = vmatpush1.msra.mxu0 0.0
      %3831 = vmatprep.subr.mxu0 0.0
      %3832 = vmatpush1.msra.mxu0 0.0
      %3833 = vmatprep.subr.mxu0 0.0
      %3834 = vmatpush1.msra.mxu0 0.0
      %3835 = vmatprep.subr.mxu0 0.0
      %3836 = vmatpush1.msra.mxu0 0.0
      %3837 = vmatprep.subr.mxu0 0.0
      %3838 = vmatpush1.msra.mxu0 0.0
      %3839 = vmatprep.subr.mxu0 0.0
      %3840 = vmatpush1.msra.mxu0 0.0
      %3841 = vmatprep.subr.mxu0 0.0
      %3842 = vmatpush1.msra.mxu0 0.0
      %3843 = vmatprep.subr.mxu0 0.0
      %3844 = vmatpush1.msra.mxu0 0.0
      %3845 = vmatprep.subr.mxu0 0.0
      %3846 = vmatpush1.msra.mxu0 0.0
      %3847 = vmatprep.subr.mxu0 0.0
      %3848 = vmatpush1.msra.mxu0 0.0
      %3849 = vmatprep.subr.mxu0 0.0
      %3850 = vmatpush1.msra.mxu0 0.0
      %3851 = vmatprep.mubr.f32.mxu0 0.0
      %3852 = vmatmul.mubr.f32.gmra.mrb[0].mxu0 %v3779
      %v3853 = vpop.f32.mrb[0].mxu0
      %v3854 = vadd.f32 0.0, %v3853
      %v3855 = vpop.f32.mrb[0].mxu0
      %3856 = vmatprep.mubr.f32.mxu0 0.0
      %3857 = vmatmul.mubr.f32.gmra.mrb[0].mxu0 %v3782
      %v3858 = vpop.f32.mrb[0].mxu0
      %v3859 = vadd.f32 0.0, %v3858
      %v3860 = vpop.f32.mrb[0].mxu0
      %3861 = vmatprep.mubr.f32.mxu0 0.0
      %3862 = vmatmul.mubr.f32.gmra.mrb[0].mxu0 %v3785
      %v3863 = vpop.f32.mrb[0].mxu0
      %v3864 = vadd.f32 0.0, %v3863
      %v3865 = vpop.f32.mrb[0].mxu0
      %3866 = vdwg.mxu0
      %v3867 = vadd.f32 %v3695, %v3854
      %v3868 = vadd.f32 %v3696, %v3859
      %v3869 = vadd.f32 %v3697, %v3864
      %3870 = vmatprep.subr.mxu0 0.0
      %3871 = vmatpush1.msra.mxu0 %v3765
      %3872 = vmatprep.subr.mxu0 0.0
      %3873 = vmatpush1.msra.mxu0 %v3770
      %3874 = vmatprep.subr.mxu0 0.0
      %3875 = vmatpush1.msra.mxu0 %v3775
      %3876 = vmatprep.subr.mxu0 0.0
      %3877 = vmatpush1.msra.mxu0 0.0
      %3878 = vmatprep.subr.mxu0 0.0
      %3879 = vmatpush1.msra.mxu0 0.0
      %3880 = vmatprep.subr.mxu0 0.0
      %3881 = vmatpush1.msra.mxu0 0.0
      %3882 = vmatprep.subr.mxu0 0.0
      %3883 = vmatpush1.msra.mxu0 0.0
      %3884 = vmatprep.subr.mxu0 0.0
      %3885 = vmatpush1.msra.mxu0 0.0
      %3886 = vmatprep.subr.mxu0 0.0
      %3887 = vmatpush1.msra.mxu0 0.0
      %3888 = vmatprep.subr.mxu0 0.0
      %3889 = vmatpush1.msra.mxu0 0.0
      %3890 = vmatprep.subr.mxu0 0.0
      %3891 = vmatpush1.msra.mxu0 0.0
      %3892 = vmatprep.subr.mxu0 0.0
      %3893 = vmatpush1.msra.mxu0 0.0
      %3894 = vmatprep.subr.mxu0 0.0
      %3895 = vmatpush1.msra.mxu0 0.0
      %3896 = vmatprep.subr.mxu0 0.0
      %3897 = vmatpush1.msra.mxu0 0.0
      %3898 = vmatprep.subr.mxu0 0.0
      %3899 = vmatpush1.msra.mxu0 0.0
      %3900 = vmatprep.subr.mxu0 0.0
      %3901 = vmatpush1.msra.mxu0 0.0
      %3902 = vmatprep.subr.mxu0 0.0
      %3903 = vmatpush1.msra.mxu0 0.0
      %3904 = vmatprep.subr.mxu0 0.0
      %3905 = vmatpush1.msra.mxu0 0.0
      %3906 = vmatprep.subr.mxu0 0.0
      %3907 = vmatpush1.msra.mxu0 0.0
      %3908 = vmatprep.subr.mxu0 0.0
      %3909 = vmatpush1.msra.mxu0 0.0
      %3910 = vmatprep.subr.mxu0 0.0
      %3911 = vmatpush1.msra.mxu0 0.0
      %3912 = vmatprep.subr.mxu0 0.0
      %3913 = vmatpush1.msra.mxu0 0.0
      %3914 = vmatprep.subr.mxu0 0.0
      %3915 = vmatpush1.msra.mxu0 0.0
      %3916 = vmatprep.subr.mxu0 0.0
      %3917 = vmatpush1.msra.mxu0 0.0
      %3918 = vmatprep.subr.mxu0 0.0
      %3919 = vmatpush1.msra.mxu0 0.0
      %3920 = vmatprep.subr.mxu0 0.0
      %3921 = vmatpush1.msra.mxu0 0.0
      %3922 = vmatprep.subr.mxu0 0.0
      %3923 = vmatpush1.msra.mxu0 0.0
      %3924 = vmatprep.subr.mxu0 0.0
      %3925 = vmatpush1.msra.mxu0 0.0
      %3926 = vmatprep.subr.mxu0 0.0
      %3927 = vmatpush1.msra.mxu0 0.0
      %3928 = vmatprep.subr.mxu0 0.0
      %3929 = vmatpush1.msra.mxu0 0.0
      %3930 = vmatprep.subr.mxu0 0.0
      %3931 = vmatpush1.msra.mxu0 0.0
      %3932 = vmatprep.subr.mxu0 0.0
      %3933 = vmatpush1.msra.mxu0 0.0
      %3934 = vmatprep.mubr.f32.mxu0 0.0
      %3935 = vmatmul.mubr.f32.gmra.mrb[0].mxu0 %v3779
      %v3936 = vpop.f32.mrb[0].mxu0
      %v3937 = vadd.f32 0.0, %v3936
      %v3938 = vpop.f32.mrb[0].mxu0
      %3939 = vmatprep.mubr.f32.mxu0 0.0
      %3940 = vmatmul.mubr.f32.gmra.mrb[0].mxu0 %v3782
      %v3941 = vpop.f32.mrb[0].mxu0
      %v3942 = vadd.f32 0.0, %v3941
      %v3943 = vpop.f32.mrb[0].mxu0
      %3944 = vmatprep.mubr.f32.mxu0 0.0
      %3945 = vmatmul.mubr.f32.gmra.mrb[0].mxu0 %v3785
      %v3946 = vpop.f32.mrb[0].mxu0
      %v3947 = vadd.f32 0.0, %v3946
      %v3948 = vpop.f32.mrb[0].mxu0
      %3949 = vdwg.mxu0
      %v3951 = vsel %vm786, %v3937, 0
      %v3954 = vsel %vm786, %v3942, 0
      %v3957 = vsel %vm786, %v3947, 0
      %3959 = vmatprep.subr.mxu0 0.0
      %3960 = vmatpush1.msra.mxu0 %v3867
      %3961 = vmatprep.subr.mxu0 0.0
      %3962 = vmatpush1.msra.mxu0 %v3868
      %3963 = vmatprep.subr.mxu0 0.0
      %3964 = vmatpush1.msra.mxu0 %v3869
      %3965 = vmatprep.subr.mxu0 0.0
      %3966 = vmatpush1.msra.mxu0 0.0
      %3967 = vmatprep.subr.mxu0 0.0
      %3968 = vmatpush1.msra.mxu0 0.0
      %3969 = vmatprep.subr.mxu0 0.0
      %3970 = vmatpush1.msra.mxu0 0.0
      %3971 = vmatprep.subr.mxu0 0.0
      %3972 = vmatpush1.msra.mxu0 0.0
      %3973 = vmatprep.subr.mxu0 0.0
      %3974 = vmatpush1.msra.mxu0 0.0
      %3975 = vmatprep.subr.mxu0 0.0
      %3976 = vmatpush1.msra.mxu0 0.0
      %3977 = vmatprep.subr.mxu0 0.0
      %3978 = vmatpush1.msra.mxu0 0.0
      %3979 = vmatprep.subr.mxu0 0.0
      %3980 = vmatpush1.msra.mxu0 0.0
      %3981 = vmatprep.subr.mxu0 0.0
      %3982 = vmatpush1.msra.mxu0 0.0
      %3983 = vmatprep.subr.mxu0 0.0
      %3984 = vmatpush1.msra.mxu0 0.0
      %3985 = vmatprep.subr.mxu0 0.0
      %3986 = vmatpush1.msra.mxu0 0.0
      %3987 = vmatprep.subr.mxu0 0.0
      %3988 = vmatpush1.msra.mxu0 0.0
      %3989 = vmatprep.subr.mxu0 0.0
      %3990 = vmatpush1.msra.mxu0 0.0
      %3991 = vmatprep.subr.mxu0 0.0
      %3992 = vmatpush1.msra.mxu0 0.0
      %3993 = vmatprep.subr.mxu0 0.0
      %3994 = vmatpush1.msra.mxu0 0.0
      %3995 = vmatprep.subr.mxu0 0.0
      %3996 = vmatpush1.msra.mxu0 0.0
      %3997 = vmatprep.subr.mxu0 0.0
      %3998 = vmatpush1.msra.mxu0 0.0
      %3999 = vmatprep.subr.mxu0 0.0
      %4000 = vmatpush1.msra.mxu0 0.0
      %4001 = vmatprep.subr.mxu0 0.0
      %4002 = vmatpush1.msra.mxu0 0.0
      %4003 = vmatprep.subr.mxu0 0.0
      %4004 = vmatpush1.msra.mxu0 0.0
      %4005 = vmatprep.subr.mxu0 0.0
      %4006 = vmatpush1.msra.mxu0 0.0
      %4007 = vmatprep.subr.mxu0 0.0
      %4008 = vmatpush1.msra.mxu0 0.0
      %4009 = vmatprep.subr.mxu0 0.0
      %4010 = vmatpush1.msra.mxu0 0.0
      %4011 = vmatprep.subr.mxu0 0.0
      %4012 = vmatpush1.msra.mxu0 0.0
      %4013 = vmatprep.subr.mxu0 0.0
      %4014 = vmatpush1.msra.mxu0 0.0
      %4015 = vmatprep.subr.mxu0 0.0
      %4016 = vmatpush1.msra.mxu0 0.0
      %4017 = vmatprep.subr.mxu0 0.0
      %4018 = vmatpush1.msra.mxu0 0.0
      %4019 = vmatprep.subr.mxu0 0.0
      %4020 = vmatpush1.msra.mxu0 0.0
      %4021 = vmatprep.subr.mxu0 0.0
      %4022 = vmatpush1.msra.mxu0 0.0
      %4023 = vmatprep.mubr.f32.mxu0 0.0
      %4024 = vmatmul.mubr.f32.gmra.mrb[0].mxu0 %v3951
      %v4025 = vpop.f32.mrb[0].mxu0
      %v4026 = vadd.f32 0.0, %v4025
      %v4027 = vpop.f32.mrb[0].mxu0
      %4028 = vmatprep.mubr.f32.mxu0 0.0
      %4029 = vmatmul.mubr.f32.gmra.mrb[0].mxu0 %v3954
      %v4030 = vpop.f32.mrb[0].mxu0
      %v4031 = vadd.f32 0.0, %v4030
      %v4032 = vpop.f32.mrb[0].mxu0
      %4033 = vmatprep.mubr.f32.mxu0 0.0
      %4034 = vmatmul.mubr.f32.gmra.mrb[0].mxu0 %v3957
      %v4035 = vpop.f32.mrb[0].mxu0
      %v4036 = vadd.f32 0.0, %v4035
      %v4037 = vpop.f32.mrb[0].mxu0
      %4038 = vdwg.mxu0
      %v4039 = vadd.f32 %v3867, %v4026
      %v4040 = vadd.f32 %v3868, %v4031
      %v4041 = vadd.f32 %v3869, %v4036
      %4042 = vmatprep.subr.mxu0 0.0
      %4043 = vmatpush1.msra.mxu0 %v3937
      %4044 = vmatprep.subr.mxu0 0.0
      %4045 = vmatpush1.msra.mxu0 %v3942
      %4046 = vmatprep.subr.mxu0 0.0
      %4047 = vmatpush1.msra.mxu0 %v3947
      %4048 = vmatprep.subr.mxu0 0.0
      %4049 = vmatpush1.msra.mxu0 0.0
      %4050 = vmatprep.subr.mxu0 0.0
      %4051 = vmatpush1.msra.mxu0 0.0
      %4052 = vmatprep.subr.mxu0 0.0
      %4053 = vmatpush1.msra.mxu0 0.0
      %4054 = vmatprep.subr.mxu0 0.0
      %4055 = vmatpush1.msra.mxu0 0.0
      %4056 = vmatprep.subr.mxu0 0.0
      %4057 = vmatpush1.msra.mxu0 0.0
      %4058 = vmatprep.subr.mxu0 0.0
      %4059 = vmatpush1.msra.mxu0 0.0
      %4060 = vmatprep.subr.mxu0 0.0
      %4061 = vmatpush1.msra.mxu0 0.0
      %4062 = vmatprep.subr.mxu0 0.0
      %4063 = vmatpush1.msra.mxu0 0.0
      %4064 = vmatprep.subr.mxu0 0.0
      %4065 = vmatpush1.msra.mxu0 0.0
      %4066 = vmatprep.subr.mxu0 0.0
      %4067 = vmatpush1.msra.mxu0 0.0
      %4068 = vmatprep.subr.mxu0 0.0
      %4069 = vmatpush1.msra.mxu0 0.0
      %4070 = vmatprep.subr.mxu0 0.0
      %4071 = vmatpush1.msra.mxu0 0.0
      %4072 = vmatprep.subr.mxu0 0.0
      %4073 = vmatpush1.msra.mxu0 0.0
      %4074 = vmatprep.subr.mxu0 0.0
      %4075 = vmatpush1.msra.mxu0 0.0
      %4076 = vmatprep.subr.mxu0 0.0
      %4077 = vmatpush1.msra.mxu0 0.0
      %4078 = vmatprep.subr.mxu0 0.0
      %4079 = vmatpush1.msra.mxu0 0.0
      %4080 = vmatprep.subr.mxu0 0.0
      %4081 = vmatpush1.msra.mxu0 0.0
      %4082 = vmatprep.subr.mxu0 0.0
      %4083 = vmatpush1.msra.mxu0 0.0
      %4084 = vmatprep.subr.mxu0 0.0
      %4085 = vmatpush1.msra.mxu0 0.0
      %4086 = vmatprep.subr.mxu0 0.0
      %4087 = vmatpush1.msra.mxu0 0.0
      %4088 = vmatprep.subr.mxu0 0.0
      %4089 = vmatpush1.msra.mxu0 0.0
      %4090 = vmatprep.subr.mxu0 0.0
      %4091 = vmatpush1.msra.mxu0 0.0
      %4092 = vmatprep.subr.mxu0 0.0
      %4093 = vmatpush1.msra.mxu0 0.0
      %4094 = vmatprep.subr.mxu0 0.0
      %4095 = vmatpush1.msra.mxu0 0.0
      %4096 = vmatprep.subr.mxu0 0.0
      %4097 = vmatpush1.msra.mxu0 0.0
      %4098 = vmatprep.subr.mxu0 0.0
      %4099 = vmatpush1.msra.mxu0 0.0
      %4100 = vmatprep.subr.mxu0 0.0
      %4101 = vmatpush1.msra.mxu0 0.0
      %4102 = vmatprep.subr.mxu0 0.0
      %4103 = vmatpush1.msra.mxu0 0.0
      %4104 = vmatprep.subr.mxu0 0.0
      %4105 = vmatpush1.msra.mxu0 0.0
      %4106 = vmatprep.mubr.f32.mxu0 0.0
      %4107 = vmatmul.mubr.f32.gmra.mrb[0].mxu0 %v3951
      %v4108 = vpop.f32.mrb[0].mxu0
      %v4109 = vadd.f32 0.0, %v4108
      %v4110 = vpop.f32.mrb[0].mxu0
      %4111 = vmatprep.mubr.f32.mxu0 0.0
      %4112 = vmatmul.mubr.f32.gmra.mrb[0].mxu0 %v3954
      %v4113 = vpop.f32.mrb[0].mxu0
      %v4114 = vadd.f32 0.0, %v4113
      %v4115 = vpop.f32.mrb[0].mxu0
      %4116 = vmatprep.mubr.f32.mxu0 0.0
      %4117 = vmatmul.mubr.f32.gmra.mrb[0].mxu0 %v3957
      %v4118 = vpop.f32.mrb[0].mxu0
      %v4119 = vadd.f32 0.0, %v4118
      %v4120 = vpop.f32.mrb[0].mxu0
      %4121 = vdwg.mxu0
      %v4123 = vsel %vm786, %v4109, 0
      %v4126 = vsel %vm786, %v4114, 0
      %v4129 = vsel %vm786, %v4119, 0
      %4131 = vmatprep.subr.mxu0 0.0
      %4132 = vmatpush1.msra.mxu0 %v4039
      %4133 = vmatprep.subr.mxu0 0.0
      %4134 = vmatpush1.msra.mxu0 %v4040
      %4135 = vmatprep.subr.mxu0 0.0
      %4136 = vmatpush1.msra.mxu0 %v4041
      %4137 = vmatprep.subr.mxu0 0.0
      %4138 = vmatpush1.msra.mxu0 0.0
      %4139 = vmatprep.subr.mxu0 0.0
      %4140 = vmatpush1.msra.mxu0 0.0
      %4141 = vmatprep.subr.mxu0 0.0
      %4142 = vmatpush1.msra.mxu0 0.0
      %4143 = vmatprep.subr.mxu0 0.0
      %4144 = vmatpush1.msra.mxu0 0.0
      %4145 = vmatprep.subr.mxu0 0.0
      %4146 = vmatpush1.msra.mxu0 0.0
      %4147 = vmatprep.subr.mxu0 0.0
      %4148 = vmatpush1.msra.mxu0 0.0
      %4149 = vmatprep.subr.mxu0 0.0
      %4150 = vmatpush1.msra.mxu0 0.0
      %4151 = vmatprep.subr.mxu0 0.0
      %4152 = vmatpush1.msra.mxu0 0.0
      %4153 = vmatprep.subr.mxu0 0.0
      %4154 = vmatpush1.msra.mxu0 0.0
      %4155 = vmatprep.subr.mxu0 0.0
      %4156 = vmatpush1.msra.mxu0 0.0
      %4157 = vmatprep.subr.mxu0 0.0
      %4158 = vmatpush1.msra.mxu0 0.0
      %4159 = vmatprep.subr.mxu0 0.0
      %4160 = vmatpush1.msra.mxu0 0.0
      %4161 = vmatprep.subr.mxu0 0.0
      %4162 = vmatpush1.msra.mxu0 0.0
      %4163 = vmatprep.subr.mxu0 0.0
      %4164 = vmatpush1.msra.mxu0 0.0
      %4165 = vmatprep.subr.mxu0 0.0
      %4166 = vmatpush1.msra.mxu0 0.0
      %4167 = vmatprep.subr.mxu0 0.0
      %4168 = vmatpush1.msra.mxu0 0.0
      %4169 = vmatprep.subr.mxu0 0.0
      %4170 = vmatpush1.msra.mxu0 0.0
      %4171 = vmatprep.subr.mxu0 0.0
      %4172 = vmatpush1.msra.mxu0 0.0
      %4173 = vmatprep.subr.mxu0 0.0
      %4174 = vmatpush1.msra.mxu0 0.0
      %4175 = vmatprep.subr.mxu0 0.0
      %4176 = vmatpush1.msra.mxu0 0.0
      %4177 = vmatprep.subr.mxu0 0.0
      %4178 = vmatpush1.msra.mxu0 0.0
      %4179 = vmatprep.subr.mxu0 0.0
      %4180 = vmatpush1.msra.mxu0 0.0
      %4181 = vmatprep.subr.mxu0 0.0
      %4182 = vmatpush1.msra.mxu0 0.0
      %4183 = vmatprep.subr.mxu0 0.0
      %4184 = vmatpush1.msra.mxu0 0.0
      %4185 = vmatprep.subr.mxu0 0.0
      %4186 = vmatpush1.msra.mxu0 0.0
      %4187 = vmatprep.subr.mxu0 0.0
      %4188 = vmatpush1.msra.mxu0 0.0
      %4189 = vmatprep.subr.mxu0 0.0
      %4190 = vmatpush1.msra.mxu0 0.0
      %4191 = vmatprep.subr.mxu0 0.0
      %4192 = vmatpush1.msra.mxu0 0.0
      %4193 = vmatprep.subr.mxu0 0.0
      %4194 = vmatpush1.msra.mxu0 0.0
      %4195 = vmatprep.mubr.f32.mxu0 0.0
      %4196 = vmatmul.mubr.f32.gmra.mrb[0].mxu0 %v4123
      %v4197 = vpop.f32.mrb[0].mxu0
      %v4198 = vadd.f32 0.0, %v4197
      %v4199 = vpop.f32.mrb[0].mxu0
      %4200 = vmatprep.mubr.f32.mxu0 0.0
      %4201 = vmatmul.mubr.f32.gmra.mrb[0].mxu0 %v4126
      %v4202 = vpop.f32.mrb[0].mxu0
      %v4203 = vadd.f32 0.0, %v4202
      %v4204 = vpop.f32.mrb[0].mxu0
      %4205 = vmatprep.mubr.f32.mxu0 0.0
      %4206 = vmatmul.mubr.f32.gmra.mrb[0].mxu0 %v4129
      %v4207 = vpop.f32.mrb[0].mxu0
      %v4208 = vadd.f32 0.0, %v4207
      %v4209 = vpop.f32.mrb[0].mxu0
      %4210 = vdwg.mxu0
      %v4211 = vadd.f32 %v4039, %v4198
      %v4212 = vadd.f32 %v4040, %v4203
      %v4213 = vadd.f32 %v4041, %v4208
      %4214 = vmatprep.subr.mxu0 0.0
      %4215 = vmatpush1.msra.mxu0 %v4109
      %4216 = vmatprep.subr.mxu0 0.0
      %4217 = vmatpush1.msra.mxu0 %v4114
      %4218 = vmatprep.subr.mxu0 0.0
      %4219 = vmatpush1.msra.mxu0 %v4119
      %4220 = vmatprep.subr.mxu0 0.0
      %4221 = vmatpush1.msra.mxu0 0.0
      %4222 = vmatprep.subr.mxu0 0.0
      %4223 = vmatpush1.msra.mxu0 0.0
      %4224 = vmatprep.subr.mxu0 0.0
      %4225 = vmatpush1.msra.mxu0 0.0
      %4226 = vmatprep.subr.mxu0 0.0
      %4227 = vmatpush1.msra.mxu0 0.0
      %4228 = vmatprep.subr.mxu0 0.0
      %4229 = vmatpush1.msra.mxu0 0.0
      %4230 = vmatprep.subr.mxu0 0.0
      %4231 = vmatpush1.msra.mxu0 0.0
      %4232 = vmatprep.subr.mxu0 0.0
      %4233 = vmatpush1.msra.mxu0 0.0
      %4234 = vmatprep.subr.mxu0 0.0
      %4235 = vmatpush1.msra.mxu0 0.0
      %4236 = vmatprep.subr.mxu0 0.0
      %4237 = vmatpush1.msra.mxu0 0.0
      %4238 = vmatprep.subr.mxu0 0.0
      %4239 = vmatpush1.msra.mxu0 0.0
      %4240 = vmatprep.subr.mxu0 0.0
      %4241 = vmatpush1.msra.mxu0 0.0
      %4242 = vmatprep.subr.mxu0 0.0
      %4243 = vmatpush1.msra.mxu0 0.0
      %4244 = vmatprep.subr.mxu0 0.0
      %4245 = vmatpush1.msra.mxu0 0.0
      %4246 = vmatprep.subr.mxu0 0.0
      %4247 = vmatpush1.msra.mxu0 0.0
      %4248 = vmatprep.subr.mxu0 0.0
      %4249 = vmatpush1.msra.mxu0 0.0
      %4250 = vmatprep.subr.mxu0 0.0
      %4251 = vmatpush1.msra.mxu0 0.0
      %4252 = vmatprep.subr.mxu0 0.0
      %4253 = vmatpush1.msra.mxu0 0.0
      %4254 = vmatprep.subr.mxu0 0.0
      %4255 = vmatpush1.msra.mxu0 0.0
      %4256 = vmatprep.subr.mxu0 0.0
      %4257 = vmatpush1.msra.mxu0 0.0
      %4258 = vmatprep.subr.mxu0 0.0
      %4259 = vmatpush1.msra.mxu0 0.0
      %4260 = vmatprep.subr.mxu0 0.0
      %4261 = vmatpush1.msra.mxu0 0.0
      %4262 = vmatprep.subr.mxu0 0.0
      %4263 = vmatpush1.msra.mxu0 0.0
      %4264 = vmatprep.subr.mxu0 0.0
      %4265 = vmatpush1.msra.mxu0 0.0
      %4266 = vmatprep.subr.mxu0 0.0
      %4267 = vmatpush1.msra.mxu0 0.0
      %4268 = vmatprep.subr.mxu0 0.0
      %4269 = vmatpush1.msra.mxu0 0.0
      %4270 = vmatprep.subr.mxu0 0.0
      %4271 = vmatpush1.msra.mxu0 0.0
      %4272 = vmatprep.subr.mxu0 0.0
      %4273 = vmatpush1.msra.mxu0 0.0
      %4274 = vmatprep.subr.mxu0 0.0
      %4275 = vmatpush1.msra.mxu0 0.0
      %4276 = vmatprep.subr.mxu0 0.0
      %4277 = vmatpush1.msra.mxu0 0.0
      %4278 = vmatprep.mubr.f32.mxu0 0.0
      %4279 = vmatmul.mubr.f32.gmra.mrb[0].mxu0 %v4123
      %v4280 = vpop.f32.mrb[0].mxu0
      %v4281 = vadd.f32 0.0, %v4280
      %v4282 = vpop.f32.mrb[0].mxu0
      %4283 = vmatprep.mubr.f32.mxu0 0.0
      %4284 = vmatmul.mubr.f32.gmra.mrb[0].mxu0 %v4126
      %v4285 = vpop.f32.mrb[0].mxu0
      %v4286 = vadd.f32 0.0, %v4285
      %v4287 = vpop.f32.mrb[0].mxu0
      %4288 = vmatprep.mubr.f32.mxu0 0.0
      %4289 = vmatmul.mubr.f32.gmra.mrb[0].mxu0 %v4129
      %v4290 = vpop.f32.mrb[0].mxu0
      %v4291 = vadd.f32 0.0, %v4290
      %v4292 = vpop.f32.mrb[0].mxu0
      %4293 = vdwg.mxu0
      %v4295 = vsel %vm786, %v4281, 0
      %v4298 = vsel %vm786, %v4286, 0
      %v4301 = vsel %vm786, %v4291, 0
      %4303 = vmatprep.subr.mxu0 0.0
      %4304 = vmatpush1.msra.mxu0 %v4211
      %4305 = vmatprep.subr.mxu0 0.0
      %4306 = vmatpush1.msra.mxu0 %v4212
      %4307 = vmatprep.subr.mxu0 0.0
      %4308 = vmatpush1.msra.mxu0 %v4213
      %4309 = vmatprep.subr.mxu0 0.0
      %4310 = vmatpush1.msra.mxu0 0.0
      %4311 = vmatprep.subr.mxu0 0.0
      %4312 = vmatpush1.msra.mxu0 0.0
      %4313 = vmatprep.subr.mxu0 0.0
      %4314 = vmatpush1.msra.mxu0 0.0
      %4315 = vmatprep.subr.mxu0 0.0
      %4316 = vmatpush1.msra.mxu0 0.0
      %4317 = vmatprep.subr.mxu0 0.0
      %4318 = vmatpush1.msra.mxu0 0.0
      %4319 = vmatprep.subr.mxu0 0.0
      %4320 = vmatpush1.msra.mxu0 0.0
      %4321 = vmatprep.subr.mxu0 0.0
      %4322 = vmatpush1.msra.mxu0 0.0
      %4323 = vmatprep.subr.mxu0 0.0
      %4324 = vmatpush1.msra.mxu0 0.0
      %4325 = vmatprep.subr.mxu0 0.0
      %4326 = vmatpush1.msra.mxu0 0.0
      %4327 = vmatprep.subr.mxu0 0.0
      %4328 = vmatpush1.msra.mxu0 0.0
      %4329 = vmatprep.subr.mxu0 0.0
      %4330 = vmatpush1.msra.mxu0 0.0
      %4331 = vmatprep.subr.mxu0 0.0
      %4332 = vmatpush1.msra.mxu0 0.0
      %4333 = vmatprep.subr.mxu0 0.0
      %4334 = vmatpush1.msra.mxu0 0.0
      %4335 = vmatprep.subr.mxu0 0.0
      %4336 = vmatpush1.msra.mxu0 0.0
      %4337 = vmatprep.subr.mxu0 0.0
      %4338 = vmatpush1.msra.mxu0 0.0
      %4339 = vmatprep.subr.mxu0 0.0
      %4340 = vmatpush1.msra.mxu0 0.0
      %4341 = vmatprep.subr.mxu0 0.0
      %4342 = vmatpush1.msra.mxu0 0.0
      %4343 = vmatprep.subr.mxu0 0.0
      %4344 = vmatpush1.msra.mxu0 0.0
      %4345 = vmatprep.subr.mxu0 0.0
      %4346 = vmatpush1.msra.mxu0 0.0
      %4347 = vmatprep.subr.mxu0 0.0
      %4348 = vmatpush1.msra.mxu0 0.0
      %4349 = vmatprep.subr.mxu0 0.0
      %4350 = vmatpush1.msra.mxu0 0.0
      %4351 = vmatprep.subr.mxu0 0.0
      %4352 = vmatpush1.msra.mxu0 0.0
      %4353 = vmatprep.subr.mxu0 0.0
      %4354 = vmatpush1.msra.mxu0 0.0
      %4355 = vmatprep.subr.mxu0 0.0
      %4356 = vmatpush1.msra.mxu0 0.0
      %4357 = vmatprep.subr.mxu0 0.0
      %4358 = vmatpush1.msra.mxu0 0.0
      %4359 = vmatprep.subr.mxu0 0.0
      %4360 = vmatpush1.msra.mxu0 0.0
      %4361 = vmatprep.subr.mxu0 0.0
      %4362 = vmatpush1.msra.mxu0 0.0
      %4363 = vmatprep.subr.mxu0 0.0
      %4364 = vmatpush1.msra.mxu0 0.0
      %4365 = vmatprep.subr.mxu0 0.0
      %4366 = vmatpush1.msra.mxu0 0.0
      %4367 = vmatprep.mubr.f32.mxu0 0.0
      %4368 = vmatmul.mubr.f32.gmra.mrb[0].mxu0 %v4295
      %v4369 = vpop.f32.mrb[0].mxu0
      %v4370 = vadd.f32 0.0, %v4369
      %v4371 = vpop.f32.mrb[0].mxu0
      %4372 = vmatprep.mubr.f32.mxu0 0.0
      %4373 = vmatmul.mubr.f32.gmra.mrb[0].mxu0 %v4298
      %v4374 = vpop.f32.mrb[0].mxu0
      %v4375 = vadd.f32 0.0, %v4374
      %v4376 = vpop.f32.mrb[0].mxu0
      %4377 = vmatprep.mubr.f32.mxu0 0.0
      %4378 = vmatmul.mubr.f32.gmra.mrb[0].mxu0 %v4301
      %v4379 = vpop.f32.mrb[0].mxu0
      %v4380 = vadd.f32 0.0, %v4379
      %v4381 = vpop.f32.mrb[0].mxu0
      %4382 = vdwg.mxu0
      %v4383 = vadd.f32 %v4211, %v4370
      %v4384 = vadd.f32 %v4212, %v4375
      %v4385 = vadd.f32 %v4213, %v4380
      %4389 = vrot.lane.b32.xlu0 %v3154, 64
      %v4390 = vpop.permute.xlu0 %4389
      %4391 = vrot.lane.b32.xlu0 %v3155, 64
      %v4392 = vpop.permute.xlu0 %4391
      %4393 = vrot.lane.b32.xlu0 %v3156, 64
      %v4394 = vpop.permute.xlu0 %4393
      %v4395 = vsel %vm715, %v4390, 0
      %v4397 = vsel %vm715, %v4392, 0
      %v4399 = vsel %vm715, %v4394, 0
      %4401 = vmatprep.subr.mxu0 0.0
      %4402 = vmatpush1.xpose.msra.mxu0 %v3312
      %4403 = vmatprep.subr.mxu0 0.0
      %4404 = vmatpush1.xpose.msra.mxu0 %v3314
      %4405 = vmatprep.subr.mxu0 0.0
      %4406 = vmatpush1.xpose.msra.mxu0 %v3316
      %4407 = vmatprep.subr.mxu0 0.0
      %4408 = vmatpush1.xpose.msra.mxu0 0.0
      %4409 = vmatprep.subr.mxu0 0.0
      %4410 = vmatpush1.xpose.msra.mxu0 0.0
      %4411 = vmatprep.subr.mxu0 0.0
      %4412 = vmatpush1.xpose.msra.mxu0 0.0
      %4413 = vmatprep.subr.mxu0 0.0
      %4414 = vmatpush1.xpose.msra.mxu0 0.0
      %4415 = vmatprep.subr.mxu0 0.0
      %4416 = vmatpush1.xpose.msra.mxu0 0.0
      %4417 = vmatprep.subr.mxu0 0.0
      %4418 = vmatpush1.xpose.msra.mxu0 0.0
      %4419 = vmatprep.subr.mxu0 0.0
      %4420 = vmatpush1.xpose.msra.mxu0 0.0
      %4421 = vmatprep.subr.mxu0 0.0
      %4422 = vmatpush1.xpose.msra.mxu0 0.0
      %4423 = vmatprep.subr.mxu0 0.0
      %4424 = vmatpush1.xpose.msra.mxu0 0.0
      %4425 = vmatprep.subr.mxu0 0.0
      %4426 = vmatpush1.xpose.msra.mxu0 0.0
      %4427 = vmatprep.subr.mxu0 0.0
      %4428 = vmatpush1.xpose.msra.mxu0 0.0
      %4429 = vmatprep.subr.mxu0 0.0
      %4430 = vmatpush1.xpose.msra.mxu0 0.0
      %4431 = vmatprep.subr.mxu0 0.0
      %4432 = vmatpush1.xpose.msra.mxu0 0.0
      %4433 = vmatprep.subr.mxu0 0.0
      %4434 = vmatpush1.xpose.msra.mxu0 0.0
      %4435 = vmatprep.subr.mxu0 0.0
      %4436 = vmatpush1.xpose.msra.mxu0 0.0
      %4437 = vmatprep.subr.mxu0 0.0
      %4438 = vmatpush1.xpose.msra.mxu0 0.0
      %4439 = vmatprep.subr.mxu0 0.0
      %4440 = vmatpush1.xpose.msra.mxu0 0.0
      %4441 = vmatprep.subr.mxu0 0.0
      %4442 = vmatpush1.xpose.msra.mxu0 0.0
      %4443 = vmatprep.subr.mxu0 0.0
      %4444 = vmatpush1.xpose.msra.mxu0 0.0
      %4445 = vmatprep.subr.mxu0 0.0
      %4446 = vmatpush1.xpose.msra.mxu0 0.0
      %4447 = vmatprep.subr.mxu0 0.0
      %4448 = vmatpush1.xpose.msra.mxu0 0.0
      %4449 = vmatprep.subr.mxu0 0.0
      %4450 = vmatpush1.xpose.msra.mxu0 0.0
      %4451 = vmatprep.subr.mxu0 0.0
      %4452 = vmatpush1.xpose.msra.mxu0 0.0
      %4453 = vmatprep.subr.mxu0 0.0
      %4454 = vmatpush1.xpose.msra.mxu0 0.0
      %4455 = vmatprep.subr.mxu0 0.0
      %4456 = vmatpush1.xpose.msra.mxu0 0.0
      %4457 = vmatprep.subr.mxu0 0.0
      %4458 = vmatpush1.xpose.msra.mxu0 0.0
      %4459 = vmatprep.subr.mxu0 0.0
      %4460 = vmatpush1.xpose.msra.mxu0 0.0
      %4461 = vmatprep.subr.mxu0 0.0
      %4462 = vmatpush1.xpose.msra.mxu0 0.0
      %4463 = vmatprep.subr.mxu0 0.0
      %4464 = vmatpush1.xpose.msra.mxu0 0.0
      %4465 = vmatprep.mubr.f32.mxu0 0.0
      %4466 = vmatmul.mubr.f32.gmra.mrb[0].mxu0 %v4395
      %v4467 = vpop.f32.mrb[0].mxu0
      %v4468 = vadd.f32 0.0, %v4467
      %v4469 = vpop.f32.mrb[0].mxu0
      %4470 = vmatprep.mubr.f32.mxu0 0.0
      %4471 = vmatmul.mubr.f32.gmra.mrb[0].mxu0 %v4397
      %v4472 = vpop.f32.mrb[0].mxu0
      %v4473 = vadd.f32 0.0, %v4472
      %v4474 = vpop.f32.mrb[0].mxu0
      %4475 = vmatprep.mubr.f32.mxu0 0.0
      %4476 = vmatmul.mubr.f32.gmra.mrb[0].mxu0 %v4399
      %v4477 = vpop.f32.mrb[0].mxu0
      %v4478 = vadd.f32 0.0, %v4477
      %v4479 = vpop.f32.mrb[0].mxu0
      %4480 = vdwg.mxu0
      %v4481 = vmul.f32 %v4468, %v639
      %v4482 = vmul.f32 %v4473, %v640
      %v4483 = vmul.f32 %v4478, %v641
      %4484 = vmatprep.subr.mxu0 0.0
      %4485 = vmatpush1.xpose.msra.mxu0 %v3214
      %4486 = vmatprep.subr.mxu0 0.0
      %4487 = vmatpush1.xpose.msra.mxu0 %v3216
      %4488 = vmatprep.subr.mxu0 0.0
      %4489 = vmatpush1.xpose.msra.mxu0 %v3218
      %4490 = vmatprep.subr.mxu0 0.0
      %4491 = vmatpush1.xpose.msra.mxu0 0.0
      %4492 = vmatprep.subr.mxu0 0.0
      %4493 = vmatpush1.xpose.msra.mxu0 0.0
      %4494 = vmatprep.subr.mxu0 0.0
      %4495 = vmatpush1.xpose.msra.mxu0 0.0
      %4496 = vmatprep.subr.mxu0 0.0
      %4497 = vmatpush1.xpose.msra.mxu0 0.0
      %4498 = vmatprep.subr.mxu0 0.0
      %4499 = vmatpush1.xpose.msra.mxu0 0.0
      %4500 = vmatprep.subr.mxu0 0.0
      %4501 = vmatpush1.xpose.msra.mxu0 0.0
      %4502 = vmatprep.subr.mxu0 0.0
      %4503 = vmatpush1.xpose.msra.mxu0 0.0
      %4504 = vmatprep.subr.mxu0 0.0
      %4505 = vmatpush1.xpose.msra.mxu0 0.0
      %4506 = vmatprep.subr.mxu0 0.0
      %4507 = vmatpush1.xpose.msra.mxu0 0.0
      %4508 = vmatprep.subr.mxu0 0.0
      %4509 = vmatpush1.xpose.msra.mxu0 0.0
      %4510 = vmatprep.subr.mxu0 0.0
      %4511 = vmatpush1.xpose.msra.mxu0 0.0
      %4512 = vmatprep.subr.mxu0 0.0
      %4513 = vmatpush1.xpose.msra.mxu0 0.0
      %4514 = vmatprep.subr.mxu0 0.0
      %4515 = vmatpush1.xpose.msra.mxu0 0.0
      %4516 = vmatprep.subr.mxu0 0.0
      %4517 = vmatpush1.xpose.msra.mxu0 0.0
      %4518 = vmatprep.subr.mxu0 0.0
      %4519 = vmatpush1.xpose.msra.mxu0 0.0
      %4520 = vmatprep.subr.mxu0 0.0
      %4521 = vmatpush1.xpose.msra.mxu0 0.0
      %4522 = vmatprep.subr.mxu0 0.0
      %4523 = vmatpush1.xpose.msra.mxu0 0.0
      %4524 = vmatprep.subr.mxu0 0.0
      %4525 = vmatpush1.xpose.msra.mxu0 0.0
      %4526 = vmatprep.subr.mxu0 0.0
      %4527 = vmatpush1.xpose.msra.mxu0 0.0
      %4528 = vmatprep.subr.mxu0 0.0
      %4529 = vmatpush1.xpose.msra.mxu0 0.0
      %4530 = vmatprep.subr.mxu0 0.0
      %4531 = vmatpush1.xpose.msra.mxu0 0.0
      %4532 = vmatprep.subr.mxu0 0.0
      %4533 = vmatpush1.xpose.msra.mxu0 0.0
      %4534 = vmatprep.subr.mxu0 0.0
      %4535 = vmatpush1.xpose.msra.mxu0 0.0
      %4536 = vmatprep.subr.mxu0 0.0
      %4537 = vmatpush1.xpose.msra.mxu0 0.0
      %4538 = vmatprep.subr.mxu0 0.0
      %4539 = vmatpush1.xpose.msra.mxu0 0.0
      %4540 = vmatprep.subr.mxu0 0.0
      %4541 = vmatpush1.xpose.msra.mxu0 0.0
      %4542 = vmatprep.subr.mxu0 0.0
      %4543 = vmatpush1.xpose.msra.mxu0 0.0
      %4544 = vmatprep.subr.mxu0 0.0
      %4545 = vmatpush1.xpose.msra.mxu0 0.0
      %4546 = vmatprep.subr.mxu0 0.0
      %4547 = vmatpush1.xpose.msra.mxu0 0.0
      %4548 = vmatprep.mubr.f32.mxu0 0.0
      %4549 = vmatmul.mubr.f32.gmra.mrb[0].mxu0 %v4395
      %v4550 = vpop.f32.mrb[0].mxu0
      %v4551 = vadd.f32 0.0, %v4550
      %v4552 = vpop.f32.mrb[0].mxu0
      %4553 = vmatprep.mubr.f32.mxu0 0.0
      %4554 = vmatmul.mubr.f32.gmra.mrb[0].mxu0 %v4397
      %v4555 = vpop.f32.mrb[0].mxu0
      %v4556 = vadd.f32 0.0, %v4555
      %v4557 = vpop.f32.mrb[0].mxu0
      %4558 = vmatprep.mubr.f32.mxu0 0.0
      %4559 = vmatmul.mubr.f32.gmra.mrb[0].mxu0 %v4399
      %v4560 = vpop.f32.mrb[0].mxu0
      %v4561 = vadd.f32 0.0, %v4560
      %v4562 = vpop.f32.mrb[0].mxu0
      %4563 = vdwg.mxu0
      %v4564 = vmul.f32 %v4551, %v639
      %v4565 = vmul.f32 %v4556, %v640
      %v4566 = vmul.f32 %v4561, %v641
      %v4568 = vsel %vm786, %v4481, 0
      %v4571 = vsel %vm786, %v4482, 0
      %v4574 = vsel %vm786, %v4483, 0
      %4576 = vmatprep.subr.mxu0 0.0
      %4577 = vmatpush1.msra.mxu0 %v3405
      %4578 = vmatprep.subr.mxu0 0.0
      %4579 = vmatpush1.msra.mxu0 %v3407
      %4580 = vmatprep.subr.mxu0 0.0
      %4581 = vmatpush1.msra.mxu0 %v3409
      %4582 = vmatprep.subr.mxu0 0.0
      %4583 = vmatpush1.msra.mxu0 0.0
      %4584 = vmatprep.subr.mxu0 0.0
      %4585 = vmatpush1.msra.mxu0 0.0
      %4586 = vmatprep.subr.mxu0 0.0
      %4587 = vmatpush1.msra.mxu0 0.0
      %4588 = vmatprep.subr.mxu0 0.0
      %4589 = vmatpush1.msra.mxu0 0.0
      %4590 = vmatprep.subr.mxu0 0.0
      %4591 = vmatpush1.msra.mxu0 0.0
      %4592 = vmatprep.subr.mxu0 0.0
      %4593 = vmatpush1.msra.mxu0 0.0
      %4594 = vmatprep.subr.mxu0 0.0
      %4595 = vmatpush1.msra.mxu0 0.0
      %4596 = vmatprep.subr.mxu0 0.0
      %4597 = vmatpush1.msra.mxu0 0.0
      %4598 = vmatprep.subr.mxu0 0.0
      %4599 = vmatpush1.msra.mxu0 0.0
      %4600 = vmatprep.subr.mxu0 0.0
      %4601 = vmatpush1.msra.mxu0 0.0
      %4602 = vmatprep.subr.mxu0 0.0
      %4603 = vmatpush1.msra.mxu0 0.0
      %4604 = vmatprep.subr.mxu0 0.0
      %4605 = vmatpush1.msra.mxu0 0.0
      %4606 = vmatprep.subr.mxu0 0.0
      %4607 = vmatpush1.msra.mxu0 0.0
      %4608 = vmatprep.subr.mxu0 0.0
      %4609 = vmatpush1.msra.mxu0 0.0
      %4610 = vmatprep.subr.mxu0 0.0
      %4611 = vmatpush1.msra.mxu0 0.0
      %4612 = vmatprep.subr.mxu0 0.0
      %4613 = vmatpush1.msra.mxu0 0.0
      %4614 = vmatprep.subr.mxu0 0.0
      %4615 = vmatpush1.msra.mxu0 0.0
      %4616 = vmatprep.subr.mxu0 0.0
      %4617 = vmatpush1.msra.mxu0 0.0
      %4618 = vmatprep.subr.mxu0 0.0
      %4619 = vmatpush1.msra.mxu0 0.0
      %4620 = vmatprep.subr.mxu0 0.0
      %4621 = vmatpush1.msra.mxu0 0.0
      %4622 = vmatprep.subr.mxu0 0.0
      %4623 = vmatpush1.msra.mxu0 0.0
      %4624 = vmatprep.subr.mxu0 0.0
      %4625 = vmatpush1.msra.mxu0 0.0
      %4626 = vmatprep.subr.mxu0 0.0
      %4627 = vmatpush1.msra.mxu0 0.0
      %4628 = vmatprep.subr.mxu0 0.0
      %4629 = vmatpush1.msra.mxu0 0.0
      %4630 = vmatprep.subr.mxu0 0.0
      %4631 = vmatpush1.msra.mxu0 0.0
      %4632 = vmatprep.subr.mxu0 0.0
      %4633 = vmatpush1.msra.mxu0 0.0
      %4634 = vmatprep.subr.mxu0 0.0
      %4635 = vmatpush1.msra.mxu0 0.0
      %4636 = vmatprep.subr.mxu0 0.0
      %4637 = vmatpush1.msra.mxu0 0.0
      %4638 = vmatprep.subr.mxu0 0.0
      %4639 = vmatpush1.msra.mxu0 0.0
      %4640 = vmatprep.mubr.f32.mxu0 0.0
      %4641 = vmatmul.mubr.f32.gmra.mrb[0].mxu0 %v4568
      %v4642 = vpop.f32.mrb[0].mxu0
      %v4643 = vadd.f32 0.0, %v4642
      %v4644 = vpop.f32.mrb[0].mxu0
      %4645 = vmatprep.mubr.f32.mxu0 0.0
      %4646 = vmatmul.mubr.f32.gmra.mrb[0].mxu0 %v4571
      %v4647 = vpop.f32.mrb[0].mxu0
      %v4648 = vadd.f32 0.0, %v4647
      %v4649 = vpop.f32.mrb[0].mxu0
      %4650 = vmatprep.mubr.f32.mxu0 0.0
      %4651 = vmatmul.mubr.f32.gmra.mrb[0].mxu0 %v4574
      %v4652 = vpop.f32.mrb[0].mxu0
      %v4653 = vadd.f32 0.0, %v4652
      %v4654 = vpop.f32.mrb[0].mxu0
      %4655 = vdwg.mxu0
      %4656 = vmatprep.subr.mxu0 0.0
      %4657 = vmatpush1.xpose.msra.mxu0 %v3503
      %4658 = vmatprep.subr.mxu0 0.0
      %4659 = vmatpush1.xpose.msra.mxu0 %v3506
      %4660 = vmatprep.subr.mxu0 0.0
      %4661 = vmatpush1.xpose.msra.mxu0 %v3509
      %4662 = vmatprep.subr.mxu0 0.0
      %4663 = vmatpush1.xpose.msra.mxu0 %v3512
      %4664 = vmatprep.subr.mxu0 0.0
      %4665 = vmatpush1.xpose.msra.mxu0 %v3515
      %4666 = vmatprep.subr.mxu0 0.0
      %4667 = vmatpush1.xpose.msra.mxu0 %v3518
      %4668 = vmatprep.subr.mxu0 0.0
      %4669 = vmatpush1.xpose.msra.mxu0 %v3521
      %4670 = vmatprep.subr.mxu0 0.0
      %4671 = vmatpush1.xpose.msra.mxu0 %v3524
      %4672 = vmatprep.subr.mxu0 0.0
      %4673 = vmatpush1.xpose.msra.mxu0 0.0
      %4674 = vmatprep.subr.mxu0 0.0
      %4675 = vmatpush1.xpose.msra.mxu0 0.0
      %4676 = vmatprep.subr.mxu0 0.0
      %4677 = vmatpush1.xpose.msra.mxu0 0.0
      %4678 = vmatprep.subr.mxu0 0.0
      %4679 = vmatpush1.xpose.msra.mxu0 0.0
      %4680 = vmatprep.subr.mxu0 0.0
      %4681 = vmatpush1.xpose.msra.mxu0 0.0
      %4682 = vmatprep.subr.mxu0 0.0
      %4683 = vmatpush1.xpose.msra.mxu0 0.0
      %4684 = vmatprep.subr.mxu0 0.0
      %4685 = vmatpush1.xpose.msra.mxu0 0.0
      %4686 = vmatprep.subr.mxu0 0.0
      %4687 = vmatpush1.xpose.msra.mxu0 0.0
      %4688 = vmatprep.subr.mxu0 0.0
      %4689 = vmatpush1.xpose.msra.mxu0 0.0
      %4690 = vmatprep.subr.mxu0 0.0
      %4691 = vmatpush1.xpose.msra.mxu0 0.0
      %4692 = vmatprep.subr.mxu0 0.0
      %4693 = vmatpush1.xpose.msra.mxu0 0.0
      %4694 = vmatprep.subr.mxu0 0.0
      %4695 = vmatpush1.xpose.msra.mxu0 0.0
      %4696 = vmatprep.subr.mxu0 0.0
      %4697 = vmatpush1.xpose.msra.mxu0 0.0
      %4698 = vmatprep.subr.mxu0 0.0
      %4699 = vmatpush1.xpose.msra.mxu0 0.0
      %4700 = vmatprep.subr.mxu0 0.0
      %4701 = vmatpush1.xpose.msra.mxu0 0.0
      %4702 = vmatprep.subr.mxu0 0.0
      %4703 = vmatpush1.xpose.msra.mxu0 0.0
      %4704 = vmatprep.subr.mxu0 0.0
      %4705 = vmatpush1.xpose.msra.mxu0 0.0
      %4706 = vmatprep.subr.mxu0 0.0
      %4707 = vmatpush1.xpose.msra.mxu0 0.0
      %4708 = vmatprep.subr.mxu0 0.0
      %4709 = vmatpush1.xpose.msra.mxu0 0.0
      %4710 = vmatprep.subr.mxu0 0.0
      %4711 = vmatpush1.xpose.msra.mxu0 0.0
      %4712 = vmatprep.subr.mxu0 0.0
      %4713 = vmatpush1.xpose.msra.mxu0 0.0
      %4714 = vmatprep.subr.mxu0 0.0
      %4715 = vmatpush1.xpose.msra.mxu0 0.0
      %4716 = vmatprep.subr.mxu0 0.0
      %4717 = vmatpush1.xpose.msra.mxu0 0.0
      %4718 = vmatprep.subr.mxu0 0.0
      %4719 = vmatpush1.xpose.msra.mxu0 0.0
      %4720 = vmatprep.mubr.f32.mxu0 0.0
      %4721 = vmatmul.mubr.f32.gmra.mrb[0].mxu0 %v4395
      %v4722 = vpop.f32.mrb[0].mxu0
      %v4723 = vadd.f32 %v4643, %v4722
      %v4724 = vpop.f32.mrb[0].mxu0
      %4725 = vmatprep.mubr.f32.mxu0 0.0
      %4726 = vmatmul.mubr.f32.gmra.mrb[0].mxu0 %v4397
      %v4727 = vpop.f32.mrb[0].mxu0
      %v4728 = vadd.f32 %v4648, %v4727
      %v4729 = vpop.f32.mrb[0].mxu0
      %4730 = vmatprep.mubr.f32.mxu0 0.0
      %4731 = vmatmul.mubr.f32.gmra.mrb[0].mxu0 %v4399
      %v4732 = vpop.f32.mrb[0].mxu0
      %v4733 = vadd.f32 %v4653, %v4732
      %v4734 = vpop.f32.mrb[0].mxu0
      %4735 = vdwg.mxu0
      %v4737 = vsel %vm786, %v4564, 0
      %v4740 = vsel %vm786, %v4565, 0
      %v4743 = vsel %vm786, %v4566, 0
      %4745 = vmatprep.subr.mxu0 0.0
      %4746 = vmatpush1.msra.mxu0 %v4383
      %4747 = vmatprep.subr.mxu0 0.0
      %4748 = vmatpush1.msra.mxu0 %v4384
      %4749 = vmatprep.subr.mxu0 0.0
      %4750 = vmatpush1.msra.mxu0 %v4385
      %4751 = vmatprep.subr.mxu0 0.0
      %4752 = vmatpush1.msra.mxu0 0.0
      %4753 = vmatprep.subr.mxu0 0.0
      %4754 = vmatpush1.msra.mxu0 0.0
      %4755 = vmatprep.subr.mxu0 0.0
      %4756 = vmatpush1.msra.mxu0 0.0
      %4757 = vmatprep.subr.mxu0 0.0
      %4758 = vmatpush1.msra.mxu0 0.0
      %4759 = vmatprep.subr.mxu0 0.0
      %4760 = vmatpush1.msra.mxu0 0.0
      %4761 = vmatprep.subr.mxu0 0.0
      %4762 = vmatpush1.msra.mxu0 0.0
      %4763 = vmatprep.subr.mxu0 0.0
      %4764 = vmatpush1.msra.mxu0 0.0
      %4765 = vmatprep.subr.mxu0 0.0
      %4766 = vmatpush1.msra.mxu0 0.0
      %4767 = vmatprep.subr.mxu0 0.0
      %4768 = vmatpush1.msra.mxu0 0.0
      %4769 = vmatprep.subr.mxu0 0.0
      %4770 = vmatpush1.msra.mxu0 0.0
      %4771 = vmatprep.subr.mxu0 0.0
      %4772 = vmatpush1.msra.mxu0 0.0
      %4773 = vmatprep.subr.mxu0 0.0
      %4774 = vmatpush1.msra.mxu0 0.0
      %4775 = vmatprep.subr.mxu0 0.0
      %4776 = vmatpush1.msra.mxu0 0.0
      %4777 = vmatprep.subr.mxu0 0.0
      %4778 = vmatpush1.msra.mxu0 0.0
      %4779 = vmatprep.subr.mxu0 0.0
      %4780 = vmatpush1.msra.mxu0 0.0
      %4781 = vmatprep.subr.mxu0 0.0
      %4782 = vmatpush1.msra.mxu0 0.0
      %4783 = vmatprep.subr.mxu0 0.0
      %4784 = vmatpush1.msra.mxu0 0.0
      %4785 = vmatprep.subr.mxu0 0.0
      %4786 = vmatpush1.msra.mxu0 0.0
      %4787 = vmatprep.subr.mxu0 0.0
      %4788 = vmatpush1.msra.mxu0 0.0
      %4789 = vmatprep.subr.mxu0 0.0
      %4790 = vmatpush1.msra.mxu0 0.0
      %4791 = vmatprep.subr.mxu0 0.0
      %4792 = vmatpush1.msra.mxu0 0.0
      %4793 = vmatprep.subr.mxu0 0.0
      %4794 = vmatpush1.msra.mxu0 0.0
      %4795 = vmatprep.subr.mxu0 0.0
      %4796 = vmatpush1.msra.mxu0 0.0
      %4797 = vmatprep.subr.mxu0 0.0
      %4798 = vmatpush1.msra.mxu0 0.0
      %4799 = vmatprep.subr.mxu0 0.0
      %4800 = vmatpush1.msra.mxu0 0.0
      %4801 = vmatprep.subr.mxu0 0.0
      %4802 = vmatpush1.msra.mxu0 0.0
      %4803 = vmatprep.subr.mxu0 0.0
      %4804 = vmatpush1.msra.mxu0 0.0
      %4805 = vmatprep.subr.mxu0 0.0
      %4806 = vmatpush1.msra.mxu0 0.0
      %4807 = vmatprep.subr.mxu0 0.0
      %4808 = vmatpush1.msra.mxu0 0.0
      %4809 = vmatprep.mubr.f32.mxu0 0.0
      %4810 = vmatmul.mubr.f32.gmra.mrb[0].mxu0 %v4737
      %v4811 = vpop.f32.mrb[0].mxu0
      %v4812 = vadd.f32 0.0, %v4811
      %v4813 = vpop.f32.mrb[0].mxu0
      %4814 = vmatprep.mubr.f32.mxu0 0.0
      %4815 = vmatmul.mubr.f32.gmra.mrb[0].mxu0 %v4740
      %v4816 = vpop.f32.mrb[0].mxu0
      %v4817 = vadd.f32 0.0, %v4816
      %v4818 = vpop.f32.mrb[0].mxu0
      %4819 = vmatprep.mubr.f32.mxu0 0.0
      %4820 = vmatmul.mubr.f32.gmra.mrb[0].mxu0 %v4743
      %v4821 = vpop.f32.mrb[0].mxu0
      %v4822 = vadd.f32 0.0, %v4821
      %v4823 = vpop.f32.mrb[0].mxu0
      %4824 = vdwg.mxu0
      %v4825 = vadd.f32 %v4723, %v4812
      %v4826 = vadd.f32 %v4728, %v4817
      %v4827 = vadd.f32 %v4733, %v4822
      %v4828 = vlaneseq
      %v4829 = vshrl.u32 %v4828, 7
      %v4830 = vsub.s32 7, %v4829
      %v4831 = vrot.slane %v3126, %v4830
      %v4832 = vmul.f32 %v2961, %v4831
      %v4833 = vmul.f32 %v2962, %v4831
      %v4834 = vmul.f32 %v2963, %v4831
      %v4835 = vmul.f32 %v2964, %v4831
      %v4836 = vmul.f32 %v2965, %v4831
      %v4837 = vmul.f32 %v2966, %v4831
      %v4838 = vmul.f32 %v2967, %v4831
      %v4839 = vmul.f32 %v2968, %v4831
      %4841 = vrot.lane.b32.xlu0 %v4831, 64
      %v4842 = vpop.permute.xlu0 %4841
      %v4844 = vmul.f32 %v3169, %v4842
      %v4845 = vmul.f32 %v3170, %v4842
      %v4846 = vmul.f32 %v3171, %v4842
      %4847 = vxpose.xlu0.b32.start [1/16] %v3405, 128
      %4848 = vxpose.xlu0.b32.cont [2/16] %v3407, 128
      %4849 = vxpose.xlu0.b32.cont [3/16] %v3409, 128
      %4850 = vxpose.xlu0.b32.cont [4/16] 0.0, 128
      %4851 = vxpose.xlu0.b32.cont [5/16] 0.0, 128
      %4852 = vxpose.xlu0.b32.cont [6/16] 0.0, 128
      %4853 = vxpose.xlu0.b32.cont [7/16] 0.0, 128
      %4854 = vxpose.xlu0.b32.cont [8/16] 0.0, 128
      %4855 = vxpose.xlu0.b32.cont [9/16] 0.0, 128
      %4856 = vxpose.xlu0.b32.cont [10/16] 0.0, 128
      %4857 = vxpose.xlu0.b32.cont [11/16] 0.0, 128
      %4858 = vxpose.xlu0.b32.cont [12/16] 0.0, 128
      %4859 = vxpose.xlu0.b32.cont [13/16] 0.0, 128
      %4860 = vxpose.xlu0.b32.cont [14/16] 0.0, 128
      %4861 = vxpose.xlu0.b32.cont [15/16] 0.0, 128
      %4862 = vxpose.xlu0.b32.end [16/16] 0.0, 128
      %v4863 = vpop.trf.xlu0
      %v4864 = vpop.trf.xlu0
      %v4865 = vpop.trf.xlu0
      %v4866 = vpop.trf.xlu0
      %v4867 = vpop.trf.xlu0
      %v4868 = vpop.trf.xlu0
      %v4869 = vpop.trf.xlu0
      %v4870 = vpop.trf.xlu0
      %v4871 = vpop.trf.xlu0
      %v4872 = vpop.trf.xlu0
      %v4873 = vpop.trf.xlu0
      %v4874 = vpop.trf.xlu0
      %v4875 = vpop.trf.xlu0
      %v4876 = vpop.trf.xlu0
      %v4877 = vpop.trf.xlu0
      %v4878 = vpop.trf.xlu0
      %4882 = vrot.lane.b32.xlu0 %v4844, 64
      %v4883 = vpop.permute.xlu0 %4882
      %4884 = vrot.lane.b32.xlu0 %v4845, 64
      %v4885 = vpop.permute.xlu0 %4884
      %4886 = vrot.lane.b32.xlu0 %v4846, 64
      %v4887 = vpop.permute.xlu0 %4886
      %v4892 = vsel %vm786, %v4863, 0
      %v4895 = vsel %vm786, %v4864, 0
      %v4898 = vsel %vm786, %v4865, 0
      %v4901 = vsel %vm786, %v4866, 0
      %v4904 = vsel %vm786, %v4867, 0
      %v4907 = vsel %vm786, %v4868, 0
      %v4910 = vsel %vm786, %v4869, 0
      %v4913 = vsel %vm786, %v4870, 0
      %4915 = vmatprep.subr.mxu0 0.0
      %4916 = vmatpush1.msra.mxu0 %v4883
      %4917 = vmatprep.subr.mxu0 0.0
      %4918 = vmatpush1.msra.mxu0 %v4885
      %4919 = vmatprep.subr.mxu0 0.0
      %4920 = vmatpush1.msra.mxu0 %v4887
      %4921 = vmatprep.subr.mxu0 0.0
      %4922 = vmatpush1.msra.mxu0 0.0
      %4923 = vmatprep.subr.mxu0 0.0
      %4924 = vmatpush1.msra.mxu0 0.0
      %4925 = vmatprep.subr.mxu0 0.0
      %4926 = vmatpush1.msra.mxu0 0.0
      %4927 = vmatprep.subr.mxu0 0.0
      %4928 = vmatpush1.msra.mxu0 0.0
      %4929 = vmatprep.subr.mxu0 0.0
      %4930 = vmatpush1.msra.mxu0 0.0
      %4931 = vmatprep.subr.mxu0 0.0
      %4932 = vmatpush1.msra.mxu0 0.0
      %4933 = vmatprep.subr.mxu0 0.0
      %4934 = vmatpush1.msra.mxu0 0.0
      %4935 = vmatprep.subr.mxu0 0.0
      %4936 = vmatpush1.msra.mxu0 0.0
      %4937 = vmatprep.subr.mxu0 0.0
      %4938 = vmatpush1.msra.mxu0 0.0
      %4939 = vmatprep.subr.mxu0 0.0
      %4940 = vmatpush1.msra.mxu0 0.0
      %4941 = vmatprep.subr.mxu0 0.0
      %4942 = vmatpush1.msra.mxu0 0.0
      %4943 = vmatprep.subr.mxu0 0.0
      %4944 = vmatpush1.msra.mxu0 0.0
      %4945 = vmatprep.subr.mxu0 0.0
      %4946 = vmatpush1.msra.mxu0 0.0
      %4947 = vmatprep.subr.mxu0 0.0
      %4948 = vmatpush1.msra.mxu0 0.0
      %4949 = vmatprep.subr.mxu0 0.0
      %4950 = vmatpush1.msra.mxu0 0.0
      %4951 = vmatprep.subr.mxu0 0.0
      %4952 = vmatpush1.msra.mxu0 0.0
      %4953 = vmatprep.subr.mxu0 0.0
      %4954 = vmatpush1.msra.mxu0 0.0
      %4955 = vmatprep.subr.mxu0 0.0
      %4956 = vmatpush1.msra.mxu0 0.0
      %4957 = vmatprep.subr.mxu0 0.0
      %4958 = vmatpush1.msra.mxu0 0.0
      %4959 = vmatprep.subr.mxu0 0.0
      %4960 = vmatpush1.msra.mxu0 0.0
      %4961 = vmatprep.subr.mxu0 0.0
      %4962 = vmatpush1.msra.mxu0 0.0
      %4963 = vmatprep.subr.mxu0 0.0
      %4964 = vmatpush1.msra.mxu0 0.0
      %4965 = vmatprep.subr.mxu0 0.0
      %4966 = vmatpush1.msra.mxu0 0.0
      %4967 = vmatprep.subr.mxu0 0.0
      %4968 = vmatpush1.msra.mxu0 0.0
      %4969 = vmatprep.subr.mxu0 0.0
      %4970 = vmatpush1.msra.mxu0 0.0
      %4971 = vmatprep.subr.mxu0 0.0
      %4972 = vmatpush1.msra.mxu0 0.0
      %4973 = vmatprep.subr.mxu0 0.0
      %4974 = vmatpush1.msra.mxu0 0.0
      %4975 = vmatprep.subr.mxu0 0.0
      %4976 = vmatpush1.msra.mxu0 0.0
      %4977 = vmatprep.subr.mxu0 0.0
      %4978 = vmatpush1.msra.mxu0 0.0
      %4979 = vmatprep.mubr.f32.mxu0 0.0
      %4980 = vmatmul.mubr.f32.gmra.mrb[0].mxu0 %v4892
      %v4981 = vpop.f32.mrb[0].mxu0
      %v4982 = vadd.f32 0.0, %v4981
      %v4983 = vpop.f32.mrb[0].mxu0
      %4984 = vmatprep.mubr.f32.mxu0 0.0
      %4985 = vmatmul.mubr.f32.gmra.mrb[0].mxu0 %v4895
      %v4986 = vpop.f32.mrb[0].mxu0
      %v4987 = vadd.f32 0.0, %v4986
      %v4988 = vpop.f32.mrb[0].mxu0
      %4989 = vmatprep.mubr.f32.mxu0 0.0
      %4990 = vmatmul.mubr.f32.gmra.mrb[0].mxu0 %v4898
      %v4991 = vpop.f32.mrb[0].mxu0
      %v4992 = vadd.f32 0.0, %v4991
      %v4993 = vpop.f32.mrb[0].mxu0
      %4994 = vmatprep.mubr.f32.mxu0 0.0
      %4995 = vmatmul.mubr.f32.gmra.mrb[0].mxu0 %v4901
      %v4996 = vpop.f32.mrb[0].mxu0
      %v4997 = vadd.f32 0.0, %v4996
      %v4998 = vpop.f32.mrb[0].mxu0
      %4999 = vmatprep.mubr.f32.mxu0 0.0
      %5000 = vmatmul.mubr.f32.gmra.mrb[0].mxu0 %v4904
      %v5001 = vpop.f32.mrb[0].mxu0
      %v5002 = vadd.f32 0.0, %v5001
      %v5003 = vpop.f32.mrb[0].mxu0
      %5004 = vmatprep.mubr.f32.mxu0 0.0
      %5005 = vmatmul.mubr.f32.gmra.mrb[0].mxu0 %v4907
      %v5006 = vpop.f32.mrb[0].mxu0
      %v5007 = vadd.f32 0.0, %v5006
      %v5008 = vpop.f32.mrb[0].mxu0
      %5009 = vmatprep.mubr.f32.mxu0 0.0
      %5010 = vmatmul.mubr.f32.gmra.mrb[0].mxu0 %v4910
      %v5011 = vpop.f32.mrb[0].mxu0
      %v5012 = vadd.f32 0.0, %v5011
      %v5013 = vpop.f32.mrb[0].mxu0
      %5014 = vmatprep.mubr.f32.mxu0 0.0
      %5015 = vmatmul.mubr.f32.gmra.mrb[0].mxu0 %v4913
      %v5016 = vpop.f32.mrb[0].mxu0
      %v5017 = vadd.f32 0.0, %v5016
      %v5018 = vpop.f32.mrb[0].mxu0
      %5019 = vdwg.mxu0
      %v5020 = vadd.f32 %v4832, %v4982
      %v5021 = vadd.f32 %v4833, %v4987
      %v5022 = vadd.f32 %v4834, %v4992
      %v5023 = vadd.f32 %v4835, %v4997
      %v5024 = vadd.f32 %v4836, %v5002
      %v5025 = vadd.f32 %v4837, %v5007
      %v5026 = vadd.f32 %v4838, %v5012
      %v5027 = vadd.f32 %v4839, %v5017
      %v5028 = vmul.f32 %v3172, %v4842
      %v5029 = vmul.f32 %v3173, %v4842
      %v5030 = vmul.f32 %v3174, %v4842
      %5031 = vxpose.xlu0.b32.start [1/16] %v4383, 128
      %5032 = vxpose.xlu0.b32.cont [2/16] %v4384, 128
      %5033 = vxpose.xlu0.b32.cont [3/16] %v4385, 128
      %5034 = vxpose.xlu0.b32.cont [4/16] 0.0, 128
      %5035 = vxpose.xlu0.b32.cont [5/16] 0.0, 128
      %5036 = vxpose.xlu0.b32.cont [6/16] 0.0, 128
      %5037 = vxpose.xlu0.b32.cont [7/16] 0.0, 128
      %5038 = vxpose.xlu0.b32.cont [8/16] 0.0, 128
      %5039 = vxpose.xlu0.b32.cont [9/16] 0.0, 128
      %5040 = vxpose.xlu0.b32.cont [10/16] 0.0, 128
      %5041 = vxpose.xlu0.b32.cont [11/16] 0.0, 128
      %5042 = vxpose.xlu0.b32.cont [12/16] 0.0, 128
      %5043 = vxpose.xlu0.b32.cont [13/16] 0.0, 128
      %5044 = vxpose.xlu0.b32.cont [14/16] 0.0, 128
      %5045 = vxpose.xlu0.b32.cont [15/16] 0.0, 128
      %5046 = vxpose.xlu0.b32.end [16/16] 0.0, 128
      %v5047 = vpop.trf.xlu0
      %v5048 = vpop.trf.xlu0
      %v5049 = vpop.trf.xlu0
      %v5050 = vpop.trf.xlu0
      %v5051 = vpop.trf.xlu0
      %v5052 = vpop.trf.xlu0
      %v5053 = vpop.trf.xlu0
      %v5054 = vpop.trf.xlu0
      %v5055 = vpop.trf.xlu0
      %v5056 = vpop.trf.xlu0
      %v5057 = vpop.trf.xlu0
      %v5058 = vpop.trf.xlu0
      %v5059 = vpop.trf.xlu0
      %v5060 = vpop.trf.xlu0
      %v5061 = vpop.trf.xlu0
      %v5062 = vpop.trf.xlu0
      %5066 = vrot.lane.b32.xlu0 %v5028, 64
      %v5067 = vpop.permute.xlu0 %5066
      %5068 = vrot.lane.b32.xlu0 %v5029, 64
      %v5069 = vpop.permute.xlu0 %5068
      %5070 = vrot.lane.b32.xlu0 %v5030, 64
      %v5071 = vpop.permute.xlu0 %5070
      %v5076 = vsel %vm786, %v5047, 0
      %v5079 = vsel %vm786, %v5048, 0
      %v5082 = vsel %vm786, %v5049, 0
      %v5085 = vsel %vm786, %v5050, 0
      %v5088 = vsel %vm786, %v5051, 0
      %v5091 = vsel %vm786, %v5052, 0
      %v5094 = vsel %vm786, %v5053, 0
      %v5097 = vsel %vm786, %v5054, 0
      %5099 = vmatprep.subr.mxu0 0.0
      %5100 = vmatpush1.msra.mxu0 %v5067
      %5101 = vmatprep.subr.mxu0 0.0
      %5102 = vmatpush1.msra.mxu0 %v5069
      %5103 = vmatprep.subr.mxu0 0.0
      %5104 = vmatpush1.msra.mxu0 %v5071
      %5105 = vmatprep.subr.mxu0 0.0
      %5106 = vmatpush1.msra.mxu0 0.0
      %5107 = vmatprep.subr.mxu0 0.0
      %5108 = vmatpush1.msra.mxu0 0.0
      %5109 = vmatprep.subr.mxu0 0.0
      %5110 = vmatpush1.msra.mxu0 0.0
      %5111 = vmatprep.subr.mxu0 0.0
      %5112 = vmatpush1.msra.mxu0 0.0
      %5113 = vmatprep.subr.mxu0 0.0
      %5114 = vmatpush1.msra.mxu0 0.0
      %5115 = vmatprep.subr.mxu0 0.0
      %5116 = vmatpush1.msra.mxu0 0.0
      %5117 = vmatprep.subr.mxu0 0.0
      %5118 = vmatpush1.msra.mxu0 0.0
      %5119 = vmatprep.subr.mxu0 0.0
      %5120 = vmatpush1.msra.mxu0 0.0
      %5121 = vmatprep.subr.mxu0 0.0
      %5122 = vmatpush1.msra.mxu0 0.0
      %5123 = vmatprep.subr.mxu0 0.0
      %5124 = vmatpush1.msra.mxu0 0.0
      %5125 = vmatprep.subr.mxu0 0.0
      %5126 = vmatpush1.msra.mxu0 0.0
      %5127 = vmatprep.subr.mxu0 0.0
      %5128 = vmatpush1.msra.mxu0 0.0
      %5129 = vmatprep.subr.mxu0 0.0
      %5130 = vmatpush1.msra.mxu0 0.0
      %5131 = vmatprep.subr.mxu0 0.0
      %5132 = vmatpush1.msra.mxu0 0.0
      %5133 = vmatprep.subr.mxu0 0.0
      %5134 = vmatpush1.msra.mxu0 0.0
      %5135 = vmatprep.subr.mxu0 0.0
      %5136 = vmatpush1.msra.mxu0 0.0
      %5137 = vmatprep.subr.mxu0 0.0
      %5138 = vmatpush1.msra.mxu0 0.0
      %5139 = vmatprep.subr.mxu0 0.0
      %5140 = vmatpush1.msra.mxu0 0.0
      %5141 = vmatprep.subr.mxu0 0.0
      %5142 = vmatpush1.msra.mxu0 0.0
      %5143 = vmatprep.subr.mxu0 0.0
      %5144 = vmatpush1.msra.mxu0 0.0
      %5145 = vmatprep.subr.mxu0 0.0
      %5146 = vmatpush1.msra.mxu0 0.0
      %5147 = vmatprep.subr.mxu0 0.0
      %5148 = vmatpush1.msra.mxu0 0.0
      %5149 = vmatprep.subr.mxu0 0.0
      %5150 = vmatpush1.msra.mxu0 0.0
      %5151 = vmatprep.subr.mxu0 0.0
      %5152 = vmatpush1.msra.mxu0 0.0
      %5153 = vmatprep.subr.mxu0 0.0
      %5154 = vmatpush1.msra.mxu0 0.0
      %5155 = vmatprep.subr.mxu0 0.0
      %5156 = vmatpush1.msra.mxu0 0.0
      %5157 = vmatprep.subr.mxu0 0.0
      %5158 = vmatpush1.msra.mxu0 0.0
      %5159 = vmatprep.subr.mxu0 0.0
      %5160 = vmatpush1.msra.mxu0 0.0
      %5161 = vmatprep.subr.mxu0 0.0
      %5162 = vmatpush1.msra.mxu0 0.0
      %5163 = vmatprep.mubr.f32.mxu0 0.0
      %5164 = vmatmul.mubr.f32.gmra.mrb[0].mxu0 %v5076
      %v5165 = vpop.f32.mrb[0].mxu0
      %v5166 = vadd.f32 0.0, %v5165
      %v5167 = vpop.f32.mrb[0].mxu0
      %5168 = vmatprep.mubr.f32.mxu0 0.0
      %5169 = vmatmul.mubr.f32.gmra.mrb[0].mxu0 %v5079
      %v5170 = vpop.f32.mrb[0].mxu0
      %v5171 = vadd.f32 0.0, %v5170
      %v5172 = vpop.f32.mrb[0].mxu0
      %5173 = vmatprep.mubr.f32.mxu0 0.0
      %5174 = vmatmul.mubr.f32.gmra.mrb[0].mxu0 %v5082
      %v5175 = vpop.f32.mrb[0].mxu0
      %v5176 = vadd.f32 0.0, %v5175
      %v5177 = vpop.f32.mrb[0].mxu0
      %5178 = vmatprep.mubr.f32.mxu0 0.0
      %5179 = vmatmul.mubr.f32.gmra.mrb[0].mxu0 %v5085
      %v5180 = vpop.f32.mrb[0].mxu0
      %v5181 = vadd.f32 0.0, %v5180
      %v5182 = vpop.f32.mrb[0].mxu0
      %5183 = vmatprep.mubr.f32.mxu0 0.0
      %5184 = vmatmul.mubr.f32.gmra.mrb[0].mxu0 %v5088
      %v5185 = vpop.f32.mrb[0].mxu0
      %v5186 = vadd.f32 0.0, %v5185
      %v5187 = vpop.f32.mrb[0].mxu0
      %5188 = vmatprep.mubr.f32.mxu0 0.0
      %5189 = vmatmul.mubr.f32.gmra.mrb[0].mxu0 %v5091
      %v5190 = vpop.f32.mrb[0].mxu0
      %v5191 = vadd.f32 0.0, %v5190
      %v5192 = vpop.f32.mrb[0].mxu0
      %5193 = vmatprep.mubr.f32.mxu0 0.0
      %5194 = vmatmul.mubr.f32.gmra.mrb[0].mxu0 %v5094
      %v5195 = vpop.f32.mrb[0].mxu0
      %v5196 = vadd.f32 0.0, %v5195
      %v5197 = vpop.f32.mrb[0].mxu0
      %5198 = vmatprep.mubr.f32.mxu0 0.0
      %5199 = vmatmul.mubr.f32.gmra.mrb[0].mxu0 %v5097
      %v5200 = vpop.f32.mrb[0].mxu0
      %v5201 = vadd.f32 0.0, %v5200
      %v5202 = vpop.f32.mrb[0].mxu0
      %5203 = vdwg.mxu0
      %v5204 = vadd.f32 %v5020, %v5166
      %v5205 = vadd.f32 %v5021, %v5171
      %v5206 = vadd.f32 %v5022, %v5176
      %v5207 = vadd.f32 %v5023, %v5181
      %v5208 = vadd.f32 %v5024, %v5186
      %v5209 = vadd.f32 %v5025, %v5191
      %v5210 = vadd.f32 %v5026, %v5196
      %v5211 = vadd.f32 %v5027, %v5201
      %v5212 = vsel %vm715, %v4825, 0.0
      %5213 = vadd.xlane.f32.xlu0 %v5212
      %v5214 = vpop.xlane.xlu0 %5213
      %v5215 = vsel %vm715, %v4826, 0.0
      %5216 = vadd.xlane.f32.xlu0 %v5215
      %v5217 = vpop.xlane.xlu0 %5216
      %v5218 = vsel %vm715, %v4827, 0.0
      %5219 = vadd.xlane.f32.xlu0 %v5218
      %v5220 = vpop.xlane.xlu0 %5219
      %v5221 = vmul.f32 %v5214, %v2879
      %v5222 = vmul.f32 %v5217, %v2879
      %v5223 = vmul.f32 %v5220, %v2879
      %v5224 = vsub.f32 %v4825, %v5221
      %v5225 = vsub.f32 %v4826, %v5222
      %v5226 = vsub.f32 %v4827, %v5223
      %v5227 = vmul.f32 %v5224, %v5224
      %v5228 = vmul.f32 %v5225, %v5225
      %v5229 = vmul.f32 %v5226, %v5226
      %v5230 = vsel %vm715, %v5227, 0.0
      %5231 = vadd.xlane.f32.xlu0 %v5230
      %v5232 = vpop.xlane.xlu0 %5231
      %v5233 = vsel %vm715, %v5228, 0.0
      %5234 = vadd.xlane.f32.xlu0 %v5233
      %v5235 = vpop.xlane.xlu0 %5234
      %v5236 = vsel %vm715, %v5229, 0.0
      %5237 = vadd.xlane.f32.xlu0 %v5236
      %v5238 = vpop.xlane.xlu0 %5237
      %v5239 = vmul.f32 %v5232, %v2879
      %v5240 = vmul.f32 %v5235, %v2879
      %v5241 = vmul.f32 %v5238, %v2879
      %v5242 = vadd.f32 %v5239, 0.00064
      %v5243 = vadd.f32 %v5240, 0.00064
      %v5244 = vadd.f32 %v5241, 0.00064
      %v5245 = vrsqrt.pop %v5242
      %v5246 = vrsqrt.pop %v5243
      %v5247 = vrsqrt.pop %v5244
      %v5248 = vmul.f32 %v5224, %v5245
      %v5249 = vmul.f32 %v5225, %v5246
      %v5250 = vmul.f32 %v5226, %v5247
      %5252 = vrot.lane.b32.xlu0 %v2913, 64
      %v5253 = vpop.permute.xlu0 %5252
      %v5255 = vmul.f32 %v5248, %v5253
      %v5256 = vmul.f32 %v5249, %v5253
      %v5257 = vmul.f32 %v5250, %v5253
      %5259 = vrot.lane.b32.xlu0 %v2920, 64
      %v5260 = vpop.permute.xlu0 %5259
      %v5262 = vadd.f32 %v5255, %v5260
      %v5263 = vadd.f32 %v5256, %v5260
      %v5264 = vadd.f32 %v5257, %v5260
      %5268 = vrot.lane.b32.xlu0 %v2931, 64
      %v5269 = vpop.permute.xlu0 %5268
      %5270 = vrot.lane.b32.xlu0 %v2932, 64
      %v5271 = vpop.permute.xlu0 %5270
      %5272 = vrot.lane.b32.xlu0 %v2933, 64
      %v5273 = vpop.permute.xlu0 %5272
      %v5277 = vsel %vm715, %v5269, 0.0
      %5278 = vadd.xlane.f32.xlu0 %v5277
      %v5279 = vpop.xlane.xlu0 %5278
      %v5280 = vsel %vm715, %v5271, 0.0
      %5281 = vadd.xlane.f32.xlu0 %v5280
      %v5282 = vpop.xlane.xlu0 %5281
      %v5283 = vsel %vm715, %v5273, 0.0
      %5284 = vadd.xlane.f32.xlu0 %v5283
      %v5285 = vpop.xlane.xlu0 %5284
      %v5286 = vmul.f32 %v5279, %v672
      %v5287 = vmul.f32 %v5282, %v673
      %v5288 = vmul.f32 %v5285, %v674
      %5292 = vrot.lane.b32.xlu0 %v5286, 64
      %v5293 = vpop.permute.xlu0 %5292
      %5294 = vrot.lane.b32.xlu0 %v5287, 64
      %v5295 = vpop.permute.xlu0 %5294
      %5296 = vrot.lane.b32.xlu0 %v5288, 64
      %v5297 = vpop.permute.xlu0 %5296
      %v5301 = vadd.f32 %v5262, %v5293
      %v5302 = vadd.f32 %v5263, %v5295
      %v5303 = vadd.f32 %v5264, %v5297
      %5307 = vrot.lane.b32.xlu0 %v684, 64
      %v5308 = vpop.permute.xlu0 %5307
      %5309 = vrot.lane.b32.xlu0 %v685, 64
      %v5310 = vpop.permute.xlu0 %5309
      %5311 = vrot.lane.b32.xlu0 %v686, 64
      %v5312 = vpop.permute.xlu0 %5311
      %v5316 = vmul.f32 %v5301, %v5308
      %v5317 = vmul.f32 %v5302, %v5310
      %v5318 = vmul.f32 %v5303, %v5312
      %5319 = vst.msk [vmem:[%s2960] sm:$0xff] %vm715, %v5204
      %5320 = vst.msk [vmem:[%s2960 + $0x8] sm:$0xff] %vm715, %v5205
      %5321 = vst.msk [vmem:[%s2960 + $0x10] sm:$0xff] %vm715, %v5206
      %5322 = vst.msk [vmem:[%s2960 + $0x18] sm:$0xff] %vm715, %v5207
      %5323 = vst.msk [vmem:[%s2960 + $0x20] sm:$0xff] %vm715, %v5208
      %5324 = vst.msk [vmem:[%s2960 + $0x28] sm:$0xff] %vm715, %v5209
      %5325 = vst.msk [vmem:[%s2960 + $0x30] sm:$0xff] %vm715, %v5210
      %5326 = vst.msk [vmem:[%s2960 + $0x38] sm:$0xff] %vm715, %v5211
      %5330 = vrot.lane.b32.xlu0 %v5316, 64
      %v5331 = vpop.permute.xlu0 %5330
      %5332 = vrot.lane.b32.xlu0 %v5317, 64
      %v5333 = vpop.permute.xlu0 %5332
      %5334 = vrot.lane.b32.xlu0 %v5318, 64
      %v5335 = vpop.permute.xlu0 %5334
      %v5339 = vsel %vm715, %v2949, %v5331
      %v5340 = vsel %vm715, %v2950, %v5333
      %v5341 = vsel %vm715, %v2951, %v5335
      %v5342 = vpack.c.bf16 %v5340, %v5339
      %v5343 = vpack.c.bf16 %v5341, %v5341
      %v5346 = vunpack.c.l.b16 %v5342
      %v5347 = vunpack.c.h.b16 %v5342
      %v5348 = vunpack.c.l.b16 %v5343
      %v5349 = vpack.c.b16 %v5346, %v5346
      %v5350 = vpack.c.b16 %v5347, %v5347
      %v5351 = vpack.c.b16 %v5348, %v5348
      %5355 = vst [vmem:[%s604] sm:$0xf] %v5349
      %5356 = vst [vmem:[%s604 + $0x4] sm:$0xf] %v5350
      %5357 = vst [vmem:[%s604 + $0x8] sm:$0xf] %v5351
      %s5358 = smul.u32 3, %s27
      %p5359 = scmp.lt.s32.totalorder %s26, 1
      %s5360 = scalar_select %p5359, %s26, 1
      %p5361 = scmp.lt.s32.totalorder %s5358, 2
      %s5362 = scalar_select %p5361, %s5358, 2
      %s5363 = smul.addr %s5360, 3
      %s5364 = sadd.s32 %s5362, %s5363
      %s5365 = smul.addr %s5364, 4
      %s5366 = scalar_lea.vmem %s11, %s5365
      // Predicated region
      $region69: #{rwkv_forward.30} parent=63 // pred_check
        %p5367 = pneg %p327
      $region70: #{rwkv_forward.30} parent=63 // pred_check_branch
        %5369 = sbr.rel (%p5367) target = $region72
      $region71: #{rwkv_forward.30} parent=63 // pred_region
        %s5370 = smul.u32 3, %s27
      $region72: #{rwkv_forward.30} parent=63 // pred_fallthru
        _
    $region64: #{rwkv_forward.30} parent=5 // pred_fallthru
      _
    %p5371 = scmp.le.s32.totalorder 2, %s17
    // Predicated region
    $region73: #{rwkv_forward.30} parent=5 // pred_check
      %p5372 = pneg %p5371
    $region74: #{rwkv_forward.30} parent=5 // pred_check_branch
      %5374 = sbr.rel (%p5372) target = $region76
    $region75: #{rwkv_forward.30} parent=5 // pred_region
      %s5375 = ssub.s32 %s17, 2
      // Predicated region
      $region77: #{rwkv_forward.30} parent=75 // pred_check
        %p5376 = pneg %p333
      $region78: #{rwkv_forward.30} parent=75 // pred_check_branch
        %5378 = sbr.rel (%p5376) target = $region80
      $region79: #{rwkv_forward.30} parent=75 // pred_region
        %s5379 = smul.u32 3, %s29
        %p5380 = scmp.lt.s32.totalorder %s28, 1
        %s5381 = scalar_select %p5380, %s28, 1
        %p5382 = scmp.lt.s32.totalorder %s5379, 2
        %s5383 = scalar_select %p5382, %s5379, 2
        %s5384 = smul.addr %s5381, 3
        %s5385 = sadd.s32 %s5383, %s5384
        %s5386 = smul.addr %s5385, 4
        %s5387 = scalar_lea.vmem %s11, %s5386
      $region80: #{rwkv_forward.30} parent=75 // pred_fallthru
        _
    $region76: #{rwkv_forward.30} parent=5 // pred_fallthru
      _
  $region6: #{rwkv_forward.30} parent=0 // loop_footer
    %s21 = sadd.s32 1, %s17
  $region7: #{rwkv_forward.30} parent=0 // loop_footer_branch
    %16 = sbr.rel target = $region3
  $region8: #{rwkv_forward.30} parent=0 // loop_exit
    _

</llo_original>
